<compile_context>
chip_gen: v7x
topology: tpu7x:2x2x1
jax: 0.10.0
libtpu: 0.0.40
codegen_flags: <defaults>
</compile_context>

<pallas_src>
import functools

import jax
import jax.numpy as jnp
from jax.experimental import pallas as pl
from jax.experimental.pallas import tpu as pltpu

D_IN = 64
D_HID = 1024


def _round_up(n, m):
    return ((n + m - 1) // m) * m


def decoder_kernel(x_ref,
                   w1_ref, b1_ref,
                   w2_ref, b2_ref,
                   w3_ref, b3_ref,
                   w4_ref, b4_ref,
                   w5_ref, b5_ref,
                   o_ref):
    """Whole 5-layer MLP for one tile of rows. Weights resident in VMEM."""

    def layer(h, w_ref, b_ref, relu):
        # Matmul operands in the weight dtype (f32 or bf16), accumulate in f32.
        y = jnp.dot(h.astype(w_ref.dtype), w_ref[...],
                    preferred_element_type=jnp.float32)
        y = y + b_ref[...].astype(jnp.float32)
        return jnp.maximum(y, 0.0) if relu else y

    h = jnp.maximum(x_ref[...].astype(jnp.float32), 0.0)   # relu on the input
    h = layer(h, w1_ref, b1_ref, True)
    h = layer(h, w2_ref, b2_ref, True)
    h = layer(h, w3_ref, b3_ref, True)
    h = layer(h, w4_ref, b4_ref, True)
    h = layer(h, w5_ref, b5_ref, False)
    o_ref[...] = h.astype(o_ref.dtype)


@functools.partial(jax.jit, static_argnames=("tile_m", "compute_dtype"))
def decoder_forward(x, params, *, tile_m=512, compute_dtype=jnp.float32):
    """x: (..., 64) float array. params: dict of (w [in,out], b [out]) per layer."""
    lead_shape = x.shape[:-1]
    x2 = x.reshape(-1, D_IN).astype(jnp.float32)
    M = x2.shape[0]

    # Don't over-pad tiny inputs; keep the sublane (8) constraint satisfied.
    tm = min(tile_m, _round_up(M, 8))
    M_pad = _round_up(M, tm)
    if M_pad != M:
        x2 = jnp.pad(x2, ((0, M_pad - M), (0, 0)))
    grid = (M_pad // tm,)

    def get(name):
        w, b = params[name]
        return w.astype(compute_dtype), b.astype(jnp.float32).reshape(1, -1)

    w1, b1 = get("l1")
    w2, b2 = get("l2")
    w3, b3 = get("l3")
    w4, b4 = get("l4")
    w5, b5 = get("l5")

    # Weights/biases: same block every grid step -> single-buffered resident copy.
    const = lambda shape: pl.BlockSpec(shape, lambda i: (0, 0),
                                       pipeline_mode=pl.Buffered(1))

    out = pl.pallas_call(
        decoder_kernel,
        out_shape=jax.ShapeDtypeStruct((M_pad, D_HID), jnp.float32),
        grid_spec=pltpu.PrefetchScalarGridSpec(
            num_scalar_prefetch=0,
            grid=grid,
            in_specs=[
                pl.BlockSpec((tm, D_IN), lambda i: (i, 0)),       # x tile
                const((D_IN, D_HID)),  const((1, D_HID)),         # layer 1
                const((D_HID, D_HID)), const((1, D_HID)),         # layer 2
                const((D_HID, D_HID)), const((1, D_HID)),         # layer 3
                const((D_HID, D_HID)), const((1, D_HID)),         # layer 4
                const((D_HID, D_HID)), const((1, D_HID)),         # layer 5
            ],
            out_specs=pl.BlockSpec((tm, D_HID), lambda i: (i, 0)),
        ),
        compiler_params=pltpu.CompilerParams(
            dimension_semantics=("parallel",),       # shards rows across v7x cores
            vmem_limit_bytes=48 * 1024 * 1024,       # fits v7x's 64 MiB VMEM
        ),
    )(x2, w1, b1, w2, b2, w3, b3, w4, b4, w5, b5)

    return out[:M].reshape(lead_shape + (D_HID,))


def init_params(key):
    """Deterministic init mirroring nn.Linear default (uniform +/- 1/sqrt(fan_in)).
    Weights stored as [in, out] (transposed vs. PyTorch's [out, in])."""
    sizes = [(D_IN, D_HID)] + [(D_HID, D_HID)] * 4
    params = {}
    for idx, (fan_in, fan_out) in enumerate(sizes, start=1):
        key, kw, kb = jax.random.split(key, 3)
        bound = 1.0 / jnp.sqrt(jnp.float32(fan_in))
        w = jax.random.uniform(kw, (fan_in, fan_out), jnp.float32, -bound, bound)
        b = jax.random.uniform(kb, (fan_out,), jnp.float32, -bound, bound)
        params[f"l{idx}"] = (w, b)
    return params


def decoder_ref(x, params):
    """Pure-JAX reference for correctness check."""
    h = jnp.maximum(x.astype(jnp.float32), 0.0)
    for i in range(1, 6):
        w, b = params[f"l{i}"]
        h = h @ w + b
        if i < 5:
            h = jnp.maximum(h, 0.0)
    return h


if __name__ == "__main__":
    key = jax.random.PRNGKey(0)
    key, kx = jax.random.split(key)
    params = init_params(key)

    # Small shapes consistent with the module: (batch=2, tokens=8, features=64).
    x = jax.random.normal(kx, (2, 8, D_IN), jnp.float32)

    # Default (f32) path — must match the reference tightly.
    out = decoder_forward(x, params)
    out = jax.block_until_ready(out)
    ref = decoder_ref(x, params)
    assert out.shape == (2, 8, D_HID), out.shape
    assert jnp.allclose(out, ref, atol=1e-3, rtol=1e-3), "mismatch vs JAX reference"

    # bf16-operand path (f32 accumulation): exercised for compile coverage only.
    out_bf16 = decoder_forward(x, params, compute_dtype=jnp.bfloat16)
    out_bf16 = jax.block_until_ready(out_bf16)
    assert out_bf16.shape == (2, 8, D_HID)
    assert bool(jnp.all(jnp.isfinite(out_bf16)))

    print("KERNEL_OK")
</pallas_src>

<mosaic_0001>
module attributes {stable_mosaic.version = 11 : i64} {
  func.func @decoder_kernel(%arg0: i32, %arg1: memref<16x64xf32, #tpu.memory_space<vmem>>, %arg2: memref<64x1024xf32, #tpu.memory_space<vmem>>, %arg3: memref<1x1024xf32, #tpu.memory_space<vmem>>, %arg4: memref<1024x1024xf32, #tpu.memory_space<vmem>>, %arg5: memref<1x1024xf32, #tpu.memory_space<vmem>>, %arg6: memref<1024x1024xf32, #tpu.memory_space<vmem>>, %arg7: memref<1x1024xf32, #tpu.memory_space<vmem>>, %arg8: memref<1024x1024xf32, #tpu.memory_space<vmem>>, %arg9: memref<1x1024xf32, #tpu.memory_space<vmem>>, %arg10: memref<1024x1024xf32, #tpu.memory_space<vmem>>, %arg11: memref<1x1024xf32, #tpu.memory_space<vmem>>, %arg12: memref<16x1024xf32, #tpu.memory_space<vmem>>) attributes {dimension_semantics = [#tpu.dimension_semantics<parallel>], iteration_bounds = array<i64: 1>, scalar_prefetch = 0 : i64, scratch_operands = 0 : i64, tpu.core_type = #tpu.core_type<tc>, window_params = [{transform_indices = @transform_0, window_bounds = array<i64: 16, 64>}, {pipeline_mode = #tpu.pipeline_mode<synchronous>, transform_indices = @transform_1, window_bounds = array<i64: 64, 1024>}, {pipeline_mode = #tpu.pipeline_mode<synchronous>, transform_indices = @transform_2, window_bounds = array<i64: 1, 1024>}, {pipeline_mode = #tpu.pipeline_mode<synchronous>, transform_indices = @transform_3, window_bounds = array<i64: 1024, 1024>}, {pipeline_mode = #tpu.pipeline_mode<synchronous>, transform_indices = @transform_4, window_bounds = array<i64: 1, 1024>}, {pipeline_mode = #tpu.pipeline_mode<synchronous>, transform_indices = @transform_5, window_bounds = array<i64: 1024, 1024>}, {pipeline_mode = #tpu.pipeline_mode<synchronous>, transform_indices = @transform_6, window_bounds = array<i64: 1, 1024>}, {pipeline_mode = #tpu.pipeline_mode<synchronous>, transform_indices = @transform_7, window_bounds = array<i64: 1024, 1024>}, {pipeline_mode = #tpu.pipeline_mode<synchronous>, transform_indices = @transform_8, window_bounds = array<i64: 1, 1024>}, {pipeline_mode = #tpu.pipeline_mode<synchronous>, transform_indices = @transform_9, window_bounds = array<i64: 1024, 1024>}, {pipeline_mode = #tpu.pipeline_mode<synchronous>, transform_indices = @transform_10, window_bounds = array<i64: 1, 1024>}, {transform_indices = @transform_11, window_bounds = array<i64: 16, 1024>}]} {
    %c0 = arith.constant 0 : index
    %c0_0 = arith.constant 0 : index
    %0 = vector.load %arg1[%c0, %c0_0] : memref<16x64xf32, #tpu.memory_space<vmem>>, vector<16x64xf32>
    %cst = arith.constant 0.000000e+00 : f32
    %1 = vector.broadcast %cst : f32 to vector<16x64xf32>
    %2 = arith.maximumf %0, %1 : vector<16x64xf32>
    %c0_1 = arith.constant 0 : index
    %c0_2 = arith.constant 0 : index
    %3 = vector.load %arg2[%c0_1, %c0_2] : memref<64x1024xf32, #tpu.memory_space<vmem>>, vector<64x1024xf32>
    %cst_3 = arith.constant dense<0.000000e+00> : vector<16x1024xf32>
    %4 = tpu.matmul %2, %3, %cst_3 {dimension_numbers = #tpu.dot_dimension_numbers<[1], [0], [0], [1], [0, 0, 1, 1], [], []>} : vector<16x64xf32>, vector<64x1024xf32>, vector<16x1024xf32> -> vector<16x1024xf32>
    %c0_4 = arith.constant 0 : index
    %c0_5 = arith.constant 0 : index
    %5 = vector.load %arg3[%c0_4, %c0_5] : memref<1x1024xf32, #tpu.memory_space<vmem>>, vector<1x1024xf32>
    %6 = vector.broadcast %5 : vector<1x1024xf32> to vector<16x1024xf32>
    %7 = arith.addf %4, %6 : vector<16x1024xf32>
    %cst_6 = arith.constant 0.000000e+00 : f32
    %8 = vector.broadcast %cst_6 : f32 to vector<16x1024xf32>
    %9 = arith.maximumf %7, %8 : vector<16x1024xf32>
    %c0_7 = arith.constant 0 : index
    %c0_8 = arith.constant 0 : index
    %10 = vector.load %arg4[%c0_7, %c0_8] : memref<1024x1024xf32, #tpu.memory_space<vmem>>, vector<1024x1024xf32>
    %cst_9 = arith.constant dense<0.000000e+00> : vector<16x1024xf32>
    %11 = tpu.matmul %9, %10, %cst_9 {dimension_numbers = #tpu.dot_dimension_numbers<[1], [0], [0], [1], [0, 0, 1, 1], [], []>} : vector<16x1024xf32>, vector<1024x1024xf32>, vector<16x1024xf32> -> vector<16x1024xf32>
    %c0_10 = arith.constant 0 : index
    %c0_11 = arith.constant 0 : index
    %12 = vector.load %arg5[%c0_10, %c0_11] : memref<1x1024xf32, #tpu.memory_space<vmem>>, vector<1x1024xf32>
    %13 = vector.broadcast %12 : vector<1x1024xf32> to vector<16x1024xf32>
    %14 = arith.addf %11, %13 : vector<16x1024xf32>
    %cst_12 = arith.constant 0.000000e+00 : f32
    %15 = vector.broadcast %cst_12 : f32 to vector<16x1024xf32>
    %16 = arith.maximumf %14, %15 : vector<16x1024xf32>
    %c0_13 = arith.constant 0 : index
    %c0_14 = arith.constant 0 : index
    %17 = vector.load %arg6[%c0_13, %c0_14] : memref<1024x1024xf32, #tpu.memory_space<vmem>>, vector<1024x1024xf32>
    %cst_15 = arith.constant dense<0.000000e+00> : vector<16x1024xf32>
    %18 = tpu.matmul %16, %17, %cst_15 {dimension_numbers = #tpu.dot_dimension_numbers<[1], [0], [0], [1], [0, 0, 1, 1], [], []>} : vector<16x1024xf32>, vector<1024x1024xf32>, vector<16x1024xf32> -> vector<16x1024xf32>
    %c0_16 = arith.constant 0 : index
    %c0_17 = arith.constant 0 : index
    %19 = vector.load %arg7[%c0_16, %c0_17] : memref<1x1024xf32, #tpu.memory_space<vmem>>, vector<1x1024xf32>
    %20 = vector.broadcast %19 : vector<1x1024xf32> to vector<16x1024xf32>
    %21 = arith.addf %18, %20 : vector<16x1024xf32>
    %cst_18 = arith.constant 0.000000e+00 : f32
    %22 = vector.broadcast %cst_18 : f32 to vector<16x1024xf32>
    %23 = arith.maximumf %21, %22 : vector<16x1024xf32>
    %c0_19 = arith.constant 0 : index
    %c0_20 = arith.constant 0 : index
    %24 = vector.load %arg8[%c0_19, %c0_20] : memref<1024x1024xf32, #tpu.memory_space<vmem>>, vector<1024x1024xf32>
    %cst_21 = arith.constant dense<0.000000e+00> : vector<16x1024xf32>
    %25 = tpu.matmul %23, %24, %cst_21 {dimension_numbers = #tpu.dot_dimension_numbers<[1], [0], [0], [1], [0, 0, 1, 1], [], []>} : vector<16x1024xf32>, vector<1024x1024xf32>, vector<16x1024xf32> -> vector<16x1024xf32>
    %c0_22 = arith.constant 0 : index
    %c0_23 = arith.constant 0 : index
    %26 = vector.load %arg9[%c0_22, %c0_23] : memref<1x1024xf32, #tpu.memory_space<vmem>>, vector<1x1024xf32>
    %27 = vector.broadcast %26 : vector<1x1024xf32> to vector<16x1024xf32>
    %28 = arith.addf %25, %27 : vector<16x1024xf32>
    %cst_24 = arith.constant 0.000000e+00 : f32
    %29 = vector.broadcast %cst_24 : f32 to vector<16x1024xf32>
    %30 = arith.maximumf %28, %29 : vector<16x1024xf32>
    %c0_25 = arith.constant 0 : index
    %c0_26 = arith.constant 0 : index
    %31 = vector.load %arg10[%c0_25, %c0_26] : memref<1024x1024xf32, #tpu.memory_space<vmem>>, vector<1024x1024xf32>
    %cst_27 = arith.constant dense<0.000000e+00> : vector<16x1024xf32>
    %32 = tpu.matmul %30, %31, %cst_27 {dimension_numbers = #tpu.dot_dimension_numbers<[1], [0], [0], [1], [0, 0, 1, 1], [], []>} : vector<16x1024xf32>, vector<1024x1024xf32>, vector<16x1024xf32> -> vector<16x1024xf32>
    %c0_28 = arith.constant 0 : index
    %c0_29 = arith.constant 0 : index
    %33 = vector.load %arg11[%c0_28, %c0_29] : memref<1x1024xf32, #tpu.memory_space<vmem>>, vector<1x1024xf32>
    %34 = vector.broadcast %33 : vector<1x1024xf32> to vector<16x1024xf32>
    %35 = arith.addf %32, %34 : vector<16x1024xf32>
    %c0_30 = arith.constant 0 : index
    %c0_31 = arith.constant 0 : index
    %36 = vector.load %arg12[%c0_30, %c0_31] : memref<16x1024xf32, #tpu.memory_space<vmem>>, vector<16x1024xf32>
    tpu.vector_store %arg12[%c0_30, %c0_31], %35 {strides = array<i32>} : memref<16x1024xf32, #tpu.memory_space<vmem>>, vector<16x1024xf32>,
    return
  }
  func.func @transform_0(%arg0: i32) -> (i32, i32) {
    %c0_i32 = arith.constant 0 : i32
    %c0_i32_0 = arith.constant 0 : i32
    return %arg0, %c0_i32 : i32, i32
  }
  func.func @transform_1(%arg0: i32) -> (i32, i32) {
    %c0_i32 = arith.constant 0 : i32
    %c0_i32_0 = arith.constant 0 : i32
    %c0_i32_1 = arith.constant 0 : i32
    return %c0_i32, %c0_i32_0 : i32, i32
  }
  func.func @transform_2(%arg0: i32) -> (i32, i32) {
    %c0_i32 = arith.constant 0 : i32
    %c0_i32_0 = arith.constant 0 : i32
    %c0_i32_1 = arith.constant 0 : i32
    return %c0_i32, %c0_i32_0 : i32, i32
  }
  func.func @transform_3(%arg0: i32) -> (i32, i32) {
    %c0_i32 = arith.constant 0 : i32
    %c0_i32_0 = arith.constant 0 : i32
    %c0_i32_1 = arith.constant 0 : i32
    return %c0_i32, %c0_i32_0 : i32, i32
  }
  func.func @transform_4(%arg0: i32) -> (i32, i32) {
    %c0_i32 = arith.constant 0 : i32
    %c0_i32_0 = arith.constant 0 : i32
    %c0_i32_1 = arith.constant 0 : i32
    return %c0_i32, %c0_i32_0 : i32, i32
  }
  func.func @transform_5(%arg0: i32) -> (i32, i32) {
    %c0_i32 = arith.constant 0 : i32
    %c0_i32_0 = arith.constant 0 : i32
    %c0_i32_1 = arith.constant 0 : i32
    return %c0_i32, %c0_i32_0 : i32, i32
  }
  func.func @transform_6(%arg0: i32) -> (i32, i32) {
    %c0_i32 = arith.constant 0 : i32
    %c0_i32_0 = arith.constant 0 : i32
    %c0_i32_1 = arith.constant 0 : i32
    return %c0_i32, %c0_i32_0 : i32, i32
  }
  func.func @transform_7(%arg0: i32) -> (i32, i32) {
    %c0_i32 = arith.constant 0 : i32
    %c0_i32_0 = arith.constant 0 : i32
    %c0_i32_1 = arith.constant 0 : i32
    return %c0_i32, %c0_i32_0 : i32, i32
  }
  func.func @transform_8(%arg0: i32) -> (i32, i32) {
    %c0_i32 = arith.constant 0 : i32
    %c0_i32_0 = arith.constant 0 : i32
    %c0_i32_1 = arith.constant 0 : i32
    return %c0_i32, %c0_i32_0 : i32, i32
  }
  func.func @transform_9(%arg0: i32) -> (i32, i32) {
    %c0_i32 = arith.constant 0 : i32
    %c0_i32_0 = arith.constant 0 : i32
    %c0_i32_1 = arith.constant 0 : i32
    return %c0_i32, %c0_i32_0 : i32, i32
  }
  func.func @transform_10(%arg0: i32) -> (i32, i32) {
    %c0_i32 = arith.constant 0 : i32
    %c0_i32_0 = arith.constant 0 : i32
    %c0_i32_1 = arith.constant 0 : i32
    return %c0_i32, %c0_i32_0 : i32, i32
  }
  func.func @transform_11(%arg0: i32) -> (i32, i32) {
    %c0_i32 = arith.constant 0 : i32
    %c0_i32_0 = arith.constant 0 : i32
    return %arg0, %c0_i32 : i32, i32
  }
}

</mosaic_0001>

<llo_original>
// kernel: decoder_forward.1
$region0: #{decoder_forward.1}
  #allocation0 [shape = 'u32[]', space=smem, size = 0x4, offset = 0x4, fixed_abs, tag = 'smem constant byte address 0x4 - core index']
  #allocation1 [shape = 'u32[144,128]{1,0:T(1,128)}', space=vmem, size = 0x12000, scoped, tag = 'internal scratch']
  %s0 = inlined_call_operand.hbm [shape: f32[16,64], index: 0, kind: input, shape index: {}]
  %s1 = inlined_call_operand.hbm [shape: f32[64,1024], index: 1, kind: input, shape index: {}]
  %s2 = inlined_call_operand.hbm [shape: f32[1,1024], index: 2, kind: input, shape index: {}]
  %s3 = inlined_call_operand.hbm [shape: f32[1024,1024], index: 3, kind: input, shape index: {}]
  %s4 = inlined_call_operand.hbm [shape: f32[1,1024], index: 4, kind: input, shape index: {}]
  %s5 = inlined_call_operand.hbm [shape: f32[1024,1024], index: 5, kind: input, shape index: {}]
  %s6 = inlined_call_operand.hbm [shape: f32[1,1024], index: 6, kind: input, shape index: {}]
  %s7 = inlined_call_operand.hbm [shape: f32[1024,1024], index: 7, kind: input, shape index: {}]
  %s8 = inlined_call_operand.hbm [shape: f32[1,1024], index: 8, kind: input, shape index: {}]
  %s9 = inlined_call_operand.hbm [shape: f32[1024,1024], index: 9, kind: input, shape index: {}]
  %s10 = inlined_call_operand.hbm [shape: f32[1,1024], index: 10, kind: input, shape index: {}]
  %s11 = inlined_call_operand.hbm [shape: f32[16,1024], index: 11, kind: output, shape index: {}]
  %s12 = sld [smem:[#allocation0]]
  $region98: #{decoder_forward.1} parent=0
    _
  %s14 = ssub.s32 1, %s12
  %s15 = scalar_select 0, %s14, %s12
  $region1: #{decoder_forward.1} parent=0
    #allocation2 [shape = 'u8[8192]{0}', space=vmem, size = 0x2000, scoped, tag = 'input window, operand 0, single buffered']
    #allocation3 [shape = 's32[1]{0}', space=sflag, size = 0x4, scoped, tag = 'scoped memory for decoder_forward.1']
    #allocation4 [shape = 's32[1]{0}', space=sflag, size = 0x4, scoped, tag = 'scoped memory for decoder_forward.1']
    #allocation5 [shape = 'u8[262144]{0}', space=vmem, size = 0x40000, scoped, tag = 'input window, operand 1, single buffered']
    #allocation6 [shape = 's32[1]{0}', space=sflag, size = 0x4, scoped, tag = 'scoped memory for decoder_forward.1']
    #allocation7 [shape = 'u8[4096]{0}', space=vmem, size = 0x1000, scoped, tag = 'input window, operand 2, single buffered']
    #allocation8 [shape = 'u8[4194304]{0}', space=vmem, size = 0x400000, scoped, tag = 'input window, operand 3, single buffered']
    #allocation9 [shape = 's32[1]{0}', space=sflag, size = 0x4, scoped, tag = 'scoped memory for decoder_forward.1']
    #allocation10 [shape = 'u8[4096]{0}', space=vmem, size = 0x1000, scoped, tag = 'input window, operand 4, single buffered']
    #allocation11 [shape = 'u8[4194304]{0}', space=vmem, size = 0x400000, scoped, tag = 'input window, operand 5, single buffered']
    #allocation12 [shape = 's32[1]{0}', space=sflag, size = 0x4, scoped, tag = 'scoped memory for decoder_forward.1']
    #allocation13 [shape = 'u8[4096]{0}', space=vmem, size = 0x1000, scoped, tag = 'input window, operand 6, single buffered']
    #allocation14 [shape = 'u8[4194304]{0}', space=vmem, size = 0x400000, scoped, tag = 'input window, operand 7, single buffered']
    #allocation15 [shape = 's32[1]{0}', space=sflag, size = 0x4, scoped, tag = 'scoped memory for decoder_forward.1']
    #allocation16 [shape = 'u8[4096]{0}', space=vmem, size = 0x1000, scoped, tag = 'input window, operand 8, single buffered']
    #allocation17 [shape = 'u8[4194304]{0}', space=vmem, size = 0x400000, scoped, tag = 'input window, operand 9, single buffered']
    #allocation18 [shape = 's32[1]{0}', space=sflag, size = 0x4, scoped, tag = 'scoped memory for decoder_forward.1']
    #allocation19 [shape = 'u8[4096]{0}', space=vmem, size = 0x1000, scoped, tag = 'input window, operand 10, single buffered']
    #allocation20 [shape = 'u8[65536]{0}', space=vmem, size = 0x10000, scoped, tag = 'output window, operand 0, single buffered']
    %16 = vsyncpa [#allocation3], 0
    %17 = vsyncpa [#allocation6], 0
    %18 = vsyncpa [#allocation9], 0
    %19 = vsyncpa [#allocation12], 0
    %20 = vsyncpa [#allocation15], 0
    %21 = vsyncpa [#allocation18], 0
    %22 = vsyncpa [#allocation4], 0
    // Predicated region
    $region2: #{decoder_forward.1} parent=1 // pred_check
      _
    $region3: #{decoder_forward.1} parent=1 // pred_check_branch
      %24 = sbr.rel (0) target = $region5
    $region4: #{decoder_forward.1} parent=1 // pred_region
      %s26 = ssub.s32 256, 256
      %27 = vsyncadd [#allocation3], %s26
      %s28 = sshll.u32 [#allocation2], 4
      %s29 = int_to_ptr.vmem [resolvable:$true] %s28
      %34 = dma.hbm_to_vmem [thread:$0]  %s0, 256, %s29, [#allocation3], 128, 128, 8
    $region5: #{decoder_forward.1} parent=1 // pred_fallthru
      _
    // Predicated region
    $region6: #{decoder_forward.1} parent=1 // pred_check
      _
    $region7: #{decoder_forward.1} parent=1 // pred_check_branch
      %36 = sbr.rel (0) target = $region9
    $region8: #{decoder_forward.1} parent=1 // pred_region
      %s38 = ssub.s32 8192, 8192
      %39 = vsyncadd [#allocation6], %s38
      %s40 = sshll.u32 [#allocation5], 4
      %s41 = int_to_ptr.vmem [resolvable:$true] %s40
      %46 = dma.hbm_to_vmem [thread:$0]  %s1, 8192, %s41, [#allocation6], 1024, 1024, 64
    $region9: #{decoder_forward.1} parent=1 // pred_fallthru
      _
    // Predicated region
    $region10: #{decoder_forward.1} parent=1 // pred_check
      _
    $region11: #{decoder_forward.1} parent=1 // pred_check_branch
      %48 = sbr.rel (0) target = $region13
    $region12: #{decoder_forward.1} parent=1 // pred_region
      %s50 = ssub.s32 128, 128
      %51 = vsyncadd [#allocation6], %s50
      %s53 = sshll.u32 [#allocation7], 4
      %s54 = int_to_ptr.vmem [resolvable:$true] %s53
      %56 = dma.hbm_to_vmem [thread:$0]  %s2, 128, %s54, [#allocation6]
    $region13: #{decoder_forward.1} parent=1 // pred_fallthru
      _
    // Predicated region
    $region14: #{decoder_forward.1} parent=1 // pred_check
      _
    $region15: #{decoder_forward.1} parent=1 // pred_check_branch
      %58 = sbr.rel (0) target = $region17
    $region16: #{decoder_forward.1} parent=1 // pred_region
      %s60 = ssub.s32 131072, 131072
      %61 = vsyncadd [#allocation9], %s60
      %s62 = sshll.u32 [#allocation8], 4
      %s63 = int_to_ptr.vmem [resolvable:$true] %s62
      %68 = dma.hbm_to_vmem [thread:$0]  %s3, 131072, %s63, [#allocation9], 1024, 1024, 64
    $region17: #{decoder_forward.1} parent=1 // pred_fallthru
      _
    // Predicated region
    $region18: #{decoder_forward.1} parent=1 // pred_check
      _
    $region19: #{decoder_forward.1} parent=1 // pred_check_branch
      %70 = sbr.rel (0) target = $region21
    $region20: #{decoder_forward.1} parent=1 // pred_region
      %s72 = ssub.s32 128, 128
      %73 = vsyncadd [#allocation9], %s72
      %s75 = sshll.u32 [#allocation10], 4
      %s76 = int_to_ptr.vmem [resolvable:$true] %s75
      %78 = dma.hbm_to_vmem [thread:$0]  %s4, 128, %s76, [#allocation9]
    $region21: #{decoder_forward.1} parent=1 // pred_fallthru
      _
    // Predicated region
    $region22: #{decoder_forward.1} parent=1 // pred_check
      _
    $region23: #{decoder_forward.1} parent=1 // pred_check_branch
      %80 = sbr.rel (0) target = $region25
    $region24: #{decoder_forward.1} parent=1 // pred_region
      %s82 = ssub.s32 131072, 131072
      %83 = vsyncadd [#allocation12], %s82
      %s84 = sshll.u32 [#allocation11], 4
      %s85 = int_to_ptr.vmem [resolvable:$true] %s84
      %90 = dma.hbm_to_vmem [thread:$0]  %s5, 131072, %s85, [#allocation12], 1024, 1024, 64
    $region25: #{decoder_forward.1} parent=1 // pred_fallthru
      _
    // Predicated region
    $region26: #{decoder_forward.1} parent=1 // pred_check
      _
    $region27: #{decoder_forward.1} parent=1 // pred_check_branch
      %92 = sbr.rel (0) target = $region29
    $region28: #{decoder_forward.1} parent=1 // pred_region
      %s94 = ssub.s32 128, 128
      %95 = vsyncadd [#allocation12], %s94
      %s97 = sshll.u32 [#allocation13], 4
      %s98 = int_to_ptr.vmem [resolvable:$true] %s97
      %100 = dma.hbm_to_vmem [thread:$0]  %s6, 128, %s98, [#allocation12]
    $region29: #{decoder_forward.1} parent=1 // pred_fallthru
      _
    // Predicated region
    $region30: #{decoder_forward.1} parent=1 // pred_check
      _
    $region31: #{decoder_forward.1} parent=1 // pred_check_branch
      %102 = sbr.rel (0) target = $region33
    $region32: #{decoder_forward.1} parent=1 // pred_region
      %s104 = ssub.s32 131072, 131072
      %105 = vsyncadd [#allocation15], %s104
      %s106 = sshll.u32 [#allocation14], 4
      %s107 = int_to_ptr.vmem [resolvable:$true] %s106
      %112 = dma.hbm_to_vmem [thread:$0]  %s7, 131072, %s107, [#allocation15], 1024, 1024, 64
    $region33: #{decoder_forward.1} parent=1 // pred_fallthru
      _
    // Predicated region
    $region34: #{decoder_forward.1} parent=1 // pred_check
      _
    $region35: #{decoder_forward.1} parent=1 // pred_check_branch
      %114 = sbr.rel (0) target = $region37
    $region36: #{decoder_forward.1} parent=1 // pred_region
      %s116 = ssub.s32 128, 128
      %117 = vsyncadd [#allocation15], %s116
      %s119 = sshll.u32 [#allocation16], 4
      %s120 = int_to_ptr.vmem [resolvable:$true] %s119
      %122 = dma.hbm_to_vmem [thread:$0]  %s8, 128, %s120, [#allocation15]
    $region37: #{decoder_forward.1} parent=1 // pred_fallthru
      _
    // Predicated region
    $region38: #{decoder_forward.1} parent=1 // pred_check
      _
    $region39: #{decoder_forward.1} parent=1 // pred_check_branch
      %124 = sbr.rel (0) target = $region41
    $region40: #{decoder_forward.1} parent=1 // pred_region
      %s126 = ssub.s32 131072, 131072
      %127 = vsyncadd [#allocation18], %s126
      %s128 = sshll.u32 [#allocation17], 4
      %s129 = int_to_ptr.vmem [resolvable:$true] %s128
      %134 = dma.hbm_to_vmem [thread:$0]  %s9, 131072, %s129, [#allocation18], 1024, 1024, 64
    $region41: #{decoder_forward.1} parent=1 // pred_fallthru
      _
    // Predicated region
    $region42: #{decoder_forward.1} parent=1 // pred_check
      _
    $region43: #{decoder_forward.1} parent=1 // pred_check_branch
      %136 = sbr.rel (0) target = $region45
    $region44: #{decoder_forward.1} parent=1 // pred_region
      %s138 = ssub.s32 128, 128
      %139 = vsyncadd [#allocation18], %s138
      %s141 = sshll.u32 [#allocation19], 4
      %s142 = int_to_ptr.vmem [resolvable:$true] %s141
      %144 = dma.hbm_to_vmem [thread:$0]  %s10, 128, %s142, [#allocation18]
    $region45: #{decoder_forward.1} parent=1 // pred_fallthru
      _
    // Predicated region
    $region46: #{decoder_forward.1} parent=1 // pred_check
      _
    $region47: #{decoder_forward.1} parent=1 // pred_check_branch
      %146 = sbr.rel (0) target = $region49
    $region48: #{decoder_forward.1} parent=1 // pred_region
      %147 = dma.done [#allocation3], 256
    $region49: #{decoder_forward.1} parent=1 // pred_fallthru
      _
    // Predicated region
    $region50: #{decoder_forward.1} parent=1 // pred_check
      _
    $region51: #{decoder_forward.1} parent=1 // pred_check_branch
      %149 = sbr.rel (0) target = $region53
    $region52: #{decoder_forward.1} parent=1 // pred_region
      %150 = dma.done [#allocation6], 8192
    $region53: #{decoder_forward.1} parent=1 // pred_fallthru
      _
    // Predicated region
    $region54: #{decoder_forward.1} parent=1 // pred_check
      _
    $region55: #{decoder_forward.1} parent=1 // pred_check_branch
      %152 = sbr.rel (0) target = $region57
    $region56: #{decoder_forward.1} parent=1 // pred_region
      %153 = dma.done [#allocation6], 128
    $region57: #{decoder_forward.1} parent=1 // pred_fallthru
      _
    // Predicated region
    $region58: #{decoder_forward.1} parent=1 // pred_check
      _
    $region59: #{decoder_forward.1} parent=1 // pred_check_branch
      %155 = sbr.rel (0) target = $region61
    $region60: #{decoder_forward.1} parent=1 // pred_region
      %156 = dma.done [#allocation9], 131072
    $region61: #{decoder_forward.1} parent=1 // pred_fallthru
      _
    // Predicated region
    $region62: #{decoder_forward.1} parent=1 // pred_check
      _
    $region63: #{decoder_forward.1} parent=1 // pred_check_branch
      %158 = sbr.rel (0) target = $region65
    $region64: #{decoder_forward.1} parent=1 // pred_region
      %159 = dma.done [#allocation9], 128
    $region65: #{decoder_forward.1} parent=1 // pred_fallthru
      _
    // Predicated region
    $region66: #{decoder_forward.1} parent=1 // pred_check
      _
    $region67: #{decoder_forward.1} parent=1 // pred_check_branch
      %161 = sbr.rel (0) target = $region69
    $region68: #{decoder_forward.1} parent=1 // pred_region
      %162 = dma.done [#allocation12], 131072
    $region69: #{decoder_forward.1} parent=1 // pred_fallthru
      _
    // Predicated region
    $region70: #{decoder_forward.1} parent=1 // pred_check
      _
    $region71: #{decoder_forward.1} parent=1 // pred_check_branch
      %164 = sbr.rel (0) target = $region73
    $region72: #{decoder_forward.1} parent=1 // pred_region
      %165 = dma.done [#allocation12], 128
    $region73: #{decoder_forward.1} parent=1 // pred_fallthru
      _
    // Predicated region
    $region74: #{decoder_forward.1} parent=1 // pred_check
      _
    $region75: #{decoder_forward.1} parent=1 // pred_check_branch
      %167 = sbr.rel (0) target = $region77
    $region76: #{decoder_forward.1} parent=1 // pred_region
      %168 = dma.done [#allocation15], 131072
    $region77: #{decoder_forward.1} parent=1 // pred_fallthru
      _
    // Predicated region
    $region78: #{decoder_forward.1} parent=1 // pred_check
      _
    $region79: #{decoder_forward.1} parent=1 // pred_check_branch
      %170 = sbr.rel (0) target = $region81
    $region80: #{decoder_forward.1} parent=1 // pred_region
      %171 = dma.done [#allocation15], 128
    $region81: #{decoder_forward.1} parent=1 // pred_fallthru
      _
    // Predicated region
    $region82: #{decoder_forward.1} parent=1 // pred_check
      _
    $region83: #{decoder_forward.1} parent=1 // pred_check_branch
      %173 = sbr.rel (0) target = $region85
    $region84: #{decoder_forward.1} parent=1 // pred_region
      %174 = dma.done [#allocation18], 131072
    $region85: #{decoder_forward.1} parent=1 // pred_fallthru
      _
    // Predicated region
    $region86: #{decoder_forward.1} parent=1 // pred_check
      _
    $region87: #{decoder_forward.1} parent=1 // pred_check_branch
      %176 = sbr.rel (0) target = $region89
    $region88: #{decoder_forward.1} parent=1 // pred_region
      %177 = dma.done [#allocation18], 128
    $region89: #{decoder_forward.1} parent=1 // pred_fallthru
      _
    %v178 = vld [vmem:[#allocation2] sm:$0xff]
    %v179 = vld [vmem:[#allocation2 + $0x8] sm:$0xff]
    %v180 = vmax.f32 %v178, 0.0
    %v181 = vmax.f32 %v179, 0.0
    %v182 = vld [vmem:[#allocation5] sm:$0xff]
    %v183 = vld [vmem:[#allocation5 + $0x8] sm:$0xff]
    %v184 = vld [vmem:[#allocation5 + $0x10] sm:$0xff]
    %v185 = vld [vmem:[#allocation5 + $0x18] sm:$0xff]
    %v186 = vld [vmem:[#allocation5 + $0x20] sm:$0xff]
    %v187 = vld [vmem:[#allocation5 + $0x28] sm:$0xff]
    %v188 = vld [vmem:[#allocation5 + $0x30] sm:$0xff]
    %v189 = vld [vmem:[#allocation5 + $0x38] sm:$0xff]
    %v190 = vld [vmem:[#allocation5 + $0x40] sm:$0xff]
    %v191 = vld [vmem:[#allocation5 + $0x48] sm:$0xff]
    %v192 = vld [vmem:[#allocation5 + $0x50] sm:$0xff]
    %v193 = vld [vmem:[#allocation5 + $0x58] sm:$0xff]
    %v194 = vld [vmem:[#allocation5 + $0x60] sm:$0xff]
    %v195 = vld [vmem:[#allocation5 + $0x68] sm:$0xff]
    %v196 = vld [vmem:[#allocation5 + $0x70] sm:$0xff]
    %v197 = vld [vmem:[#allocation5 + $0x78] sm:$0xff]
    %v198 = vld [vmem:[#allocation5 + $0x80] sm:$0xff]
    %v199 = vld [vmem:[#allocation5 + $0x88] sm:$0xff]
    %v200 = vld [vmem:[#allocation5 + $0x90] sm:$0xff]
    %v201 = vld [vmem:[#allocation5 + $0x98] sm:$0xff]
    %v202 = vld [vmem:[#allocation5 + $0xa0] sm:$0xff]
    %v203 = vld [vmem:[#allocation5 + $0xa8] sm:$0xff]
    %v204 = vld [vmem:[#allocation5 + $0xb0] sm:$0xff]
    %v205 = vld [vmem:[#allocation5 + $0xb8] sm:$0xff]
    %v206 = vld [vmem:[#allocation5 + $0xc0] sm:$0xff]
    %v207 = vld [vmem:[#allocation5 + $0xc8] sm:$0xff]
    %v208 = vld [vmem:[#allocation5 + $0xd0] sm:$0xff]
    %v209 = vld [vmem:[#allocation5 + $0xd8] sm:$0xff]
    %v210 = vld [vmem:[#allocation5 + $0xe0] sm:$0xff]
    %v211 = vld [vmem:[#allocation5 + $0xe8] sm:$0xff]
    %v212 = vld [vmem:[#allocation5 + $0xf0] sm:$0xff]
    %v213 = vld [vmem:[#allocation5 + $0xf8] sm:$0xff]
    %v214 = vld [vmem:[#allocation5 + $0x100] sm:$0xff]
    %v215 = vld [vmem:[#allocation5 + $0x108] sm:$0xff]
    %v216 = vld [vmem:[#allocation5 + $0x110] sm:$0xff]
    %v217 = vld [vmem:[#allocation5 + $0x118] sm:$0xff]
    %v218 = vld [vmem:[#allocation5 + $0x120] sm:$0xff]
    %v219 = vld [vmem:[#allocation5 + $0x128] sm:$0xff]
    %v220 = vld [vmem:[#allocation5 + $0x130] sm:$0xff]
    %v221 = vld [vmem:[#allocation5 + $0x138] sm:$0xff]
    %v222 = vld [vmem:[#allocation5 + $0x140] sm:$0xff]
    %v223 = vld [vmem:[#allocation5 + $0x148] sm:$0xff]
    %v224 = vld [vmem:[#allocation5 + $0x150] sm:$0xff]
    %v225 = vld [vmem:[#allocation5 + $0x158] sm:$0xff]
    %v226 = vld [vmem:[#allocation5 + $0x160] sm:$0xff]
    %v227 = vld [vmem:[#allocation5 + $0x168] sm:$0xff]
    %v228 = vld [vmem:[#allocation5 + $0x170] sm:$0xff]
    %v229 = vld [vmem:[#allocation5 + $0x178] sm:$0xff]
    %v230 = vld [vmem:[#allocation5 + $0x180] sm:$0xff]
    %v231 = vld [vmem:[#allocation5 + $0x188] sm:$0xff]
    %v232 = vld [vmem:[#allocation5 + $0x190] sm:$0xff]
    %v233 = vld [vmem:[#allocation5 + $0x198] sm:$0xff]
    %v234 = vld [vmem:[#allocation5 + $0x1a0] sm:$0xff]
    %v235 = vld [vmem:[#allocation5 + $0x1a8] sm:$0xff]
    %v236 = vld [vmem:[#allocation5 + $0x1b0] sm:$0xff]
    %v237 = vld [vmem:[#allocation5 + $0x1b8] sm:$0xff]
    %v238 = vld [vmem:[#allocation5 + $0x1c0] sm:$0xff]
    %v239 = vld [vmem:[#allocation5 + $0x1c8] sm:$0xff]
    %v240 = vld [vmem:[#allocation5 + $0x1d0] sm:$0xff]
    %v241 = vld [vmem:[#allocation5 + $0x1d8] sm:$0xff]
    %v242 = vld [vmem:[#allocation5 + $0x1e0] sm:$0xff]
    %v243 = vld [vmem:[#allocation5 + $0x1e8] sm:$0xff]
    %v244 = vld [vmem:[#allocation5 + $0x1f0] sm:$0xff]
    %v245 = vld [vmem:[#allocation5 + $0x1f8] sm:$0xff]
    %v246 = vld [vmem:[#allocation7] sm:$0xff]
    %v248 = vlaneseq
    %v249 = vshrl.u32 %v248, 7
    %v250 = vsub.s32 0, %v249
    %v251 = vrot.slane %v246, %v250
    %v252 = vlaneseq
    %v253 = vshrl.u32 %v252, 7
    %v254 = vsub.s32 1, %v253
    %v255 = vrot.slane %v246, %v254
    %v256 = vlaneseq
    %v257 = vshrl.u32 %v256, 7
    %v258 = vsub.s32 2, %v257
    %v259 = vrot.slane %v246, %v258
    %v260 = vlaneseq
    %v261 = vshrl.u32 %v260, 7
    %v262 = vsub.s32 3, %v261
    %v263 = vrot.slane %v246, %v262
    %v264 = vlaneseq
    %v265 = vshrl.u32 %v264, 7
    %v266 = vsub.s32 4, %v265
    %v267 = vrot.slane %v246, %v266
    %v268 = vlaneseq
    %v269 = vshrl.u32 %v268, 7
    %v270 = vsub.s32 5, %v269
    %v271 = vrot.slane %v246, %v270
    %v272 = vlaneseq
    %v273 = vshrl.u32 %v272, 7
    %v274 = vsub.s32 6, %v273
    %v275 = vrot.slane %v246, %v274
    %v276 = vlaneseq
    %v277 = vshrl.u32 %v276, 7
    %v278 = vsub.s32 7, %v277
    %v279 = vrot.slane %v246, %v278
    %vm288 = vcmask 523264
    %v290 = vsel %vm288, %v180, 0
    %v293 = vsel %vm288, %v181, 0
    %295 = vmatprep.subr.mxu0 %v183
    %296 = vmatpush1.msra.mxu0 %v182
    %297 = vmatprep.subr.mxu0 %v191
    %298 = vmatpush1.msra.mxu0 %v190
    %299 = vmatprep.subr.mxu0 %v199
    %300 = vmatpush1.msra.mxu0 %v198
    %301 = vmatprep.subr.mxu0 %v207
    %302 = vmatpush1.msra.mxu0 %v206
    %303 = vmatprep.subr.mxu0 %v215
    %304 = vmatpush1.msra.mxu0 %v214
    %305 = vmatprep.subr.mxu0 %v223
    %306 = vmatpush1.msra.mxu0 %v222
    %307 = vmatprep.subr.mxu0 %v231
    %308 = vmatpush1.msra.mxu0 %v230
    %309 = vmatprep.subr.mxu0 %v239
    %310 = vmatpush1.msra.mxu0 %v238
    %311 = vmatprep.subr.mxu0 0.0
    %312 = vmatpush1.msra.mxu0 0.0
    %313 = vmatprep.subr.mxu0 0.0
    %314 = vmatpush1.msra.mxu0 0.0
    %315 = vmatprep.subr.mxu0 0.0
    %316 = vmatpush1.msra.mxu0 0.0
    %317 = vmatprep.subr.mxu0 0.0
    %318 = vmatpush1.msra.mxu0 0.0
    %319 = vmatprep.subr.mxu0 0.0
    %320 = vmatpush1.msra.mxu0 0.0
    %321 = vmatprep.subr.mxu0 0.0
    %322 = vmatpush1.msra.mxu0 0.0
    %323 = vmatprep.subr.mxu0 0.0
    %324 = vmatpush1.msra.mxu0 0.0
    %325 = vmatprep.subr.mxu0 0.0
    %326 = vmatpush1.msra.mxu0 0.0
    %327 = vmatprep.subr.mxu0 0.0
    %328 = vmatpush1.msra.mxu0 0.0
    %329 = vmatprep.subr.mxu0 0.0
    %330 = vmatpush1.msra.mxu0 0.0
    %331 = vmatprep.subr.mxu0 0.0
    %332 = vmatpush1.msra.mxu0 0.0
    %333 = vmatprep.subr.mxu0 0.0
    %334 = vmatpush1.msra.mxu0 0.0
    %335 = vmatprep.subr.mxu0 0.0
    %336 = vmatpush1.msra.mxu0 0.0
    %337 = vmatprep.subr.mxu0 0.0
    %338 = vmatpush1.msra.mxu0 0.0
    %339 = vmatprep.subr.mxu0 0.0
    %340 = vmatpush1.msra.mxu0 0.0
    %341 = vmatprep.subr.mxu0 0.0
    %342 = vmatpush1.msra.mxu0 0.0
    %343 = vmatprep.subr.mxu0 0.0
    %344 = vmatpush1.msra.mxu0 0.0
    %345 = vmatprep.subr.mxu0 0.0
    %346 = vmatpush1.msra.mxu0 0.0
    %347 = vmatprep.subr.mxu0 0.0
    %348 = vmatpush1.msra.mxu0 0.0
    %349 = vmatprep.subr.mxu0 0.0
    %350 = vmatpush1.msra.mxu0 0.0
    %351 = vmatprep.subr.mxu0 0.0
    %352 = vmatpush1.msra.mxu0 0.0
    %353 = vmatprep.subr.mxu0 0.0
    %354 = vmatpush1.msra.mxu0 0.0
    %355 = vmatprep.subr.mxu0 0.0
    %356 = vmatpush1.msra.mxu0 0.0
    %357 = vmatprep.subr.mxu0 0.0
    %358 = vmatpush1.msra.mxu0 0.0
    %359 = vmatprep.mubr.f32.mxu0 0.0
    %360 = vmatmul.mubr.f32.gmra.mrb[0].mxu0 %v290
    %v361 = vpop.f32.mrb[0].mxu0
    %v362 = vadd.f32 %v251, %v361
    %v363 = vpop.f32.mrb[0].mxu0
    %v364 = vadd.f32 %v255, %v363
    %365 = vmatprep.mubr.f32.mxu0 0.0
    %366 = vmatmul.mubr.f32.gmra.mrb[0].mxu0 %v293
    %v367 = vpop.f32.mrb[0].mxu0
    %v368 = vadd.f32 %v251, %v367
    %v369 = vpop.f32.mrb[0].mxu0
    %v370 = vadd.f32 %v255, %v369
    %371 = vdwg.mxu0
    %372 = vmatprep.subr.mxu0 %v185
    %373 = vmatpush1.msra.mxu0 %v184
    %374 = vmatprep.subr.mxu0 %v193
    %375 = vmatpush1.msra.mxu0 %v192
    %376 = vmatprep.subr.mxu0 %v201
    %377 = vmatpush1.msra.mxu0 %v200
    %378 = vmatprep.subr.mxu0 %v209
    %379 = vmatpush1.msra.mxu0 %v208
    %380 = vmatprep.subr.mxu0 %v217
    %381 = vmatpush1.msra.mxu0 %v216
    %382 = vmatprep.subr.mxu0 %v225
    %383 = vmatpush1.msra.mxu0 %v224
    %384 = vmatprep.subr.mxu0 %v233
    %385 = vmatpush1.msra.mxu0 %v232
    %386 = vmatprep.subr.mxu0 %v241
    %387 = vmatpush1.msra.mxu0 %v240
    %388 = vmatprep.subr.mxu0 0.0
    %389 = vmatpush1.msra.mxu0 0.0
    %390 = vmatprep.subr.mxu0 0.0
    %391 = vmatpush1.msra.mxu0 0.0
    %392 = vmatprep.subr.mxu0 0.0
    %393 = vmatpush1.msra.mxu0 0.0
    %394 = vmatprep.subr.mxu0 0.0
    %395 = vmatpush1.msra.mxu0 0.0
    %396 = vmatprep.subr.mxu0 0.0
    %397 = vmatpush1.msra.mxu0 0.0
    %398 = vmatprep.subr.mxu0 0.0
    %399 = vmatpush1.msra.mxu0 0.0
    %400 = vmatprep.subr.mxu0 0.0
    %401 = vmatpush1.msra.mxu0 0.0
    %402 = vmatprep.subr.mxu0 0.0
    %403 = vmatpush1.msra.mxu0 0.0
    %404 = vmatprep.subr.mxu0 0.0
    %405 = vmatpush1.msra.mxu0 0.0
    %406 = vmatprep.subr.mxu0 0.0
    %407 = vmatpush1.msra.mxu0 0.0
    %408 = vmatprep.subr.mxu0 0.0
    %409 = vmatpush1.msra.mxu0 0.0
    %410 = vmatprep.subr.mxu0 0.0
    %411 = vmatpush1.msra.mxu0 0.0
    %412 = vmatprep.subr.mxu0 0.0
    %413 = vmatpush1.msra.mxu0 0.0
    %414 = vmatprep.subr.mxu0 0.0
    %415 = vmatpush1.msra.mxu0 0.0
    %416 = vmatprep.subr.mxu0 0.0
    %417 = vmatpush1.msra.mxu0 0.0
    %418 = vmatprep.subr.mxu0 0.0
    %419 = vmatpush1.msra.mxu0 0.0
    %420 = vmatprep.subr.mxu0 0.0
    %421 = vmatpush1.msra.mxu0 0.0
    %422 = vmatprep.subr.mxu0 0.0
    %423 = vmatpush1.msra.mxu0 0.0
    %424 = vmatprep.subr.mxu0 0.0
    %425 = vmatpush1.msra.mxu0 0.0
    %426 = vmatprep.subr.mxu0 0.0
    %427 = vmatpush1.msra.mxu0 0.0
    %428 = vmatprep.subr.mxu0 0.0
    %429 = vmatpush1.msra.mxu0 0.0
    %430 = vmatprep.subr.mxu0 0.0
    %431 = vmatpush1.msra.mxu0 0.0
    %432 = vmatprep.subr.mxu0 0.0
    %433 = vmatpush1.msra.mxu0 0.0
    %434 = vmatprep.subr.mxu0 0.0
    %435 = vmatpush1.msra.mxu0 0.0
    %436 = vmatprep.mubr.f32.mxu0 0.0
    %437 = vmatmul.mubr.f32.gmra.mrb[0].mxu0 %v290
    %v438 = vpop.f32.mrb[0].mxu0
    %v439 = vadd.f32 %v259, %v438
    %v440 = vpop.f32.mrb[0].mxu0
    %v441 = vadd.f32 %v263, %v440
    %442 = vmatprep.mubr.f32.mxu0 0.0
    %443 = vmatmul.mubr.f32.gmra.mrb[0].mxu0 %v293
    %v444 = vpop.f32.mrb[0].mxu0
    %v445 = vadd.f32 %v259, %v444
    %v446 = vpop.f32.mrb[0].mxu0
    %v447 = vadd.f32 %v263, %v446
    %448 = vdwg.mxu0
    %449 = vmatprep.subr.mxu0 %v187
    %450 = vmatpush1.msra.mxu0 %v186
    %451 = vmatprep.subr.mxu0 %v195
    %452 = vmatpush1.msra.mxu0 %v194
    %453 = vmatprep.subr.mxu0 %v203
    %454 = vmatpush1.msra.mxu0 %v202
    %455 = vmatprep.subr.mxu0 %v211
    %456 = vmatpush1.msra.mxu0 %v210
    %457 = vmatprep.subr.mxu0 %v219
    %458 = vmatpush1.msra.mxu0 %v218
    %459 = vmatprep.subr.mxu0 %v227
    %460 = vmatpush1.msra.mxu0 %v226
    %461 = vmatprep.subr.mxu0 %v235
    %462 = vmatpush1.msra.mxu0 %v234
    %463 = vmatprep.subr.mxu0 %v243
    %464 = vmatpush1.msra.mxu0 %v242
    %465 = vmatprep.subr.mxu0 0.0
    %466 = vmatpush1.msra.mxu0 0.0
    %467 = vmatprep.subr.mxu0 0.0
    %468 = vmatpush1.msra.mxu0 0.0
    %469 = vmatprep.subr.mxu0 0.0
    %470 = vmatpush1.msra.mxu0 0.0
    %471 = vmatprep.subr.mxu0 0.0
    %472 = vmatpush1.msra.mxu0 0.0
    %473 = vmatprep.subr.mxu0 0.0
    %474 = vmatpush1.msra.mxu0 0.0
    %475 = vmatprep.subr.mxu0 0.0
    %476 = vmatpush1.msra.mxu0 0.0
    %477 = vmatprep.subr.mxu0 0.0
    %478 = vmatpush1.msra.mxu0 0.0
    %479 = vmatprep.subr.mxu0 0.0
    %480 = vmatpush1.msra.mxu0 0.0
    %481 = vmatprep.subr.mxu0 0.0
    %482 = vmatpush1.msra.mxu0 0.0
    %483 = vmatprep.subr.mxu0 0.0
    %484 = vmatpush1.msra.mxu0 0.0
    %485 = vmatprep.subr.mxu0 0.0
    %486 = vmatpush1.msra.mxu0 0.0
    %487 = vmatprep.subr.mxu0 0.0
    %488 = vmatpush1.msra.mxu0 0.0
    %489 = vmatprep.subr.mxu0 0.0
    %490 = vmatpush1.msra.mxu0 0.0
    %491 = vmatprep.subr.mxu0 0.0
    %492 = vmatpush1.msra.mxu0 0.0
    %493 = vmatprep.subr.mxu0 0.0
    %494 = vmatpush1.msra.mxu0 0.0
    %495 = vmatprep.subr.mxu0 0.0
    %496 = vmatpush1.msra.mxu0 0.0
    %497 = vmatprep.subr.mxu0 0.0
    %498 = vmatpush1.msra.mxu0 0.0
    %499 = vmatprep.subr.mxu0 0.0
    %500 = vmatpush1.msra.mxu0 0.0
    %501 = vmatprep.subr.mxu0 0.0
    %502 = vmatpush1.msra.mxu0 0.0
    %503 = vmatprep.subr.mxu0 0.0
    %504 = vmatpush1.msra.mxu0 0.0
    %505 = vmatprep.subr.mxu0 0.0
    %506 = vmatpush1.msra.mxu0 0.0
    %507 = vmatprep.subr.mxu0 0.0
    %508 = vmatpush1.msra.mxu0 0.0
    %509 = vmatprep.subr.mxu0 0.0
    %510 = vmatpush1.msra.mxu0 0.0
    %511 = vmatprep.subr.mxu0 0.0
    %512 = vmatpush1.msra.mxu0 0.0
    %513 = vmatprep.mubr.f32.mxu0 0.0
    %514 = vmatmul.mubr.f32.gmra.mrb[0].mxu0 %v290
    %v515 = vpop.f32.mrb[0].mxu0
    %v516 = vadd.f32 %v267, %v515
    %v517 = vpop.f32.mrb[0].mxu0
    %v518 = vadd.f32 %v271, %v517
    %519 = vmatprep.mubr.f32.mxu0 0.0
    %520 = vmatmul.mubr.f32.gmra.mrb[0].mxu0 %v293
    %v521 = vpop.f32.mrb[0].mxu0
    %v522 = vadd.f32 %v267, %v521
    %v523 = vpop.f32.mrb[0].mxu0
    %v524 = vadd.f32 %v271, %v523
    %525 = vdwg.mxu0
    %526 = vmatprep.subr.mxu0 %v189
    %527 = vmatpush1.msra.mxu0 %v188
    %528 = vmatprep.subr.mxu0 %v197
    %529 = vmatpush1.msra.mxu0 %v196
    %530 = vmatprep.subr.mxu0 %v205
    %531 = vmatpush1.msra.mxu0 %v204
    %532 = vmatprep.subr.mxu0 %v213
    %533 = vmatpush1.msra.mxu0 %v212
    %534 = vmatprep.subr.mxu0 %v221
    %535 = vmatpush1.msra.mxu0 %v220
    %536 = vmatprep.subr.mxu0 %v229
    %537 = vmatpush1.msra.mxu0 %v228
    %538 = vmatprep.subr.mxu0 %v237
    %539 = vmatpush1.msra.mxu0 %v236
    %540 = vmatprep.subr.mxu0 %v245
    %541 = vmatpush1.msra.mxu0 %v244
    %542 = vmatprep.subr.mxu0 0.0
    %543 = vmatpush1.msra.mxu0 0.0
    %544 = vmatprep.subr.mxu0 0.0
    %545 = vmatpush1.msra.mxu0 0.0
    %546 = vmatprep.subr.mxu0 0.0
    %547 = vmatpush1.msra.mxu0 0.0
    %548 = vmatprep.subr.mxu0 0.0
    %549 = vmatpush1.msra.mxu0 0.0
    %550 = vmatprep.subr.mxu0 0.0
    %551 = vmatpush1.msra.mxu0 0.0
    %552 = vmatprep.subr.mxu0 0.0
    %553 = vmatpush1.msra.mxu0 0.0
    %554 = vmatprep.subr.mxu0 0.0
    %555 = vmatpush1.msra.mxu0 0.0
    %556 = vmatprep.subr.mxu0 0.0
    %557 = vmatpush1.msra.mxu0 0.0
    %558 = vmatprep.subr.mxu0 0.0
    %559 = vmatpush1.msra.mxu0 0.0
    %560 = vmatprep.subr.mxu0 0.0
    %561 = vmatpush1.msra.mxu0 0.0
    %562 = vmatprep.subr.mxu0 0.0
    %563 = vmatpush1.msra.mxu0 0.0
    %564 = vmatprep.subr.mxu0 0.0
    %565 = vmatpush1.msra.mxu0 0.0
    %566 = vmatprep.subr.mxu0 0.0
    %567 = vmatpush1.msra.mxu0 0.0
    %568 = vmatprep.subr.mxu0 0.0
    %569 = vmatpush1.msra.mxu0 0.0
    %570 = vmatprep.subr.mxu0 0.0
    %571 = vmatpush1.msra.mxu0 0.0
    %572 = vmatprep.subr.mxu0 0.0
    %573 = vmatpush1.msra.mxu0 0.0
    %574 = vmatprep.subr.mxu0 0.0
    %575 = vmatpush1.msra.mxu0 0.0
    %576 = vmatprep.subr.mxu0 0.0
    %577 = vmatpush1.msra.mxu0 0.0
    %578 = vmatprep.subr.mxu0 0.0
    %579 = vmatpush1.msra.mxu0 0.0
    %580 = vmatprep.subr.mxu0 0.0
    %581 = vmatpush1.msra.mxu0 0.0
    %582 = vmatprep.subr.mxu0 0.0
    %583 = vmatpush1.msra.mxu0 0.0
    %584 = vmatprep.subr.mxu0 0.0
    %585 = vmatpush1.msra.mxu0 0.0
    %586 = vmatprep.subr.mxu0 0.0
    %587 = vmatpush1.msra.mxu0 0.0
    %588 = vmatprep.subr.mxu0 0.0
    %589 = vmatpush1.msra.mxu0 0.0
    %590 = vmatprep.mubr.f32.mxu0 0.0
    %591 = vmatmul.mubr.f32.gmra.mrb[0].mxu0 %v290
    %v592 = vpop.f32.mrb[0].mxu0
    %v593 = vadd.f32 %v275, %v592
    %v594 = vpop.f32.mrb[0].mxu0
    %v595 = vadd.f32 %v279, %v594
    %596 = vmatprep.mubr.f32.mxu0 0.0
    %597 = vmatmul.mubr.f32.gmra.mrb[0].mxu0 %v293
    %v598 = vpop.f32.mrb[0].mxu0
    %v599 = vadd.f32 %v275, %v598
    %v600 = vpop.f32.mrb[0].mxu0
    %v601 = vadd.f32 %v279, %v600
    %602 = vdwg.mxu0
    %v603 = vmax.f32 %v362, 0.0
    %v604 = vmax.f32 %v364, 0.0
    %v605 = vmax.f32 %v439, 0.0
    %v606 = vmax.f32 %v441, 0.0
    %v607 = vmax.f32 %v516, 0.0
    %v608 = vmax.f32 %v518, 0.0
    %v609 = vmax.f32 %v593, 0.0
    %v610 = vmax.f32 %v595, 0.0
    %v611 = vmax.f32 %v368, 0.0
    %v612 = vmax.f32 %v370, 0.0
    %v613 = vmax.f32 %v445, 0.0
    %v614 = vmax.f32 %v447, 0.0
    %v615 = vmax.f32 %v522, 0.0
    %v616 = vmax.f32 %v524, 0.0
    %v617 = vmax.f32 %v599, 0.0
    %v618 = vmax.f32 %v601, 0.0
    %v619 = vld [vmem:[#allocation8] sm:$0xff]
    %v620 = vld [vmem:[#allocation8 + $0x8] sm:$0xff]
    %v621 = vld [vmem:[#allocation8 + $0x10] sm:$0xff]
    %v622 = vld [vmem:[#allocation8 + $0x18] sm:$0xff]
    %v623 = vld [vmem:[#allocation8 + $0x20] sm:$0xff]
    %v624 = vld [vmem:[#allocation8 + $0x28] sm:$0xff]
    %v625 = vld [vmem:[#allocation8 + $0x30] sm:$0xff]
    %v626 = vld [vmem:[#allocation8 + $0x38] sm:$0xff]
    %v627 = vld [vmem:[#allocation8 + $0x40] sm:$0xff]
    %v628 = vld [vmem:[#allocation8 + $0x48] sm:$0xff]
    %v629 = vld [vmem:[#allocation8 + $0x50] sm:$0xff]
    %v630 = vld [vmem:[#allocation8 + $0x58] sm:$0xff]
    %v631 = vld [vmem:[#allocation8 + $0x60] sm:$0xff]
    %v632 = vld [vmem:[#allocation8 + $0x68] sm:$0xff]
    %v633 = vld [vmem:[#allocation8 + $0x70] sm:$0xff]
    %v634 = vld [vmem:[#allocation8 + $0x78] sm:$0xff]
    %v635 = vld [vmem:[#allocation8 + $0x80] sm:$0xff]
    %v636 = vld [vmem:[#allocation8 + $0x88] sm:$0xff]
    %v637 = vld [vmem:[#allocation8 + $0x90] sm:$0xff]
    %v638 = vld [vmem:[#allocation8 + $0x98] sm:$0xff]
    %v639 = vld [vmem:[#allocation8 + $0xa0] sm:$0xff]
    %v640 = vld [vmem:[#allocation8 + $0xa8] sm:$0xff]
    %v641 = vld [vmem:[#allocation8 + $0xb0] sm:$0xff]
    %v642 = vld [vmem:[#allocation8 + $0xb8] sm:$0xff]
    %v643 = vld [vmem:[#allocation8 + $0xc0] sm:$0xff]
    %v644 = vld [vmem:[#allocation8 + $0xc8] sm:$0xff]
    %v645 = vld [vmem:[#allocation8 + $0xd0] sm:$0xff]
    %v646 = vld [vmem:[#allocation8 + $0xd8] sm:$0xff]
    %v647 = vld [vmem:[#allocation8 + $0xe0] sm:$0xff]
    %v648 = vld [vmem:[#allocation8 + $0xe8] sm:$0xff]
    %v649 = vld [vmem:[#allocation8 + $0xf0] sm:$0xff]
    %v650 = vld [vmem:[#allocation8 + $0xf8] sm:$0xff]
    %v651 = vld [vmem:[#allocation8 + $0x100] sm:$0xff]
    %v652 = vld [vmem:[#allocation8 + $0x108] sm:$0xff]
    %v653 = vld [vmem:[#allocation8 + $0x110] sm:$0xff]
    %v654 = vld [vmem:[#allocation8 + $0x118] sm:$0xff]
    %v655 = vld [vmem:[#allocation8 + $0x120] sm:$0xff]
    %v656 = vld [vmem:[#allocation8 + $0x128] sm:$0xff]
    %v657 = vld [vmem:[#allocation8 + $0x130] sm:$0xff]
    %v658 = vld [vmem:[#allocation8 + $0x138] sm:$0xff]
    %v659 = vld [vmem:[#allocation8 + $0x140] sm:$0xff]
    %v660 = vld [vmem:[#allocation8 + $0x148] sm:$0xff]
    %v661 = vld [vmem:[#allocation8 + $0x150] sm:$0xff]
    %v662 = vld [vmem:[#allocation8 + $0x158] sm:$0xff]
    %v663 = vld [vmem:[#allocation8 + $0x160] sm:$0xff]
    %v664 = vld [vmem:[#allocation8 + $0x168] sm:$0xff]
    %v665 = vld [vmem:[#allocation8 + $0x170] sm:$0xff]
    %v666 = vld [vmem:[#allocation8 + $0x178] sm:$0xff]
    %v667 = vld [vmem:[#allocation8 + $0x180] sm:$0xff]
    %v668 = vld [vmem:[#allocation8 + $0x188] sm:$0xff]
    %v669 = vld [vmem:[#allocation8 + $0x190] sm:$0xff]
    %v670 = vld [vmem:[#allocation8 + $0x198] sm:$0xff]
    %v671 = vld [vmem:[#allocation8 + $0x1a0] sm:$0xff]
    %v672 = vld [vmem:[#allocation8 + $0x1a8] sm:$0xff]
    %v673 = vld [vmem:[#allocation8 + $0x1b0] sm:$0xff]
    %v674 = vld [vmem:[#allocation8 + $0x1b8] sm:$0xff]
    %v675 = vld [vmem:[#allocation8 + $0x1c0] sm:$0xff]
    %v676 = vld [vmem:[#allocation8 + $0x1c8] sm:$0xff]
    %v677 = vld [vmem:[#allocation8 + $0x1d0] sm:$0xff]
    %v678 = vld [vmem:[#allocation8 + $0x1d8] sm:$0xff]
    %v679 = vld [vmem:[#allocation8 + $0x1e0] sm:$0xff]
    %v680 = vld [vmem:[#allocation8 + $0x1e8] sm:$0xff]
    %v681 = vld [vmem:[#allocation8 + $0x1f0] sm:$0xff]
    %v682 = vld [vmem:[#allocation8 + $0x1f8] sm:$0xff]
    %v683 = vld [vmem:[#allocation8 + $0x200] sm:$0xff]
    %v684 = vld [vmem:[#allocation8 + $0x208] sm:$0xff]
    %v685 = vld [vmem:[#allocation8 + $0x210] sm:$0xff]
    %v686 = vld [vmem:[#allocation8 + $0x218] sm:$0xff]
    %v687 = vld [vmem:[#allocation8 + $0x220] sm:$0xff]
    %v688 = vld [vmem:[#allocation8 + $0x228] sm:$0xff]
    %v689 = vld [vmem:[#allocation8 + $0x230] sm:$0xff]
    %v690 = vld [vmem:[#allocation8 + $0x238] sm:$0xff]
    %v691 = vld [vmem:[#allocation8 + $0x240] sm:$0xff]
    %v692 = vld [vmem:[#allocation8 + $0x248] sm:$0xff]
    %v693 = vld [vmem:[#allocation8 + $0x250] sm:$0xff]
    %v694 = vld [vmem:[#allocation8 + $0x258] sm:$0xff]
    %v695 = vld [vmem:[#allocation8 + $0x260] sm:$0xff]
    %v696 = vld [vmem:[#allocation8 + $0x268] sm:$0xff]
    %v697 = vld [vmem:[#allocation8 + $0x270] sm:$0xff]
    %v698 = vld [vmem:[#allocation8 + $0x278] sm:$0xff]
    %v699 = vld [vmem:[#allocation8 + $0x280] sm:$0xff]
    %v700 = vld [vmem:[#allocation8 + $0x288] sm:$0xff]
    %v701 = vld [vmem:[#allocation8 + $0x290] sm:$0xff]
    %v702 = vld [vmem:[#allocation8 + $0x298] sm:$0xff]
    %v703 = vld [vmem:[#allocation8 + $0x2a0] sm:$0xff]
    %v704 = vld [vmem:[#allocation8 + $0x2a8] sm:$0xff]
    %v705 = vld [vmem:[#allocation8 + $0x2b0] sm:$0xff]
    %v706 = vld [vmem:[#allocation8 + $0x2b8] sm:$0xff]
    %v707 = vld [vmem:[#allocation8 + $0x2c0] sm:$0xff]
    %v708 = vld [vmem:[#allocation8 + $0x2c8] sm:$0xff]
    %v709 = vld [vmem:[#allocation8 + $0x2d0] sm:$0xff]
    %v710 = vld [vmem:[#allocation8 + $0x2d8] sm:$0xff]
    %v711 = vld [vmem:[#allocation8 + $0x2e0] sm:$0xff]
    %v712 = vld [vmem:[#allocation8 + $0x2e8] sm:$0xff]
    %v713 = vld [vmem:[#allocation8 + $0x2f0] sm:$0xff]
    %v714 = vld [vmem:[#allocation8 + $0x2f8] sm:$0xff]
    %v715 = vld [vmem:[#allocation8 + $0x300] sm:$0xff]
    %v716 = vld [vmem:[#allocation8 + $0x308] sm:$0xff]
    %v717 = vld [vmem:[#allocation8 + $0x310] sm:$0xff]
    %v718 = vld [vmem:[#allocation8 + $0x318] sm:$0xff]
    %v719 = vld [vmem:[#allocation8 + $0x320] sm:$0xff]
    %v720 = vld [vmem:[#allocation8 + $0x328] sm:$0xff]
    %v721 = vld [vmem:[#allocation8 + $0x330] sm:$0xff]
    %v722 = vld [vmem:[#allocation8 + $0x338] sm:$0xff]
    %v723 = vld [vmem:[#allocation8 + $0x340] sm:$0xff]
    %v724 = vld [vmem:[#allocation8 + $0x348] sm:$0xff]
    %v725 = vld [vmem:[#allocation8 + $0x350] sm:$0xff]
    %v726 = vld [vmem:[#allocation8 + $0x358] sm:$0xff]
    %v727 = vld [vmem:[#allocation8 + $0x360] sm:$0xff]
    %v728 = vld [vmem:[#allocation8 + $0x368] sm:$0xff]
    %v729 = vld [vmem:[#allocation8 + $0x370] sm:$0xff]
    %v730 = vld [vmem:[#allocation8 + $0x378] sm:$0xff]
    %v731 = vld [vmem:[#allocation8 + $0x380] sm:$0xff]
    %v732 = vld [vmem:[#allocation8 + $0x388] sm:$0xff]
    %v733 = vld [vmem:[#allocation8 + $0x390] sm:$0xff]
    %v734 = vld [vmem:[#allocation8 + $0x398] sm:$0xff]
    %v735 = vld [vmem:[#allocation8 + $0x3a0] sm:$0xff]
    %v736 = vld [vmem:[#allocation8 + $0x3a8] sm:$0xff]
    %v737 = vld [vmem:[#allocation8 + $0x3b0] sm:$0xff]
    %v738 = vld [vmem:[#allocation8 + $0x3b8] sm:$0xff]
    %v739 = vld [vmem:[#allocation8 + $0x3c0] sm:$0xff]
    %v740 = vld [vmem:[#allocation8 + $0x3c8] sm:$0xff]
    %v741 = vld [vmem:[#allocation8 + $0x3d0] sm:$0xff]
    %v742 = vld [vmem:[#allocation8 + $0x3d8] sm:$0xff]
    %v743 = vld [vmem:[#allocation8 + $0x3e0] sm:$0xff]
    %v744 = vld [vmem:[#allocation8 + $0x3e8] sm:$0xff]
    %v745 = vld [vmem:[#allocation8 + $0x3f0] sm:$0xff]
    %v746 = vld [vmem:[#allocation8 + $0x3f8] sm:$0xff]
    %v747 = vld [vmem:[#allocation8 + $0x400] sm:$0xff]
    %v748 = vld [vmem:[#allocation8 + $0x408] sm:$0xff]
    %v749 = vld [vmem:[#allocation8 + $0x410] sm:$0xff]
    %v750 = vld [vmem:[#allocation8 + $0x418] sm:$0xff]
    %v751 = vld [vmem:[#allocation8 + $0x420] sm:$0xff]
    %v752 = vld [vmem:[#allocation8 + $0x428] sm:$0xff]
    %v753 = vld [vmem:[#allocation8 + $0x430] sm:$0xff]
    %v754 = vld [vmem:[#allocation8 + $0x438] sm:$0xff]
    %v755 = vld [vmem:[#allocation8 + $0x440] sm:$0xff]
    %v756 = vld [vmem:[#allocation8 + $0x448] sm:$0xff]
    %v757 = vld [vmem:[#allocation8 + $0x450] sm:$0xff]
    %v758 = vld [vmem:[#allocation8 + $0x458] sm:$0xff]
    %v759 = vld [vmem:[#allocation8 + $0x460] sm:$0xff]
    %v760 = vld [vmem:[#allocation8 + $0x468] sm:$0xff]
    %v761 = vld [vmem:[#allocation8 + $0x470] sm:$0xff]
    %v762 = vld [vmem:[#allocation8 + $0x478] sm:$0xff]
    %v763 = vld [vmem:[#allocation8 + $0x480] sm:$0xff]
    %v764 = vld [vmem:[#allocation8 + $0x488] sm:$0xff]
    %v765 = vld [vmem:[#allocation8 + $0x490] sm:$0xff]
    %v766 = vld [vmem:[#allocation8 + $0x498] sm:$0xff]
    %v767 = vld [vmem:[#allocation8 + $0x4a0] sm:$0xff]
    %v768 = vld [vmem:[#allocation8 + $0x4a8] sm:$0xff]
    %v769 = vld [vmem:[#allocation8 + $0x4b0] sm:$0xff]
    %v770 = vld [vmem:[#allocation8 + $0x4b8] sm:$0xff]
    %v771 = vld [vmem:[#allocation8 + $0x4c0] sm:$0xff]
    %v772 = vld [vmem:[#allocation8 + $0x4c8] sm:$0xff]
    %v773 = vld [vmem:[#allocation8 + $0x4d0] sm:$0xff]
    %v774 = vld [vmem:[#allocation8 + $0x4d8] sm:$0xff]
    %v775 = vld [vmem:[#allocation8 + $0x4e0] sm:$0xff]
    %v776 = vld [vmem:[#allocation8 + $0x4e8] sm:$0xff]
    %v777 = vld [vmem:[#allocation8 + $0x4f0] sm:$0xff]
    %v778 = vld [vmem:[#allocation8 + $0x4f8] sm:$0xff]
    %v779 = vld [vmem:[#allocation8 + $0x500] sm:$0xff]
    %v780 = vld [vmem:[#allocation8 + $0x508] sm:$0xff]
    %v781 = vld [vmem:[#allocation8 + $0x510] sm:$0xff]
    %v782 = vld [vmem:[#allocation8 + $0x518] sm:$0xff]
    %v783 = vld [vmem:[#allocation8 + $0x520] sm:$0xff]
    %v784 = vld [vmem:[#allocation8 + $0x528] sm:$0xff]
    %v785 = vld [vmem:[#allocation8 + $0x530] sm:$0xff]
    %v786 = vld [vmem:[#allocation8 + $0x538] sm:$0xff]
    %v787 = vld [vmem:[#allocation8 + $0x540] sm:$0xff]
    %v788 = vld [vmem:[#allocation8 + $0x548] sm:$0xff]
    %v789 = vld [vmem:[#allocation8 + $0x550] sm:$0xff]
    %v790 = vld [vmem:[#allocation8 + $0x558] sm:$0xff]
    %v791 = vld [vmem:[#allocation8 + $0x560] sm:$0xff]
    %v792 = vld [vmem:[#allocation8 + $0x568] sm:$0xff]
    %v793 = vld [vmem:[#allocation8 + $0x570] sm:$0xff]
    %v794 = vld [vmem:[#allocation8 + $0x578] sm:$0xff]
    %v795 = vld [vmem:[#allocation8 + $0x580] sm:$0xff]
    %v796 = vld [vmem:[#allocation8 + $0x588] sm:$0xff]
    %v797 = vld [vmem:[#allocation8 + $0x590] sm:$0xff]
    %v798 = vld [vmem:[#allocation8 + $0x598] sm:$0xff]
    %v799 = vld [vmem:[#allocation8 + $0x5a0] sm:$0xff]
    %v800 = vld [vmem:[#allocation8 + $0x5a8] sm:$0xff]
    %v801 = vld [vmem:[#allocation8 + $0x5b0] sm:$0xff]
    %v802 = vld [vmem:[#allocation8 + $0x5b8] sm:$0xff]
    %v803 = vld [vmem:[#allocation8 + $0x5c0] sm:$0xff]
    %v804 = vld [vmem:[#allocation8 + $0x5c8] sm:$0xff]
    %v805 = vld [vmem:[#allocation8 + $0x5d0] sm:$0xff]
    %v806 = vld [vmem:[#allocation8 + $0x5d8] sm:$0xff]
    %v807 = vld [vmem:[#allocation8 + $0x5e0] sm:$0xff]
    %v808 = vld [vmem:[#allocation8 + $0x5e8] sm:$0xff]
    %v809 = vld [vmem:[#allocation8 + $0x5f0] sm:$0xff]
    %v810 = vld [vmem:[#allocation8 + $0x5f8] sm:$0xff]
    %v811 = vld [vmem:[#allocation8 + $0x600] sm:$0xff]
    %v812 = vld [vmem:[#allocation8 + $0x608] sm:$0xff]
    %v813 = vld [vmem:[#allocation8 + $0x610] sm:$0xff]
    %v814 = vld [vmem:[#allocation8 + $0x618] sm:$0xff]
    %v815 = vld [vmem:[#allocation8 + $0x620] sm:$0xff]
    %v816 = vld [vmem:[#allocation8 + $0x628] sm:$0xff]
    %v817 = vld [vmem:[#allocation8 + $0x630] sm:$0xff]
    %v818 = vld [vmem:[#allocation8 + $0x638] sm:$0xff]
    %v819 = vld [vmem:[#allocation8 + $0x640] sm:$0xff]
    %v820 = vld [vmem:[#allocation8 + $0x648] sm:$0xff]
    %v821 = vld [vmem:[#allocation8 + $0x650] sm:$0xff]
    %v822 = vld [vmem:[#allocation8 + $0x658] sm:$0xff]
    %v823 = vld [vmem:[#allocation8 + $0x660] sm:$0xff]
    %v824 = vld [vmem:[#allocation8 + $0x668] sm:$0xff]
    %v825 = vld [vmem:[#allocation8 + $0x670] sm:$0xff]
    %v826 = vld [vmem:[#allocation8 + $0x678] sm:$0xff]
    %v827 = vld [vmem:[#allocation8 + $0x680] sm:$0xff]
    %v828 = vld [vmem:[#allocation8 + $0x688] sm:$0xff]
    %v829 = vld [vmem:[#allocation8 + $0x690] sm:$0xff]
    %v830 = vld [vmem:[#allocation8 + $0x698] sm:$0xff]
    %v831 = vld [vmem:[#allocation8 + $0x6a0] sm:$0xff]
    %v832 = vld [vmem:[#allocation8 + $0x6a8] sm:$0xff]
    %v833 = vld [vmem:[#allocation8 + $0x6b0] sm:$0xff]
    %v834 = vld [vmem:[#allocation8 + $0x6b8] sm:$0xff]
    %v835 = vld [vmem:[#allocation8 + $0x6c0] sm:$0xff]
    %v836 = vld [vmem:[#allocation8 + $0x6c8] sm:$0xff]
    %v837 = vld [vmem:[#allocation8 + $0x6d0] sm:$0xff]
    %v838 = vld [vmem:[#allocation8 + $0x6d8] sm:$0xff]
    %v839 = vld [vmem:[#allocation8 + $0x6e0] sm:$0xff]
    %v840 = vld [vmem:[#allocation8 + $0x6e8] sm:$0xff]
    %v841 = vld [vmem:[#allocation8 + $0x6f0] sm:$0xff]
    %v842 = vld [vmem:[#allocation8 + $0x6f8] sm:$0xff]
    %v843 = vld [vmem:[#allocation8 + $0x700] sm:$0xff]
    %v844 = vld [vmem:[#allocation8 + $0x708] sm:$0xff]
    %v845 = vld [vmem:[#allocation8 + $0x710] sm:$0xff]
    %v846 = vld [vmem:[#allocation8 + $0x718] sm:$0xff]
    %v847 = vld [vmem:[#allocation8 + $0x720] sm:$0xff]
    %v848 = vld [vmem:[#allocation8 + $0x728] sm:$0xff]
    %v849 = vld [vmem:[#allocation8 + $0x730] sm:$0xff]
    %v850 = vld [vmem:[#allocation8 + $0x738] sm:$0xff]
    %v851 = vld [vmem:[#allocation8 + $0x740] sm:$0xff]
    %v852 = vld [vmem:[#allocation8 + $0x748] sm:$0xff]
    %v853 = vld [vmem:[#allocation8 + $0x750] sm:$0xff]
    %v854 = vld [vmem:[#allocation8 + $0x758] sm:$0xff]
    %v855 = vld [vmem:[#allocation8 + $0x760] sm:$0xff]
    %v856 = vld [vmem:[#allocation8 + $0x768] sm:$0xff]
    %v857 = vld [vmem:[#allocation8 + $0x770] sm:$0xff]
    %v858 = vld [vmem:[#allocation8 + $0x778] sm:$0xff]
    %v859 = vld [vmem:[#allocation8 + $0x780] sm:$0xff]
    %v860 = vld [vmem:[#allocation8 + $0x788] sm:$0xff]
    %v861 = vld [vmem:[#allocation8 + $0x790] sm:$0xff]
    %v862 = vld [vmem:[#allocation8 + $0x798] sm:$0xff]
    %v863 = vld [vmem:[#allocation8 + $0x7a0] sm:$0xff]
    %v864 = vld [vmem:[#allocation8 + $0x7a8] sm:$0xff]
    %v865 = vld [vmem:[#allocation8 + $0x7b0] sm:$0xff]
    %v866 = vld [vmem:[#allocation8 + $0x7b8] sm:$0xff]
    %v867 = vld [vmem:[#allocation8 + $0x7c0] sm:$0xff]
    %v868 = vld [vmem:[#allocation8 + $0x7c8] sm:$0xff]
    %v869 = vld [vmem:[#allocation8 + $0x7d0] sm:$0xff]
    %v870 = vld [vmem:[#allocation8 + $0x7d8] sm:$0xff]
    %v871 = vld [vmem:[#allocation8 + $0x7e0] sm:$0xff]
    %v872 = vld [vmem:[#allocation8 + $0x7e8] sm:$0xff]
    %v873 = vld [vmem:[#allocation8 + $0x7f0] sm:$0xff]
    %v874 = vld [vmem:[#allocation8 + $0x7f8] sm:$0xff]
    %v875 = vld [vmem:[#allocation8 + $0x800] sm:$0xff]
    %v876 = vld [vmem:[#allocation8 + $0x808] sm:$0xff]
    %v877 = vld [vmem:[#allocation8 + $0x810] sm:$0xff]
    %v878 = vld [vmem:[#allocation8 + $0x818] sm:$0xff]
    %v879 = vld [vmem:[#allocation8 + $0x820] sm:$0xff]
    %v880 = vld [vmem:[#allocation8 + $0x828] sm:$0xff]
    %v881 = vld [vmem:[#allocation8 + $0x830] sm:$0xff]
    %v882 = vld [vmem:[#allocation8 + $0x838] sm:$0xff]
    %v883 = vld [vmem:[#allocation8 + $0x840] sm:$0xff]
    %v884 = vld [vmem:[#allocation8 + $0x848] sm:$0xff]
    %v885 = vld [vmem:[#allocation8 + $0x850] sm:$0xff]
    %v886 = vld [vmem:[#allocation8 + $0x858] sm:$0xff]
    %v887 = vld [vmem:[#allocation8 + $0x860] sm:$0xff]
    %v888 = vld [vmem:[#allocation8 + $0x868] sm:$0xff]
    %v889 = vld [vmem:[#allocation8 + $0x870] sm:$0xff]
    %v890 = vld [vmem:[#allocation8 + $0x878] sm:$0xff]
    %v891 = vld [vmem:[#allocation8 + $0x880] sm:$0xff]
    %v892 = vld [vmem:[#allocation8 + $0x888] sm:$0xff]
    %v893 = vld [vmem:[#allocation8 + $0x890] sm:$0xff]
    %v894 = vld [vmem:[#allocation8 + $0x898] sm:$0xff]
    %v895 = vld [vmem:[#allocation8 + $0x8a0] sm:$0xff]
    %v896 = vld [vmem:[#allocation8 + $0x8a8] sm:$0xff]
    %v897 = vld [vmem:[#allocation8 + $0x8b0] sm:$0xff]
    %v898 = vld [vmem:[#allocation8 + $0x8b8] sm:$0xff]
    %v899 = vld [vmem:[#allocation8 + $0x8c0] sm:$0xff]
    %v900 = vld [vmem:[#allocation8 + $0x8c8] sm:$0xff]
    %v901 = vld [vmem:[#allocation8 + $0x8d0] sm:$0xff]
    %v902 = vld [vmem:[#allocation8 + $0x8d8] sm:$0xff]
    %v903 = vld [vmem:[#allocation8 + $0x8e0] sm:$0xff]
    %v904 = vld [vmem:[#allocation8 + $0x8e8] sm:$0xff]
    %v905 = vld [vmem:[#allocation8 + $0x8f0] sm:$0xff]
    %v906 = vld [vmem:[#allocation8 + $0x8f8] sm:$0xff]
    %v907 = vld [vmem:[#allocation8 + $0x900] sm:$0xff]
    %v908 = vld [vmem:[#allocation8 + $0x908] sm:$0xff]
    %v909 = vld [vmem:[#allocation8 + $0x910] sm:$0xff]
    %v910 = vld [vmem:[#allocation8 + $0x918] sm:$0xff]
    %v911 = vld [vmem:[#allocation8 + $0x920] sm:$0xff]
    %v912 = vld [vmem:[#allocation8 + $0x928] sm:$0xff]
    %v913 = vld [vmem:[#allocation8 + $0x930] sm:$0xff]
    %v914 = vld [vmem:[#allocation8 + $0x938] sm:$0xff]
    %v915 = vld [vmem:[#allocation8 + $0x940] sm:$0xff]
    %v916 = vld [vmem:[#allocation8 + $0x948] sm:$0xff]
    %v917 = vld [vmem:[#allocation8 + $0x950] sm:$0xff]
    %v918 = vld [vmem:[#allocation8 + $0x958] sm:$0xff]
    %v919 = vld [vmem:[#allocation8 + $0x960] sm:$0xff]
    %v920 = vld [vmem:[#allocation8 + $0x968] sm:$0xff]
    %v921 = vld [vmem:[#allocation8 + $0x970] sm:$0xff]
    %v922 = vld [vmem:[#allocation8 + $0x978] sm:$0xff]
    %v923 = vld [vmem:[#allocation8 + $0x980] sm:$0xff]
    %v924 = vld [vmem:[#allocation8 + $0x988] sm:$0xff]
    %v925 = vld [vmem:[#allocation8 + $0x990] sm:$0xff]
    %v926 = vld [vmem:[#allocation8 + $0x998] sm:$0xff]
    %v927 = vld [vmem:[#allocation8 + $0x9a0] sm:$0xff]
    %v928 = vld [vmem:[#allocation8 + $0x9a8] sm:$0xff]
    %v929 = vld [vmem:[#allocation8 + $0x9b0] sm:$0xff]
    %v930 = vld [vmem:[#allocation8 + $0x9b8] sm:$0xff]
    %v931 = vld [vmem:[#allocation8 + $0x9c0] sm:$0xff]
    %v932 = vld [vmem:[#allocation8 + $0x9c8] sm:$0xff]
    %v933 = vld [vmem:[#allocation8 + $0x9d0] sm:$0xff]
    %v934 = vld [vmem:[#allocation8 + $0x9d8] sm:$0xff]
    %v935 = vld [vmem:[#allocation8 + $0x9e0] sm:$0xff]
    %v936 = vld [vmem:[#allocation8 + $0x9e8] sm:$0xff]
    %v937 = vld [vmem:[#allocation8 + $0x9f0] sm:$0xff]
    %v938 = vld [vmem:[#allocation8 + $0x9f8] sm:$0xff]
    %v939 = vld [vmem:[#allocation8 + $0xa00] sm:$0xff]
    %v940 = vld [vmem:[#allocation8 + $0xa08] sm:$0xff]
    %v941 = vld [vmem:[#allocation8 + $0xa10] sm:$0xff]
    %v942 = vld [vmem:[#allocation8 + $0xa18] sm:$0xff]
    %v943 = vld [vmem:[#allocation8 + $0xa20] sm:$0xff]
    %v944 = vld [vmem:[#allocation8 + $0xa28] sm:$0xff]
    %v945 = vld [vmem:[#allocation8 + $0xa30] sm:$0xff]
    %v946 = vld [vmem:[#allocation8 + $0xa38] sm:$0xff]
    %v947 = vld [vmem:[#allocation8 + $0xa40] sm:$0xff]
    %v948 = vld [vmem:[#allocation8 + $0xa48] sm:$0xff]
    %v949 = vld [vmem:[#allocation8 + $0xa50] sm:$0xff]
    %v950 = vld [vmem:[#allocation8 + $0xa58] sm:$0xff]
    %v951 = vld [vmem:[#allocation8 + $0xa60] sm:$0xff]
    %v952 = vld [vmem:[#allocation8 + $0xa68] sm:$0xff]
    %v953 = vld [vmem:[#allocation8 + $0xa70] sm:$0xff]
    %v954 = vld [vmem:[#allocation8 + $0xa78] sm:$0xff]
    %v955 = vld [vmem:[#allocation8 + $0xa80] sm:$0xff]
    %v956 = vld [vmem:[#allocation8 + $0xa88] sm:$0xff]
    %v957 = vld [vmem:[#allocation8 + $0xa90] sm:$0xff]
    %v958 = vld [vmem:[#allocation8 + $0xa98] sm:$0xff]
    %v959 = vld [vmem:[#allocation8 + $0xaa0] sm:$0xff]
    %v960 = vld [vmem:[#allocation8 + $0xaa8] sm:$0xff]
    %v961 = vld [vmem:[#allocation8 + $0xab0] sm:$0xff]
    %v962 = vld [vmem:[#allocation8 + $0xab8] sm:$0xff]
    %v963 = vld [vmem:[#allocation8 + $0xac0] sm:$0xff]
    %v964 = vld [vmem:[#allocation8 + $0xac8] sm:$0xff]
    %v965 = vld [vmem:[#allocation8 + $0xad0] sm:$0xff]
    %v966 = vld [vmem:[#allocation8 + $0xad8] sm:$0xff]
    %v967 = vld [vmem:[#allocation8 + $0xae0] sm:$0xff]
    %v968 = vld [vmem:[#allocation8 + $0xae8] sm:$0xff]
    %v969 = vld [vmem:[#allocation8 + $0xaf0] sm:$0xff]
    %v970 = vld [vmem:[#allocation8 + $0xaf8] sm:$0xff]
    %v971 = vld [vmem:[#allocation8 + $0xb00] sm:$0xff]
    %v972 = vld [vmem:[#allocation8 + $0xb08] sm:$0xff]
    %v973 = vld [vmem:[#allocation8 + $0xb10] sm:$0xff]
    %v974 = vld [vmem:[#allocation8 + $0xb18] sm:$0xff]
    %v975 = vld [vmem:[#allocation8 + $0xb20] sm:$0xff]
    %v976 = vld [vmem:[#allocation8 + $0xb28] sm:$0xff]
    %v977 = vld [vmem:[#allocation8 + $0xb30] sm:$0xff]
    %v978 = vld [vmem:[#allocation8 + $0xb38] sm:$0xff]
    %v979 = vld [vmem:[#allocation8 + $0xb40] sm:$0xff]
    %v980 = vld [vmem:[#allocation8 + $0xb48] sm:$0xff]
    %v981 = vld [vmem:[#allocation8 + $0xb50] sm:$0xff]
    %v982 = vld [vmem:[#allocation8 + $0xb58] sm:$0xff]
    %v983 = vld [vmem:[#allocation8 + $0xb60] sm:$0xff]
    %v984 = vld [vmem:[#allocation8 + $0xb68] sm:$0xff]
    %v985 = vld [vmem:[#allocation8 + $0xb70] sm:$0xff]
    %v986 = vld [vmem:[#allocation8 + $0xb78] sm:$0xff]
    %v987 = vld [vmem:[#allocation8 + $0xb80] sm:$0xff]
    %v988 = vld [vmem:[#allocation8 + $0xb88] sm:$0xff]
    %v989 = vld [vmem:[#allocation8 + $0xb90] sm:$0xff]
    %v990 = vld [vmem:[#allocation8 + $0xb98] sm:$0xff]
    %v991 = vld [vmem:[#allocation8 + $0xba0] sm:$0xff]
    %v992 = vld [vmem:[#allocation8 + $0xba8] sm:$0xff]
    %v993 = vld [vmem:[#allocation8 + $0xbb0] sm:$0xff]
    %v994 = vld [vmem:[#allocation8 + $0xbb8] sm:$0xff]
    %v995 = vld [vmem:[#allocation8 + $0xbc0] sm:$0xff]
    %v996 = vld [vmem:[#allocation8 + $0xbc8] sm:$0xff]
    %v997 = vld [vmem:[#allocation8 + $0xbd0] sm:$0xff]
    %v998 = vld [vmem:[#allocation8 + $0xbd8] sm:$0xff]
    %v999 = vld [vmem:[#allocation8 + $0xbe0] sm:$0xff]
    %v1000 = vld [vmem:[#allocation8 + $0xbe8] sm:$0xff]
    %v1001 = vld [vmem:[#allocation8 + $0xbf0] sm:$0xff]
    %v1002 = vld [vmem:[#allocation8 + $0xbf8] sm:$0xff]
    %v1003 = vld [vmem:[#allocation8 + $0xc00] sm:$0xff]
    %v1004 = vld [vmem:[#allocation8 + $0xc08] sm:$0xff]
    %v1005 = vld [vmem:[#allocation8 + $0xc10] sm:$0xff]
    %v1006 = vld [vmem:[#allocation8 + $0xc18] sm:$0xff]
    %v1007 = vld [vmem:[#allocation8 + $0xc20] sm:$0xff]
    %v1008 = vld [vmem:[#allocation8 + $0xc28] sm:$0xff]
    %v1009 = vld [vmem:[#allocation8 + $0xc30] sm:$0xff]
    %v1010 = vld [vmem:[#allocation8 + $0xc38] sm:$0xff]
    %v1011 = vld [vmem:[#allocation8 + $0xc40] sm:$0xff]
    %v1012 = vld [vmem:[#allocation8 + $0xc48] sm:$0xff]
    %v1013 = vld [vmem:[#allocation8 + $0xc50] sm:$0xff]
    %v1014 = vld [vmem:[#allocation8 + $0xc58] sm:$0xff]
    %v1015 = vld [vmem:[#allocation8 + $0xc60] sm:$0xff]
    %v1016 = vld [vmem:[#allocation8 + $0xc68] sm:$0xff]
    %v1017 = vld [vmem:[#allocation8 + $0xc70] sm:$0xff]
    %v1018 = vld [vmem:[#allocation8 + $0xc78] sm:$0xff]
    %v1019 = vld [vmem:[#allocation8 + $0xc80] sm:$0xff]
    %v1020 = vld [vmem:[#allocation8 + $0xc88] sm:$0xff]
    %v1021 = vld [vmem:[#allocation8 + $0xc90] sm:$0xff]
    %v1022 = vld [vmem:[#allocation8 + $0xc98] sm:$0xff]
    %v1023 = vld [vmem:[#allocation8 + $0xca0] sm:$0xff]
    %v1024 = vld [vmem:[#allocation8 + $0xca8] sm:$0xff]
    %v1025 = vld [vmem:[#allocation8 + $0xcb0] sm:$0xff]
    %v1026 = vld [vmem:[#allocation8 + $0xcb8] sm:$0xff]
    %v1027 = vld [vmem:[#allocation8 + $0xcc0] sm:$0xff]
    %v1028 = vld [vmem:[#allocation8 + $0xcc8] sm:$0xff]
    %v1029 = vld [vmem:[#allocation8 + $0xcd0] sm:$0xff]
    %v1030 = vld [vmem:[#allocation8 + $0xcd8] sm:$0xff]
    %v1031 = vld [vmem:[#allocation8 + $0xce0] sm:$0xff]
    %v1032 = vld [vmem:[#allocation8 + $0xce8] sm:$0xff]
    %v1033 = vld [vmem:[#allocation8 + $0xcf0] sm:$0xff]
    %v1034 = vld [vmem:[#allocation8 + $0xcf8] sm:$0xff]
    %v1035 = vld [vmem:[#allocation8 + $0xd00] sm:$0xff]
    %v1036 = vld [vmem:[#allocation8 + $0xd08] sm:$0xff]
    %v1037 = vld [vmem:[#allocation8 + $0xd10] sm:$0xff]
    %v1038 = vld [vmem:[#allocation8 + $0xd18] sm:$0xff]
    %v1039 = vld [vmem:[#allocation8 + $0xd20] sm:$0xff]
    %v1040 = vld [vmem:[#allocation8 + $0xd28] sm:$0xff]
    %v1041 = vld [vmem:[#allocation8 + $0xd30] sm:$0xff]
    %v1042 = vld [vmem:[#allocation8 + $0xd38] sm:$0xff]
    %v1043 = vld [vmem:[#allocation8 + $0xd40] sm:$0xff]
    %v1044 = vld [vmem:[#allocation8 + $0xd48] sm:$0xff]
    %v1045 = vld [vmem:[#allocation8 + $0xd50] sm:$0xff]
    %v1046 = vld [vmem:[#allocation8 + $0xd58] sm:$0xff]
    %v1047 = vld [vmem:[#allocation8 + $0xd60] sm:$0xff]
    %v1048 = vld [vmem:[#allocation8 + $0xd68] sm:$0xff]
    %v1049 = vld [vmem:[#allocation8 + $0xd70] sm:$0xff]
    %v1050 = vld [vmem:[#allocation8 + $0xd78] sm:$0xff]
    %v1051 = vld [vmem:[#allocation8 + $0xd80] sm:$0xff]
    %v1052 = vld [vmem:[#allocation8 + $0xd88] sm:$0xff]
    %v1053 = vld [vmem:[#allocation8 + $0xd90] sm:$0xff]
    %v1054 = vld [vmem:[#allocation8 + $0xd98] sm:$0xff]
    %v1055 = vld [vmem:[#allocation8 + $0xda0] sm:$0xff]
    %v1056 = vld [vmem:[#allocation8 + $0xda8] sm:$0xff]
    %v1057 = vld [vmem:[#allocation8 + $0xdb0] sm:$0xff]
    %v1058 = vld [vmem:[#allocation8 + $0xdb8] sm:$0xff]
    %v1059 = vld [vmem:[#allocation8 + $0xdc0] sm:$0xff]
    %v1060 = vld [vmem:[#allocation8 + $0xdc8] sm:$0xff]
    %v1061 = vld [vmem:[#allocation8 + $0xdd0] sm:$0xff]
    %v1062 = vld [vmem:[#allocation8 + $0xdd8] sm:$0xff]
    %v1063 = vld [vmem:[#allocation8 + $0xde0] sm:$0xff]
    %v1064 = vld [vmem:[#allocation8 + $0xde8] sm:$0xff]
    %v1065 = vld [vmem:[#allocation8 + $0xdf0] sm:$0xff]
    %v1066 = vld [vmem:[#allocation8 + $0xdf8] sm:$0xff]
    %v1067 = vld [vmem:[#allocation8 + $0xe00] sm:$0xff]
    %v1068 = vld [vmem:[#allocation8 + $0xe08] sm:$0xff]
    %v1069 = vld [vmem:[#allocation8 + $0xe10] sm:$0xff]
    %v1070 = vld [vmem:[#allocation8 + $0xe18] sm:$0xff]
    %v1071 = vld [vmem:[#allocation8 + $0xe20] sm:$0xff]
    %v1072 = vld [vmem:[#allocation8 + $0xe28] sm:$0xff]
    %v1073 = vld [vmem:[#allocation8 + $0xe30] sm:$0xff]
    %v1074 = vld [vmem:[#allocation8 + $0xe38] sm:$0xff]
    %v1075 = vld [vmem:[#allocation8 + $0xe40] sm:$0xff]
    %v1076 = vld [vmem:[#allocation8 + $0xe48] sm:$0xff]
    %v1077 = vld [vmem:[#allocation8 + $0xe50] sm:$0xff]
    %v1078 = vld [vmem:[#allocation8 + $0xe58] sm:$0xff]
    %v1079 = vld [vmem:[#allocation8 + $0xe60] sm:$0xff]
    %v1080 = vld [vmem:[#allocation8 + $0xe68] sm:$0xff]
    %v1081 = vld [vmem:[#allocation8 + $0xe70] sm:$0xff]
    %v1082 = vld [vmem:[#allocation8 + $0xe78] sm:$0xff]
    %v1083 = vld [vmem:[#allocation8 + $0xe80] sm:$0xff]
    %v1084 = vld [vmem:[#allocation8 + $0xe88] sm:$0xff]
    %v1085 = vld [vmem:[#allocation8 + $0xe90] sm:$0xff]
    %v1086 = vld [vmem:[#allocation8 + $0xe98] sm:$0xff]
    %v1087 = vld [vmem:[#allocation8 + $0xea0] sm:$0xff]
    %v1088 = vld [vmem:[#allocation8 + $0xea8] sm:$0xff]
    %v1089 = vld [vmem:[#allocation8 + $0xeb0] sm:$0xff]
    %v1090 = vld [vmem:[#allocation8 + $0xeb8] sm:$0xff]
    %v1091 = vld [vmem:[#allocation8 + $0xec0] sm:$0xff]
    %v1092 = vld [vmem:[#allocation8 + $0xec8] sm:$0xff]
    %v1093 = vld [vmem:[#allocation8 + $0xed0] sm:$0xff]
    %v1094 = vld [vmem:[#allocation8 + $0xed8] sm:$0xff]
    %v1095 = vld [vmem:[#allocation8 + $0xee0] sm:$0xff]
    %v1096 = vld [vmem:[#allocation8 + $0xee8] sm:$0xff]
    %v1097 = vld [vmem:[#allocation8 + $0xef0] sm:$0xff]
    %v1098 = vld [vmem:[#allocation8 + $0xef8] sm:$0xff]
    %v1099 = vld [vmem:[#allocation8 + $0xf00] sm:$0xff]
    %v1100 = vld [vmem:[#allocation8 + $0xf08] sm:$0xff]
    %v1101 = vld [vmem:[#allocation8 + $0xf10] sm:$0xff]
    %v1102 = vld [vmem:[#allocation8 + $0xf18] sm:$0xff]
    %v1103 = vld [vmem:[#allocation8 + $0xf20] sm:$0xff]
    %v1104 = vld [vmem:[#allocation8 + $0xf28] sm:$0xff]
    %v1105 = vld [vmem:[#allocation8 + $0xf30] sm:$0xff]
    %v1106 = vld [vmem:[#allocation8 + $0xf38] sm:$0xff]
    %v1107 = vld [vmem:[#allocation8 + $0xf40] sm:$0xff]
    %v1108 = vld [vmem:[#allocation8 + $0xf48] sm:$0xff]
    %v1109 = vld [vmem:[#allocation8 + $0xf50] sm:$0xff]
    %v1110 = vld [vmem:[#allocation8 + $0xf58] sm:$0xff]
    %v1111 = vld [vmem:[#allocation8 + $0xf60] sm:$0xff]
    %v1112 = vld [vmem:[#allocation8 + $0xf68] sm:$0xff]
    %v1113 = vld [vmem:[#allocation8 + $0xf70] sm:$0xff]
    %v1114 = vld [vmem:[#allocation8 + $0xf78] sm:$0xff]
    %v1115 = vld [vmem:[#allocation8 + $0xf80] sm:$0xff]
    %v1116 = vld [vmem:[#allocation8 + $0xf88] sm:$0xff]
    %v1117 = vld [vmem:[#allocation8 + $0xf90] sm:$0xff]
    %v1118 = vld [vmem:[#allocation8 + $0xf98] sm:$0xff]
    %v1119 = vld [vmem:[#allocation8 + $0xfa0] sm:$0xff]
    %v1120 = vld [vmem:[#allocation8 + $0xfa8] sm:$0xff]
    %v1121 = vld [vmem:[#allocation8 + $0xfb0] sm:$0xff]
    %v1122 = vld [vmem:[#allocation8 + $0xfb8] sm:$0xff]
    %v1123 = vld [vmem:[#allocation8 + $0xfc0] sm:$0xff]
    %v1124 = vld [vmem:[#allocation8 + $0xfc8] sm:$0xff]
    %v1125 = vld [vmem:[#allocation8 + $0xfd0] sm:$0xff]
    %v1126 = vld [vmem:[#allocation8 + $0xfd8] sm:$0xff]
    %v1127 = vld [vmem:[#allocation8 + $0xfe0] sm:$0xff]
    %v1128 = vld [vmem:[#allocation8 + $0xfe8] sm:$0xff]
    %v1129 = vld [vmem:[#allocation8 + $0xff0] sm:$0xff]
    %v1130 = vld [vmem:[#allocation8 + $0xff8] sm:$0xff]
    %v1131 = vld [vmem:[#allocation8 + $0x1000] sm:$0xff]
    %v1132 = vld [vmem:[#allocation8 + $0x1008] sm:$0xff]
    %v1133 = vld [vmem:[#allocation8 + $0x1010] sm:$0xff]
    %v1134 = vld [vmem:[#allocation8 + $0x1018] sm:$0xff]
    %v1135 = vld [vmem:[#allocation8 + $0x1020] sm:$0xff]
    %v1136 = vld [vmem:[#allocation8 + $0x1028] sm:$0xff]
    %v1137 = vld [vmem:[#allocation8 + $0x1030] sm:$0xff]
    %v1138 = vld [vmem:[#allocation8 + $0x1038] sm:$0xff]
    %v1139 = vld [vmem:[#allocation8 + $0x1040] sm:$0xff]
    %v1140 = vld [vmem:[#allocation8 + $0x1048] sm:$0xff]
    %v1141 = vld [vmem:[#allocation8 + $0x1050] sm:$0xff]
    %v1142 = vld [vmem:[#allocation8 + $0x1058] sm:$0xff]
    %v1143 = vld [vmem:[#allocation8 + $0x1060] sm:$0xff]
    %v1144 = vld [vmem:[#allocation8 + $0x1068] sm:$0xff]
    %v1145 = vld [vmem:[#allocation8 + $0x1070] sm:$0xff]
    %v1146 = vld [vmem:[#allocation8 + $0x1078] sm:$0xff]
    %v1147 = vld [vmem:[#allocation8 + $0x1080] sm:$0xff]
    %v1148 = vld [vmem:[#allocation8 + $0x1088] sm:$0xff]
    %v1149 = vld [vmem:[#allocation8 + $0x1090] sm:$0xff]
    %v1150 = vld [vmem:[#allocation8 + $0x1098] sm:$0xff]
    %v1151 = vld [vmem:[#allocation8 + $0x10a0] sm:$0xff]
    %v1152 = vld [vmem:[#allocation8 + $0x10a8] sm:$0xff]
    %v1153 = vld [vmem:[#allocation8 + $0x10b0] sm:$0xff]
    %v1154 = vld [vmem:[#allocation8 + $0x10b8] sm:$0xff]
    %v1155 = vld [vmem:[#allocation8 + $0x10c0] sm:$0xff]
    %v1156 = vld [vmem:[#allocation8 + $0x10c8] sm:$0xff]
    %v1157 = vld [vmem:[#allocation8 + $0x10d0] sm:$0xff]
    %v1158 = vld [vmem:[#allocation8 + $0x10d8] sm:$0xff]
    %v1159 = vld [vmem:[#allocation8 + $0x10e0] sm:$0xff]
    %v1160 = vld [vmem:[#allocation8 + $0x10e8] sm:$0xff]
    %v1161 = vld [vmem:[#allocation8 + $0x10f0] sm:$0xff]
    %v1162 = vld [vmem:[#allocation8 + $0x10f8] sm:$0xff]
    %v1163 = vld [vmem:[#allocation8 + $0x1100] sm:$0xff]
    %v1164 = vld [vmem:[#allocation8 + $0x1108] sm:$0xff]
    %v1165 = vld [vmem:[#allocation8 + $0x1110] sm:$0xff]
    %v1166 = vld [vmem:[#allocation8 + $0x1118] sm:$0xff]
    %v1167 = vld [vmem:[#allocation8 + $0x1120] sm:$0xff]
    %v1168 = vld [vmem:[#allocation8 + $0x1128] sm:$0xff]
    %v1169 = vld [vmem:[#allocation8 + $0x1130] sm:$0xff]
    %v1170 = vld [vmem:[#allocation8 + $0x1138] sm:$0xff]
    %v1171 = vld [vmem:[#allocation8 + $0x1140] sm:$0xff]
    %v1172 = vld [vmem:[#allocation8 + $0x1148] sm:$0xff]
    %v1173 = vld [vmem:[#allocation8 + $0x1150] sm:$0xff]
    %v1174 = vld [vmem:[#allocation8 + $0x1158] sm:$0xff]
    %v1175 = vld [vmem:[#allocation8 + $0x1160] sm:$0xff]
    %v1176 = vld [vmem:[#allocation8 + $0x1168] sm:$0xff]
    %v1177 = vld [vmem:[#allocation8 + $0x1170] sm:$0xff]
    %v1178 = vld [vmem:[#allocation8 + $0x1178] sm:$0xff]
    %v1179 = vld [vmem:[#allocation8 + $0x1180] sm:$0xff]
    %v1180 = vld [vmem:[#allocation8 + $0x1188] sm:$0xff]
    %v1181 = vld [vmem:[#allocation8 + $0x1190] sm:$0xff]
    %v1182 = vld [vmem:[#allocation8 + $0x1198] sm:$0xff]
    %v1183 = vld [vmem:[#allocation8 + $0x11a0] sm:$0xff]
    %v1184 = vld [vmem:[#allocation8 + $0x11a8] sm:$0xff]
    %v1185 = vld [vmem:[#allocation8 + $0x11b0] sm:$0xff]
    %v1186 = vld [vmem:[#allocation8 + $0x11b8] sm:$0xff]
    %v1187 = vld [vmem:[#allocation8 + $0x11c0] sm:$0xff]
    %v1188 = vld [vmem:[#allocation8 + $0x11c8] sm:$0xff]
    %v1189 = vld [vmem:[#allocation8 + $0x11d0] sm:$0xff]
    %v1190 = vld [vmem:[#allocation8 + $0x11d8] sm:$0xff]
    %v1191 = vld [vmem:[#allocation8 + $0x11e0] sm:$0xff]
    %v1192 = vld [vmem:[#allocation8 + $0x11e8] sm:$0xff]
    %v1193 = vld [vmem:[#allocation8 + $0x11f0] sm:$0xff]
    %v1194 = vld [vmem:[#allocation8 + $0x11f8] sm:$0xff]
    %v1195 = vld [vmem:[#allocation8 + $0x1200] sm:$0xff]
    %v1196 = vld [vmem:[#allocation8 + $0x1208] sm:$0xff]
    %v1197 = vld [vmem:[#allocation8 + $0x1210] sm:$0xff]
    %v1198 = vld [vmem:[#allocation8 + $0x1218] sm:$0xff]
    %v1199 = vld [vmem:[#allocation8 + $0x1220] sm:$0xff]
    %v1200 = vld [vmem:[#allocation8 + $0x1228] sm:$0xff]
    %v1201 = vld [vmem:[#allocation8 + $0x1230] sm:$0xff]
    %v1202 = vld [vmem:[#allocation8 + $0x1238] sm:$0xff]
    %v1203 = vld [vmem:[#allocation8 + $0x1240] sm:$0xff]
    %v1204 = vld [vmem:[#allocation8 + $0x1248] sm:$0xff]
    %v1205 = vld [vmem:[#allocation8 + $0x1250] sm:$0xff]
    %v1206 = vld [vmem:[#allocation8 + $0x1258] sm:$0xff]
    %v1207 = vld [vmem:[#allocation8 + $0x1260] sm:$0xff]
    %v1208 = vld [vmem:[#allocation8 + $0x1268] sm:$0xff]
    %v1209 = vld [vmem:[#allocation8 + $0x1270] sm:$0xff]
    %v1210 = vld [vmem:[#allocation8 + $0x1278] sm:$0xff]
    %v1211 = vld [vmem:[#allocation8 + $0x1280] sm:$0xff]
    %v1212 = vld [vmem:[#allocation8 + $0x1288] sm:$0xff]
    %v1213 = vld [vmem:[#allocation8 + $0x1290] sm:$0xff]
    %v1214 = vld [vmem:[#allocation8 + $0x1298] sm:$0xff]
    %v1215 = vld [vmem:[#allocation8 + $0x12a0] sm:$0xff]
    %v1216 = vld [vmem:[#allocation8 + $0x12a8] sm:$0xff]
    %v1217 = vld [vmem:[#allocation8 + $0x12b0] sm:$0xff]
    %v1218 = vld [vmem:[#allocation8 + $0x12b8] sm:$0xff]
    %v1219 = vld [vmem:[#allocation8 + $0x12c0] sm:$0xff]
    %v1220 = vld [vmem:[#allocation8 + $0x12c8] sm:$0xff]
    %v1221 = vld [vmem:[#allocation8 + $0x12d0] sm:$0xff]
    %v1222 = vld [vmem:[#allocation8 + $0x12d8] sm:$0xff]
    %v1223 = vld [vmem:[#allocation8 + $0x12e0] sm:$0xff]
    %v1224 = vld [vmem:[#allocation8 + $0x12e8] sm:$0xff]
    %v1225 = vld [vmem:[#allocation8 + $0x12f0] sm:$0xff]
    %v1226 = vld [vmem:[#allocation8 + $0x12f8] sm:$0xff]
    %v1227 = vld [vmem:[#allocation8 + $0x1300] sm:$0xff]
    %v1228 = vld [vmem:[#allocation8 + $0x1308] sm:$0xff]
    %v1229 = vld [vmem:[#allocation8 + $0x1310] sm:$0xff]
    %v1230 = vld [vmem:[#allocation8 + $0x1318] sm:$0xff]
    %v1231 = vld [vmem:[#allocation8 + $0x1320] sm:$0xff]
    %v1232 = vld [vmem:[#allocation8 + $0x1328] sm:$0xff]
    %v1233 = vld [vmem:[#allocation8 + $0x1330] sm:$0xff]
    %v1234 = vld [vmem:[#allocation8 + $0x1338] sm:$0xff]
    %v1235 = vld [vmem:[#allocation8 + $0x1340] sm:$0xff]
    %v1236 = vld [vmem:[#allocation8 + $0x1348] sm:$0xff]
    %v1237 = vld [vmem:[#allocation8 + $0x1350] sm:$0xff]
    %v1238 = vld [vmem:[#allocation8 + $0x1358] sm:$0xff]
    %v1239 = vld [vmem:[#allocation8 + $0x1360] sm:$0xff]
    %v1240 = vld [vmem:[#allocation8 + $0x1368] sm:$0xff]
    %v1241 = vld [vmem:[#allocation8 + $0x1370] sm:$0xff]
    %v1242 = vld [vmem:[#allocation8 + $0x1378] sm:$0xff]
    %v1243 = vld [vmem:[#allocation8 + $0x1380] sm:$0xff]
    %v1244 = vld [vmem:[#allocation8 + $0x1388] sm:$0xff]
    %v1245 = vld [vmem:[#allocation8 + $0x1390] sm:$0xff]
    %v1246 = vld [vmem:[#allocation8 + $0x1398] sm:$0xff]
    %v1247 = vld [vmem:[#allocation8 + $0x13a0] sm:$0xff]
    %v1248 = vld [vmem:[#allocation8 + $0x13a8] sm:$0xff]
    %v1249 = vld [vmem:[#allocation8 + $0x13b0] sm:$0xff]
    %v1250 = vld [vmem:[#allocation8 + $0x13b8] sm:$0xff]
    %v1251 = vld [vmem:[#allocation8 + $0x13c0] sm:$0xff]
    %v1252 = vld [vmem:[#allocation8 + $0x13c8] sm:$0xff]
    %v1253 = vld [vmem:[#allocation8 + $0x13d0] sm:$0xff]
    %v1254 = vld [vmem:[#allocation8 + $0x13d8] sm:$0xff]
    %v1255 = vld [vmem:[#allocation8 + $0x13e0] sm:$0xff]
    %v1256 = vld [vmem:[#allocation8 + $0x13e8] sm:$0xff]
    %v1257 = vld [vmem:[#allocation8 + $0x13f0] sm:$0xff]
    %v1258 = vld [vmem:[#allocation8 + $0x13f8] sm:$0xff]
    %v1259 = vld [vmem:[#allocation8 + $0x1400] sm:$0xff]
    %v1260 = vld [vmem:[#allocation8 + $0x1408] sm:$0xff]
    %v1261 = vld [vmem:[#allocation8 + $0x1410] sm:$0xff]
    %v1262 = vld [vmem:[#allocation8 + $0x1418] sm:$0xff]
    %v1263 = vld [vmem:[#allocation8 + $0x1420] sm:$0xff]
    %v1264 = vld [vmem:[#allocation8 + $0x1428] sm:$0xff]
    %v1265 = vld [vmem:[#allocation8 + $0x1430] sm:$0xff]
    %v1266 = vld [vmem:[#allocation8 + $0x1438] sm:$0xff]
    %v1267 = vld [vmem:[#allocation8 + $0x1440] sm:$0xff]
    %v1268 = vld [vmem:[#allocation8 + $0x1448] sm:$0xff]
    %v1269 = vld [vmem:[#allocation8 + $0x1450] sm:$0xff]
    %v1270 = vld [vmem:[#allocation8 + $0x1458] sm:$0xff]
    %v1271 = vld [vmem:[#allocation8 + $0x1460] sm:$0xff]
    %v1272 = vld [vmem:[#allocation8 + $0x1468] sm:$0xff]
    %v1273 = vld [vmem:[#allocation8 + $0x1470] sm:$0xff]
    %v1274 = vld [vmem:[#allocation8 + $0x1478] sm:$0xff]
    %v1275 = vld [vmem:[#allocation8 + $0x1480] sm:$0xff]
    %v1276 = vld [vmem:[#allocation8 + $0x1488] sm:$0xff]
    %v1277 = vld [vmem:[#allocation8 + $0x1490] sm:$0xff]
    %v1278 = vld [vmem:[#allocation8 + $0x1498] sm:$0xff]
    %v1279 = vld [vmem:[#allocation8 + $0x14a0] sm:$0xff]
    %v1280 = vld [vmem:[#allocation8 + $0x14a8] sm:$0xff]
    %v1281 = vld [vmem:[#allocation8 + $0x14b0] sm:$0xff]
    %v1282 = vld [vmem:[#allocation8 + $0x14b8] sm:$0xff]
    %v1283 = vld [vmem:[#allocation8 + $0x14c0] sm:$0xff]
    %v1284 = vld [vmem:[#allocation8 + $0x14c8] sm:$0xff]
    %v1285 = vld [vmem:[#allocation8 + $0x14d0] sm:$0xff]
    %v1286 = vld [vmem:[#allocation8 + $0x14d8] sm:$0xff]
    %v1287 = vld [vmem:[#allocation8 + $0x14e0] sm:$0xff]
    %v1288 = vld [vmem:[#allocation8 + $0x14e8] sm:$0xff]
    %v1289 = vld [vmem:[#allocation8 + $0x14f0] sm:$0xff]
    %v1290 = vld [vmem:[#allocation8 + $0x14f8] sm:$0xff]
    %v1291 = vld [vmem:[#allocation8 + $0x1500] sm:$0xff]
    %v1292 = vld [vmem:[#allocation8 + $0x1508] sm:$0xff]
    %v1293 = vld [vmem:[#allocation8 + $0x1510] sm:$0xff]
    %v1294 = vld [vmem:[#allocation8 + $0x1518] sm:$0xff]
    %v1295 = vld [vmem:[#allocation8 + $0x1520] sm:$0xff]
    %v1296 = vld [vmem:[#allocation8 + $0x1528] sm:$0xff]
    %v1297 = vld [vmem:[#allocation8 + $0x1530] sm:$0xff]
    %v1298 = vld [vmem:[#allocation8 + $0x1538] sm:$0xff]
    %v1299 = vld [vmem:[#allocation8 + $0x1540] sm:$0xff]
    %v1300 = vld [vmem:[#allocation8 + $0x1548] sm:$0xff]
    %v1301 = vld [vmem:[#allocation8 + $0x1550] sm:$0xff]
    %v1302 = vld [vmem:[#allocation8 + $0x1558] sm:$0xff]
    %v1303 = vld [vmem:[#allocation8 + $0x1560] sm:$0xff]
    %v1304 = vld [vmem:[#allocation8 + $0x1568] sm:$0xff]
    %v1305 = vld [vmem:[#allocation8 + $0x1570] sm:$0xff]
    %v1306 = vld [vmem:[#allocation8 + $0x1578] sm:$0xff]
    %v1307 = vld [vmem:[#allocation8 + $0x1580] sm:$0xff]
    %v1308 = vld [vmem:[#allocation8 + $0x1588] sm:$0xff]
    %v1309 = vld [vmem:[#allocation8 + $0x1590] sm:$0xff]
    %v1310 = vld [vmem:[#allocation8 + $0x1598] sm:$0xff]
    %v1311 = vld [vmem:[#allocation8 + $0x15a0] sm:$0xff]
    %v1312 = vld [vmem:[#allocation8 + $0x15a8] sm:$0xff]
    %v1313 = vld [vmem:[#allocation8 + $0x15b0] sm:$0xff]
    %v1314 = vld [vmem:[#allocation8 + $0x15b8] sm:$0xff]
    %v1315 = vld [vmem:[#allocation8 + $0x15c0] sm:$0xff]
    %v1316 = vld [vmem:[#allocation8 + $0x15c8] sm:$0xff]
    %v1317 = vld [vmem:[#allocation8 + $0x15d0] sm:$0xff]
    %v1318 = vld [vmem:[#allocation8 + $0x15d8] sm:$0xff]
    %v1319 = vld [vmem:[#allocation8 + $0x15e0] sm:$0xff]
    %v1320 = vld [vmem:[#allocation8 + $0x15e8] sm:$0xff]
    %v1321 = vld [vmem:[#allocation8 + $0x15f0] sm:$0xff]
    %v1322 = vld [vmem:[#allocation8 + $0x15f8] sm:$0xff]
    %v1323 = vld [vmem:[#allocation8 + $0x1600] sm:$0xff]
    %v1324 = vld [vmem:[#allocation8 + $0x1608] sm:$0xff]
    %v1325 = vld [vmem:[#allocation8 + $0x1610] sm:$0xff]
    %v1326 = vld [vmem:[#allocation8 + $0x1618] sm:$0xff]
    %v1327 = vld [vmem:[#allocation8 + $0x1620] sm:$0xff]
    %v1328 = vld [vmem:[#allocation8 + $0x1628] sm:$0xff]
    %v1329 = vld [vmem:[#allocation8 + $0x1630] sm:$0xff]
    %v1330 = vld [vmem:[#allocation8 + $0x1638] sm:$0xff]
    %v1331 = vld [vmem:[#allocation8 + $0x1640] sm:$0xff]
    %v1332 = vld [vmem:[#allocation8 + $0x1648] sm:$0xff]
    %v1333 = vld [vmem:[#allocation8 + $0x1650] sm:$0xff]
    %v1334 = vld [vmem:[#allocation8 + $0x1658] sm:$0xff]
    %v1335 = vld [vmem:[#allocation8 + $0x1660] sm:$0xff]
    %v1336 = vld [vmem:[#allocation8 + $0x1668] sm:$0xff]
    %v1337 = vld [vmem:[#allocation8 + $0x1670] sm:$0xff]
    %v1338 = vld [vmem:[#allocation8 + $0x1678] sm:$0xff]
    %v1339 = vld [vmem:[#allocation8 + $0x1680] sm:$0xff]
    %v1340 = vld [vmem:[#allocation8 + $0x1688] sm:$0xff]
    %v1341 = vld [vmem:[#allocation8 + $0x1690] sm:$0xff]
    %v1342 = vld [vmem:[#allocation8 + $0x1698] sm:$0xff]
    %v1343 = vld [vmem:[#allocation8 + $0x16a0] sm:$0xff]
    %v1344 = vld [vmem:[#allocation8 + $0x16a8] sm:$0xff]
    %v1345 = vld [vmem:[#allocation8 + $0x16b0] sm:$0xff]
    %v1346 = vld [vmem:[#allocation8 + $0x16b8] sm:$0xff]
    %v1347 = vld [vmem:[#allocation8 + $0x16c0] sm:$0xff]
    %v1348 = vld [vmem:[#allocation8 + $0x16c8] sm:$0xff]
    %v1349 = vld [vmem:[#allocation8 + $0x16d0] sm:$0xff]
    %v1350 = vld [vmem:[#allocation8 + $0x16d8] sm:$0xff]
    %v1351 = vld [vmem:[#allocation8 + $0x16e0] sm:$0xff]
    %v1352 = vld [vmem:[#allocation8 + $0x16e8] sm:$0xff]
    %v1353 = vld [vmem:[#allocation8 + $0x16f0] sm:$0xff]
    %v1354 = vld [vmem:[#allocation8 + $0x16f8] sm:$0xff]
    %v1355 = vld [vmem:[#allocation8 + $0x1700] sm:$0xff]
    %v1356 = vld [vmem:[#allocation8 + $0x1708] sm:$0xff]
    %v1357 = vld [vmem:[#allocation8 + $0x1710] sm:$0xff]
    %v1358 = vld [vmem:[#allocation8 + $0x1718] sm:$0xff]
    %v1359 = vld [vmem:[#allocation8 + $0x1720] sm:$0xff]
    %v1360 = vld [vmem:[#allocation8 + $0x1728] sm:$0xff]
    %v1361 = vld [vmem:[#allocation8 + $0x1730] sm:$0xff]
    %v1362 = vld [vmem:[#allocation8 + $0x1738] sm:$0xff]
    %v1363 = vld [vmem:[#allocation8 + $0x1740] sm:$0xff]
    %v1364 = vld [vmem:[#allocation8 + $0x1748] sm:$0xff]
    %v1365 = vld [vmem:[#allocation8 + $0x1750] sm:$0xff]
    %v1366 = vld [vmem:[#allocation8 + $0x1758] sm:$0xff]
    %v1367 = vld [vmem:[#allocation8 + $0x1760] sm:$0xff]
    %v1368 = vld [vmem:[#allocation8 + $0x1768] sm:$0xff]
    %v1369 = vld [vmem:[#allocation8 + $0x1770] sm:$0xff]
    %v1370 = vld [vmem:[#allocation8 + $0x1778] sm:$0xff]
    %v1371 = vld [vmem:[#allocation8 + $0x1780] sm:$0xff]
    %v1372 = vld [vmem:[#allocation8 + $0x1788] sm:$0xff]
    %v1373 = vld [vmem:[#allocation8 + $0x1790] sm:$0xff]
    %v1374 = vld [vmem:[#allocation8 + $0x1798] sm:$0xff]
    %v1375 = vld [vmem:[#allocation8 + $0x17a0] sm:$0xff]
    %v1376 = vld [vmem:[#allocation8 + $0x17a8] sm:$0xff]
    %v1377 = vld [vmem:[#allocation8 + $0x17b0] sm:$0xff]
    %v1378 = vld [vmem:[#allocation8 + $0x17b8] sm:$0xff]
    %v1379 = vld [vmem:[#allocation8 + $0x17c0] sm:$0xff]
    %v1380 = vld [vmem:[#allocation8 + $0x17c8] sm:$0xff]
    %v1381 = vld [vmem:[#allocation8 + $0x17d0] sm:$0xff]
    %v1382 = vld [vmem:[#allocation8 + $0x17d8] sm:$0xff]
    %v1383 = vld [vmem:[#allocation8 + $0x17e0] sm:$0xff]
    %v1384 = vld [vmem:[#allocation8 + $0x17e8] sm:$0xff]
    %v1385 = vld [vmem:[#allocation8 + $0x17f0] sm:$0xff]
    %v1386 = vld [vmem:[#allocation8 + $0x17f8] sm:$0xff]
    %v1387 = vld [vmem:[#allocation8 + $0x1800] sm:$0xff]
    %v1388 = vld [vmem:[#allocation8 + $0x1808] sm:$0xff]
    %v1389 = vld [vmem:[#allocation8 + $0x1810] sm:$0xff]
    %v1390 = vld [vmem:[#allocation8 + $0x1818] sm:$0xff]
    %v1391 = vld [vmem:[#allocation8 + $0x1820] sm:$0xff]
    %v1392 = vld [vmem:[#allocation8 + $0x1828] sm:$0xff]
    %v1393 = vld [vmem:[#allocation8 + $0x1830] sm:$0xff]
    %v1394 = vld [vmem:[#allocation8 + $0x1838] sm:$0xff]
    %v1395 = vld [vmem:[#allocation8 + $0x1840] sm:$0xff]
    %v1396 = vld [vmem:[#allocation8 + $0x1848] sm:$0xff]
    %v1397 = vld [vmem:[#allocation8 + $0x1850] sm:$0xff]
    %v1398 = vld [vmem:[#allocation8 + $0x1858] sm:$0xff]
    %v1399 = vld [vmem:[#allocation8 + $0x1860] sm:$0xff]
    %v1400 = vld [vmem:[#allocation8 + $0x1868] sm:$0xff]
    %v1401 = vld [vmem:[#allocation8 + $0x1870] sm:$0xff]
    %v1402 = vld [vmem:[#allocation8 + $0x1878] sm:$0xff]
    %v1403 = vld [vmem:[#allocation8 + $0x1880] sm:$0xff]
    %v1404 = vld [vmem:[#allocation8 + $0x1888] sm:$0xff]
    %v1405 = vld [vmem:[#allocation8 + $0x1890] sm:$0xff]
    %v1406 = vld [vmem:[#allocation8 + $0x1898] sm:$0xff]
    %v1407 = vld [vmem:[#allocation8 + $0x18a0] sm:$0xff]
    %v1408 = vld [vmem:[#allocation8 + $0x18a8] sm:$0xff]
    %v1409 = vld [vmem:[#allocation8 + $0x18b0] sm:$0xff]
    %v1410 = vld [vmem:[#allocation8 + $0x18b8] sm:$0xff]
    %v1411 = vld [vmem:[#allocation8 + $0x18c0] sm:$0xff]
    %v1412 = vld [vmem:[#allocation8 + $0x18c8] sm:$0xff]
    %v1413 = vld [vmem:[#allocation8 + $0x18d0] sm:$0xff]
    %v1414 = vld [vmem:[#allocation8 + $0x18d8] sm:$0xff]
    %v1415 = vld [vmem:[#allocation8 + $0x18e0] sm:$0xff]
    %v1416 = vld [vmem:[#allocation8 + $0x18e8] sm:$0xff]
    %v1417 = vld [vmem:[#allocation8 + $0x18f0] sm:$0xff]
    %v1418 = vld [vmem:[#allocation8 + $0x18f8] sm:$0xff]
    %v1419 = vld [vmem:[#allocation8 + $0x1900] sm:$0xff]
    %v1420 = vld [vmem:[#allocation8 + $0x1908] sm:$0xff]
    %v1421 = vld [vmem:[#allocation8 + $0x1910] sm:$0xff]
    %v1422 = vld [vmem:[#allocation8 + $0x1918] sm:$0xff]
    %v1423 = vld [vmem:[#allocation8 + $0x1920] sm:$0xff]
    %v1424 = vld [vmem:[#allocation8 + $0x1928] sm:$0xff]
    %v1425 = vld [vmem:[#allocation8 + $0x1930] sm:$0xff]
    %v1426 = vld [vmem:[#allocation8 + $0x1938] sm:$0xff]
    %v1427 = vld [vmem:[#allocation8 + $0x1940] sm:$0xff]
    %v1428 = vld [vmem:[#allocation8 + $0x1948] sm:$0xff]
    %v1429 = vld [vmem:[#allocation8 + $0x1950] sm:$0xff]
    %v1430 = vld [vmem:[#allocation8 + $0x1958] sm:$0xff]
    %v1431 = vld [vmem:[#allocation8 + $0x1960] sm:$0xff]
    %v1432 = vld [vmem:[#allocation8 + $0x1968] sm:$0xff]
    %v1433 = vld [vmem:[#allocation8 + $0x1970] sm:$0xff]
    %v1434 = vld [vmem:[#allocation8 + $0x1978] sm:$0xff]
    %v1435 = vld [vmem:[#allocation8 + $0x1980] sm:$0xff]
    %v1436 = vld [vmem:[#allocation8 + $0x1988] sm:$0xff]
    %v1437 = vld [vmem:[#allocation8 + $0x1990] sm:$0xff]
    %v1438 = vld [vmem:[#allocation8 + $0x1998] sm:$0xff]
    %v1439 = vld [vmem:[#allocation8 + $0x19a0] sm:$0xff]
    %v1440 = vld [vmem:[#allocation8 + $0x19a8] sm:$0xff]
    %v1441 = vld [vmem:[#allocation8 + $0x19b0] sm:$0xff]
    %v1442 = vld [vmem:[#allocation8 + $0x19b8] sm:$0xff]
    %v1443 = vld [vmem:[#allocation8 + $0x19c0] sm:$0xff]
    %v1444 = vld [vmem:[#allocation8 + $0x19c8] sm:$0xff]
    %v1445 = vld [vmem:[#allocation8 + $0x19d0] sm:$0xff]
    %v1446 = vld [vmem:[#allocation8 + $0x19d8] sm:$0xff]
    %v1447 = vld [vmem:[#allocation8 + $0x19e0] sm:$0xff]
    %v1448 = vld [vmem:[#allocation8 + $0x19e8] sm:$0xff]
    %v1449 = vld [vmem:[#allocation8 + $0x19f0] sm:$0xff]
    %v1450 = vld [vmem:[#allocation8 + $0x19f8] sm:$0xff]
    %v1451 = vld [vmem:[#allocation8 + $0x1a00] sm:$0xff]
    %v1452 = vld [vmem:[#allocation8 + $0x1a08] sm:$0xff]
    %v1453 = vld [vmem:[#allocation8 + $0x1a10] sm:$0xff]
    %v1454 = vld [vmem:[#allocation8 + $0x1a18] sm:$0xff]
    %v1455 = vld [vmem:[#allocation8 + $0x1a20] sm:$0xff]
    %v1456 = vld [vmem:[#allocation8 + $0x1a28] sm:$0xff]
    %v1457 = vld [vmem:[#allocation8 + $0x1a30] sm:$0xff]
    %v1458 = vld [vmem:[#allocation8 + $0x1a38] sm:$0xff]
    %v1459 = vld [vmem:[#allocation8 + $0x1a40] sm:$0xff]
    %v1460 = vld [vmem:[#allocation8 + $0x1a48] sm:$0xff]
    %v1461 = vld [vmem:[#allocation8 + $0x1a50] sm:$0xff]
    %v1462 = vld [vmem:[#allocation8 + $0x1a58] sm:$0xff]
    %v1463 = vld [vmem:[#allocation8 + $0x1a60] sm:$0xff]
    %v1464 = vld [vmem:[#allocation8 + $0x1a68] sm:$0xff]
    %v1465 = vld [vmem:[#allocation8 + $0x1a70] sm:$0xff]
    %v1466 = vld [vmem:[#allocation8 + $0x1a78] sm:$0xff]
    %v1467 = vld [vmem:[#allocation8 + $0x1a80] sm:$0xff]
    %v1468 = vld [vmem:[#allocation8 + $0x1a88] sm:$0xff]
    %v1469 = vld [vmem:[#allocation8 + $0x1a90] sm:$0xff]
    %v1470 = vld [vmem:[#allocation8 + $0x1a98] sm:$0xff]
    %v1471 = vld [vmem:[#allocation8 + $0x1aa0] sm:$0xff]
    %v1472 = vld [vmem:[#allocation8 + $0x1aa8] sm:$0xff]
    %v1473 = vld [vmem:[#allocation8 + $0x1ab0] sm:$0xff]
    %v1474 = vld [vmem:[#allocation8 + $0x1ab8] sm:$0xff]
    %v1475 = vld [vmem:[#allocation8 + $0x1ac0] sm:$0xff]
    %v1476 = vld [vmem:[#allocation8 + $0x1ac8] sm:$0xff]
    %v1477 = vld [vmem:[#allocation8 + $0x1ad0] sm:$0xff]
    %v1478 = vld [vmem:[#allocation8 + $0x1ad8] sm:$0xff]
    %v1479 = vld [vmem:[#allocation8 + $0x1ae0] sm:$0xff]
    %v1480 = vld [vmem:[#allocation8 + $0x1ae8] sm:$0xff]
    %v1481 = vld [vmem:[#allocation8 + $0x1af0] sm:$0xff]
    %v1482 = vld [vmem:[#allocation8 + $0x1af8] sm:$0xff]
    %v1483 = vld [vmem:[#allocation8 + $0x1b00] sm:$0xff]
    %v1484 = vld [vmem:[#allocation8 + $0x1b08] sm:$0xff]
    %v1485 = vld [vmem:[#allocation8 + $0x1b10] sm:$0xff]
    %v1486 = vld [vmem:[#allocation8 + $0x1b18] sm:$0xff]
    %v1487 = vld [vmem:[#allocation8 + $0x1b20] sm:$0xff]
    %v1488 = vld [vmem:[#allocation8 + $0x1b28] sm:$0xff]
    %v1489 = vld [vmem:[#allocation8 + $0x1b30] sm:$0xff]
    %v1490 = vld [vmem:[#allocation8 + $0x1b38] sm:$0xff]
    %v1491 = vld [vmem:[#allocation8 + $0x1b40] sm:$0xff]
    %v1492 = vld [vmem:[#allocation8 + $0x1b48] sm:$0xff]
    %v1493 = vld [vmem:[#allocation8 + $0x1b50] sm:$0xff]
    %v1494 = vld [vmem:[#allocation8 + $0x1b58] sm:$0xff]
    %v1495 = vld [vmem:[#allocation8 + $0x1b60] sm:$0xff]
    %v1496 = vld [vmem:[#allocation8 + $0x1b68] sm:$0xff]
    %v1497 = vld [vmem:[#allocation8 + $0x1b70] sm:$0xff]
    %v1498 = vld [vmem:[#allocation8 + $0x1b78] sm:$0xff]
    %v1499 = vld [vmem:[#allocation8 + $0x1b80] sm:$0xff]
    %v1500 = vld [vmem:[#allocation8 + $0x1b88] sm:$0xff]
    %v1501 = vld [vmem:[#allocation8 + $0x1b90] sm:$0xff]
    %v1502 = vld [vmem:[#allocation8 + $0x1b98] sm:$0xff]
    %v1503 = vld [vmem:[#allocation8 + $0x1ba0] sm:$0xff]
    %v1504 = vld [vmem:[#allocation8 + $0x1ba8] sm:$0xff]
    %v1505 = vld [vmem:[#allocation8 + $0x1bb0] sm:$0xff]
    %v1506 = vld [vmem:[#allocation8 + $0x1bb8] sm:$0xff]
    %v1507 = vld [vmem:[#allocation8 + $0x1bc0] sm:$0xff]
    %v1508 = vld [vmem:[#allocation8 + $0x1bc8] sm:$0xff]
    %v1509 = vld [vmem:[#allocation8 + $0x1bd0] sm:$0xff]
    %v1510 = vld [vmem:[#allocation8 + $0x1bd8] sm:$0xff]
    %v1511 = vld [vmem:[#allocation8 + $0x1be0] sm:$0xff]
    %v1512 = vld [vmem:[#allocation8 + $0x1be8] sm:$0xff]
    %v1513 = vld [vmem:[#allocation8 + $0x1bf0] sm:$0xff]
    %v1514 = vld [vmem:[#allocation8 + $0x1bf8] sm:$0xff]
    %v1515 = vld [vmem:[#allocation8 + $0x1c00] sm:$0xff]
    %v1516 = vld [vmem:[#allocation8 + $0x1c08] sm:$0xff]
    %v1517 = vld [vmem:[#allocation8 + $0x1c10] sm:$0xff]
    %v1518 = vld [vmem:[#allocation8 + $0x1c18] sm:$0xff]
    %v1519 = vld [vmem:[#allocation8 + $0x1c20] sm:$0xff]
    %v1520 = vld [vmem:[#allocation8 + $0x1c28] sm:$0xff]
    %v1521 = vld [vmem:[#allocation8 + $0x1c30] sm:$0xff]
    %v1522 = vld [vmem:[#allocation8 + $0x1c38] sm:$0xff]
    %v1523 = vld [vmem:[#allocation8 + $0x1c40] sm:$0xff]
    %v1524 = vld [vmem:[#allocation8 + $0x1c48] sm:$0xff]
    %v1525 = vld [vmem:[#allocation8 + $0x1c50] sm:$0xff]
    %v1526 = vld [vmem:[#allocation8 + $0x1c58] sm:$0xff]
    %v1527 = vld [vmem:[#allocation8 + $0x1c60] sm:$0xff]
    %v1528 = vld [vmem:[#allocation8 + $0x1c68] sm:$0xff]
    %v1529 = vld [vmem:[#allocation8 + $0x1c70] sm:$0xff]
    %v1530 = vld [vmem:[#allocation8 + $0x1c78] sm:$0xff]
    %v1531 = vld [vmem:[#allocation8 + $0x1c80] sm:$0xff]
    %v1532 = vld [vmem:[#allocation8 + $0x1c88] sm:$0xff]
    %v1533 = vld [vmem:[#allocation8 + $0x1c90] sm:$0xff]
    %v1534 = vld [vmem:[#allocation8 + $0x1c98] sm:$0xff]
    %v1535 = vld [vmem:[#allocation8 + $0x1ca0] sm:$0xff]
    %v1536 = vld [vmem:[#allocation8 + $0x1ca8] sm:$0xff]
    %v1537 = vld [vmem:[#allocation8 + $0x1cb0] sm:$0xff]
    %v1538 = vld [vmem:[#allocation8 + $0x1cb8] sm:$0xff]
    %v1539 = vld [vmem:[#allocation8 + $0x1cc0] sm:$0xff]
    %v1540 = vld [vmem:[#allocation8 + $0x1cc8] sm:$0xff]
    %v1541 = vld [vmem:[#allocation8 + $0x1cd0] sm:$0xff]
    %v1542 = vld [vmem:[#allocation8 + $0x1cd8] sm:$0xff]
    %v1543 = vld [vmem:[#allocation8 + $0x1ce0] sm:$0xff]
    %v1544 = vld [vmem:[#allocation8 + $0x1ce8] sm:$0xff]
    %v1545 = vld [vmem:[#allocation8 + $0x1cf0] sm:$0xff]
    %v1546 = vld [vmem:[#allocation8 + $0x1cf8] sm:$0xff]
    %v1547 = vld [vmem:[#allocation8 + $0x1d00] sm:$0xff]
    %v1548 = vld [vmem:[#allocation8 + $0x1d08] sm:$0xff]
    %v1549 = vld [vmem:[#allocation8 + $0x1d10] sm:$0xff]
    %v1550 = vld [vmem:[#allocation8 + $0x1d18] sm:$0xff]
    %v1551 = vld [vmem:[#allocation8 + $0x1d20] sm:$0xff]
    %v1552 = vld [vmem:[#allocation8 + $0x1d28] sm:$0xff]
    %v1553 = vld [vmem:[#allocation8 + $0x1d30] sm:$0xff]
    %v1554 = vld [vmem:[#allocation8 + $0x1d38] sm:$0xff]
    %v1555 = vld [vmem:[#allocation8 + $0x1d40] sm:$0xff]
    %v1556 = vld [vmem:[#allocation8 + $0x1d48] sm:$0xff]
    %v1557 = vld [vmem:[#allocation8 + $0x1d50] sm:$0xff]
    %v1558 = vld [vmem:[#allocation8 + $0x1d58] sm:$0xff]
    %v1559 = vld [vmem:[#allocation8 + $0x1d60] sm:$0xff]
    %v1560 = vld [vmem:[#allocation8 + $0x1d68] sm:$0xff]
    %v1561 = vld [vmem:[#allocation8 + $0x1d70] sm:$0xff]
    %v1562 = vld [vmem:[#allocation8 + $0x1d78] sm:$0xff]
    %v1563 = vld [vmem:[#allocation8 + $0x1d80] sm:$0xff]
    %v1564 = vld [vmem:[#allocation8 + $0x1d88] sm:$0xff]
    %v1565 = vld [vmem:[#allocation8 + $0x1d90] sm:$0xff]
    %v1566 = vld [vmem:[#allocation8 + $0x1d98] sm:$0xff]
    %v1567 = vld [vmem:[#allocation8 + $0x1da0] sm:$0xff]
    %v1568 = vld [vmem:[#allocation8 + $0x1da8] sm:$0xff]
    %v1569 = vld [vmem:[#allocation8 + $0x1db0] sm:$0xff]
    %v1570 = vld [vmem:[#allocation8 + $0x1db8] sm:$0xff]
    %v1571 = vld [vmem:[#allocation8 + $0x1dc0] sm:$0xff]
    %v1572 = vld [vmem:[#allocation8 + $0x1dc8] sm:$0xff]
    %v1573 = vld [vmem:[#allocation8 + $0x1dd0] sm:$0xff]
    %v1574 = vld [vmem:[#allocation8 + $0x1dd8] sm:$0xff]
    %v1575 = vld [vmem:[#allocation8 + $0x1de0] sm:$0xff]
    %v1576 = vld [vmem:[#allocation8 + $0x1de8] sm:$0xff]
    %v1577 = vld [vmem:[#allocation8 + $0x1df0] sm:$0xff]
    %v1578 = vld [vmem:[#allocation8 + $0x1df8] sm:$0xff]
    %v1579 = vld [vmem:[#allocation8 + $0x1e00] sm:$0xff]
    %v1580 = vld [vmem:[#allocation8 + $0x1e08] sm:$0xff]
    %v1581 = vld [vmem:[#allocation8 + $0x1e10] sm:$0xff]
    %v1582 = vld [vmem:[#allocation8 + $0x1e18] sm:$0xff]
    %v1583 = vld [vmem:[#allocation8 + $0x1e20] sm:$0xff]
    %v1584 = vld [vmem:[#allocation8 + $0x1e28] sm:$0xff]
    %v1585 = vld [vmem:[#allocation8 + $0x1e30] sm:$0xff]
    %v1586 = vld [vmem:[#allocation8 + $0x1e38] sm:$0xff]
    %v1587 = vld [vmem:[#allocation8 + $0x1e40] sm:$0xff]
    %v1588 = vld [vmem:[#allocation8 + $0x1e48] sm:$0xff]
    %v1589 = vld [vmem:[#allocation8 + $0x1e50] sm:$0xff]
    %v1590 = vld [vmem:[#allocation8 + $0x1e58] sm:$0xff]
    %v1591 = vld [vmem:[#allocation8 + $0x1e60] sm:$0xff]
    %v1592 = vld [vmem:[#allocation8 + $0x1e68] sm:$0xff]
    %v1593 = vld [vmem:[#allocation8 + $0x1e70] sm:$0xff]
    %v1594 = vld [vmem:[#allocation8 + $0x1e78] sm:$0xff]
    %v1595 = vld [vmem:[#allocation8 + $0x1e80] sm:$0xff]
    %v1596 = vld [vmem:[#allocation8 + $0x1e88] sm:$0xff]
    %v1597 = vld [vmem:[#allocation8 + $0x1e90] sm:$0xff]
    %v1598 = vld [vmem:[#allocation8 + $0x1e98] sm:$0xff]
    %v1599 = vld [vmem:[#allocation8 + $0x1ea0] sm:$0xff]
    %v1600 = vld [vmem:[#allocation8 + $0x1ea8] sm:$0xff]
    %v1601 = vld [vmem:[#allocation8 + $0x1eb0] sm:$0xff]
    %v1602 = vld [vmem:[#allocation8 + $0x1eb8] sm:$0xff]
    %v1603 = vld [vmem:[#allocation8 + $0x1ec0] sm:$0xff]
    %v1604 = vld [vmem:[#allocation8 + $0x1ec8] sm:$0xff]
    %v1605 = vld [vmem:[#allocation8 + $0x1ed0] sm:$0xff]
    %v1606 = vld [vmem:[#allocation8 + $0x1ed8] sm:$0xff]
    %v1607 = vld [vmem:[#allocation8 + $0x1ee0] sm:$0xff]
    %v1608 = vld [vmem:[#allocation8 + $0x1ee8] sm:$0xff]
    %v1609 = vld [vmem:[#allocation8 + $0x1ef0] sm:$0xff]
    %v1610 = vld [vmem:[#allocation8 + $0x1ef8] sm:$0xff]
    %v1611 = vld [vmem:[#allocation8 + $0x1f00] sm:$0xff]
    %v1612 = vld [vmem:[#allocation8 + $0x1f08] sm:$0xff]
    %v1613 = vld [vmem:[#allocation8 + $0x1f10] sm:$0xff]
    %v1614 = vld [vmem:[#allocation8 + $0x1f18] sm:$0xff]
    %v1615 = vld [vmem:[#allocation8 + $0x1f20] sm:$0xff]
    %v1616 = vld [vmem:[#allocation8 + $0x1f28] sm:$0xff]
    %v1617 = vld [vmem:[#allocation8 + $0x1f30] sm:$0xff]
    %v1618 = vld [vmem:[#allocation8 + $0x1f38] sm:$0xff]
    %v1619 = vld [vmem:[#allocation8 + $0x1f40] sm:$0xff]
    %v1620 = vld [vmem:[#allocation8 + $0x1f48] sm:$0xff]
    %v1621 = vld [vmem:[#allocation8 + $0x1f50] sm:$0xff]
    %v1622 = vld [vmem:[#allocation8 + $0x1f58] sm:$0xff]
    %v1623 = vld [vmem:[#allocation8 + $0x1f60] sm:$0xff]
    %v1624 = vld [vmem:[#allocation8 + $0x1f68] sm:$0xff]
    %v1625 = vld [vmem:[#allocation8 + $0x1f70] sm:$0xff]
    %v1626 = vld [vmem:[#allocation8 + $0x1f78] sm:$0xff]
    %v1627 = vld [vmem:[#allocation8 + $0x1f80] sm:$0xff]
    %v1628 = vld [vmem:[#allocation8 + $0x1f88] sm:$0xff]
    %v1629 = vld [vmem:[#allocation8 + $0x1f90] sm:$0xff]
    %v1630 = vld [vmem:[#allocation8 + $0x1f98] sm:$0xff]
    %v1631 = vld [vmem:[#allocation8 + $0x1fa0] sm:$0xff]
    %v1632 = vld [vmem:[#allocation8 + $0x1fa8] sm:$0xff]
    %v1633 = vld [vmem:[#allocation8 + $0x1fb0] sm:$0xff]
    %v1634 = vld [vmem:[#allocation8 + $0x1fb8] sm:$0xff]
    %v1635 = vld [vmem:[#allocation8 + $0x1fc0] sm:$0xff]
    %v1636 = vld [vmem:[#allocation8 + $0x1fc8] sm:$0xff]
    %v1637 = vld [vmem:[#allocation8 + $0x1fd0] sm:$0xff]
    %v1638 = vld [vmem:[#allocation8 + $0x1fd8] sm:$0xff]
    %v1639 = vld [vmem:[#allocation8 + $0x1fe0] sm:$0xff]
    %v1640 = vld [vmem:[#allocation8 + $0x1fe8] sm:$0xff]
    %v1641 = vld [vmem:[#allocation8 + $0x1ff0] sm:$0xff]
    %v1642 = vld [vmem:[#allocation8 + $0x1ff8] sm:$0xff]
    %v1643 = vld [vmem:[#allocation10] sm:$0xff]
    %v1645 = vlaneseq
    %v1646 = vshrl.u32 %v1645, 7
    %v1647 = vsub.s32 0, %v1646
    %v1648 = vrot.slane %v1643, %v1647
    %v1649 = vlaneseq
    %v1650 = vshrl.u32 %v1649, 7
    %v1651 = vsub.s32 1, %v1650
    %v1652 = vrot.slane %v1643, %v1651
    %v1653 = vlaneseq
    %v1654 = vshrl.u32 %v1653, 7
    %v1655 = vsub.s32 2, %v1654
    %v1656 = vrot.slane %v1643, %v1655
    %v1657 = vlaneseq
    %v1658 = vshrl.u32 %v1657, 7
    %v1659 = vsub.s32 3, %v1658
    %v1660 = vrot.slane %v1643, %v1659
    %v1661 = vlaneseq
    %v1662 = vshrl.u32 %v1661, 7
    %v1663 = vsub.s32 4, %v1662
    %v1664 = vrot.slane %v1643, %v1663
    %v1665 = vlaneseq
    %v1666 = vshrl.u32 %v1665, 7
    %v1667 = vsub.s32 5, %v1666
    %v1668 = vrot.slane %v1643, %v1667
    %v1669 = vlaneseq
    %v1670 = vshrl.u32 %v1669, 7
    %v1671 = vsub.s32 6, %v1670
    %v1672 = vrot.slane %v1643, %v1671
    %v1673 = vlaneseq
    %v1674 = vshrl.u32 %v1673, 7
    %v1675 = vsub.s32 7, %v1674
    %v1676 = vrot.slane %v1643, %v1675
    %1685 = vmatprep.subr.mxu0 %v620
    %1686 = vmatpush1.msra.mxu0 %v619
    %1687 = vmatprep.subr.mxu0 %v628
    %1688 = vmatpush1.msra.mxu0 %v627
    %1689 = vmatprep.subr.mxu0 %v636
    %1690 = vmatpush1.msra.mxu0 %v635
    %1691 = vmatprep.subr.mxu0 %v644
    %1692 = vmatpush1.msra.mxu0 %v643
    %1693 = vmatprep.subr.mxu0 %v652
    %1694 = vmatpush1.msra.mxu0 %v651
    %1695 = vmatprep.subr.mxu0 %v660
    %1696 = vmatpush1.msra.mxu0 %v659
    %1697 = vmatprep.subr.mxu0 %v668
    %1698 = vmatpush1.msra.mxu0 %v667
    %1699 = vmatprep.subr.mxu0 %v676
    %1700 = vmatpush1.msra.mxu0 %v675
    %1701 = vmatprep.subr.mxu0 %v684
    %1702 = vmatpush1.msra.mxu0 %v683
    %1703 = vmatprep.subr.mxu0 %v692
    %1704 = vmatpush1.msra.mxu0 %v691
    %1705 = vmatprep.subr.mxu0 %v700
    %1706 = vmatpush1.msra.mxu0 %v699
    %1707 = vmatprep.subr.mxu0 %v708
    %1708 = vmatpush1.msra.mxu0 %v707
    %1709 = vmatprep.subr.mxu0 %v716
    %1710 = vmatpush1.msra.mxu0 %v715
    %1711 = vmatprep.subr.mxu0 %v724
    %1712 = vmatpush1.msra.mxu0 %v723
    %1713 = vmatprep.subr.mxu0 %v732
    %1714 = vmatpush1.msra.mxu0 %v731
    %1715 = vmatprep.subr.mxu0 %v740
    %1716 = vmatpush1.msra.mxu0 %v739
    %1717 = vmatprep.subr.mxu0 %v748
    %1718 = vmatpush1.msra.mxu0 %v747
    %1719 = vmatprep.subr.mxu0 %v756
    %1720 = vmatpush1.msra.mxu0 %v755
    %1721 = vmatprep.subr.mxu0 %v764
    %1722 = vmatpush1.msra.mxu0 %v763
    %1723 = vmatprep.subr.mxu0 %v772
    %1724 = vmatpush1.msra.mxu0 %v771
    %1725 = vmatprep.subr.mxu0 %v780
    %1726 = vmatpush1.msra.mxu0 %v779
    %1727 = vmatprep.subr.mxu0 %v788
    %1728 = vmatpush1.msra.mxu0 %v787
    %1729 = vmatprep.subr.mxu0 %v796
    %1730 = vmatpush1.msra.mxu0 %v795
    %1731 = vmatprep.subr.mxu0 %v804
    %1732 = vmatpush1.msra.mxu0 %v803
    %1733 = vmatprep.subr.mxu0 %v812
    %1734 = vmatpush1.msra.mxu0 %v811
    %1735 = vmatprep.subr.mxu0 %v820
    %1736 = vmatpush1.msra.mxu0 %v819
    %1737 = vmatprep.subr.mxu0 %v828
    %1738 = vmatpush1.msra.mxu0 %v827
    %1739 = vmatprep.subr.mxu0 %v836
    %1740 = vmatpush1.msra.mxu0 %v835
    %1741 = vmatprep.subr.mxu0 %v844
    %1742 = vmatpush1.msra.mxu0 %v843
    %1743 = vmatprep.subr.mxu0 %v852
    %1744 = vmatpush1.msra.mxu0 %v851
    %1745 = vmatprep.subr.mxu0 %v860
    %1746 = vmatpush1.msra.mxu0 %v859
    %1747 = vmatprep.subr.mxu0 %v868
    %1748 = vmatpush1.msra.mxu0 %v867
    %1749 = vmatprep.mubr.f32.mxu0 %v604
    %1750 = vmatmul.mubr.f32.gmra.mrb[0].mxu0 %v603
    %v1751 = vpop.f32.mrb[0].mxu0
    %v1752 = vadd.f32 %v1648, %v1751
    %v1753 = vpop.f32.mrb[0].mxu0
    %v1754 = vadd.f32 %v1652, %v1753
    %1755 = vmatprep.mubr.f32.mxu0 %v612
    %1756 = vmatmul.mubr.f32.gmra.mrb[0].mxu0 %v611
    %v1757 = vpop.f32.mrb[0].mxu0
    %v1758 = vadd.f32 %v1648, %v1757
    %v1759 = vpop.f32.mrb[0].mxu0
    %v1760 = vadd.f32 %v1652, %v1759
    %1761 = vdwg.mxu0
    %1762 = vmatprep.subr.mxu0 %v876
    %1763 = vmatpush1.msra.mxu0 %v875
    %1764 = vmatprep.subr.mxu0 %v884
    %1765 = vmatpush1.msra.mxu0 %v883
    %1766 = vmatprep.subr.mxu0 %v892
    %1767 = vmatpush1.msra.mxu0 %v891
    %1768 = vmatprep.subr.mxu0 %v900
    %1769 = vmatpush1.msra.mxu0 %v899
    %1770 = vmatprep.subr.mxu0 %v908
    %1771 = vmatpush1.msra.mxu0 %v907
    %1772 = vmatprep.subr.mxu0 %v916
    %1773 = vmatpush1.msra.mxu0 %v915
    %1774 = vmatprep.subr.mxu0 %v924
    %1775 = vmatpush1.msra.mxu0 %v923
    %1776 = vmatprep.subr.mxu0 %v932
    %1777 = vmatpush1.msra.mxu0 %v931
    %1778 = vmatprep.subr.mxu0 %v940
    %1779 = vmatpush1.msra.mxu0 %v939
    %1780 = vmatprep.subr.mxu0 %v948
    %1781 = vmatpush1.msra.mxu0 %v947
    %1782 = vmatprep.subr.mxu0 %v956
    %1783 = vmatpush1.msra.mxu0 %v955
    %1784 = vmatprep.subr.mxu0 %v964
    %1785 = vmatpush1.msra.mxu0 %v963
    %1786 = vmatprep.subr.mxu0 %v972
    %1787 = vmatpush1.msra.mxu0 %v971
    %1788 = vmatprep.subr.mxu0 %v980
    %1789 = vmatpush1.msra.mxu0 %v979
    %1790 = vmatprep.subr.mxu0 %v988
    %1791 = vmatpush1.msra.mxu0 %v987
    %1792 = vmatprep.subr.mxu0 %v996
    %1793 = vmatpush1.msra.mxu0 %v995
    %1794 = vmatprep.subr.mxu0 %v1004
    %1795 = vmatpush1.msra.mxu0 %v1003
    %1796 = vmatprep.subr.mxu0 %v1012
    %1797 = vmatpush1.msra.mxu0 %v1011
    %1798 = vmatprep.subr.mxu0 %v1020
    %1799 = vmatpush1.msra.mxu0 %v1019
    %1800 = vmatprep.subr.mxu0 %v1028
    %1801 = vmatpush1.msra.mxu0 %v1027
    %1802 = vmatprep.subr.mxu0 %v1036
    %1803 = vmatpush1.msra.mxu0 %v1035
    %1804 = vmatprep.subr.mxu0 %v1044
    %1805 = vmatpush1.msra.mxu0 %v1043
    %1806 = vmatprep.subr.mxu0 %v1052
    %1807 = vmatpush1.msra.mxu0 %v1051
    %1808 = vmatprep.subr.mxu0 %v1060
    %1809 = vmatpush1.msra.mxu0 %v1059
    %1810 = vmatprep.subr.mxu0 %v1068
    %1811 = vmatpush1.msra.mxu0 %v1067
    %1812 = vmatprep.subr.mxu0 %v1076
    %1813 = vmatpush1.msra.mxu0 %v1075
    %1814 = vmatprep.subr.mxu0 %v1084
    %1815 = vmatpush1.msra.mxu0 %v1083
    %1816 = vmatprep.subr.mxu0 %v1092
    %1817 = vmatpush1.msra.mxu0 %v1091
    %1818 = vmatprep.subr.mxu0 %v1100
    %1819 = vmatpush1.msra.mxu0 %v1099
    %1820 = vmatprep.subr.mxu0 %v1108
    %1821 = vmatpush1.msra.mxu0 %v1107
    %1822 = vmatprep.subr.mxu0 %v1116
    %1823 = vmatpush1.msra.mxu0 %v1115
    %1824 = vmatprep.subr.mxu0 %v1124
    %1825 = vmatpush1.msra.mxu0 %v1123
    %1826 = vmatprep.mubr.f32.mxu0 %v606
    %1827 = vmatmul.mubr.f32.gmra.mrb[0].mxu0 %v605
    %v1828 = vpop.f32.mrb[0].mxu0
    %v1829 = vadd.f32 %v1752, %v1828
    %v1830 = vpop.f32.mrb[0].mxu0
    %v1831 = vadd.f32 %v1754, %v1830
    %1832 = vmatprep.mubr.f32.mxu0 %v614
    %1833 = vmatmul.mubr.f32.gmra.mrb[0].mxu0 %v613
    %v1834 = vpop.f32.mrb[0].mxu0
    %v1835 = vadd.f32 %v1758, %v1834
    %v1836 = vpop.f32.mrb[0].mxu0
    %v1837 = vadd.f32 %v1760, %v1836
    %1838 = vdwg.mxu0
    %1839 = vmatprep.subr.mxu0 %v1132
    %1840 = vmatpush1.msra.mxu0 %v1131
    %1841 = vmatprep.subr.mxu0 %v1140
    %1842 = vmatpush1.msra.mxu0 %v1139
    %1843 = vmatprep.subr.mxu0 %v1148
    %1844 = vmatpush1.msra.mxu0 %v1147
    %1845 = vmatprep.subr.mxu0 %v1156
    %1846 = vmatpush1.msra.mxu0 %v1155
    %1847 = vmatprep.subr.mxu0 %v1164
    %1848 = vmatpush1.msra.mxu0 %v1163
    %1849 = vmatprep.subr.mxu0 %v1172
    %1850 = vmatpush1.msra.mxu0 %v1171
    %1851 = vmatprep.subr.mxu0 %v1180
    %1852 = vmatpush1.msra.mxu0 %v1179
    %1853 = vmatprep.subr.mxu0 %v1188
    %1854 = vmatpush1.msra.mxu0 %v1187
    %1855 = vmatprep.subr.mxu0 %v1196
    %1856 = vmatpush1.msra.mxu0 %v1195
    %1857 = vmatprep.subr.mxu0 %v1204
    %1858 = vmatpush1.msra.mxu0 %v1203
    %1859 = vmatprep.subr.mxu0 %v1212
    %1860 = vmatpush1.msra.mxu0 %v1211
    %1861 = vmatprep.subr.mxu0 %v1220
    %1862 = vmatpush1.msra.mxu0 %v1219
    %1863 = vmatprep.subr.mxu0 %v1228
    %1864 = vmatpush1.msra.mxu0 %v1227
    %1865 = vmatprep.subr.mxu0 %v1236
    %1866 = vmatpush1.msra.mxu0 %v1235
    %1867 = vmatprep.subr.mxu0 %v1244
    %1868 = vmatpush1.msra.mxu0 %v1243
    %1869 = vmatprep.subr.mxu0 %v1252
    %1870 = vmatpush1.msra.mxu0 %v1251
    %1871 = vmatprep.subr.mxu0 %v1260
    %1872 = vmatpush1.msra.mxu0 %v1259
    %1873 = vmatprep.subr.mxu0 %v1268
    %1874 = vmatpush1.msra.mxu0 %v1267
    %1875 = vmatprep.subr.mxu0 %v1276
    %1876 = vmatpush1.msra.mxu0 %v1275
    %1877 = vmatprep.subr.mxu0 %v1284
    %1878 = vmatpush1.msra.mxu0 %v1283
    %1879 = vmatprep.subr.mxu0 %v1292
    %1880 = vmatpush1.msra.mxu0 %v1291
    %1881 = vmatprep.subr.mxu0 %v1300
    %1882 = vmatpush1.msra.mxu0 %v1299
    %1883 = vmatprep.subr.mxu0 %v1308
    %1884 = vmatpush1.msra.mxu0 %v1307
    %1885 = vmatprep.subr.mxu0 %v1316
    %1886 = vmatpush1.msra.mxu0 %v1315
    %1887 = vmatprep.subr.mxu0 %v1324
    %1888 = vmatpush1.msra.mxu0 %v1323
    %1889 = vmatprep.subr.mxu0 %v1332
    %1890 = vmatpush1.msra.mxu0 %v1331
    %1891 = vmatprep.subr.mxu0 %v1340
    %1892 = vmatpush1.msra.mxu0 %v1339
    %1893 = vmatprep.subr.mxu0 %v1348
    %1894 = vmatpush1.msra.mxu0 %v1347
    %1895 = vmatprep.subr.mxu0 %v1356
    %1896 = vmatpush1.msra.mxu0 %v1355
    %1897 = vmatprep.subr.mxu0 %v1364
    %1898 = vmatpush1.msra.mxu0 %v1363
    %1899 = vmatprep.subr.mxu0 %v1372
    %1900 = vmatpush1.msra.mxu0 %v1371
    %1901 = vmatprep.subr.mxu0 %v1380
    %1902 = vmatpush1.msra.mxu0 %v1379
    %1903 = vmatprep.mubr.f32.mxu0 %v608
    %1904 = vmatmul.mubr.f32.gmra.mrb[0].mxu0 %v607
    %v1905 = vpop.f32.mrb[0].mxu0
    %v1906 = vadd.f32 %v1829, %v1905
    %v1907 = vpop.f32.mrb[0].mxu0
    %v1908 = vadd.f32 %v1831, %v1907
    %1909 = vmatprep.mubr.f32.mxu0 %v616
    %1910 = vmatmul.mubr.f32.gmra.mrb[0].mxu0 %v615
    %v1911 = vpop.f32.mrb[0].mxu0
    %v1912 = vadd.f32 %v1835, %v1911
    %v1913 = vpop.f32.mrb[0].mxu0
    %v1914 = vadd.f32 %v1837, %v1913
    %1915 = vdwg.mxu0
    %1916 = vmatprep.subr.mxu0 %v1388
    %1917 = vmatpush1.msra.mxu0 %v1387
    %1918 = vmatprep.subr.mxu0 %v1396
    %1919 = vmatpush1.msra.mxu0 %v1395
    %1920 = vmatprep.subr.mxu0 %v1404
    %1921 = vmatpush1.msra.mxu0 %v1403
    %1922 = vmatprep.subr.mxu0 %v1412
    %1923 = vmatpush1.msra.mxu0 %v1411
    %1924 = vmatprep.subr.mxu0 %v1420
    %1925 = vmatpush1.msra.mxu0 %v1419
    %1926 = vmatprep.subr.mxu0 %v1428
    %1927 = vmatpush1.msra.mxu0 %v1427
    %1928 = vmatprep.subr.mxu0 %v1436
    %1929 = vmatpush1.msra.mxu0 %v1435
    %1930 = vmatprep.subr.mxu0 %v1444
    %1931 = vmatpush1.msra.mxu0 %v1443
    %1932 = vmatprep.subr.mxu0 %v1452
    %1933 = vmatpush1.msra.mxu0 %v1451
    %1934 = vmatprep.subr.mxu0 %v1460
    %1935 = vmatpush1.msra.mxu0 %v1459
    %1936 = vmatprep.subr.mxu0 %v1468
    %1937 = vmatpush1.msra.mxu0 %v1467
    %1938 = vmatprep.subr.mxu0 %v1476
    %1939 = vmatpush1.msra.mxu0 %v1475
    %1940 = vmatprep.subr.mxu0 %v1484
    %1941 = vmatpush1.msra.mxu0 %v1483
    %1942 = vmatprep.subr.mxu0 %v1492
    %1943 = vmatpush1.msra.mxu0 %v1491
    %1944 = vmatprep.subr.mxu0 %v1500
    %1945 = vmatpush1.msra.mxu0 %v1499
    %1946 = vmatprep.subr.mxu0 %v1508
    %1947 = vmatpush1.msra.mxu0 %v1507
    %1948 = vmatprep.subr.mxu0 %v1516
    %1949 = vmatpush1.msra.mxu0 %v1515
    %1950 = vmatprep.subr.mxu0 %v1524
    %1951 = vmatpush1.msra.mxu0 %v1523
    %1952 = vmatprep.subr.mxu0 %v1532
    %1953 = vmatpush1.msra.mxu0 %v1531
    %1954 = vmatprep.subr.mxu0 %v1540
    %1955 = vmatpush1.msra.mxu0 %v1539
    %1956 = vmatprep.subr.mxu0 %v1548
    %1957 = vmatpush1.msra.mxu0 %v1547
    %1958 = vmatprep.subr.mxu0 %v1556
    %1959 = vmatpush1.msra.mxu0 %v1555
    %1960 = vmatprep.subr.mxu0 %v1564
    %1961 = vmatpush1.msra.mxu0 %v1563
    %1962 = vmatprep.subr.mxu0 %v1572
    %1963 = vmatpush1.msra.mxu0 %v1571
    %1964 = vmatprep.subr.mxu0 %v1580
    %1965 = vmatpush1.msra.mxu0 %v1579
    %1966 = vmatprep.subr.mxu0 %v1588
    %1967 = vmatpush1.msra.mxu0 %v1587
    %1968 = vmatprep.subr.mxu0 %v1596
    %1969 = vmatpush1.msra.mxu0 %v1595
    %1970 = vmatprep.subr.mxu0 %v1604
    %1971 = vmatpush1.msra.mxu0 %v1603
    %1972 = vmatprep.subr.mxu0 %v1612
    %1973 = vmatpush1.msra.mxu0 %v1611
    %1974 = vmatprep.subr.mxu0 %v1620
    %1975 = vmatpush1.msra.mxu0 %v1619
    %1976 = vmatprep.subr.mxu0 %v1628
    %1977 = vmatpush1.msra.mxu0 %v1627
    %1978 = vmatprep.subr.mxu0 %v1636
    %1979 = vmatpush1.msra.mxu0 %v1635
    %1980 = vmatprep.mubr.f32.mxu0 %v610
    %1981 = vmatmul.mubr.f32.gmra.mrb[0].mxu0 %v609
    %v1982 = vpop.f32.mrb[0].mxu0
    %v1983 = vadd.f32 %v1906, %v1982
    %v1984 = vpop.f32.mrb[0].mxu0
    %v1985 = vadd.f32 %v1908, %v1984
    %1986 = vmatprep.mubr.f32.mxu0 %v618
    %1987 = vmatmul.mubr.f32.gmra.mrb[0].mxu0 %v617
    %v1988 = vpop.f32.mrb[0].mxu0
    %v1989 = vadd.f32 %v1912, %v1988
    %v1990 = vpop.f32.mrb[0].mxu0
    %v1991 = vadd.f32 %v1914, %v1990
    %1992 = vdwg.mxu0
    %1993 = vmatprep.subr.mxu0 %v622
    %1994 = vmatpush1.msra.mxu0 %v621
    %1995 = vmatprep.subr.mxu0 %v630
    %1996 = vmatpush1.msra.mxu0 %v629
    %1997 = vmatprep.subr.mxu0 %v638
    %1998 = vmatpush1.msra.mxu0 %v637
    %1999 = vmatprep.subr.mxu0 %v646
    %2000 = vmatpush1.msra.mxu0 %v645
    %2001 = vmatprep.subr.mxu0 %v654
    %2002 = vmatpush1.msra.mxu0 %v653
    %2003 = vmatprep.subr.mxu0 %v662
    %2004 = vmatpush1.msra.mxu0 %v661
    %2005 = vmatprep.subr.mxu0 %v670
    %2006 = vmatpush1.msra.mxu0 %v669
    %2007 = vmatprep.subr.mxu0 %v678
    %2008 = vmatpush1.msra.mxu0 %v677
    %2009 = vmatprep.subr.mxu0 %v686
    %2010 = vmatpush1.msra.mxu0 %v685
    %2011 = vmatprep.subr.mxu0 %v694
    %2012 = vmatpush1.msra.mxu0 %v693
    %2013 = vmatprep.subr.mxu0 %v702
    %2014 = vmatpush1.msra.mxu0 %v701
    %2015 = vmatprep.subr.mxu0 %v710
    %2016 = vmatpush1.msra.mxu0 %v709
    %2017 = vmatprep.subr.mxu0 %v718
    %2018 = vmatpush1.msra.mxu0 %v717
    %2019 = vmatprep.subr.mxu0 %v726
    %2020 = vmatpush1.msra.mxu0 %v725
    %2021 = vmatprep.subr.mxu0 %v734
    %2022 = vmatpush1.msra.mxu0 %v733
    %2023 = vmatprep.subr.mxu0 %v742
    %2024 = vmatpush1.msra.mxu0 %v741
    %2025 = vmatprep.subr.mxu0 %v750
    %2026 = vmatpush1.msra.mxu0 %v749
    %2027 = vmatprep.subr.mxu0 %v758
    %2028 = vmatpush1.msra.mxu0 %v757
    %2029 = vmatprep.subr.mxu0 %v766
    %2030 = vmatpush1.msra.mxu0 %v765
    %2031 = vmatprep.subr.mxu0 %v774
    %2032 = vmatpush1.msra.mxu0 %v773
    %2033 = vmatprep.subr.mxu0 %v782
    %2034 = vmatpush1.msra.mxu0 %v781
    %2035 = vmatprep.subr.mxu0 %v790
    %2036 = vmatpush1.msra.mxu0 %v789
    %2037 = vmatprep.subr.mxu0 %v798
    %2038 = vmatpush1.msra.mxu0 %v797
    %2039 = vmatprep.subr.mxu0 %v806
    %2040 = vmatpush1.msra.mxu0 %v805
    %2041 = vmatprep.subr.mxu0 %v814
    %2042 = vmatpush1.msra.mxu0 %v813
    %2043 = vmatprep.subr.mxu0 %v822
    %2044 = vmatpush1.msra.mxu0 %v821
    %2045 = vmatprep.subr.mxu0 %v830
    %2046 = vmatpush1.msra.mxu0 %v829
    %2047 = vmatprep.subr.mxu0 %v838
    %2048 = vmatpush1.msra.mxu0 %v837
    %2049 = vmatprep.subr.mxu0 %v846
    %2050 = vmatpush1.msra.mxu0 %v845
    %2051 = vmatprep.subr.mxu0 %v854
    %2052 = vmatpush1.msra.mxu0 %v853
    %2053 = vmatprep.subr.mxu0 %v862
    %2054 = vmatpush1.msra.mxu0 %v861
    %2055 = vmatprep.subr.mxu0 %v870
    %2056 = vmatpush1.msra.mxu0 %v869
    %2057 = vmatprep.mubr.f32.mxu0 %v604
    %2058 = vmatmul.mubr.f32.gmra.mrb[0].mxu0 %v603
    %v2059 = vpop.f32.mrb[0].mxu0
    %v2060 = vadd.f32 %v1656, %v2059
    %v2061 = vpop.f32.mrb[0].mxu0
    %v2062 = vadd.f32 %v1660, %v2061
    %2063 = vmatprep.mubr.f32.mxu0 %v612
    %2064 = vmatmul.mubr.f32.gmra.mrb[0].mxu0 %v611
    %v2065 = vpop.f32.mrb[0].mxu0
    %v2066 = vadd.f32 %v1656, %v2065
    %v2067 = vpop.f32.mrb[0].mxu0
    %v2068 = vadd.f32 %v1660, %v2067
    %2069 = vdwg.mxu0
    %2070 = vmatprep.subr.mxu0 %v878
    %2071 = vmatpush1.msra.mxu0 %v877
    %2072 = vmatprep.subr.mxu0 %v886
    %2073 = vmatpush1.msra.mxu0 %v885
    %2074 = vmatprep.subr.mxu0 %v894
    %2075 = vmatpush1.msra.mxu0 %v893
    %2076 = vmatprep.subr.mxu0 %v902
    %2077 = vmatpush1.msra.mxu0 %v901
    %2078 = vmatprep.subr.mxu0 %v910
    %2079 = vmatpush1.msra.mxu0 %v909
    %2080 = vmatprep.subr.mxu0 %v918
    %2081 = vmatpush1.msra.mxu0 %v917
    %2082 = vmatprep.subr.mxu0 %v926
    %2083 = vmatpush1.msra.mxu0 %v925
    %2084 = vmatprep.subr.mxu0 %v934
    %2085 = vmatpush1.msra.mxu0 %v933
    %2086 = vmatprep.subr.mxu0 %v942
    %2087 = vmatpush1.msra.mxu0 %v941
    %2088 = vmatprep.subr.mxu0 %v950
    %2089 = vmatpush1.msra.mxu0 %v949
    %2090 = vmatprep.subr.mxu0 %v958
    %2091 = vmatpush1.msra.mxu0 %v957
    %2092 = vmatprep.subr.mxu0 %v966
    %2093 = vmatpush1.msra.mxu0 %v965
    %2094 = vmatprep.subr.mxu0 %v974
    %2095 = vmatpush1.msra.mxu0 %v973
    %2096 = vmatprep.subr.mxu0 %v982
    %2097 = vmatpush1.msra.mxu0 %v981
    %2098 = vmatprep.subr.mxu0 %v990
    %2099 = vmatpush1.msra.mxu0 %v989
    %2100 = vmatprep.subr.mxu0 %v998
    %2101 = vmatpush1.msra.mxu0 %v997
    %2102 = vmatprep.subr.mxu0 %v1006
    %2103 = vmatpush1.msra.mxu0 %v1005
    %2104 = vmatprep.subr.mxu0 %v1014
    %2105 = vmatpush1.msra.mxu0 %v1013
    %2106 = vmatprep.subr.mxu0 %v1022
    %2107 = vmatpush1.msra.mxu0 %v1021
    %2108 = vmatprep.subr.mxu0 %v1030
    %2109 = vmatpush1.msra.mxu0 %v1029
    %2110 = vmatprep.subr.mxu0 %v1038
    %2111 = vmatpush1.msra.mxu0 %v1037
    %2112 = vmatprep.subr.mxu0 %v1046
    %2113 = vmatpush1.msra.mxu0 %v1045
    %2114 = vmatprep.subr.mxu0 %v1054
    %2115 = vmatpush1.msra.mxu0 %v1053
    %2116 = vmatprep.subr.mxu0 %v1062
    %2117 = vmatpush1.msra.mxu0 %v1061
    %2118 = vmatprep.subr.mxu0 %v1070
    %2119 = vmatpush1.msra.mxu0 %v1069
    %2120 = vmatprep.subr.mxu0 %v1078
    %2121 = vmatpush1.msra.mxu0 %v1077
    %2122 = vmatprep.subr.mxu0 %v1086
    %2123 = vmatpush1.msra.mxu0 %v1085
    %2124 = vmatprep.subr.mxu0 %v1094
    %2125 = vmatpush1.msra.mxu0 %v1093
    %2126 = vmatprep.subr.mxu0 %v1102
    %2127 = vmatpush1.msra.mxu0 %v1101
    %2128 = vmatprep.subr.mxu0 %v1110
    %2129 = vmatpush1.msra.mxu0 %v1109
    %2130 = vmatprep.subr.mxu0 %v1118
    %2131 = vmatpush1.msra.mxu0 %v1117
    %2132 = vmatprep.subr.mxu0 %v1126
    %2133 = vmatpush1.msra.mxu0 %v1125
    %2134 = vmatprep.mubr.f32.mxu0 %v606
    %2135 = vmatmul.mubr.f32.gmra.mrb[0].mxu0 %v605
    %v2136 = vpop.f32.mrb[0].mxu0
    %v2137 = vadd.f32 %v2060, %v2136
    %v2138 = vpop.f32.mrb[0].mxu0
    %v2139 = vadd.f32 %v2062, %v2138
    %2140 = vmatprep.mubr.f32.mxu0 %v614
    %2141 = vmatmul.mubr.f32.gmra.mrb[0].mxu0 %v613
    %v2142 = vpop.f32.mrb[0].mxu0
    %v2143 = vadd.f32 %v2066, %v2142
    %v2144 = vpop.f32.mrb[0].mxu0
    %v2145 = vadd.f32 %v2068, %v2144
    %2146 = vdwg.mxu0
    %2147 = vmatprep.subr.mxu0 %v1134
    %2148 = vmatpush1.msra.mxu0 %v1133
    %2149 = vmatprep.subr.mxu0 %v1142
    %2150 = vmatpush1.msra.mxu0 %v1141
    %2151 = vmatprep.subr.mxu0 %v1150
    %2152 = vmatpush1.msra.mxu0 %v1149
    %2153 = vmatprep.subr.mxu0 %v1158
    %2154 = vmatpush1.msra.mxu0 %v1157
    %2155 = vmatprep.subr.mxu0 %v1166
    %2156 = vmatpush1.msra.mxu0 %v1165
    %2157 = vmatprep.subr.mxu0 %v1174
    %2158 = vmatpush1.msra.mxu0 %v1173
    %2159 = vmatprep.subr.mxu0 %v1182
    %2160 = vmatpush1.msra.mxu0 %v1181
    %2161 = vmatprep.subr.mxu0 %v1190
    %2162 = vmatpush1.msra.mxu0 %v1189
    %2163 = vmatprep.subr.mxu0 %v1198
    %2164 = vmatpush1.msra.mxu0 %v1197
    %2165 = vmatprep.subr.mxu0 %v1206
    %2166 = vmatpush1.msra.mxu0 %v1205
    %2167 = vmatprep.subr.mxu0 %v1214
    %2168 = vmatpush1.msra.mxu0 %v1213
    %2169 = vmatprep.subr.mxu0 %v1222
    %2170 = vmatpush1.msra.mxu0 %v1221
    %2171 = vmatprep.subr.mxu0 %v1230
    %2172 = vmatpush1.msra.mxu0 %v1229
    %2173 = vmatprep.subr.mxu0 %v1238
    %2174 = vmatpush1.msra.mxu0 %v1237
    %2175 = vmatprep.subr.mxu0 %v1246
    %2176 = vmatpush1.msra.mxu0 %v1245
    %2177 = vmatprep.subr.mxu0 %v1254
    %2178 = vmatpush1.msra.mxu0 %v1253
    %2179 = vmatprep.subr.mxu0 %v1262
    %2180 = vmatpush1.msra.mxu0 %v1261
    %2181 = vmatprep.subr.mxu0 %v1270
    %2182 = vmatpush1.msra.mxu0 %v1269
    %2183 = vmatprep.subr.mxu0 %v1278
    %2184 = vmatpush1.msra.mxu0 %v1277
    %2185 = vmatprep.subr.mxu0 %v1286
    %2186 = vmatpush1.msra.mxu0 %v1285
    %2187 = vmatprep.subr.mxu0 %v1294
    %2188 = vmatpush1.msra.mxu0 %v1293
    %2189 = vmatprep.subr.mxu0 %v1302
    %2190 = vmatpush1.msra.mxu0 %v1301
    %2191 = vmatprep.subr.mxu0 %v1310
    %2192 = vmatpush1.msra.mxu0 %v1309
    %2193 = vmatprep.subr.mxu0 %v1318
    %2194 = vmatpush1.msra.mxu0 %v1317
    %2195 = vmatprep.subr.mxu0 %v1326
    %2196 = vmatpush1.msra.mxu0 %v1325
    %2197 = vmatprep.subr.mxu0 %v1334
    %2198 = vmatpush1.msra.mxu0 %v1333
    %2199 = vmatprep.subr.mxu0 %v1342
    %2200 = vmatpush1.msra.mxu0 %v1341
    %2201 = vmatprep.subr.mxu0 %v1350
    %2202 = vmatpush1.msra.mxu0 %v1349
    %2203 = vmatprep.subr.mxu0 %v1358
    %2204 = vmatpush1.msra.mxu0 %v1357
    %2205 = vmatprep.subr.mxu0 %v1366
    %2206 = vmatpush1.msra.mxu0 %v1365
    %2207 = vmatprep.subr.mxu0 %v1374
    %2208 = vmatpush1.msra.mxu0 %v1373
    %2209 = vmatprep.subr.mxu0 %v1382
    %2210 = vmatpush1.msra.mxu0 %v1381
    %2211 = vmatprep.mubr.f32.mxu0 %v608
    %2212 = vmatmul.mubr.f32.gmra.mrb[0].mxu0 %v607
    %v2213 = vpop.f32.mrb[0].mxu0
    %v2214 = vadd.f32 %v2137, %v2213
    %v2215 = vpop.f32.mrb[0].mxu0
    %v2216 = vadd.f32 %v2139, %v2215
    %2217 = vmatprep.mubr.f32.mxu0 %v616
    %2218 = vmatmul.mubr.f32.gmra.mrb[0].mxu0 %v615
    %v2219 = vpop.f32.mrb[0].mxu0
    %v2220 = vadd.f32 %v2143, %v2219
    %v2221 = vpop.f32.mrb[0].mxu0
    %v2222 = vadd.f32 %v2145, %v2221
    %2223 = vdwg.mxu0
    %2224 = vmatprep.subr.mxu0 %v1390
    %2225 = vmatpush1.msra.mxu0 %v1389
    %2226 = vmatprep.subr.mxu0 %v1398
    %2227 = vmatpush1.msra.mxu0 %v1397
    %2228 = vmatprep.subr.mxu0 %v1406
    %2229 = vmatpush1.msra.mxu0 %v1405
    %2230 = vmatprep.subr.mxu0 %v1414
    %2231 = vmatpush1.msra.mxu0 %v1413
    %2232 = vmatprep.subr.mxu0 %v1422
    %2233 = vmatpush1.msra.mxu0 %v1421
    %2234 = vmatprep.subr.mxu0 %v1430
    %2235 = vmatpush1.msra.mxu0 %v1429
    %2236 = vmatprep.subr.mxu0 %v1438
    %2237 = vmatpush1.msra.mxu0 %v1437
    %2238 = vmatprep.subr.mxu0 %v1446
    %2239 = vmatpush1.msra.mxu0 %v1445
    %2240 = vmatprep.subr.mxu0 %v1454
    %2241 = vmatpush1.msra.mxu0 %v1453
    %2242 = vmatprep.subr.mxu0 %v1462
    %2243 = vmatpush1.msra.mxu0 %v1461
    %2244 = vmatprep.subr.mxu0 %v1470
    %2245 = vmatpush1.msra.mxu0 %v1469
    %2246 = vmatprep.subr.mxu0 %v1478
    %2247 = vmatpush1.msra.mxu0 %v1477
    %2248 = vmatprep.subr.mxu0 %v1486
    %2249 = vmatpush1.msra.mxu0 %v1485
    %2250 = vmatprep.subr.mxu0 %v1494
    %2251 = vmatpush1.msra.mxu0 %v1493
    %2252 = vmatprep.subr.mxu0 %v1502
    %2253 = vmatpush1.msra.mxu0 %v1501
    %2254 = vmatprep.subr.mxu0 %v1510
    %2255 = vmatpush1.msra.mxu0 %v1509
    %2256 = vmatprep.subr.mxu0 %v1518
    %2257 = vmatpush1.msra.mxu0 %v1517
    %2258 = vmatprep.subr.mxu0 %v1526
    %2259 = vmatpush1.msra.mxu0 %v1525
    %2260 = vmatprep.subr.mxu0 %v1534
    %2261 = vmatpush1.msra.mxu0 %v1533
    %2262 = vmatprep.subr.mxu0 %v1542
    %2263 = vmatpush1.msra.mxu0 %v1541
    %2264 = vmatprep.subr.mxu0 %v1550
    %2265 = vmatpush1.msra.mxu0 %v1549
    %2266 = vmatprep.subr.mxu0 %v1558
    %2267 = vmatpush1.msra.mxu0 %v1557
    %2268 = vmatprep.subr.mxu0 %v1566
    %2269 = vmatpush1.msra.mxu0 %v1565
    %2270 = vmatprep.subr.mxu0 %v1574
    %2271 = vmatpush1.msra.mxu0 %v1573
    %2272 = vmatprep.subr.mxu0 %v1582
    %2273 = vmatpush1.msra.mxu0 %v1581
    %2274 = vmatprep.subr.mxu0 %v1590
    %2275 = vmatpush1.msra.mxu0 %v1589
    %2276 = vmatprep.subr.mxu0 %v1598
    %2277 = vmatpush1.msra.mxu0 %v1597
    %2278 = vmatprep.subr.mxu0 %v1606
    %2279 = vmatpush1.msra.mxu0 %v1605
    %2280 = vmatprep.subr.mxu0 %v1614
    %2281 = vmatpush1.msra.mxu0 %v1613
    %2282 = vmatprep.subr.mxu0 %v1622
    %2283 = vmatpush1.msra.mxu0 %v1621
    %2284 = vmatprep.subr.mxu0 %v1630
    %2285 = vmatpush1.msra.mxu0 %v1629
    %2286 = vmatprep.subr.mxu0 %v1638
    %2287 = vmatpush1.msra.mxu0 %v1637
    %2288 = vmatprep.mubr.f32.mxu0 %v610
    %2289 = vmatmul.mubr.f32.gmra.mrb[0].mxu0 %v609
    %v2290 = vpop.f32.mrb[0].mxu0
    %v2291 = vadd.f32 %v2214, %v2290
    %v2292 = vpop.f32.mrb[0].mxu0
    %v2293 = vadd.f32 %v2216, %v2292
    %2294 = vmatprep.mubr.f32.mxu0 %v618
    %2295 = vmatmul.mubr.f32.gmra.mrb[0].mxu0 %v617
    %v2296 = vpop.f32.mrb[0].mxu0
    %v2297 = vadd.f32 %v2220, %v2296
    %v2298 = vpop.f32.mrb[0].mxu0
    %v2299 = vadd.f32 %v2222, %v2298
    %2300 = vdwg.mxu0
    %2301 = vmatprep.subr.mxu0 %v624
    %2302 = vmatpush1.msra.mxu0 %v623
    %2303 = vmatprep.subr.mxu0 %v632
    %2304 = vmatpush1.msra.mxu0 %v631
    %2305 = vmatprep.subr.mxu0 %v640
    %2306 = vmatpush1.msra.mxu0 %v639
    %2307 = vmatprep.subr.mxu0 %v648
    %2308 = vmatpush1.msra.mxu0 %v647
    %2309 = vmatprep.subr.mxu0 %v656
    %2310 = vmatpush1.msra.mxu0 %v655
    %2311 = vmatprep.subr.mxu0 %v664
    %2312 = vmatpush1.msra.mxu0 %v663
    %2313 = vmatprep.subr.mxu0 %v672
    %2314 = vmatpush1.msra.mxu0 %v671
    %2315 = vmatprep.subr.mxu0 %v680
    %2316 = vmatpush1.msra.mxu0 %v679
    %2317 = vmatprep.subr.mxu0 %v688
    %2318 = vmatpush1.msra.mxu0 %v687
    %2319 = vmatprep.subr.mxu0 %v696
    %2320 = vmatpush1.msra.mxu0 %v695
    %2321 = vmatprep.subr.mxu0 %v704
    %2322 = vmatpush1.msra.mxu0 %v703
    %2323 = vmatprep.subr.mxu0 %v712
    %2324 = vmatpush1.msra.mxu0 %v711
    %2325 = vmatprep.subr.mxu0 %v720
    %2326 = vmatpush1.msra.mxu0 %v719
    %2327 = vmatprep.subr.mxu0 %v728
    %2328 = vmatpush1.msra.mxu0 %v727
    %2329 = vmatprep.subr.mxu0 %v736
    %2330 = vmatpush1.msra.mxu0 %v735
    %2331 = vmatprep.subr.mxu0 %v744
    %2332 = vmatpush1.msra.mxu0 %v743
    %2333 = vmatprep.subr.mxu0 %v752
    %2334 = vmatpush1.msra.mxu0 %v751
    %2335 = vmatprep.subr.mxu0 %v760
    %2336 = vmatpush1.msra.mxu0 %v759
    %2337 = vmatprep.subr.mxu0 %v768
    %2338 = vmatpush1.msra.mxu0 %v767
    %2339 = vmatprep.subr.mxu0 %v776
    %2340 = vmatpush1.msra.mxu0 %v775
    %2341 = vmatprep.subr.mxu0 %v784
    %2342 = vmatpush1.msra.mxu0 %v783
    %2343 = vmatprep.subr.mxu0 %v792
    %2344 = vmatpush1.msra.mxu0 %v791
    %2345 = vmatprep.subr.mxu0 %v800
    %2346 = vmatpush1.msra.mxu0 %v799
    %2347 = vmatprep.subr.mxu0 %v808
    %2348 = vmatpush1.msra.mxu0 %v807
    %2349 = vmatprep.subr.mxu0 %v816
    %2350 = vmatpush1.msra.mxu0 %v815
    %2351 = vmatprep.subr.mxu0 %v824
    %2352 = vmatpush1.msra.mxu0 %v823
    %2353 = vmatprep.subr.mxu0 %v832
    %2354 = vmatpush1.msra.mxu0 %v831
    %2355 = vmatprep.subr.mxu0 %v840
    %2356 = vmatpush1.msra.mxu0 %v839
    %2357 = vmatprep.subr.mxu0 %v848
    %2358 = vmatpush1.msra.mxu0 %v847
    %2359 = vmatprep.subr.mxu0 %v856
    %2360 = vmatpush1.msra.mxu0 %v855
    %2361 = vmatprep.subr.mxu0 %v864
    %2362 = vmatpush1.msra.mxu0 %v863
    %2363 = vmatprep.subr.mxu0 %v872
    %2364 = vmatpush1.msra.mxu0 %v871
    %2365 = vmatprep.mubr.f32.mxu0 %v604
    %2366 = vmatmul.mubr.f32.gmra.mrb[0].mxu0 %v603
    %v2367 = vpop.f32.mrb[0].mxu0
    %v2368 = vadd.f32 %v1664, %v2367
    %v2369 = vpop.f32.mrb[0].mxu0
    %v2370 = vadd.f32 %v1668, %v2369
    %2371 = vmatprep.mubr.f32.mxu0 %v612
    %2372 = vmatmul.mubr.f32.gmra.mrb[0].mxu0 %v611
    %v2373 = vpop.f32.mrb[0].mxu0
    %v2374 = vadd.f32 %v1664, %v2373
    %v2375 = vpop.f32.mrb[0].mxu0
    %v2376 = vadd.f32 %v1668, %v2375
    %2377 = vdwg.mxu0
    %2378 = vmatprep.subr.mxu0 %v880
    %2379 = vmatpush1.msra.mxu0 %v879
    %2380 = vmatprep.subr.mxu0 %v888
    %2381 = vmatpush1.msra.mxu0 %v887
    %2382 = vmatprep.subr.mxu0 %v896
    %2383 = vmatpush1.msra.mxu0 %v895
    %2384 = vmatprep.subr.mxu0 %v904
    %2385 = vmatpush1.msra.mxu0 %v903
    %2386 = vmatprep.subr.mxu0 %v912
    %2387 = vmatpush1.msra.mxu0 %v911
    %2388 = vmatprep.subr.mxu0 %v920
    %2389 = vmatpush1.msra.mxu0 %v919
    %2390 = vmatprep.subr.mxu0 %v928
    %2391 = vmatpush1.msra.mxu0 %v927
    %2392 = vmatprep.subr.mxu0 %v936
    %2393 = vmatpush1.msra.mxu0 %v935
    %2394 = vmatprep.subr.mxu0 %v944
    %2395 = vmatpush1.msra.mxu0 %v943
    %2396 = vmatprep.subr.mxu0 %v952
    %2397 = vmatpush1.msra.mxu0 %v951
    %2398 = vmatprep.subr.mxu0 %v960
    %2399 = vmatpush1.msra.mxu0 %v959
    %2400 = vmatprep.subr.mxu0 %v968
    %2401 = vmatpush1.msra.mxu0 %v967
    %2402 = vmatprep.subr.mxu0 %v976
    %2403 = vmatpush1.msra.mxu0 %v975
    %2404 = vmatprep.subr.mxu0 %v984
    %2405 = vmatpush1.msra.mxu0 %v983
    %2406 = vmatprep.subr.mxu0 %v992
    %2407 = vmatpush1.msra.mxu0 %v991
    %2408 = vmatprep.subr.mxu0 %v1000
    %2409 = vmatpush1.msra.mxu0 %v999
    %2410 = vmatprep.subr.mxu0 %v1008
    %2411 = vmatpush1.msra.mxu0 %v1007
    %2412 = vmatprep.subr.mxu0 %v1016
    %2413 = vmatpush1.msra.mxu0 %v1015
    %2414 = vmatprep.subr.mxu0 %v1024
    %2415 = vmatpush1.msra.mxu0 %v1023
    %2416 = vmatprep.subr.mxu0 %v1032
    %2417 = vmatpush1.msra.mxu0 %v1031
    %2418 = vmatprep.subr.mxu0 %v1040
    %2419 = vmatpush1.msra.mxu0 %v1039
    %2420 = vmatprep.subr.mxu0 %v1048
    %2421 = vmatpush1.msra.mxu0 %v1047
    %2422 = vmatprep.subr.mxu0 %v1056
    %2423 = vmatpush1.msra.mxu0 %v1055
    %2424 = vmatprep.subr.mxu0 %v1064
    %2425 = vmatpush1.msra.mxu0 %v1063
    %2426 = vmatprep.subr.mxu0 %v1072
    %2427 = vmatpush1.msra.mxu0 %v1071
    %2428 = vmatprep.subr.mxu0 %v1080
    %2429 = vmatpush1.msra.mxu0 %v1079
    %2430 = vmatprep.subr.mxu0 %v1088
    %2431 = vmatpush1.msra.mxu0 %v1087
    %2432 = vmatprep.subr.mxu0 %v1096
    %2433 = vmatpush1.msra.mxu0 %v1095
    %2434 = vmatprep.subr.mxu0 %v1104
    %2435 = vmatpush1.msra.mxu0 %v1103
    %2436 = vmatprep.subr.mxu0 %v1112
    %2437 = vmatpush1.msra.mxu0 %v1111
    %2438 = vmatprep.subr.mxu0 %v1120
    %2439 = vmatpush1.msra.mxu0 %v1119
    %2440 = vmatprep.subr.mxu0 %v1128
    %2441 = vmatpush1.msra.mxu0 %v1127
    %2442 = vmatprep.mubr.f32.mxu0 %v606
    %2443 = vmatmul.mubr.f32.gmra.mrb[0].mxu0 %v605
    %v2444 = vpop.f32.mrb[0].mxu0
    %v2445 = vadd.f32 %v2368, %v2444
    %v2446 = vpop.f32.mrb[0].mxu0
    %v2447 = vadd.f32 %v2370, %v2446
    %2448 = vmatprep.mubr.f32.mxu0 %v614
    %2449 = vmatmul.mubr.f32.gmra.mrb[0].mxu0 %v613
    %v2450 = vpop.f32.mrb[0].mxu0
    %v2451 = vadd.f32 %v2374, %v2450
    %v2452 = vpop.f32.mrb[0].mxu0
    %v2453 = vadd.f32 %v2376, %v2452
    %2454 = vdwg.mxu0
    %2455 = vmatprep.subr.mxu0 %v1136
    %2456 = vmatpush1.msra.mxu0 %v1135
    %2457 = vmatprep.subr.mxu0 %v1144
    %2458 = vmatpush1.msra.mxu0 %v1143
    %2459 = vmatprep.subr.mxu0 %v1152
    %2460 = vmatpush1.msra.mxu0 %v1151
    %2461 = vmatprep.subr.mxu0 %v1160
    %2462 = vmatpush1.msra.mxu0 %v1159
    %2463 = vmatprep.subr.mxu0 %v1168
    %2464 = vmatpush1.msra.mxu0 %v1167
    %2465 = vmatprep.subr.mxu0 %v1176
    %2466 = vmatpush1.msra.mxu0 %v1175
    %2467 = vmatprep.subr.mxu0 %v1184
    %2468 = vmatpush1.msra.mxu0 %v1183
    %2469 = vmatprep.subr.mxu0 %v1192
    %2470 = vmatpush1.msra.mxu0 %v1191
    %2471 = vmatprep.subr.mxu0 %v1200
    %2472 = vmatpush1.msra.mxu0 %v1199
    %2473 = vmatprep.subr.mxu0 %v1208
    %2474 = vmatpush1.msra.mxu0 %v1207
    %2475 = vmatprep.subr.mxu0 %v1216
    %2476 = vmatpush1.msra.mxu0 %v1215
    %2477 = vmatprep.subr.mxu0 %v1224
    %2478 = vmatpush1.msra.mxu0 %v1223
    %2479 = vmatprep.subr.mxu0 %v1232
    %2480 = vmatpush1.msra.mxu0 %v1231
    %2481 = vmatprep.subr.mxu0 %v1240
    %2482 = vmatpush1.msra.mxu0 %v1239
    %2483 = vmatprep.subr.mxu0 %v1248
    %2484 = vmatpush1.msra.mxu0 %v1247
    %2485 = vmatprep.subr.mxu0 %v1256
    %2486 = vmatpush1.msra.mxu0 %v1255
    %2487 = vmatprep.subr.mxu0 %v1264
    %2488 = vmatpush1.msra.mxu0 %v1263
    %2489 = vmatprep.subr.mxu0 %v1272
    %2490 = vmatpush1.msra.mxu0 %v1271
    %2491 = vmatprep.subr.mxu0 %v1280
    %2492 = vmatpush1.msra.mxu0 %v1279
    %2493 = vmatprep.subr.mxu0 %v1288
    %2494 = vmatpush1.msra.mxu0 %v1287
    %2495 = vmatprep.subr.mxu0 %v1296
    %2496 = vmatpush1.msra.mxu0 %v1295
    %2497 = vmatprep.subr.mxu0 %v1304
    %2498 = vmatpush1.msra.mxu0 %v1303
    %2499 = vmatprep.subr.mxu0 %v1312
    %2500 = vmatpush1.msra.mxu0 %v1311
    %2501 = vmatprep.subr.mxu0 %v1320
    %2502 = vmatpush1.msra.mxu0 %v1319
    %2503 = vmatprep.subr.mxu0 %v1328
    %2504 = vmatpush1.msra.mxu0 %v1327
    %2505 = vmatprep.subr.mxu0 %v1336
    %2506 = vmatpush1.msra.mxu0 %v1335
    %2507 = vmatprep.subr.mxu0 %v1344
    %2508 = vmatpush1.msra.mxu0 %v1343
    %2509 = vmatprep.subr.mxu0 %v1352
    %2510 = vmatpush1.msra.mxu0 %v1351
    %2511 = vmatprep.subr.mxu0 %v1360
    %2512 = vmatpush1.msra.mxu0 %v1359
    %2513 = vmatprep.subr.mxu0 %v1368
    %2514 = vmatpush1.msra.mxu0 %v1367
    %2515 = vmatprep.subr.mxu0 %v1376
    %2516 = vmatpush1.msra.mxu0 %v1375
    %2517 = vmatprep.subr.mxu0 %v1384
    %2518 = vmatpush1.msra.mxu0 %v1383
    %2519 = vmatprep.mubr.f32.mxu0 %v608
    %2520 = vmatmul.mubr.f32.gmra.mrb[0].mxu0 %v607
    %v2521 = vpop.f32.mrb[0].mxu0
    %v2522 = vadd.f32 %v2445, %v2521
    %v2523 = vpop.f32.mrb[0].mxu0
    %v2524 = vadd.f32 %v2447, %v2523
    %2525 = vmatprep.mubr.f32.mxu0 %v616
    %2526 = vmatmul.mubr.f32.gmra.mrb[0].mxu0 %v615
    %v2527 = vpop.f32.mrb[0].mxu0
    %v2528 = vadd.f32 %v2451, %v2527
    %v2529 = vpop.f32.mrb[0].mxu0
    %v2530 = vadd.f32 %v2453, %v2529
    %2531 = vdwg.mxu0
    %2532 = vmatprep.subr.mxu0 %v1392
    %2533 = vmatpush1.msra.mxu0 %v1391
    %2534 = vmatprep.subr.mxu0 %v1400
    %2535 = vmatpush1.msra.mxu0 %v1399
    %2536 = vmatprep.subr.mxu0 %v1408
    %2537 = vmatpush1.msra.mxu0 %v1407
    %2538 = vmatprep.subr.mxu0 %v1416
    %2539 = vmatpush1.msra.mxu0 %v1415
    %2540 = vmatprep.subr.mxu0 %v1424
    %2541 = vmatpush1.msra.mxu0 %v1423
    %2542 = vmatprep.subr.mxu0 %v1432
    %2543 = vmatpush1.msra.mxu0 %v1431
    %2544 = vmatprep.subr.mxu0 %v1440
    %2545 = vmatpush1.msra.mxu0 %v1439
    %2546 = vmatprep.subr.mxu0 %v1448
    %2547 = vmatpush1.msra.mxu0 %v1447
    %2548 = vmatprep.subr.mxu0 %v1456
    %2549 = vmatpush1.msra.mxu0 %v1455
    %2550 = vmatprep.subr.mxu0 %v1464
    %2551 = vmatpush1.msra.mxu0 %v1463
    %2552 = vmatprep.subr.mxu0 %v1472
    %2553 = vmatpush1.msra.mxu0 %v1471
    %2554 = vmatprep.subr.mxu0 %v1480
    %2555 = vmatpush1.msra.mxu0 %v1479
    %2556 = vmatprep.subr.mxu0 %v1488
    %2557 = vmatpush1.msra.mxu0 %v1487
    %2558 = vmatprep.subr.mxu0 %v1496
    %2559 = vmatpush1.msra.mxu0 %v1495
    %2560 = vmatprep.subr.mxu0 %v1504
    %2561 = vmatpush1.msra.mxu0 %v1503
    %2562 = vmatprep.subr.mxu0 %v1512
    %2563 = vmatpush1.msra.mxu0 %v1511
    %2564 = vmatprep.subr.mxu0 %v1520
    %2565 = vmatpush1.msra.mxu0 %v1519
    %2566 = vmatprep.subr.mxu0 %v1528
    %2567 = vmatpush1.msra.mxu0 %v1527
    %2568 = vmatprep.subr.mxu0 %v1536
    %2569 = vmatpush1.msra.mxu0 %v1535
    %2570 = vmatprep.subr.mxu0 %v1544
    %2571 = vmatpush1.msra.mxu0 %v1543
    %2572 = vmatprep.subr.mxu0 %v1552
    %2573 = vmatpush1.msra.mxu0 %v1551
    %2574 = vmatprep.subr.mxu0 %v1560
    %2575 = vmatpush1.msra.mxu0 %v1559
    %2576 = vmatprep.subr.mxu0 %v1568
    %2577 = vmatpush1.msra.mxu0 %v1567
    %2578 = vmatprep.subr.mxu0 %v1576
    %2579 = vmatpush1.msra.mxu0 %v1575
    %2580 = vmatprep.subr.mxu0 %v1584
    %2581 = vmatpush1.msra.mxu0 %v1583
    %2582 = vmatprep.subr.mxu0 %v1592
    %2583 = vmatpush1.msra.mxu0 %v1591
    %2584 = vmatprep.subr.mxu0 %v1600
    %2585 = vmatpush1.msra.mxu0 %v1599
    %2586 = vmatprep.subr.mxu0 %v1608
    %2587 = vmatpush1.msra.mxu0 %v1607
    %2588 = vmatprep.subr.mxu0 %v1616
    %2589 = vmatpush1.msra.mxu0 %v1615
    %2590 = vmatprep.subr.mxu0 %v1624
    %2591 = vmatpush1.msra.mxu0 %v1623
    %2592 = vmatprep.subr.mxu0 %v1632
    %2593 = vmatpush1.msra.mxu0 %v1631
    %2594 = vmatprep.subr.mxu0 %v1640
    %2595 = vmatpush1.msra.mxu0 %v1639
    %2596 = vmatprep.mubr.f32.mxu0 %v610
    %2597 = vmatmul.mubr.f32.gmra.mrb[0].mxu0 %v609
    %v2598 = vpop.f32.mrb[0].mxu0
    %v2599 = vadd.f32 %v2522, %v2598
    %v2600 = vpop.f32.mrb[0].mxu0
    %v2601 = vadd.f32 %v2524, %v2600
    %2602 = vmatprep.mubr.f32.mxu0 %v618
    %2603 = vmatmul.mubr.f32.gmra.mrb[0].mxu0 %v617
    %v2604 = vpop.f32.mrb[0].mxu0
    %v2605 = vadd.f32 %v2528, %v2604
    %v2606 = vpop.f32.mrb[0].mxu0
    %v2607 = vadd.f32 %v2530, %v2606
    %2608 = vdwg.mxu0
    %2609 = vmatprep.subr.mxu0 %v626
    %2610 = vmatpush1.msra.mxu0 %v625
    %2611 = vmatprep.subr.mxu0 %v634
    %2612 = vmatpush1.msra.mxu0 %v633
    %2613 = vmatprep.subr.mxu0 %v642
    %2614 = vmatpush1.msra.mxu0 %v641
    %2615 = vmatprep.subr.mxu0 %v650
    %2616 = vmatpush1.msra.mxu0 %v649
    %2617 = vmatprep.subr.mxu0 %v658
    %2618 = vmatpush1.msra.mxu0 %v657
    %2619 = vmatprep.subr.mxu0 %v666
    %2620 = vmatpush1.msra.mxu0 %v665
    %2621 = vmatprep.subr.mxu0 %v674
    %2622 = vmatpush1.msra.mxu0 %v673
    %2623 = vmatprep.subr.mxu0 %v682
    %2624 = vmatpush1.msra.mxu0 %v681
    %2625 = vmatprep.subr.mxu0 %v690
    %2626 = vmatpush1.msra.mxu0 %v689
    %2627 = vmatprep.subr.mxu0 %v698
    %2628 = vmatpush1.msra.mxu0 %v697
    %2629 = vmatprep.subr.mxu0 %v706
    %2630 = vmatpush1.msra.mxu0 %v705
    %2631 = vmatprep.subr.mxu0 %v714
    %2632 = vmatpush1.msra.mxu0 %v713
    %2633 = vmatprep.subr.mxu0 %v722
    %2634 = vmatpush1.msra.mxu0 %v721
    %2635 = vmatprep.subr.mxu0 %v730
    %2636 = vmatpush1.msra.mxu0 %v729
    %2637 = vmatprep.subr.mxu0 %v738
    %2638 = vmatpush1.msra.mxu0 %v737
    %2639 = vmatprep.subr.mxu0 %v746
    %2640 = vmatpush1.msra.mxu0 %v745
    %2641 = vmatprep.subr.mxu0 %v754
    %2642 = vmatpush1.msra.mxu0 %v753
    %2643 = vmatprep.subr.mxu0 %v762
    %2644 = vmatpush1.msra.mxu0 %v761
    %2645 = vmatprep.subr.mxu0 %v770
    %2646 = vmatpush1.msra.mxu0 %v769
    %2647 = vmatprep.subr.mxu0 %v778
    %2648 = vmatpush1.msra.mxu0 %v777
    %2649 = vmatprep.subr.mxu0 %v786
    %2650 = vmatpush1.msra.mxu0 %v785
    %2651 = vmatprep.subr.mxu0 %v794
    %2652 = vmatpush1.msra.mxu0 %v793
    %2653 = vmatprep.subr.mxu0 %v802
    %2654 = vmatpush1.msra.mxu0 %v801
    %2655 = vmatprep.subr.mxu0 %v810
    %2656 = vmatpush1.msra.mxu0 %v809
    %2657 = vmatprep.subr.mxu0 %v818
    %2658 = vmatpush1.msra.mxu0 %v817
    %2659 = vmatprep.subr.mxu0 %v826
    %2660 = vmatpush1.msra.mxu0 %v825
    %2661 = vmatprep.subr.mxu0 %v834
    %2662 = vmatpush1.msra.mxu0 %v833
    %2663 = vmatprep.subr.mxu0 %v842
    %2664 = vmatpush1.msra.mxu0 %v841
    %2665 = vmatprep.subr.mxu0 %v850
    %2666 = vmatpush1.msra.mxu0 %v849
    %2667 = vmatprep.subr.mxu0 %v858
    %2668 = vmatpush1.msra.mxu0 %v857
    %2669 = vmatprep.subr.mxu0 %v866
    %2670 = vmatpush1.msra.mxu0 %v865
    %2671 = vmatprep.subr.mxu0 %v874
    %2672 = vmatpush1.msra.mxu0 %v873
    %2673 = vmatprep.mubr.f32.mxu0 %v604
    %2674 = vmatmul.mubr.f32.gmra.mrb[0].mxu0 %v603
    %v2675 = vpop.f32.mrb[0].mxu0
    %v2676 = vadd.f32 %v1672, %v2675
    %v2677 = vpop.f32.mrb[0].mxu0
    %v2678 = vadd.f32 %v1676, %v2677
    %2679 = vmatprep.mubr.f32.mxu0 %v612
    %2680 = vmatmul.mubr.f32.gmra.mrb[0].mxu0 %v611
    %v2681 = vpop.f32.mrb[0].mxu0
    %v2682 = vadd.f32 %v1672, %v2681
    %v2683 = vpop.f32.mrb[0].mxu0
    %v2684 = vadd.f32 %v1676, %v2683
    %2685 = vdwg.mxu0
    %2686 = vmatprep.subr.mxu0 %v882
    %2687 = vmatpush1.msra.mxu0 %v881
    %2688 = vmatprep.subr.mxu0 %v890
    %2689 = vmatpush1.msra.mxu0 %v889
    %2690 = vmatprep.subr.mxu0 %v898
    %2691 = vmatpush1.msra.mxu0 %v897
    %2692 = vmatprep.subr.mxu0 %v906
    %2693 = vmatpush1.msra.mxu0 %v905
    %2694 = vmatprep.subr.mxu0 %v914
    %2695 = vmatpush1.msra.mxu0 %v913
    %2696 = vmatprep.subr.mxu0 %v922
    %2697 = vmatpush1.msra.mxu0 %v921
    %2698 = vmatprep.subr.mxu0 %v930
    %2699 = vmatpush1.msra.mxu0 %v929
    %2700 = vmatprep.subr.mxu0 %v938
    %2701 = vmatpush1.msra.mxu0 %v937
    %2702 = vmatprep.subr.mxu0 %v946
    %2703 = vmatpush1.msra.mxu0 %v945
    %2704 = vmatprep.subr.mxu0 %v954
    %2705 = vmatpush1.msra.mxu0 %v953
    %2706 = vmatprep.subr.mxu0 %v962
    %2707 = vmatpush1.msra.mxu0 %v961
    %2708 = vmatprep.subr.mxu0 %v970
    %2709 = vmatpush1.msra.mxu0 %v969
    %2710 = vmatprep.subr.mxu0 %v978
    %2711 = vmatpush1.msra.mxu0 %v977
    %2712 = vmatprep.subr.mxu0 %v986
    %2713 = vmatpush1.msra.mxu0 %v985
    %2714 = vmatprep.subr.mxu0 %v994
    %2715 = vmatpush1.msra.mxu0 %v993
    %2716 = vmatprep.subr.mxu0 %v1002
    %2717 = vmatpush1.msra.mxu0 %v1001
    %2718 = vmatprep.subr.mxu0 %v1010
    %2719 = vmatpush1.msra.mxu0 %v1009
    %2720 = vmatprep.subr.mxu0 %v1018
    %2721 = vmatpush1.msra.mxu0 %v1017
    %2722 = vmatprep.subr.mxu0 %v1026
    %2723 = vmatpush1.msra.mxu0 %v1025
    %2724 = vmatprep.subr.mxu0 %v1034
    %2725 = vmatpush1.msra.mxu0 %v1033
    %2726 = vmatprep.subr.mxu0 %v1042
    %2727 = vmatpush1.msra.mxu0 %v1041
    %2728 = vmatprep.subr.mxu0 %v1050
    %2729 = vmatpush1.msra.mxu0 %v1049
    %2730 = vmatprep.subr.mxu0 %v1058
    %2731 = vmatpush1.msra.mxu0 %v1057
    %2732 = vmatprep.subr.mxu0 %v1066
    %2733 = vmatpush1.msra.mxu0 %v1065
    %2734 = vmatprep.subr.mxu0 %v1074
    %2735 = vmatpush1.msra.mxu0 %v1073
    %2736 = vmatprep.subr.mxu0 %v1082
    %2737 = vmatpush1.msra.mxu0 %v1081
    %2738 = vmatprep.subr.mxu0 %v1090
    %2739 = vmatpush1.msra.mxu0 %v1089
    %2740 = vmatprep.subr.mxu0 %v1098
    %2741 = vmatpush1.msra.mxu0 %v1097
    %2742 = vmatprep.subr.mxu0 %v1106
    %2743 = vmatpush1.msra.mxu0 %v1105
    %2744 = vmatprep.subr.mxu0 %v1114
    %2745 = vmatpush1.msra.mxu0 %v1113
    %2746 = vmatprep.subr.mxu0 %v1122
    %2747 = vmatpush1.msra.mxu0 %v1121
    %2748 = vmatprep.subr.mxu0 %v1130
    %2749 = vmatpush1.msra.mxu0 %v1129
    %2750 = vmatprep.mubr.f32.mxu0 %v606
    %2751 = vmatmul.mubr.f32.gmra.mrb[0].mxu0 %v605
    %v2752 = vpop.f32.mrb[0].mxu0
    %v2753 = vadd.f32 %v2676, %v2752
    %v2754 = vpop.f32.mrb[0].mxu0
    %v2755 = vadd.f32 %v2678, %v2754
    %2756 = vmatprep.mubr.f32.mxu0 %v614
    %2757 = vmatmul.mubr.f32.gmra.mrb[0].mxu0 %v613
    %v2758 = vpop.f32.mrb[0].mxu0
    %v2759 = vadd.f32 %v2682, %v2758
    %v2760 = vpop.f32.mrb[0].mxu0
    %v2761 = vadd.f32 %v2684, %v2760
    %2762 = vdwg.mxu0
    %2763 = vmatprep.subr.mxu0 %v1138
    %2764 = vmatpush1.msra.mxu0 %v1137
    %2765 = vmatprep.subr.mxu0 %v1146
    %2766 = vmatpush1.msra.mxu0 %v1145
    %2767 = vmatprep.subr.mxu0 %v1154
    %2768 = vmatpush1.msra.mxu0 %v1153
    %2769 = vmatprep.subr.mxu0 %v1162
    %2770 = vmatpush1.msra.mxu0 %v1161
    %2771 = vmatprep.subr.mxu0 %v1170
    %2772 = vmatpush1.msra.mxu0 %v1169
    %2773 = vmatprep.subr.mxu0 %v1178
    %2774 = vmatpush1.msra.mxu0 %v1177
    %2775 = vmatprep.subr.mxu0 %v1186
    %2776 = vmatpush1.msra.mxu0 %v1185
    %2777 = vmatprep.subr.mxu0 %v1194
    %2778 = vmatpush1.msra.mxu0 %v1193
    %2779 = vmatprep.subr.mxu0 %v1202
    %2780 = vmatpush1.msra.mxu0 %v1201
    %2781 = vmatprep.subr.mxu0 %v1210
    %2782 = vmatpush1.msra.mxu0 %v1209
    %2783 = vmatprep.subr.mxu0 %v1218
    %2784 = vmatpush1.msra.mxu0 %v1217
    %2785 = vmatprep.subr.mxu0 %v1226
    %2786 = vmatpush1.msra.mxu0 %v1225
    %2787 = vmatprep.subr.mxu0 %v1234
    %2788 = vmatpush1.msra.mxu0 %v1233
    %2789 = vmatprep.subr.mxu0 %v1242
    %2790 = vmatpush1.msra.mxu0 %v1241
    %2791 = vmatprep.subr.mxu0 %v1250
    %2792 = vmatpush1.msra.mxu0 %v1249
    %2793 = vmatprep.subr.mxu0 %v1258
    %2794 = vmatpush1.msra.mxu0 %v1257
    %2795 = vmatprep.subr.mxu0 %v1266
    %2796 = vmatpush1.msra.mxu0 %v1265
    %2797 = vmatprep.subr.mxu0 %v1274
    %2798 = vmatpush1.msra.mxu0 %v1273
    %2799 = vmatprep.subr.mxu0 %v1282
    %2800 = vmatpush1.msra.mxu0 %v1281
    %2801 = vmatprep.subr.mxu0 %v1290
    %2802 = vmatpush1.msra.mxu0 %v1289
    %2803 = vmatprep.subr.mxu0 %v1298
    %2804 = vmatpush1.msra.mxu0 %v1297
    %2805 = vmatprep.subr.mxu0 %v1306
    %2806 = vmatpush1.msra.mxu0 %v1305
    %2807 = vmatprep.subr.mxu0 %v1314
    %2808 = vmatpush1.msra.mxu0 %v1313
    %2809 = vmatprep.subr.mxu0 %v1322
    %2810 = vmatpush1.msra.mxu0 %v1321
    %2811 = vmatprep.subr.mxu0 %v1330
    %2812 = vmatpush1.msra.mxu0 %v1329
    %2813 = vmatprep.subr.mxu0 %v1338
    %2814 = vmatpush1.msra.mxu0 %v1337
    %2815 = vmatprep.subr.mxu0 %v1346
    %2816 = vmatpush1.msra.mxu0 %v1345
    %2817 = vmatprep.subr.mxu0 %v1354
    %2818 = vmatpush1.msra.mxu0 %v1353
    %2819 = vmatprep.subr.mxu0 %v1362
    %2820 = vmatpush1.msra.mxu0 %v1361
    %2821 = vmatprep.subr.mxu0 %v1370
    %2822 = vmatpush1.msra.mxu0 %v1369
    %2823 = vmatprep.subr.mxu0 %v1378
    %2824 = vmatpush1.msra.mxu0 %v1377
    %2825 = vmatprep.subr.mxu0 %v1386
    %2826 = vmatpush1.msra.mxu0 %v1385
    %2827 = vmatprep.mubr.f32.mxu0 %v608
    %2828 = vmatmul.mubr.f32.gmra.mrb[0].mxu0 %v607
    %v2829 = vpop.f32.mrb[0].mxu0
    %v2830 = vadd.f32 %v2753, %v2829
    %v2831 = vpop.f32.mrb[0].mxu0
    %v2832 = vadd.f32 %v2755, %v2831
    %2833 = vmatprep.mubr.f32.mxu0 %v616
    %2834 = vmatmul.mubr.f32.gmra.mrb[0].mxu0 %v615
    %v2835 = vpop.f32.mrb[0].mxu0
    %v2836 = vadd.f32 %v2759, %v2835
    %v2837 = vpop.f32.mrb[0].mxu0
    %v2838 = vadd.f32 %v2761, %v2837
    %2839 = vdwg.mxu0
    %2840 = vmatprep.subr.mxu0 %v1394
    %2841 = vmatpush1.msra.mxu0 %v1393
    %2842 = vmatprep.subr.mxu0 %v1402
    %2843 = vmatpush1.msra.mxu0 %v1401
    %2844 = vmatprep.subr.mxu0 %v1410
    %2845 = vmatpush1.msra.mxu0 %v1409
    %2846 = vmatprep.subr.mxu0 %v1418
    %2847 = vmatpush1.msra.mxu0 %v1417
    %2848 = vmatprep.subr.mxu0 %v1426
    %2849 = vmatpush1.msra.mxu0 %v1425
    %2850 = vmatprep.subr.mxu0 %v1434
    %2851 = vmatpush1.msra.mxu0 %v1433
    %2852 = vmatprep.subr.mxu0 %v1442
    %2853 = vmatpush1.msra.mxu0 %v1441
    %2854 = vmatprep.subr.mxu0 %v1450
    %2855 = vmatpush1.msra.mxu0 %v1449
    %2856 = vmatprep.subr.mxu0 %v1458
    %2857 = vmatpush1.msra.mxu0 %v1457
    %2858 = vmatprep.subr.mxu0 %v1466
    %2859 = vmatpush1.msra.mxu0 %v1465
    %2860 = vmatprep.subr.mxu0 %v1474
    %2861 = vmatpush1.msra.mxu0 %v1473
    %2862 = vmatprep.subr.mxu0 %v1482
    %2863 = vmatpush1.msra.mxu0 %v1481
    %2864 = vmatprep.subr.mxu0 %v1490
    %2865 = vmatpush1.msra.mxu0 %v1489
    %2866 = vmatprep.subr.mxu0 %v1498
    %2867 = vmatpush1.msra.mxu0 %v1497
    %2868 = vmatprep.subr.mxu0 %v1506
    %2869 = vmatpush1.msra.mxu0 %v1505
    %2870 = vmatprep.subr.mxu0 %v1514
    %2871 = vmatpush1.msra.mxu0 %v1513
    %2872 = vmatprep.subr.mxu0 %v1522
    %2873 = vmatpush1.msra.mxu0 %v1521
    %2874 = vmatprep.subr.mxu0 %v1530
    %2875 = vmatpush1.msra.mxu0 %v1529
    %2876 = vmatprep.subr.mxu0 %v1538
    %2877 = vmatpush1.msra.mxu0 %v1537
    %2878 = vmatprep.subr.mxu0 %v1546
    %2879 = vmatpush1.msra.mxu0 %v1545
    %2880 = vmatprep.subr.mxu0 %v1554
    %2881 = vmatpush1.msra.mxu0 %v1553
    %2882 = vmatprep.subr.mxu0 %v1562
    %2883 = vmatpush1.msra.mxu0 %v1561
    %2884 = vmatprep.subr.mxu0 %v1570
    %2885 = vmatpush1.msra.mxu0 %v1569
    %2886 = vmatprep.subr.mxu0 %v1578
    %2887 = vmatpush1.msra.mxu0 %v1577
    %2888 = vmatprep.subr.mxu0 %v1586
    %2889 = vmatpush1.msra.mxu0 %v1585
    %2890 = vmatprep.subr.mxu0 %v1594
    %2891 = vmatpush1.msra.mxu0 %v1593
    %2892 = vmatprep.subr.mxu0 %v1602
    %2893 = vmatpush1.msra.mxu0 %v1601
    %2894 = vmatprep.subr.mxu0 %v1610
    %2895 = vmatpush1.msra.mxu0 %v1609
    %2896 = vmatprep.subr.mxu0 %v1618
    %2897 = vmatpush1.msra.mxu0 %v1617
    %2898 = vmatprep.subr.mxu0 %v1626
    %2899 = vmatpush1.msra.mxu0 %v1625
    %2900 = vmatprep.subr.mxu0 %v1634
    %2901 = vmatpush1.msra.mxu0 %v1633
    %2902 = vmatprep.subr.mxu0 %v1642
    %2903 = vmatpush1.msra.mxu0 %v1641
    %2904 = vmatprep.mubr.f32.mxu0 %v610
    %2905 = vmatmul.mubr.f32.gmra.mrb[0].mxu0 %v609
    %v2906 = vpop.f32.mrb[0].mxu0
    %v2907 = vadd.f32 %v2830, %v2906
    %v2908 = vpop.f32.mrb[0].mxu0
    %v2909 = vadd.f32 %v2832, %v2908
    %2910 = vmatprep.mubr.f32.mxu0 %v618
    %2911 = vmatmul.mubr.f32.gmra.mrb[0].mxu0 %v617
    %v2912 = vpop.f32.mrb[0].mxu0
    %v2913 = vadd.f32 %v2836, %v2912
    %v2914 = vpop.f32.mrb[0].mxu0
    %v2915 = vadd.f32 %v2838, %v2914
    %2916 = vdwg.mxu0
    %v2917 = vmax.f32 %v1983, 0.0
    %v2918 = vmax.f32 %v1985, 0.0
    %v2919 = vmax.f32 %v2291, 0.0
    %v2920 = vmax.f32 %v2293, 0.0
    %v2921 = vmax.f32 %v2599, 0.0
    %v2922 = vmax.f32 %v2601, 0.0
    %v2923 = vmax.f32 %v2907, 0.0
    %v2924 = vmax.f32 %v2909, 0.0
    %v2925 = vmax.f32 %v1989, 0.0
    %v2926 = vmax.f32 %v1991, 0.0
    %v2927 = vmax.f32 %v2297, 0.0
    %v2928 = vmax.f32 %v2299, 0.0
    %v2929 = vmax.f32 %v2605, 0.0
    %v2930 = vmax.f32 %v2607, 0.0
    %v2931 = vmax.f32 %v2913, 0.0
    %v2932 = vmax.f32 %v2915, 0.0
    %v2933 = vld [vmem:[#allocation11] sm:$0xff]
    %v2934 = vld [vmem:[#allocation11 + $0x8] sm:$0xff]
    %v2935 = vld [vmem:[#allocation11 + $0x10] sm:$0xff]
    %v2936 = vld [vmem:[#allocation11 + $0x18] sm:$0xff]
    %v2937 = vld [vmem:[#allocation11 + $0x20] sm:$0xff]
    %v2938 = vld [vmem:[#allocation11 + $0x28] sm:$0xff]
    %v2939 = vld [vmem:[#allocation11 + $0x30] sm:$0xff]
    %v2940 = vld [vmem:[#allocation11 + $0x38] sm:$0xff]
    %v2941 = vld [vmem:[#allocation11 + $0x40] sm:$0xff]
    %v2942 = vld [vmem:[#allocation11 + $0x48] sm:$0xff]
    %v2943 = vld [vmem:[#allocation11 + $0x50] sm:$0xff]
    %v2944 = vld [vmem:[#allocation11 + $0x58] sm:$0xff]
    %v2945 = vld [vmem:[#allocation11 + $0x60] sm:$0xff]
    %v2946 = vld [vmem:[#allocation11 + $0x68] sm:$0xff]
    %v2947 = vld [vmem:[#allocation11 + $0x70] sm:$0xff]
    %v2948 = vld [vmem:[#allocation11 + $0x78] sm:$0xff]
    %v2949 = vld [vmem:[#allocation11 + $0x80] sm:$0xff]
    %v2950 = vld [vmem:[#allocation11 + $0x88] sm:$0xff]
    %v2951 = vld [vmem:[#allocation11 + $0x90] sm:$0xff]
    %v2952 = vld [vmem:[#allocation11 + $0x98] sm:$0xff]
    %v2953 = vld [vmem:[#allocation11 + $0xa0] sm:$0xff]
    %v2954 = vld [vmem:[#allocation11 + $0xa8] sm:$0xff]
    %v2955 = vld [vmem:[#allocation11 + $0xb0] sm:$0xff]
    %v2956 = vld [vmem:[#allocation11 + $0xb8] sm:$0xff]
    %v2957 = vld [vmem:[#allocation11 + $0xc0] sm:$0xff]
    %v2958 = vld [vmem:[#allocation11 + $0xc8] sm:$0xff]
    %v2959 = vld [vmem:[#allocation11 + $0xd0] sm:$0xff]
    %v2960 = vld [vmem:[#allocation11 + $0xd8] sm:$0xff]
    %v2961 = vld [vmem:[#allocation11 + $0xe0] sm:$0xff]
    %v2962 = vld [vmem:[#allocation11 + $0xe8] sm:$0xff]
    %v2963 = vld [vmem:[#allocation11 + $0xf0] sm:$0xff]
    %v2964 = vld [vmem:[#allocation11 + $0xf8] sm:$0xff]
    %v2965 = vld [vmem:[#allocation11 + $0x100] sm:$0xff]
    %v2966 = vld [vmem:[#allocation11 + $0x108] sm:$0xff]
    %v2967 = vld [vmem:[#allocation11 + $0x110] sm:$0xff]
    %v2968 = vld [vmem:[#allocation11 + $0x118] sm:$0xff]
    %v2969 = vld [vmem:[#allocation11 + $0x120] sm:$0xff]
    %v2970 = vld [vmem:[#allocation11 + $0x128] sm:$0xff]
    %v2971 = vld [vmem:[#allocation11 + $0x130] sm:$0xff]
    %v2972 = vld [vmem:[#allocation11 + $0x138] sm:$0xff]
    %v2973 = vld [vmem:[#allocation11 + $0x140] sm:$0xff]
    %v2974 = vld [vmem:[#allocation11 + $0x148] sm:$0xff]
    %v2975 = vld [vmem:[#allocation11 + $0x150] sm:$0xff]
    %v2976 = vld [vmem:[#allocation11 + $0x158] sm:$0xff]
    %v2977 = vld [vmem:[#allocation11 + $0x160] sm:$0xff]
    %v2978 = vld [vmem:[#allocation11 + $0x168] sm:$0xff]
    %v2979 = vld [vmem:[#allocation11 + $0x170] sm:$0xff]
    %v2980 = vld [vmem:[#allocation11 + $0x178] sm:$0xff]
    %v2981 = vld [vmem:[#allocation11 + $0x180] sm:$0xff]
    %v2982 = vld [vmem:[#allocation11 + $0x188] sm:$0xff]
    %v2983 = vld [vmem:[#allocation11 + $0x190] sm:$0xff]
    %v2984 = vld [vmem:[#allocation11 + $0x198] sm:$0xff]
    %v2985 = vld [vmem:[#allocation11 + $0x1a0] sm:$0xff]
    %v2986 = vld [vmem:[#allocation11 + $0x1a8] sm:$0xff]
    %v2987 = vld [vmem:[#allocation11 + $0x1b0] sm:$0xff]
    %v2988 = vld [vmem:[#allocation11 + $0x1b8] sm:$0xff]
    %v2989 = vld [vmem:[#allocation11 + $0x1c0] sm:$0xff]
    %v2990 = vld [vmem:[#allocation11 + $0x1c8] sm:$0xff]
    %v2991 = vld [vmem:[#allocation11 + $0x1d0] sm:$0xff]
    %v2992 = vld [vmem:[#allocation11 + $0x1d8] sm:$0xff]
    %v2993 = vld [vmem:[#allocation11 + $0x1e0] sm:$0xff]
    %v2994 = vld [vmem:[#allocation11 + $0x1e8] sm:$0xff]
    %v2995 = vld [vmem:[#allocation11 + $0x1f0] sm:$0xff]
    %v2996 = vld [vmem:[#allocation11 + $0x1f8] sm:$0xff]
    %v2997 = vld [vmem:[#allocation11 + $0x200] sm:$0xff]
    %v2998 = vld [vmem:[#allocation11 + $0x208] sm:$0xff]
    %v2999 = vld [vmem:[#allocation11 + $0x210] sm:$0xff]
    %v3000 = vld [vmem:[#allocation11 + $0x218] sm:$0xff]
    %v3001 = vld [vmem:[#allocation11 + $0x220] sm:$0xff]
    %v3002 = vld [vmem:[#allocation11 + $0x228] sm:$0xff]
    %v3003 = vld [vmem:[#allocation11 + $0x230] sm:$0xff]
    %v3004 = vld [vmem:[#allocation11 + $0x238] sm:$0xff]
    %v3005 = vld [vmem:[#allocation11 + $0x240] sm:$0xff]
    %v3006 = vld [vmem:[#allocation11 + $0x248] sm:$0xff]
    %v3007 = vld [vmem:[#allocation11 + $0x250] sm:$0xff]
    %v3008 = vld [vmem:[#allocation11 + $0x258] sm:$0xff]
    %v3009 = vld [vmem:[#allocation11 + $0x260] sm:$0xff]
    %v3010 = vld [vmem:[#allocation11 + $0x268] sm:$0xff]
    %v3011 = vld [vmem:[#allocation11 + $0x270] sm:$0xff]
    %v3012 = vld [vmem:[#allocation11 + $0x278] sm:$0xff]
    %v3013 = vld [vmem:[#allocation11 + $0x280] sm:$0xff]
    %v3014 = vld [vmem:[#allocation11 + $0x288] sm:$0xff]
    %v3015 = vld [vmem:[#allocation11 + $0x290] sm:$0xff]
    %v3016 = vld [vmem:[#allocation11 + $0x298] sm:$0xff]
    %v3017 = vld [vmem:[#allocation11 + $0x2a0] sm:$0xff]
    %v3018 = vld [vmem:[#allocation11 + $0x2a8] sm:$0xff]
    %v3019 = vld [vmem:[#allocation11 + $0x2b0] sm:$0xff]
    %v3020 = vld [vmem:[#allocation11 + $0x2b8] sm:$0xff]
    %v3021 = vld [vmem:[#allocation11 + $0x2c0] sm:$0xff]
    %v3022 = vld [vmem:[#allocation11 + $0x2c8] sm:$0xff]
    %v3023 = vld [vmem:[#allocation11 + $0x2d0] sm:$0xff]
    %v3024 = vld [vmem:[#allocation11 + $0x2d8] sm:$0xff]
    %v3025 = vld [vmem:[#allocation11 + $0x2e0] sm:$0xff]
    %v3026 = vld [vmem:[#allocation11 + $0x2e8] sm:$0xff]
    %v3027 = vld [vmem:[#allocation11 + $0x2f0] sm:$0xff]
    %v3028 = vld [vmem:[#allocation11 + $0x2f8] sm:$0xff]
    %v3029 = vld [vmem:[#allocation11 + $0x300] sm:$0xff]
    %v3030 = vld [vmem:[#allocation11 + $0x308] sm:$0xff]
    %v3031 = vld [vmem:[#allocation11 + $0x310] sm:$0xff]
    %v3032 = vld [vmem:[#allocation11 + $0x318] sm:$0xff]
    %v3033 = vld [vmem:[#allocation11 + $0x320] sm:$0xff]
    %v3034 = vld [vmem:[#allocation11 + $0x328] sm:$0xff]
    %v3035 = vld [vmem:[#allocation11 + $0x330] sm:$0xff]
    %v3036 = vld [vmem:[#allocation11 + $0x338] sm:$0xff]
    %v3037 = vld [vmem:[#allocation11 + $0x340] sm:$0xff]
    %v3038 = vld [vmem:[#allocation11 + $0x348] sm:$0xff]
    %v3039 = vld [vmem:[#allocation11 + $0x350] sm:$0xff]
    %v3040 = vld [vmem:[#allocation11 + $0x358] sm:$0xff]
    %v3041 = vld [vmem:[#allocation11 + $0x360] sm:$0xff]
    %v3042 = vld [vmem:[#allocation11 + $0x368] sm:$0xff]
    %v3043 = vld [vmem:[#allocation11 + $0x370] sm:$0xff]
    %v3044 = vld [vmem:[#allocation11 + $0x378] sm:$0xff]
    %v3045 = vld [vmem:[#allocation11 + $0x380] sm:$0xff]
    %v3046 = vld [vmem:[#allocation11 + $0x388] sm:$0xff]
    %v3047 = vld [vmem:[#allocation11 + $0x390] sm:$0xff]
    %v3048 = vld [vmem:[#allocation11 + $0x398] sm:$0xff]
    %v3049 = vld [vmem:[#allocation11 + $0x3a0] sm:$0xff]
    %v3050 = vld [vmem:[#allocation11 + $0x3a8] sm:$0xff]
    %v3051 = vld [vmem:[#allocation11 + $0x3b0] sm:$0xff]
    %v3052 = vld [vmem:[#allocation11 + $0x3b8] sm:$0xff]
    %v3053 = vld [vmem:[#allocation11 + $0x3c0] sm:$0xff]
    %v3054 = vld [vmem:[#allocation11 + $0x3c8] sm:$0xff]
    %v3055 = vld [vmem:[#allocation11 + $0x3d0] sm:$0xff]
    %v3056 = vld [vmem:[#allocation11 + $0x3d8] sm:$0xff]
    %v3057 = vld [vmem:[#allocation11 + $0x3e0] sm:$0xff]
    %v3058 = vld [vmem:[#allocation11 + $0x3e8] sm:$0xff]
    %v3059 = vld [vmem:[#allocation11 + $0x3f0] sm:$0xff]
    %v3060 = vld [vmem:[#allocation11 + $0x3f8] sm:$0xff]
    %v3061 = vld [vmem:[#allocation11 + $0x400] sm:$0xff]
    %v3062 = vld [vmem:[#allocation11 + $0x408] sm:$0xff]
    %v3063 = vld [vmem:[#allocation11 + $0x410] sm:$0xff]
    %v3064 = vld [vmem:[#allocation11 + $0x418] sm:$0xff]
    %v3065 = vld [vmem:[#allocation11 + $0x420] sm:$0xff]
    %v3066 = vld [vmem:[#allocation11 + $0x428] sm:$0xff]
    %v3067 = vld [vmem:[#allocation11 + $0x430] sm:$0xff]
    %v3068 = vld [vmem:[#allocation11 + $0x438] sm:$0xff]
    %v3069 = vld [vmem:[#allocation11 + $0x440] sm:$0xff]
    %v3070 = vld [vmem:[#allocation11 + $0x448] sm:$0xff]
    %v3071 = vld [vmem:[#allocation11 + $0x450] sm:$0xff]
    %v3072 = vld [vmem:[#allocation11 + $0x458] sm:$0xff]
    %v3073 = vld [vmem:[#allocation11 + $0x460] sm:$0xff]
    %v3074 = vld [vmem:[#allocation11 + $0x468] sm:$0xff]
    %v3075 = vld [vmem:[#allocation11 + $0x470] sm:$0xff]
    %v3076 = vld [vmem:[#allocation11 + $0x478] sm:$0xff]
    %v3077 = vld [vmem:[#allocation11 + $0x480] sm:$0xff]
    %v3078 = vld [vmem:[#allocation11 + $0x488] sm:$0xff]
    %v3079 = vld [vmem:[#allocation11 + $0x490] sm:$0xff]
    %v3080 = vld [vmem:[#allocation11 + $0x498] sm:$0xff]
    %v3081 = vld [vmem:[#allocation11 + $0x4a0] sm:$0xff]
    %v3082 = vld [vmem:[#allocation11 + $0x4a8] sm:$0xff]
    %v3083 = vld [vmem:[#allocation11 + $0x4b0] sm:$0xff]
    %v3084 = vld [vmem:[#allocation11 + $0x4b8] sm:$0xff]
    %v3085 = vld [vmem:[#allocation11 + $0x4c0] sm:$0xff]
    %v3086 = vld [vmem:[#allocation11 + $0x4c8] sm:$0xff]
    %v3087 = vld [vmem:[#allocation11 + $0x4d0] sm:$0xff]
    %v3088 = vld [vmem:[#allocation11 + $0x4d8] sm:$0xff]
    %v3089 = vld [vmem:[#allocation11 + $0x4e0] sm:$0xff]
    %v3090 = vld [vmem:[#allocation11 + $0x4e8] sm:$0xff]
    %v3091 = vld [vmem:[#allocation11 + $0x4f0] sm:$0xff]
    %v3092 = vld [vmem:[#allocation11 + $0x4f8] sm:$0xff]
    %v3093 = vld [vmem:[#allocation11 + $0x500] sm:$0xff]
    %v3094 = vld [vmem:[#allocation11 + $0x508] sm:$0xff]
    %v3095 = vld [vmem:[#allocation11 + $0x510] sm:$0xff]
    %v3096 = vld [vmem:[#allocation11 + $0x518] sm:$0xff]
    %v3097 = vld [vmem:[#allocation11 + $0x520] sm:$0xff]
    %v3098 = vld [vmem:[#allocation11 + $0x528] sm:$0xff]
    %v3099 = vld [vmem:[#allocation11 + $0x530] sm:$0xff]
    %v3100 = vld [vmem:[#allocation11 + $0x538] sm:$0xff]
    %v3101 = vld [vmem:[#allocation11 + $0x540] sm:$0xff]
    %v3102 = vld [vmem:[#allocation11 + $0x548] sm:$0xff]
    %v3103 = vld [vmem:[#allocation11 + $0x550] sm:$0xff]
    %v3104 = vld [vmem:[#allocation11 + $0x558] sm:$0xff]
    %v3105 = vld [vmem:[#allocation11 + $0x560] sm:$0xff]
    %v3106 = vld [vmem:[#allocation11 + $0x568] sm:$0xff]
    %v3107 = vld [vmem:[#allocation11 + $0x570] sm:$0xff]
    %v3108 = vld [vmem:[#allocation11 + $0x578] sm:$0xff]
    %v3109 = vld [vmem:[#allocation11 + $0x580] sm:$0xff]
    %v3110 = vld [vmem:[#allocation11 + $0x588] sm:$0xff]
    %v3111 = vld [vmem:[#allocation11 + $0x590] sm:$0xff]
    %v3112 = vld [vmem:[#allocation11 + $0x598] sm:$0xff]
    %v3113 = vld [vmem:[#allocation11 + $0x5a0] sm:$0xff]
    %v3114 = vld [vmem:[#allocation11 + $0x5a8] sm:$0xff]
    %v3115 = vld [vmem:[#allocation11 + $0x5b0] sm:$0xff]
    %v3116 = vld [vmem:[#allocation11 + $0x5b8] sm:$0xff]
    %v3117 = vld [vmem:[#allocation11 + $0x5c0] sm:$0xff]
    %v3118 = vld [vmem:[#allocation11 + $0x5c8] sm:$0xff]
    %v3119 = vld [vmem:[#allocation11 + $0x5d0] sm:$0xff]
    %v3120 = vld [vmem:[#allocation11 + $0x5d8] sm:$0xff]
    %v3121 = vld [vmem:[#allocation11 + $0x5e0] sm:$0xff]
    %v3122 = vld [vmem:[#allocation11 + $0x5e8] sm:$0xff]
    %v3123 = vld [vmem:[#allocation11 + $0x5f0] sm:$0xff]
    %v3124 = vld [vmem:[#allocation11 + $0x5f8] sm:$0xff]
    %v3125 = vld [vmem:[#allocation11 + $0x600] sm:$0xff]
    %v3126 = vld [vmem:[#allocation11 + $0x608] sm:$0xff]
    %v3127 = vld [vmem:[#allocation11 + $0x610] sm:$0xff]
    %v3128 = vld [vmem:[#allocation11 + $0x618] sm:$0xff]
    %v3129 = vld [vmem:[#allocation11 + $0x620] sm:$0xff]
    %v3130 = vld [vmem:[#allocation11 + $0x628] sm:$0xff]
    %v3131 = vld [vmem:[#allocation11 + $0x630] sm:$0xff]
    %v3132 = vld [vmem:[#allocation11 + $0x638] sm:$0xff]
    %v3133 = vld [vmem:[#allocation11 + $0x640] sm:$0xff]
    %v3134 = vld [vmem:[#allocation11 + $0x648] sm:$0xff]
    %v3135 = vld [vmem:[#allocation11 + $0x650] sm:$0xff]
    %v3136 = vld [vmem:[#allocation11 + $0x658] sm:$0xff]
    %v3137 = vld [vmem:[#allocation11 + $0x660] sm:$0xff]
    %v3138 = vld [vmem:[#allocation11 + $0x668] sm:$0xff]
    %v3139 = vld [vmem:[#allocation11 + $0x670] sm:$0xff]
    %v3140 = vld [vmem:[#allocation11 + $0x678] sm:$0xff]
    %v3141 = vld [vmem:[#allocation11 + $0x680] sm:$0xff]
    %v3142 = vld [vmem:[#allocation11 + $0x688] sm:$0xff]
    %v3143 = vld [vmem:[#allocation11 + $0x690] sm:$0xff]
    %v3144 = vld [vmem:[#allocation11 + $0x698] sm:$0xff]
    %v3145 = vld [vmem:[#allocation11 + $0x6a0] sm:$0xff]
    %v3146 = vld [vmem:[#allocation11 + $0x6a8] sm:$0xff]
    %v3147 = vld [vmem:[#allocation11 + $0x6b0] sm:$0xff]
    %v3148 = vld [vmem:[#allocation11 + $0x6b8] sm:$0xff]
    %v3149 = vld [vmem:[#allocation11 + $0x6c0] sm:$0xff]
    %v3150 = vld [vmem:[#allocation11 + $0x6c8] sm:$0xff]
    %v3151 = vld [vmem:[#allocation11 + $0x6d0] sm:$0xff]
    %v3152 = vld [vmem:[#allocation11 + $0x6d8] sm:$0xff]
    %v3153 = vld [vmem:[#allocation11 + $0x6e0] sm:$0xff]
    %v3154 = vld [vmem:[#allocation11 + $0x6e8] sm:$0xff]
    %v3155 = vld [vmem:[#allocation11 + $0x6f0] sm:$0xff]
    %v3156 = vld [vmem:[#allocation11 + $0x6f8] sm:$0xff]
    %v3157 = vld [vmem:[#allocation11 + $0x700] sm:$0xff]
    %v3158 = vld [vmem:[#allocation11 + $0x708] sm:$0xff]
    %v3159 = vld [vmem:[#allocation11 + $0x710] sm:$0xff]
    %v3160 = vld [vmem:[#allocation11 + $0x718] sm:$0xff]
    %v3161 = vld [vmem:[#allocation11 + $0x720] sm:$0xff]
    %v3162 = vld [vmem:[#allocation11 + $0x728] sm:$0xff]
    %v3163 = vld [vmem:[#allocation11 + $0x730] sm:$0xff]
    %v3164 = vld [vmem:[#allocation11 + $0x738] sm:$0xff]
    %v3165 = vld [vmem:[#allocation11 + $0x740] sm:$0xff]
    %v3166 = vld [vmem:[#allocation11 + $0x748] sm:$0xff]
    %v3167 = vld [vmem:[#allocation11 + $0x750] sm:$0xff]
    %v3168 = vld [vmem:[#allocation11 + $0x758] sm:$0xff]
    %v3169 = vld [vmem:[#allocation11 + $0x760] sm:$0xff]
    %v3170 = vld [vmem:[#allocation11 + $0x768] sm:$0xff]
    %v3171 = vld [vmem:[#allocation11 + $0x770] sm:$0xff]
    %v3172 = vld [vmem:[#allocation11 + $0x778] sm:$0xff]
    %v3173 = vld [vmem:[#allocation11 + $0x780] sm:$0xff]
    %v3174 = vld [vmem:[#allocation11 + $0x788] sm:$0xff]
    %v3175 = vld [vmem:[#allocation11 + $0x790] sm:$0xff]
    %v3176 = vld [vmem:[#allocation11 + $0x798] sm:$0xff]
    %v3177 = vld [vmem:[#allocation11 + $0x7a0] sm:$0xff]
    %v3178 = vld [vmem:[#allocation11 + $0x7a8] sm:$0xff]
    %v3179 = vld [vmem:[#allocation11 + $0x7b0] sm:$0xff]
    %v3180 = vld [vmem:[#allocation11 + $0x7b8] sm:$0xff]
    %v3181 = vld [vmem:[#allocation11 + $0x7c0] sm:$0xff]
    %v3182 = vld [vmem:[#allocation11 + $0x7c8] sm:$0xff]
    %v3183 = vld [vmem:[#allocation11 + $0x7d0] sm:$0xff]
    %v3184 = vld [vmem:[#allocation11 + $0x7d8] sm:$0xff]
    %v3185 = vld [vmem:[#allocation11 + $0x7e0] sm:$0xff]
    %v3186 = vld [vmem:[#allocation11 + $0x7e8] sm:$0xff]
    %v3187 = vld [vmem:[#allocation11 + $0x7f0] sm:$0xff]
    %v3188 = vld [vmem:[#allocation11 + $0x7f8] sm:$0xff]
    %v3189 = vld [vmem:[#allocation11 + $0x800] sm:$0xff]
    %v3190 = vld [vmem:[#allocation11 + $0x808] sm:$0xff]
    %v3191 = vld [vmem:[#allocation11 + $0x810] sm:$0xff]
    %v3192 = vld [vmem:[#allocation11 + $0x818] sm:$0xff]
    %v3193 = vld [vmem:[#allocation11 + $0x820] sm:$0xff]
    %v3194 = vld [vmem:[#allocation11 + $0x828] sm:$0xff]
    %v3195 = vld [vmem:[#allocation11 + $0x830] sm:$0xff]
    %v3196 = vld [vmem:[#allocation11 + $0x838] sm:$0xff]
    %v3197 = vld [vmem:[#allocation11 + $0x840] sm:$0xff]
    %v3198 = vld [vmem:[#allocation11 + $0x848] sm:$0xff]
    %v3199 = vld [vmem:[#allocation11 + $0x850] sm:$0xff]
    %v3200 = vld [vmem:[#allocation11 + $0x858] sm:$0xff]
    %v3201 = vld [vmem:[#allocation11 + $0x860] sm:$0xff]
    %v3202 = vld [vmem:[#allocation11 + $0x868] sm:$0xff]
    %v3203 = vld [vmem:[#allocation11 + $0x870] sm:$0xff]
    %v3204 = vld [vmem:[#allocation11 + $0x878] sm:$0xff]
    %v3205 = vld [vmem:[#allocation11 + $0x880] sm:$0xff]
    %v3206 = vld [vmem:[#allocation11 + $0x888] sm:$0xff]
    %v3207 = vld [vmem:[#allocation11 + $0x890] sm:$0xff]
    %v3208 = vld [vmem:[#allocation11 + $0x898] sm:$0xff]
    %v3209 = vld [vmem:[#allocation11 + $0x8a0] sm:$0xff]
    %v3210 = vld [vmem:[#allocation11 + $0x8a8] sm:$0xff]
    %v3211 = vld [vmem:[#allocation11 + $0x8b0] sm:$0xff]
    %v3212 = vld [vmem:[#allocation11 + $0x8b8] sm:$0xff]
    %v3213 = vld [vmem:[#allocation11 + $0x8c0] sm:$0xff]
    %v3214 = vld [vmem:[#allocation11 + $0x8c8] sm:$0xff]
    %v3215 = vld [vmem:[#allocation11 + $0x8d0] sm:$0xff]
    %v3216 = vld [vmem:[#allocation11 + $0x8d8] sm:$0xff]
    %v3217 = vld [vmem:[#allocation11 + $0x8e0] sm:$0xff]
    %v3218 = vld [vmem:[#allocation11 + $0x8e8] sm:$0xff]
    %v3219 = vld [vmem:[#allocation11 + $0x8f0] sm:$0xff]
    %v3220 = vld [vmem:[#allocation11 + $0x8f8] sm:$0xff]
    %v3221 = vld [vmem:[#allocation11 + $0x900] sm:$0xff]
    %v3222 = vld [vmem:[#allocation11 + $0x908] sm:$0xff]
    %v3223 = vld [vmem:[#allocation11 + $0x910] sm:$0xff]
    %v3224 = vld [vmem:[#allocation11 + $0x918] sm:$0xff]
    %v3225 = vld [vmem:[#allocation11 + $0x920] sm:$0xff]
    %v3226 = vld [vmem:[#allocation11 + $0x928] sm:$0xff]
    %v3227 = vld [vmem:[#allocation11 + $0x930] sm:$0xff]
    %v3228 = vld [vmem:[#allocation11 + $0x938] sm:$0xff]
    %v3229 = vld [vmem:[#allocation11 + $0x940] sm:$0xff]
    %v3230 = vld [vmem:[#allocation11 + $0x948] sm:$0xff]
    %v3231 = vld [vmem:[#allocation11 + $0x950] sm:$0xff]
    %v3232 = vld [vmem:[#allocation11 + $0x958] sm:$0xff]
    %v3233 = vld [vmem:[#allocation11 + $0x960] sm:$0xff]
    %v3234 = vld [vmem:[#allocation11 + $0x968] sm:$0xff]
    %v3235 = vld [vmem:[#allocation11 + $0x970] sm:$0xff]
    %v3236 = vld [vmem:[#allocation11 + $0x978] sm:$0xff]
    %v3237 = vld [vmem:[#allocation11 + $0x980] sm:$0xff]
    %v3238 = vld [vmem:[#allocation11 + $0x988] sm:$0xff]
    %v3239 = vld [vmem:[#allocation11 + $0x990] sm:$0xff]
    %v3240 = vld [vmem:[#allocation11 + $0x998] sm:$0xff]
    %v3241 = vld [vmem:[#allocation11 + $0x9a0] sm:$0xff]
    %v3242 = vld [vmem:[#allocation11 + $0x9a8] sm:$0xff]
    %v3243 = vld [vmem:[#allocation11 + $0x9b0] sm:$0xff]
    %v3244 = vld [vmem:[#allocation11 + $0x9b8] sm:$0xff]
    %v3245 = vld [vmem:[#allocation11 + $0x9c0] sm:$0xff]
    %v3246 = vld [vmem:[#allocation11 + $0x9c8] sm:$0xff]
    %v3247 = vld [vmem:[#allocation11 + $0x9d0] sm:$0xff]
    %v3248 = vld [vmem:[#allocation11 + $0x9d8] sm:$0xff]
    %v3249 = vld [vmem:[#allocation11 + $0x9e0] sm:$0xff]
    %v3250 = vld [vmem:[#allocation11 + $0x9e8] sm:$0xff]
    %v3251 = vld [vmem:[#allocation11 + $0x9f0] sm:$0xff]
    %v3252 = vld [vmem:[#allocation11 + $0x9f8] sm:$0xff]
    %v3253 = vld [vmem:[#allocation11 + $0xa00] sm:$0xff]
    %v3254 = vld [vmem:[#allocation11 + $0xa08] sm:$0xff]
    %v3255 = vld [vmem:[#allocation11 + $0xa10] sm:$0xff]
    %v3256 = vld [vmem:[#allocation11 + $0xa18] sm:$0xff]
    %v3257 = vld [vmem:[#allocation11 + $0xa20] sm:$0xff]
    %v3258 = vld [vmem:[#allocation11 + $0xa28] sm:$0xff]
    %v3259 = vld [vmem:[#allocation11 + $0xa30] sm:$0xff]
    %v3260 = vld [vmem:[#allocation11 + $0xa38] sm:$0xff]
    %v3261 = vld [vmem:[#allocation11 + $0xa40] sm:$0xff]
    %v3262 = vld [vmem:[#allocation11 + $0xa48] sm:$0xff]
    %v3263 = vld [vmem:[#allocation11 + $0xa50] sm:$0xff]
    %v3264 = vld [vmem:[#allocation11 + $0xa58] sm:$0xff]
    %v3265 = vld [vmem:[#allocation11 + $0xa60] sm:$0xff]
    %v3266 = vld [vmem:[#allocation11 + $0xa68] sm:$0xff]
    %v3267 = vld [vmem:[#allocation11 + $0xa70] sm:$0xff]
    %v3268 = vld [vmem:[#allocation11 + $0xa78] sm:$0xff]
    %v3269 = vld [vmem:[#allocation11 + $0xa80] sm:$0xff]
    %v3270 = vld [vmem:[#allocation11 + $0xa88] sm:$0xff]
    %v3271 = vld [vmem:[#allocation11 + $0xa90] sm:$0xff]
    %v3272 = vld [vmem:[#allocation11 + $0xa98] sm:$0xff]
    %v3273 = vld [vmem:[#allocation11 + $0xaa0] sm:$0xff]
    %v3274 = vld [vmem:[#allocation11 + $0xaa8] sm:$0xff]
    %v3275 = vld [vmem:[#allocation11 + $0xab0] sm:$0xff]
    %v3276 = vld [vmem:[#allocation11 + $0xab8] sm:$0xff]
    %v3277 = vld [vmem:[#allocation11 + $0xac0] sm:$0xff]
    %v3278 = vld [vmem:[#allocation11 + $0xac8] sm:$0xff]
    %v3279 = vld [vmem:[#allocation11 + $0xad0] sm:$0xff]
    %v3280 = vld [vmem:[#allocation11 + $0xad8] sm:$0xff]
    %v3281 = vld [vmem:[#allocation11 + $0xae0] sm:$0xff]
    %v3282 = vld [vmem:[#allocation11 + $0xae8] sm:$0xff]
    %v3283 = vld [vmem:[#allocation11 + $0xaf0] sm:$0xff]
    %v3284 = vld [vmem:[#allocation11 + $0xaf8] sm:$0xff]
    %v3285 = vld [vmem:[#allocation11 + $0xb00] sm:$0xff]
    %v3286 = vld [vmem:[#allocation11 + $0xb08] sm:$0xff]
    %v3287 = vld [vmem:[#allocation11 + $0xb10] sm:$0xff]
    %v3288 = vld [vmem:[#allocation11 + $0xb18] sm:$0xff]
    %v3289 = vld [vmem:[#allocation11 + $0xb20] sm:$0xff]
    %v3290 = vld [vmem:[#allocation11 + $0xb28] sm:$0xff]
    %v3291 = vld [vmem:[#allocation11 + $0xb30] sm:$0xff]
    %v3292 = vld [vmem:[#allocation11 + $0xb38] sm:$0xff]
    %v3293 = vld [vmem:[#allocation11 + $0xb40] sm:$0xff]
    %v3294 = vld [vmem:[#allocation11 + $0xb48] sm:$0xff]
    %v3295 = vld [vmem:[#allocation11 + $0xb50] sm:$0xff]
    %v3296 = vld [vmem:[#allocation11 + $0xb58] sm:$0xff]
    %v3297 = vld [vmem:[#allocation11 + $0xb60] sm:$0xff]
    %v3298 = vld [vmem:[#allocation11 + $0xb68] sm:$0xff]
    %v3299 = vld [vmem:[#allocation11 + $0xb70] sm:$0xff]
    %v3300 = vld [vmem:[#allocation11 + $0xb78] sm:$0xff]
    %v3301 = vld [vmem:[#allocation11 + $0xb80] sm:$0xff]
    %v3302 = vld [vmem:[#allocation11 + $0xb88] sm:$0xff]
    %v3303 = vld [vmem:[#allocation11 + $0xb90] sm:$0xff]
    %v3304 = vld [vmem:[#allocation11 + $0xb98] sm:$0xff]
    %v3305 = vld [vmem:[#allocation11 + $0xba0] sm:$0xff]
    %v3306 = vld [vmem:[#allocation11 + $0xba8] sm:$0xff]
    %v3307 = vld [vmem:[#allocation11 + $0xbb0] sm:$0xff]
    %v3308 = vld [vmem:[#allocation11 + $0xbb8] sm:$0xff]
    %v3309 = vld [vmem:[#allocation11 + $0xbc0] sm:$0xff]
    %v3310 = vld [vmem:[#allocation11 + $0xbc8] sm:$0xff]
    %v3311 = vld [vmem:[#allocation11 + $0xbd0] sm:$0xff]
    %v3312 = vld [vmem:[#allocation11 + $0xbd8] sm:$0xff]
    %v3313 = vld [vmem:[#allocation11 + $0xbe0] sm:$0xff]
    %v3314 = vld [vmem:[#allocation11 + $0xbe8] sm:$0xff]
    %v3315 = vld [vmem:[#allocation11 + $0xbf0] sm:$0xff]
    %v3316 = vld [vmem:[#allocation11 + $0xbf8] sm:$0xff]
    %v3317 = vld [vmem:[#allocation11 + $0xc00] sm:$0xff]
    %v3318 = vld [vmem:[#allocation11 + $0xc08] sm:$0xff]
    %v3319 = vld [vmem:[#allocation11 + $0xc10] sm:$0xff]
    %v3320 = vld [vmem:[#allocation11 + $0xc18] sm:$0xff]
    %v3321 = vld [vmem:[#allocation11 + $0xc20] sm:$0xff]
    %v3322 = vld [vmem:[#allocation11 + $0xc28] sm:$0xff]
    %v3323 = vld [vmem:[#allocation11 + $0xc30] sm:$0xff]
    %v3324 = vld [vmem:[#allocation11 + $0xc38] sm:$0xff]
    %v3325 = vld [vmem:[#allocation11 + $0xc40] sm:$0xff]
    %v3326 = vld [vmem:[#allocation11 + $0xc48] sm:$0xff]
    %v3327 = vld [vmem:[#allocation11 + $0xc50] sm:$0xff]
    %v3328 = vld [vmem:[#allocation11 + $0xc58] sm:$0xff]
    %v3329 = vld [vmem:[#allocation11 + $0xc60] sm:$0xff]
    %v3330 = vld [vmem:[#allocation11 + $0xc68] sm:$0xff]
    %v3331 = vld [vmem:[#allocation11 + $0xc70] sm:$0xff]
    %v3332 = vld [vmem:[#allocation11 + $0xc78] sm:$0xff]
    %v3333 = vld [vmem:[#allocation11 + $0xc80] sm:$0xff]
    %v3334 = vld [vmem:[#allocation11 + $0xc88] sm:$0xff]
    %v3335 = vld [vmem:[#allocation11 + $0xc90] sm:$0xff]
    %v3336 = vld [vmem:[#allocation11 + $0xc98] sm:$0xff]
    %v3337 = vld [vmem:[#allocation11 + $0xca0] sm:$0xff]
    %v3338 = vld [vmem:[#allocation11 + $0xca8] sm:$0xff]
    %v3339 = vld [vmem:[#allocation11 + $0xcb0] sm:$0xff]
    %v3340 = vld [vmem:[#allocation11 + $0xcb8] sm:$0xff]
    %v3341 = vld [vmem:[#allocation11 + $0xcc0] sm:$0xff]
    %v3342 = vld [vmem:[#allocation11 + $0xcc8] sm:$0xff]
    %v3343 = vld [vmem:[#allocation11 + $0xcd0] sm:$0xff]
    %v3344 = vld [vmem:[#allocation11 + $0xcd8] sm:$0xff]
    %v3345 = vld [vmem:[#allocation11 + $0xce0] sm:$0xff]
    %v3346 = vld [vmem:[#allocation11 + $0xce8] sm:$0xff]
    %v3347 = vld [vmem:[#allocation11 + $0xcf0] sm:$0xff]
    %v3348 = vld [vmem:[#allocation11 + $0xcf8] sm:$0xff]
    %v3349 = vld [vmem:[#allocation11 + $0xd00] sm:$0xff]
    %v3350 = vld [vmem:[#allocation11 + $0xd08] sm:$0xff]
    %v3351 = vld [vmem:[#allocation11 + $0xd10] sm:$0xff]
    %v3352 = vld [vmem:[#allocation11 + $0xd18] sm:$0xff]
    %v3353 = vld [vmem:[#allocation11 + $0xd20] sm:$0xff]
    %v3354 = vld [vmem:[#allocation11 + $0xd28] sm:$0xff]
    %v3355 = vld [vmem:[#allocation11 + $0xd30] sm:$0xff]
    %v3356 = vld [vmem:[#allocation11 + $0xd38] sm:$0xff]
    %v3357 = vld [vmem:[#allocation11 + $0xd40] sm:$0xff]
    %v3358 = vld [vmem:[#allocation11 + $0xd48] sm:$0xff]
    %v3359 = vld [vmem:[#allocation11 + $0xd50] sm:$0xff]
    %v3360 = vld [vmem:[#allocation11 + $0xd58] sm:$0xff]
    %v3361 = vld [vmem:[#allocation11 + $0xd60] sm:$0xff]
    %v3362 = vld [vmem:[#allocation11 + $0xd68] sm:$0xff]
    %v3363 = vld [vmem:[#allocation11 + $0xd70] sm:$0xff]
    %v3364 = vld [vmem:[#allocation11 + $0xd78] sm:$0xff]
    %v3365 = vld [vmem:[#allocation11 + $0xd80] sm:$0xff]
    %v3366 = vld [vmem:[#allocation11 + $0xd88] sm:$0xff]
    %v3367 = vld [vmem:[#allocation11 + $0xd90] sm:$0xff]
    %v3368 = vld [vmem:[#allocation11 + $0xd98] sm:$0xff]
    %v3369 = vld [vmem:[#allocation11 + $0xda0] sm:$0xff]
    %v3370 = vld [vmem:[#allocation11 + $0xda8] sm:$0xff]
    %v3371 = vld [vmem:[#allocation11 + $0xdb0] sm:$0xff]
    %v3372 = vld [vmem:[#allocation11 + $0xdb8] sm:$0xff]
    %v3373 = vld [vmem:[#allocation11 + $0xdc0] sm:$0xff]
    %v3374 = vld [vmem:[#allocation11 + $0xdc8] sm:$0xff]
    %v3375 = vld [vmem:[#allocation11 + $0xdd0] sm:$0xff]
    %v3376 = vld [vmem:[#allocation11 + $0xdd8] sm:$0xff]
    %v3377 = vld [vmem:[#allocation11 + $0xde0] sm:$0xff]
    %v3378 = vld [vmem:[#allocation11 + $0xde8] sm:$0xff]
    %v3379 = vld [vmem:[#allocation11 + $0xdf0] sm:$0xff]
    %v3380 = vld [vmem:[#allocation11 + $0xdf8] sm:$0xff]
    %v3381 = vld [vmem:[#allocation11 + $0xe00] sm:$0xff]
    %v3382 = vld [vmem:[#allocation11 + $0xe08] sm:$0xff]
    %v3383 = vld [vmem:[#allocation11 + $0xe10] sm:$0xff]
    %v3384 = vld [vmem:[#allocation11 + $0xe18] sm:$0xff]
    %v3385 = vld [vmem:[#allocation11 + $0xe20] sm:$0xff]
    %v3386 = vld [vmem:[#allocation11 + $0xe28] sm:$0xff]
    %v3387 = vld [vmem:[#allocation11 + $0xe30] sm:$0xff]
    %v3388 = vld [vmem:[#allocation11 + $0xe38] sm:$0xff]
    %v3389 = vld [vmem:[#allocation11 + $0xe40] sm:$0xff]
    %v3390 = vld [vmem:[#allocation11 + $0xe48] sm:$0xff]
    %v3391 = vld [vmem:[#allocation11 + $0xe50] sm:$0xff]
    %v3392 = vld [vmem:[#allocation11 + $0xe58] sm:$0xff]
    %v3393 = vld [vmem:[#allocation11 + $0xe60] sm:$0xff]
    %v3394 = vld [vmem:[#allocation11 + $0xe68] sm:$0xff]
    %v3395 = vld [vmem:[#allocation11 + $0xe70] sm:$0xff]
    %v3396 = vld [vmem:[#allocation11 + $0xe78] sm:$0xff]
    %v3397 = vld [vmem:[#allocation11 + $0xe80] sm:$0xff]
    %v3398 = vld [vmem:[#allocation11 + $0xe88] sm:$0xff]
    %v3399 = vld [vmem:[#allocation11 + $0xe90] sm:$0xff]
    %v3400 = vld [vmem:[#allocation11 + $0xe98] sm:$0xff]
    %v3401 = vld [vmem:[#allocation11 + $0xea0] sm:$0xff]
    %v3402 = vld [vmem:[#allocation11 + $0xea8] sm:$0xff]
    %v3403 = vld [vmem:[#allocation11 + $0xeb0] sm:$0xff]
    %v3404 = vld [vmem:[#allocation11 + $0xeb8] sm:$0xff]
    %v3405 = vld [vmem:[#allocation11 + $0xec0] sm:$0xff]
    %v3406 = vld [vmem:[#allocation11 + $0xec8] sm:$0xff]
    %v3407 = vld [vmem:[#allocation11 + $0xed0] sm:$0xff]
    %v3408 = vld [vmem:[#allocation11 + $0xed8] sm:$0xff]
    %v3409 = vld [vmem:[#allocation11 + $0xee0] sm:$0xff]
    %v3410 = vld [vmem:[#allocation11 + $0xee8] sm:$0xff]
    %v3411 = vld [vmem:[#allocation11 + $0xef0] sm:$0xff]
    %v3412 = vld [vmem:[#allocation11 + $0xef8] sm:$0xff]
    %v3413 = vld [vmem:[#allocation11 + $0xf00] sm:$0xff]
    %v3414 = vld [vmem:[#allocation11 + $0xf08] sm:$0xff]
    %v3415 = vld [vmem:[#allocation11 + $0xf10] sm:$0xff]
    %v3416 = vld [vmem:[#allocation11 + $0xf18] sm:$0xff]
    %v3417 = vld [vmem:[#allocation11 + $0xf20] sm:$0xff]
    %v3418 = vld [vmem:[#allocation11 + $0xf28] sm:$0xff]
    %v3419 = vld [vmem:[#allocation11 + $0xf30] sm:$0xff]
    %v3420 = vld [vmem:[#allocation11 + $0xf38] sm:$0xff]
    %v3421 = vld [vmem:[#allocation11 + $0xf40] sm:$0xff]
    %v3422 = vld [vmem:[#allocation11 + $0xf48] sm:$0xff]
    %v3423 = vld [vmem:[#allocation11 + $0xf50] sm:$0xff]
    %v3424 = vld [vmem:[#allocation11 + $0xf58] sm:$0xff]
    %v3425 = vld [vmem:[#allocation11 + $0xf60] sm:$0xff]
    %v3426 = vld [vmem:[#allocation11 + $0xf68] sm:$0xff]
    %v3427 = vld [vmem:[#allocation11 + $0xf70] sm:$0xff]
    %v3428 = vld [vmem:[#allocation11 + $0xf78] sm:$0xff]
    %v3429 = vld [vmem:[#allocation11 + $0xf80] sm:$0xff]
    %v3430 = vld [vmem:[#allocation11 + $0xf88] sm:$0xff]
    %v3431 = vld [vmem:[#allocation11 + $0xf90] sm:$0xff]
    %v3432 = vld [vmem:[#allocation11 + $0xf98] sm:$0xff]
    %v3433 = vld [vmem:[#allocation11 + $0xfa0] sm:$0xff]
    %v3434 = vld [vmem:[#allocation11 + $0xfa8] sm:$0xff]
    %v3435 = vld [vmem:[#allocation11 + $0xfb0] sm:$0xff]
    %v3436 = vld [vmem:[#allocation11 + $0xfb8] sm:$0xff]
    %v3437 = vld [vmem:[#allocation11 + $0xfc0] sm:$0xff]
    %v3438 = vld [vmem:[#allocation11 + $0xfc8] sm:$0xff]
    %v3439 = vld [vmem:[#allocation11 + $0xfd0] sm:$0xff]
    %v3440 = vld [vmem:[#allocation11 + $0xfd8] sm:$0xff]
    %v3441 = vld [vmem:[#allocation11 + $0xfe0] sm:$0xff]
    %v3442 = vld [vmem:[#allocation11 + $0xfe8] sm:$0xff]
    %v3443 = vld [vmem:[#allocation11 + $0xff0] sm:$0xff]
    %v3444 = vld [vmem:[#allocation11 + $0xff8] sm:$0xff]
    %v3445 = vld [vmem:[#allocation11 + $0x1000] sm:$0xff]
    %v3446 = vld [vmem:[#allocation11 + $0x1008] sm:$0xff]
    %v3447 = vld [vmem:[#allocation11 + $0x1010] sm:$0xff]
    %v3448 = vld [vmem:[#allocation11 + $0x1018] sm:$0xff]
    %v3449 = vld [vmem:[#allocation11 + $0x1020] sm:$0xff]
    %v3450 = vld [vmem:[#allocation11 + $0x1028] sm:$0xff]
    %v3451 = vld [vmem:[#allocation11 + $0x1030] sm:$0xff]
    %v3452 = vld [vmem:[#allocation11 + $0x1038] sm:$0xff]
    %v3453 = vld [vmem:[#allocation11 + $0x1040] sm:$0xff]
    %v3454 = vld [vmem:[#allocation11 + $0x1048] sm:$0xff]
    %v3455 = vld [vmem:[#allocation11 + $0x1050] sm:$0xff]
    %v3456 = vld [vmem:[#allocation11 + $0x1058] sm:$0xff]
    %v3457 = vld [vmem:[#allocation11 + $0x1060] sm:$0xff]
    %v3458 = vld [vmem:[#allocation11 + $0x1068] sm:$0xff]
    %v3459 = vld [vmem:[#allocation11 + $0x1070] sm:$0xff]
    %v3460 = vld [vmem:[#allocation11 + $0x1078] sm:$0xff]
    %v3461 = vld [vmem:[#allocation11 + $0x1080] sm:$0xff]
    %v3462 = vld [vmem:[#allocation11 + $0x1088] sm:$0xff]
    %v3463 = vld [vmem:[#allocation11 + $0x1090] sm:$0xff]
    %v3464 = vld [vmem:[#allocation11 + $0x1098] sm:$0xff]
    %v3465 = vld [vmem:[#allocation11 + $0x10a0] sm:$0xff]
    %v3466 = vld [vmem:[#allocation11 + $0x10a8] sm:$0xff]
    %v3467 = vld [vmem:[#allocation11 + $0x10b0] sm:$0xff]
    %v3468 = vld [vmem:[#allocation11 + $0x10b8] sm:$0xff]
    %v3469 = vld [vmem:[#allocation11 + $0x10c0] sm:$0xff]
    %v3470 = vld [vmem:[#allocation11 + $0x10c8] sm:$0xff]
    %v3471 = vld [vmem:[#allocation11 + $0x10d0] sm:$0xff]
    %v3472 = vld [vmem:[#allocation11 + $0x10d8] sm:$0xff]
    %v3473 = vld [vmem:[#allocation11 + $0x10e0] sm:$0xff]
    %v3474 = vld [vmem:[#allocation11 + $0x10e8] sm:$0xff]
    %v3475 = vld [vmem:[#allocation11 + $0x10f0] sm:$0xff]
    %v3476 = vld [vmem:[#allocation11 + $0x10f8] sm:$0xff]
    %v3477 = vld [vmem:[#allocation11 + $0x1100] sm:$0xff]
    %v3478 = vld [vmem:[#allocation11 + $0x1108] sm:$0xff]
    %v3479 = vld [vmem:[#allocation11 + $0x1110] sm:$0xff]
    %v3480 = vld [vmem:[#allocation11 + $0x1118] sm:$0xff]
    %v3481 = vld [vmem:[#allocation11 + $0x1120] sm:$0xff]
    %v3482 = vld [vmem:[#allocation11 + $0x1128] sm:$0xff]
    %v3483 = vld [vmem:[#allocation11 + $0x1130] sm:$0xff]
    %v3484 = vld [vmem:[#allocation11 + $0x1138] sm:$0xff]
    %v3485 = vld [vmem:[#allocation11 + $0x1140] sm:$0xff]
    %v3486 = vld [vmem:[#allocation11 + $0x1148] sm:$0xff]
    %v3487 = vld [vmem:[#allocation11 + $0x1150] sm:$0xff]
    %v3488 = vld [vmem:[#allocation11 + $0x1158] sm:$0xff]
    %v3489 = vld [vmem:[#allocation11 + $0x1160] sm:$0xff]
    %v3490 = vld [vmem:[#allocation11 + $0x1168] sm:$0xff]
    %v3491 = vld [vmem:[#allocation11 + $0x1170] sm:$0xff]
    %v3492 = vld [vmem:[#allocation11 + $0x1178] sm:$0xff]
    %v3493 = vld [vmem:[#allocation11 + $0x1180] sm:$0xff]
    %v3494 = vld [vmem:[#allocation11 + $0x1188] sm:$0xff]
    %v3495 = vld [vmem:[#allocation11 + $0x1190] sm:$0xff]
    %v3496 = vld [vmem:[#allocation11 + $0x1198] sm:$0xff]
    %v3497 = vld [vmem:[#allocation11 + $0x11a0] sm:$0xff]
    %v3498 = vld [vmem:[#allocation11 + $0x11a8] sm:$0xff]
    %v3499 = vld [vmem:[#allocation11 + $0x11b0] sm:$0xff]
    %v3500 = vld [vmem:[#allocation11 + $0x11b8] sm:$0xff]
    %v3501 = vld [vmem:[#allocation11 + $0x11c0] sm:$0xff]
    %v3502 = vld [vmem:[#allocation11 + $0x11c8] sm:$0xff]
    %v3503 = vld [vmem:[#allocation11 + $0x11d0] sm:$0xff]
    %v3504 = vld [vmem:[#allocation11 + $0x11d8] sm:$0xff]
    %v3505 = vld [vmem:[#allocation11 + $0x11e0] sm:$0xff]
    %v3506 = vld [vmem:[#allocation11 + $0x11e8] sm:$0xff]
    %v3507 = vld [vmem:[#allocation11 + $0x11f0] sm:$0xff]
    %v3508 = vld [vmem:[#allocation11 + $0x11f8] sm:$0xff]
    %v3509 = vld [vmem:[#allocation11 + $0x1200] sm:$0xff]
    %v3510 = vld [vmem:[#allocation11 + $0x1208] sm:$0xff]
    %v3511 = vld [vmem:[#allocation11 + $0x1210] sm:$0xff]
    %v3512 = vld [vmem:[#allocation11 + $0x1218] sm:$0xff]
    %v3513 = vld [vmem:[#allocation11 + $0x1220] sm:$0xff]
    %v3514 = vld [vmem:[#allocation11 + $0x1228] sm:$0xff]
    %v3515 = vld [vmem:[#allocation11 + $0x1230] sm:$0xff]
    %v3516 = vld [vmem:[#allocation11 + $0x1238] sm:$0xff]
    %v3517 = vld [vmem:[#allocation11 + $0x1240] sm:$0xff]
    %v3518 = vld [vmem:[#allocation11 + $0x1248] sm:$0xff]
    %v3519 = vld [vmem:[#allocation11 + $0x1250] sm:$0xff]
    %v3520 = vld [vmem:[#allocation11 + $0x1258] sm:$0xff]
    %v3521 = vld [vmem:[#allocation11 + $0x1260] sm:$0xff]
    %v3522 = vld [vmem:[#allocation11 + $0x1268] sm:$0xff]
    %v3523 = vld [vmem:[#allocation11 + $0x1270] sm:$0xff]
    %v3524 = vld [vmem:[#allocation11 + $0x1278] sm:$0xff]
    %v3525 = vld [vmem:[#allocation11 + $0x1280] sm:$0xff]
    %v3526 = vld [vmem:[#allocation11 + $0x1288] sm:$0xff]
    %v3527 = vld [vmem:[#allocation11 + $0x1290] sm:$0xff]
    %v3528 = vld [vmem:[#allocation11 + $0x1298] sm:$0xff]
    %v3529 = vld [vmem:[#allocation11 + $0x12a0] sm:$0xff]
    %v3530 = vld [vmem:[#allocation11 + $0x12a8] sm:$0xff]
    %v3531 = vld [vmem:[#allocation11 + $0x12b0] sm:$0xff]
    %v3532 = vld [vmem:[#allocation11 + $0x12b8] sm:$0xff]
    %v3533 = vld [vmem:[#allocation11 + $0x12c0] sm:$0xff]
    %v3534 = vld [vmem:[#allocation11 + $0x12c8] sm:$0xff]
    %v3535 = vld [vmem:[#allocation11 + $0x12d0] sm:$0xff]
    %v3536 = vld [vmem:[#allocation11 + $0x12d8] sm:$0xff]
    %v3537 = vld [vmem:[#allocation11 + $0x12e0] sm:$0xff]
    %v3538 = vld [vmem:[#allocation11 + $0x12e8] sm:$0xff]
    %v3539 = vld [vmem:[#allocation11 + $0x12f0] sm:$0xff]
    %v3540 = vld [vmem:[#allocation11 + $0x12f8] sm:$0xff]
    %v3541 = vld [vmem:[#allocation11 + $0x1300] sm:$0xff]
    %v3542 = vld [vmem:[#allocation11 + $0x1308] sm:$0xff]
    %v3543 = vld [vmem:[#allocation11 + $0x1310] sm:$0xff]
    %v3544 = vld [vmem:[#allocation11 + $0x1318] sm:$0xff]
    %v3545 = vld [vmem:[#allocation11 + $0x1320] sm:$0xff]
    %v3546 = vld [vmem:[#allocation11 + $0x1328] sm:$0xff]
    %v3547 = vld [vmem:[#allocation11 + $0x1330] sm:$0xff]
    %v3548 = vld [vmem:[#allocation11 + $0x1338] sm:$0xff]
    %v3549 = vld [vmem:[#allocation11 + $0x1340] sm:$0xff]
    %v3550 = vld [vmem:[#allocation11 + $0x1348] sm:$0xff]
    %v3551 = vld [vmem:[#allocation11 + $0x1350] sm:$0xff]
    %v3552 = vld [vmem:[#allocation11 + $0x1358] sm:$0xff]
    %v3553 = vld [vmem:[#allocation11 + $0x1360] sm:$0xff]
    %v3554 = vld [vmem:[#allocation11 + $0x1368] sm:$0xff]
    %v3555 = vld [vmem:[#allocation11 + $0x1370] sm:$0xff]
    %v3556 = vld [vmem:[#allocation11 + $0x1378] sm:$0xff]
    %v3557 = vld [vmem:[#allocation11 + $0x1380] sm:$0xff]
    %v3558 = vld [vmem:[#allocation11 + $0x1388] sm:$0xff]
    %v3559 = vld [vmem:[#allocation11 + $0x1390] sm:$0xff]
    %v3560 = vld [vmem:[#allocation11 + $0x1398] sm:$0xff]
    %v3561 = vld [vmem:[#allocation11 + $0x13a0] sm:$0xff]
    %v3562 = vld [vmem:[#allocation11 + $0x13a8] sm:$0xff]
    %v3563 = vld [vmem:[#allocation11 + $0x13b0] sm:$0xff]
    %v3564 = vld [vmem:[#allocation11 + $0x13b8] sm:$0xff]
    %v3565 = vld [vmem:[#allocation11 + $0x13c0] sm:$0xff]
    %v3566 = vld [vmem:[#allocation11 + $0x13c8] sm:$0xff]
    %v3567 = vld [vmem:[#allocation11 + $0x13d0] sm:$0xff]
    %v3568 = vld [vmem:[#allocation11 + $0x13d8] sm:$0xff]
    %v3569 = vld [vmem:[#allocation11 + $0x13e0] sm:$0xff]
    %v3570 = vld [vmem:[#allocation11 + $0x13e8] sm:$0xff]
    %v3571 = vld [vmem:[#allocation11 + $0x13f0] sm:$0xff]
    %v3572 = vld [vmem:[#allocation11 + $0x13f8] sm:$0xff]
    %v3573 = vld [vmem:[#allocation11 + $0x1400] sm:$0xff]
    %v3574 = vld [vmem:[#allocation11 + $0x1408] sm:$0xff]
    %v3575 = vld [vmem:[#allocation11 + $0x1410] sm:$0xff]
    %v3576 = vld [vmem:[#allocation11 + $0x1418] sm:$0xff]
    %v3577 = vld [vmem:[#allocation11 + $0x1420] sm:$0xff]
    %v3578 = vld [vmem:[#allocation11 + $0x1428] sm:$0xff]
    %v3579 = vld [vmem:[#allocation11 + $0x1430] sm:$0xff]
    %v3580 = vld [vmem:[#allocation11 + $0x1438] sm:$0xff]
    %v3581 = vld [vmem:[#allocation11 + $0x1440] sm:$0xff]
    %v3582 = vld [vmem:[#allocation11 + $0x1448] sm:$0xff]
    %v3583 = vld [vmem:[#allocation11 + $0x1450] sm:$0xff]
    %v3584 = vld [vmem:[#allocation11 + $0x1458] sm:$0xff]
    %v3585 = vld [vmem:[#allocation11 + $0x1460] sm:$0xff]
    %v3586 = vld [vmem:[#allocation11 + $0x1468] sm:$0xff]
    %v3587 = vld [vmem:[#allocation11 + $0x1470] sm:$0xff]
    %v3588 = vld [vmem:[#allocation11 + $0x1478] sm:$0xff]
    %v3589 = vld [vmem:[#allocation11 + $0x1480] sm:$0xff]
    %v3590 = vld [vmem:[#allocation11 + $0x1488] sm:$0xff]
    %v3591 = vld [vmem:[#allocation11 + $0x1490] sm:$0xff]
    %v3592 = vld [vmem:[#allocation11 + $0x1498] sm:$0xff]
    %v3593 = vld [vmem:[#allocation11 + $0x14a0] sm:$0xff]
    %v3594 = vld [vmem:[#allocation11 + $0x14a8] sm:$0xff]
    %v3595 = vld [vmem:[#allocation11 + $0x14b0] sm:$0xff]
    %v3596 = vld [vmem:[#allocation11 + $0x14b8] sm:$0xff]
    %v3597 = vld [vmem:[#allocation11 + $0x14c0] sm:$0xff]
    %v3598 = vld [vmem:[#allocation11 + $0x14c8] sm:$0xff]
    %v3599 = vld [vmem:[#allocation11 + $0x14d0] sm:$0xff]
    %v3600 = vld [vmem:[#allocation11 + $0x14d8] sm:$0xff]
    %v3601 = vld [vmem:[#allocation11 + $0x14e0] sm:$0xff]
    %v3602 = vld [vmem:[#allocation11 + $0x14e8] sm:$0xff]
    %v3603 = vld [vmem:[#allocation11 + $0x14f0] sm:$0xff]
    %v3604 = vld [vmem:[#allocation11 + $0x14f8] sm:$0xff]
    %v3605 = vld [vmem:[#allocation11 + $0x1500] sm:$0xff]
    %v3606 = vld [vmem:[#allocation11 + $0x1508] sm:$0xff]
    %v3607 = vld [vmem:[#allocation11 + $0x1510] sm:$0xff]
    %v3608 = vld [vmem:[#allocation11 + $0x1518] sm:$0xff]
    %v3609 = vld [vmem:[#allocation11 + $0x1520] sm:$0xff]
    %v3610 = vld [vmem:[#allocation11 + $0x1528] sm:$0xff]
    %v3611 = vld [vmem:[#allocation11 + $0x1530] sm:$0xff]
    %v3612 = vld [vmem:[#allocation11 + $0x1538] sm:$0xff]
    %v3613 = vld [vmem:[#allocation11 + $0x1540] sm:$0xff]
    %v3614 = vld [vmem:[#allocation11 + $0x1548] sm:$0xff]
    %v3615 = vld [vmem:[#allocation11 + $0x1550] sm:$0xff]
    %v3616 = vld [vmem:[#allocation11 + $0x1558] sm:$0xff]
    %v3617 = vld [vmem:[#allocation11 + $0x1560] sm:$0xff]
    %v3618 = vld [vmem:[#allocation11 + $0x1568] sm:$0xff]
    %v3619 = vld [vmem:[#allocation11 + $0x1570] sm:$0xff]
    %v3620 = vld [vmem:[#allocation11 + $0x1578] sm:$0xff]
    %v3621 = vld [vmem:[#allocation11 + $0x1580] sm:$0xff]
    %v3622 = vld [vmem:[#allocation11 + $0x1588] sm:$0xff]
    %v3623 = vld [vmem:[#allocation11 + $0x1590] sm:$0xff]
    %v3624 = vld [vmem:[#allocation11 + $0x1598] sm:$0xff]
    %v3625 = vld [vmem:[#allocation11 + $0x15a0] sm:$0xff]
    %v3626 = vld [vmem:[#allocation11 + $0x15a8] sm:$0xff]
    %v3627 = vld [vmem:[#allocation11 + $0x15b0] sm:$0xff]
    %v3628 = vld [vmem:[#allocation11 + $0x15b8] sm:$0xff]
    %v3629 = vld [vmem:[#allocation11 + $0x15c0] sm:$0xff]
    %v3630 = vld [vmem:[#allocation11 + $0x15c8] sm:$0xff]
    %v3631 = vld [vmem:[#allocation11 + $0x15d0] sm:$0xff]
    %v3632 = vld [vmem:[#allocation11 + $0x15d8] sm:$0xff]
    %v3633 = vld [vmem:[#allocation11 + $0x15e0] sm:$0xff]
    %v3634 = vld [vmem:[#allocation11 + $0x15e8] sm:$0xff]
    %v3635 = vld [vmem:[#allocation11 + $0x15f0] sm:$0xff]
    %v3636 = vld [vmem:[#allocation11 + $0x15f8] sm:$0xff]
    %v3637 = vld [vmem:[#allocation11 + $0x1600] sm:$0xff]
    %v3638 = vld [vmem:[#allocation11 + $0x1608] sm:$0xff]
    %v3639 = vld [vmem:[#allocation11 + $0x1610] sm:$0xff]
    %v3640 = vld [vmem:[#allocation11 + $0x1618] sm:$0xff]
    %v3641 = vld [vmem:[#allocation11 + $0x1620] sm:$0xff]
    %v3642 = vld [vmem:[#allocation11 + $0x1628] sm:$0xff]
    %v3643 = vld [vmem:[#allocation11 + $0x1630] sm:$0xff]
    %v3644 = vld [vmem:[#allocation11 + $0x1638] sm:$0xff]
    %v3645 = vld [vmem:[#allocation11 + $0x1640] sm:$0xff]
    %v3646 = vld [vmem:[#allocation11 + $0x1648] sm:$0xff]
    %v3647 = vld [vmem:[#allocation11 + $0x1650] sm:$0xff]
    %v3648 = vld [vmem:[#allocation11 + $0x1658] sm:$0xff]
    %v3649 = vld [vmem:[#allocation11 + $0x1660] sm:$0xff]
    %v3650 = vld [vmem:[#allocation11 + $0x1668] sm:$0xff]
    %v3651 = vld [vmem:[#allocation11 + $0x1670] sm:$0xff]
    %v3652 = vld [vmem:[#allocation11 + $0x1678] sm:$0xff]
    %v3653 = vld [vmem:[#allocation11 + $0x1680] sm:$0xff]
    %v3654 = vld [vmem:[#allocation11 + $0x1688] sm:$0xff]
    %v3655 = vld [vmem:[#allocation11 + $0x1690] sm:$0xff]
    %v3656 = vld [vmem:[#allocation11 + $0x1698] sm:$0xff]
    %v3657 = vld [vmem:[#allocation11 + $0x16a0] sm:$0xff]
    %v3658 = vld [vmem:[#allocation11 + $0x16a8] sm:$0xff]
    %v3659 = vld [vmem:[#allocation11 + $0x16b0] sm:$0xff]
    %v3660 = vld [vmem:[#allocation11 + $0x16b8] sm:$0xff]
    %v3661 = vld [vmem:[#allocation11 + $0x16c0] sm:$0xff]
    %v3662 = vld [vmem:[#allocation11 + $0x16c8] sm:$0xff]
    %v3663 = vld [vmem:[#allocation11 + $0x16d0] sm:$0xff]
    %v3664 = vld [vmem:[#allocation11 + $0x16d8] sm:$0xff]
    %v3665 = vld [vmem:[#allocation11 + $0x16e0] sm:$0xff]
    %v3666 = vld [vmem:[#allocation11 + $0x16e8] sm:$0xff]
    %v3667 = vld [vmem:[#allocation11 + $0x16f0] sm:$0xff]
    %v3668 = vld [vmem:[#allocation11 + $0x16f8] sm:$0xff]
    %v3669 = vld [vmem:[#allocation11 + $0x1700] sm:$0xff]
    %v3670 = vld [vmem:[#allocation11 + $0x1708] sm:$0xff]
    %v3671 = vld [vmem:[#allocation11 + $0x1710] sm:$0xff]
    %v3672 = vld [vmem:[#allocation11 + $0x1718] sm:$0xff]
    %v3673 = vld [vmem:[#allocation11 + $0x1720] sm:$0xff]
    %v3674 = vld [vmem:[#allocation11 + $0x1728] sm:$0xff]
    %v3675 = vld [vmem:[#allocation11 + $0x1730] sm:$0xff]
    %v3676 = vld [vmem:[#allocation11 + $0x1738] sm:$0xff]
    %v3677 = vld [vmem:[#allocation11 + $0x1740] sm:$0xff]
    %v3678 = vld [vmem:[#allocation11 + $0x1748] sm:$0xff]
    %v3679 = vld [vmem:[#allocation11 + $0x1750] sm:$0xff]
    %v3680 = vld [vmem:[#allocation11 + $0x1758] sm:$0xff]
    %v3681 = vld [vmem:[#allocation11 + $0x1760] sm:$0xff]
    %v3682 = vld [vmem:[#allocation11 + $0x1768] sm:$0xff]
    %v3683 = vld [vmem:[#allocation11 + $0x1770] sm:$0xff]
    %v3684 = vld [vmem:[#allocation11 + $0x1778] sm:$0xff]
    %v3685 = vld [vmem:[#allocation11 + $0x1780] sm:$0xff]
    %v3686 = vld [vmem:[#allocation11 + $0x1788] sm:$0xff]
    %v3687 = vld [vmem:[#allocation11 + $0x1790] sm:$0xff]
    %v3688 = vld [vmem:[#allocation11 + $0x1798] sm:$0xff]
    %v3689 = vld [vmem:[#allocation11 + $0x17a0] sm:$0xff]
    %v3690 = vld [vmem:[#allocation11 + $0x17a8] sm:$0xff]
    %v3691 = vld [vmem:[#allocation11 + $0x17b0] sm:$0xff]
    %v3692 = vld [vmem:[#allocation11 + $0x17b8] sm:$0xff]
    %v3693 = vld [vmem:[#allocation11 + $0x17c0] sm:$0xff]
    %v3694 = vld [vmem:[#allocation11 + $0x17c8] sm:$0xff]
    %v3695 = vld [vmem:[#allocation11 + $0x17d0] sm:$0xff]
    %v3696 = vld [vmem:[#allocation11 + $0x17d8] sm:$0xff]
    %v3697 = vld [vmem:[#allocation11 + $0x17e0] sm:$0xff]
    %v3698 = vld [vmem:[#allocation11 + $0x17e8] sm:$0xff]
    %v3699 = vld [vmem:[#allocation11 + $0x17f0] sm:$0xff]
    %v3700 = vld [vmem:[#allocation11 + $0x17f8] sm:$0xff]
    %v3701 = vld [vmem:[#allocation11 + $0x1800] sm:$0xff]
    %v3702 = vld [vmem:[#allocation11 + $0x1808] sm:$0xff]
    %v3703 = vld [vmem:[#allocation11 + $0x1810] sm:$0xff]
    %v3704 = vld [vmem:[#allocation11 + $0x1818] sm:$0xff]
    %v3705 = vld [vmem:[#allocation11 + $0x1820] sm:$0xff]
    %v3706 = vld [vmem:[#allocation11 + $0x1828] sm:$0xff]
    %v3707 = vld [vmem:[#allocation11 + $0x1830] sm:$0xff]
    %v3708 = vld [vmem:[#allocation11 + $0x1838] sm:$0xff]
    %v3709 = vld [vmem:[#allocation11 + $0x1840] sm:$0xff]
    %v3710 = vld [vmem:[#allocation11 + $0x1848] sm:$0xff]
    %v3711 = vld [vmem:[#allocation11 + $0x1850] sm:$0xff]
    %v3712 = vld [vmem:[#allocation11 + $0x1858] sm:$0xff]
    %v3713 = vld [vmem:[#allocation11 + $0x1860] sm:$0xff]
    %v3714 = vld [vmem:[#allocation11 + $0x1868] sm:$0xff]
    %v3715 = vld [vmem:[#allocation11 + $0x1870] sm:$0xff]
    %v3716 = vld [vmem:[#allocation11 + $0x1878] sm:$0xff]
    %v3717 = vld [vmem:[#allocation11 + $0x1880] sm:$0xff]
    %v3718 = vld [vmem:[#allocation11 + $0x1888] sm:$0xff]
    %v3719 = vld [vmem:[#allocation11 + $0x1890] sm:$0xff]
    %v3720 = vld [vmem:[#allocation11 + $0x1898] sm:$0xff]
    %v3721 = vld [vmem:[#allocation11 + $0x18a0] sm:$0xff]
    %v3722 = vld [vmem:[#allocation11 + $0x18a8] sm:$0xff]
    %v3723 = vld [vmem:[#allocation11 + $0x18b0] sm:$0xff]
    %v3724 = vld [vmem:[#allocation11 + $0x18b8] sm:$0xff]
    %v3725 = vld [vmem:[#allocation11 + $0x18c0] sm:$0xff]
    %v3726 = vld [vmem:[#allocation11 + $0x18c8] sm:$0xff]
    %v3727 = vld [vmem:[#allocation11 + $0x18d0] sm:$0xff]
    %v3728 = vld [vmem:[#allocation11 + $0x18d8] sm:$0xff]
    %v3729 = vld [vmem:[#allocation11 + $0x18e0] sm:$0xff]
    %v3730 = vld [vmem:[#allocation11 + $0x18e8] sm:$0xff]
    %v3731 = vld [vmem:[#allocation11 + $0x18f0] sm:$0xff]
    %v3732 = vld [vmem:[#allocation11 + $0x18f8] sm:$0xff]
    %v3733 = vld [vmem:[#allocation11 + $0x1900] sm:$0xff]
    %v3734 = vld [vmem:[#allocation11 + $0x1908] sm:$0xff]
    %v3735 = vld [vmem:[#allocation11 + $0x1910] sm:$0xff]
    %v3736 = vld [vmem:[#allocation11 + $0x1918] sm:$0xff]
    %v3737 = vld [vmem:[#allocation11 + $0x1920] sm:$0xff]
    %v3738 = vld [vmem:[#allocation11 + $0x1928] sm:$0xff]
    %v3739 = vld [vmem:[#allocation11 + $0x1930] sm:$0xff]
    %v3740 = vld [vmem:[#allocation11 + $0x1938] sm:$0xff]
    %v3741 = vld [vmem:[#allocation11 + $0x1940] sm:$0xff]
    %v3742 = vld [vmem:[#allocation11 + $0x1948] sm:$0xff]
    %v3743 = vld [vmem:[#allocation11 + $0x1950] sm:$0xff]
    %v3744 = vld [vmem:[#allocation11 + $0x1958] sm:$0xff]
    %v3745 = vld [vmem:[#allocation11 + $0x1960] sm:$0xff]
    %v3746 = vld [vmem:[#allocation11 + $0x1968] sm:$0xff]
    %v3747 = vld [vmem:[#allocation11 + $0x1970] sm:$0xff]
    %v3748 = vld [vmem:[#allocation11 + $0x1978] sm:$0xff]
    %v3749 = vld [vmem:[#allocation11 + $0x1980] sm:$0xff]
    %v3750 = vld [vmem:[#allocation11 + $0x1988] sm:$0xff]
    %v3751 = vld [vmem:[#allocation11 + $0x1990] sm:$0xff]
    %v3752 = vld [vmem:[#allocation11 + $0x1998] sm:$0xff]
    %v3753 = vld [vmem:[#allocation11 + $0x19a0] sm:$0xff]
    %v3754 = vld [vmem:[#allocation11 + $0x19a8] sm:$0xff]
    %v3755 = vld [vmem:[#allocation11 + $0x19b0] sm:$0xff]
    %v3756 = vld [vmem:[#allocation11 + $0x19b8] sm:$0xff]
    %v3757 = vld [vmem:[#allocation11 + $0x19c0] sm:$0xff]
    %v3758 = vld [vmem:[#allocation11 + $0x19c8] sm:$0xff]
    %v3759 = vld [vmem:[#allocation11 + $0x19d0] sm:$0xff]
    %v3760 = vld [vmem:[#allocation11 + $0x19d8] sm:$0xff]
    %v3761 = vld [vmem:[#allocation11 + $0x19e0] sm:$0xff]
    %v3762 = vld [vmem:[#allocation11 + $0x19e8] sm:$0xff]
    %v3763 = vld [vmem:[#allocation11 + $0x19f0] sm:$0xff]
    %v3764 = vld [vmem:[#allocation11 + $0x19f8] sm:$0xff]
    %v3765 = vld [vmem:[#allocation11 + $0x1a00] sm:$0xff]
    %v3766 = vld [vmem:[#allocation11 + $0x1a08] sm:$0xff]
    %v3767 = vld [vmem:[#allocation11 + $0x1a10] sm:$0xff]
    %v3768 = vld [vmem:[#allocation11 + $0x1a18] sm:$0xff]
    %v3769 = vld [vmem:[#allocation11 + $0x1a20] sm:$0xff]
    %v3770 = vld [vmem:[#allocation11 + $0x1a28] sm:$0xff]
    %v3771 = vld [vmem:[#allocation11 + $0x1a30] sm:$0xff]
    %v3772 = vld [vmem:[#allocation11 + $0x1a38] sm:$0xff]
    %v3773 = vld [vmem:[#allocation11 + $0x1a40] sm:$0xff]
    %v3774 = vld [vmem:[#allocation11 + $0x1a48] sm:$0xff]
    %v3775 = vld [vmem:[#allocation11 + $0x1a50] sm:$0xff]
    %v3776 = vld [vmem:[#allocation11 + $0x1a58] sm:$0xff]
    %v3777 = vld [vmem:[#allocation11 + $0x1a60] sm:$0xff]
    %v3778 = vld [vmem:[#allocation11 + $0x1a68] sm:$0xff]
    %v3779 = vld [vmem:[#allocation11 + $0x1a70] sm:$0xff]
    %v3780 = vld [vmem:[#allocation11 + $0x1a78] sm:$0xff]
    %v3781 = vld [vmem:[#allocation11 + $0x1a80] sm:$0xff]
    %v3782 = vld [vmem:[#allocation11 + $0x1a88] sm:$0xff]
    %v3783 = vld [vmem:[#allocation11 + $0x1a90] sm:$0xff]
    %v3784 = vld [vmem:[#allocation11 + $0x1a98] sm:$0xff]
    %v3785 = vld [vmem:[#allocation11 + $0x1aa0] sm:$0xff]
    %v3786 = vld [vmem:[#allocation11 + $0x1aa8] sm:$0xff]
    %v3787 = vld [vmem:[#allocation11 + $0x1ab0] sm:$0xff]
    %v3788 = vld [vmem:[#allocation11 + $0x1ab8] sm:$0xff]
    %v3789 = vld [vmem:[#allocation11 + $0x1ac0] sm:$0xff]
    %v3790 = vld [vmem:[#allocation11 + $0x1ac8] sm:$0xff]
    %v3791 = vld [vmem:[#allocation11 + $0x1ad0] sm:$0xff]
    %v3792 = vld [vmem:[#allocation11 + $0x1ad8] sm:$0xff]
    %v3793 = vld [vmem:[#allocation11 + $0x1ae0] sm:$0xff]
    %v3794 = vld [vmem:[#allocation11 + $0x1ae8] sm:$0xff]
    %v3795 = vld [vmem:[#allocation11 + $0x1af0] sm:$0xff]
    %v3796 = vld [vmem:[#allocation11 + $0x1af8] sm:$0xff]
    %v3797 = vld [vmem:[#allocation11 + $0x1b00] sm:$0xff]
    %v3798 = vld [vmem:[#allocation11 + $0x1b08] sm:$0xff]
    %v3799 = vld [vmem:[#allocation11 + $0x1b10] sm:$0xff]
    %v3800 = vld [vmem:[#allocation11 + $0x1b18] sm:$0xff]
    %v3801 = vld [vmem:[#allocation11 + $0x1b20] sm:$0xff]
    %v3802 = vld [vmem:[#allocation11 + $0x1b28] sm:$0xff]
    %v3803 = vld [vmem:[#allocation11 + $0x1b30] sm:$0xff]
    %v3804 = vld [vmem:[#allocation11 + $0x1b38] sm:$0xff]
    %v3805 = vld [vmem:[#allocation11 + $0x1b40] sm:$0xff]
    %v3806 = vld [vmem:[#allocation11 + $0x1b48] sm:$0xff]
    %v3807 = vld [vmem:[#allocation11 + $0x1b50] sm:$0xff]
    %v3808 = vld [vmem:[#allocation11 + $0x1b58] sm:$0xff]
    %v3809 = vld [vmem:[#allocation11 + $0x1b60] sm:$0xff]
    %v3810 = vld [vmem:[#allocation11 + $0x1b68] sm:$0xff]
    %v3811 = vld [vmem:[#allocation11 + $0x1b70] sm:$0xff]
    %v3812 = vld [vmem:[#allocation11 + $0x1b78] sm:$0xff]
    %v3813 = vld [vmem:[#allocation11 + $0x1b80] sm:$0xff]
    %v3814 = vld [vmem:[#allocation11 + $0x1b88] sm:$0xff]
    %v3815 = vld [vmem:[#allocation11 + $0x1b90] sm:$0xff]
    %v3816 = vld [vmem:[#allocation11 + $0x1b98] sm:$0xff]
    %v3817 = vld [vmem:[#allocation11 + $0x1ba0] sm:$0xff]
    %v3818 = vld [vmem:[#allocation11 + $0x1ba8] sm:$0xff]
    %v3819 = vld [vmem:[#allocation11 + $0x1bb0] sm:$0xff]
    %v3820 = vld [vmem:[#allocation11 + $0x1bb8] sm:$0xff]
    %v3821 = vld [vmem:[#allocation11 + $0x1bc0] sm:$0xff]
    %v3822 = vld [vmem:[#allocation11 + $0x1bc8] sm:$0xff]
    %v3823 = vld [vmem:[#allocation11 + $0x1bd0] sm:$0xff]
    %v3824 = vld [vmem:[#allocation11 + $0x1bd8] sm:$0xff]
    %v3825 = vld [vmem:[#allocation11 + $0x1be0] sm:$0xff]
    %v3826 = vld [vmem:[#allocation11 + $0x1be8] sm:$0xff]
    %v3827 = vld [vmem:[#allocation11 + $0x1bf0] sm:$0xff]
    %v3828 = vld [vmem:[#allocation11 + $0x1bf8] sm:$0xff]
    %v3829 = vld [vmem:[#allocation11 + $0x1c00] sm:$0xff]
    %v3830 = vld [vmem:[#allocation11 + $0x1c08] sm:$0xff]
    %v3831 = vld [vmem:[#allocation11 + $0x1c10] sm:$0xff]
    %v3832 = vld [vmem:[#allocation11 + $0x1c18] sm:$0xff]
    %v3833 = vld [vmem:[#allocation11 + $0x1c20] sm:$0xff]
    %v3834 = vld [vmem:[#allocation11 + $0x1c28] sm:$0xff]
    %v3835 = vld [vmem:[#allocation11 + $0x1c30] sm:$0xff]
    %v3836 = vld [vmem:[#allocation11 + $0x1c38] sm:$0xff]
    %v3837 = vld [vmem:[#allocation11 + $0x1c40] sm:$0xff]
    %v3838 = vld [vmem:[#allocation11 + $0x1c48] sm:$0xff]
    %v3839 = vld [vmem:[#allocation11 + $0x1c50] sm:$0xff]
    %v3840 = vld [vmem:[#allocation11 + $0x1c58] sm:$0xff]
    %v3841 = vld [vmem:[#allocation11 + $0x1c60] sm:$0xff]
    %v3842 = vld [vmem:[#allocation11 + $0x1c68] sm:$0xff]
    %v3843 = vld [vmem:[#allocation11 + $0x1c70] sm:$0xff]
    %v3844 = vld [vmem:[#allocation11 + $0x1c78] sm:$0xff]
    %v3845 = vld [vmem:[#allocation11 + $0x1c80] sm:$0xff]
    %v3846 = vld [vmem:[#allocation11 + $0x1c88] sm:$0xff]
    %v3847 = vld [vmem:[#allocation11 + $0x1c90] sm:$0xff]
    %v3848 = vld [vmem:[#allocation11 + $0x1c98] sm:$0xff]
    %v3849 = vld [vmem:[#allocation11 + $0x1ca0] sm:$0xff]
    %v3850 = vld [vmem:[#allocation11 + $0x1ca8] sm:$0xff]
    %v3851 = vld [vmem:[#allocation11 + $0x1cb0] sm:$0xff]
    %v3852 = vld [vmem:[#allocation11 + $0x1cb8] sm:$0xff]
    %v3853 = vld [vmem:[#allocation11 + $0x1cc0] sm:$0xff]
    %v3854 = vld [vmem:[#allocation11 + $0x1cc8] sm:$0xff]
    %v3855 = vld [vmem:[#allocation11 + $0x1cd0] sm:$0xff]
    %v3856 = vld [vmem:[#allocation11 + $0x1cd8] sm:$0xff]
    %v3857 = vld [vmem:[#allocation11 + $0x1ce0] sm:$0xff]
    %v3858 = vld [vmem:[#allocation11 + $0x1ce8] sm:$0xff]
    %v3859 = vld [vmem:[#allocation11 + $0x1cf0] sm:$0xff]
    %v3860 = vld [vmem:[#allocation11 + $0x1cf8] sm:$0xff]
    %v3861 = vld [vmem:[#allocation11 + $0x1d00] sm:$0xff]
    %v3862 = vld [vmem:[#allocation11 + $0x1d08] sm:$0xff]
    %v3863 = vld [vmem:[#allocation11 + $0x1d10] sm:$0xff]
    %v3864 = vld [vmem:[#allocation11 + $0x1d18] sm:$0xff]
    %v3865 = vld [vmem:[#allocation11 + $0x1d20] sm:$0xff]
    %v3866 = vld [vmem:[#allocation11 + $0x1d28] sm:$0xff]
    %v3867 = vld [vmem:[#allocation11 + $0x1d30] sm:$0xff]
    %v3868 = vld [vmem:[#allocation11 + $0x1d38] sm:$0xff]
    %v3869 = vld [vmem:[#allocation11 + $0x1d40] sm:$0xff]
    %v3870 = vld [vmem:[#allocation11 + $0x1d48] sm:$0xff]
    %v3871 = vld [vmem:[#allocation11 + $0x1d50] sm:$0xff]
    %v3872 = vld [vmem:[#allocation11 + $0x1d58] sm:$0xff]
    %v3873 = vld [vmem:[#allocation11 + $0x1d60] sm:$0xff]
    %v3874 = vld [vmem:[#allocation11 + $0x1d68] sm:$0xff]
    %v3875 = vld [vmem:[#allocation11 + $0x1d70] sm:$0xff]
    %v3876 = vld [vmem:[#allocation11 + $0x1d78] sm:$0xff]
    %v3877 = vld [vmem:[#allocation11 + $0x1d80] sm:$0xff]
    %v3878 = vld [vmem:[#allocation11 + $0x1d88] sm:$0xff]
    %v3879 = vld [vmem:[#allocation11 + $0x1d90] sm:$0xff]
    %v3880 = vld [vmem:[#allocation11 + $0x1d98] sm:$0xff]
    %v3881 = vld [vmem:[#allocation11 + $0x1da0] sm:$0xff]
    %v3882 = vld [vmem:[#allocation11 + $0x1da8] sm:$0xff]
    %v3883 = vld [vmem:[#allocation11 + $0x1db0] sm:$0xff]
    %v3884 = vld [vmem:[#allocation11 + $0x1db8] sm:$0xff]
    %v3885 = vld [vmem:[#allocation11 + $0x1dc0] sm:$0xff]
    %v3886 = vld [vmem:[#allocation11 + $0x1dc8] sm:$0xff]
    %v3887 = vld [vmem:[#allocation11 + $0x1dd0] sm:$0xff]
    %v3888 = vld [vmem:[#allocation11 + $0x1dd8] sm:$0xff]
    %v3889 = vld [vmem:[#allocation11 + $0x1de0] sm:$0xff]
    %v3890 = vld [vmem:[#allocation11 + $0x1de8] sm:$0xff]
    %v3891 = vld [vmem:[#allocation11 + $0x1df0] sm:$0xff]
    %v3892 = vld [vmem:[#allocation11 + $0x1df8] sm:$0xff]
    %v3893 = vld [vmem:[#allocation11 + $0x1e00] sm:$0xff]
    %v3894 = vld [vmem:[#allocation11 + $0x1e08] sm:$0xff]
    %v3895 = vld [vmem:[#allocation11 + $0x1e10] sm:$0xff]
    %v3896 = vld [vmem:[#allocation11 + $0x1e18] sm:$0xff]
    %v3897 = vld [vmem:[#allocation11 + $0x1e20] sm:$0xff]
    %v3898 = vld [vmem:[#allocation11 + $0x1e28] sm:$0xff]
    %v3899 = vld [vmem:[#allocation11 + $0x1e30] sm:$0xff]
    %v3900 = vld [vmem:[#allocation11 + $0x1e38] sm:$0xff]
    %v3901 = vld [vmem:[#allocation11 + $0x1e40] sm:$0xff]
    %v3902 = vld [vmem:[#allocation11 + $0x1e48] sm:$0xff]
    %v3903 = vld [vmem:[#allocation11 + $0x1e50] sm:$0xff]
    %v3904 = vld [vmem:[#allocation11 + $0x1e58] sm:$0xff]
    %v3905 = vld [vmem:[#allocation11 + $0x1e60] sm:$0xff]
    %v3906 = vld [vmem:[#allocation11 + $0x1e68] sm:$0xff]
    %v3907 = vld [vmem:[#allocation11 + $0x1e70] sm:$0xff]
    %v3908 = vld [vmem:[#allocation11 + $0x1e78] sm:$0xff]
    %v3909 = vld [vmem:[#allocation11 + $0x1e80] sm:$0xff]
    %v3910 = vld [vmem:[#allocation11 + $0x1e88] sm:$0xff]
    %v3911 = vld [vmem:[#allocation11 + $0x1e90] sm:$0xff]
    %v3912 = vld [vmem:[#allocation11 + $0x1e98] sm:$0xff]
    %v3913 = vld [vmem:[#allocation11 + $0x1ea0] sm:$0xff]
    %v3914 = vld [vmem:[#allocation11 + $0x1ea8] sm:$0xff]
    %v3915 = vld [vmem:[#allocation11 + $0x1eb0] sm:$0xff]
    %v3916 = vld [vmem:[#allocation11 + $0x1eb8] sm:$0xff]
    %v3917 = vld [vmem:[#allocation11 + $0x1ec0] sm:$0xff]
    %v3918 = vld [vmem:[#allocation11 + $0x1ec8] sm:$0xff]
    %v3919 = vld [vmem:[#allocation11 + $0x1ed0] sm:$0xff]
    %v3920 = vld [vmem:[#allocation11 + $0x1ed8] sm:$0xff]
    %v3921 = vld [vmem:[#allocation11 + $0x1ee0] sm:$0xff]
    %v3922 = vld [vmem:[#allocation11 + $0x1ee8] sm:$0xff]
    %v3923 = vld [vmem:[#allocation11 + $0x1ef0] sm:$0xff]
    %v3924 = vld [vmem:[#allocation11 + $0x1ef8] sm:$0xff]
    %v3925 = vld [vmem:[#allocation11 + $0x1f00] sm:$0xff]
    %v3926 = vld [vmem:[#allocation11 + $0x1f08] sm:$0xff]
    %v3927 = vld [vmem:[#allocation11 + $0x1f10] sm:$0xff]
    %v3928 = vld [vmem:[#allocation11 + $0x1f18] sm:$0xff]
    %v3929 = vld [vmem:[#allocation11 + $0x1f20] sm:$0xff]
    %v3930 = vld [vmem:[#allocation11 + $0x1f28] sm:$0xff]
    %v3931 = vld [vmem:[#allocation11 + $0x1f30] sm:$0xff]
    %v3932 = vld [vmem:[#allocation11 + $0x1f38] sm:$0xff]
    %v3933 = vld [vmem:[#allocation11 + $0x1f40] sm:$0xff]
    %v3934 = vld [vmem:[#allocation11 + $0x1f48] sm:$0xff]
    %v3935 = vld [vmem:[#allocation11 + $0x1f50] sm:$0xff]
    %v3936 = vld [vmem:[#allocation11 + $0x1f58] sm:$0xff]
    %v3937 = vld [vmem:[#allocation11 + $0x1f60] sm:$0xff]
    %v3938 = vld [vmem:[#allocation11 + $0x1f68] sm:$0xff]
    %v3939 = vld [vmem:[#allocation11 + $0x1f70] sm:$0xff]
    %v3940 = vld [vmem:[#allocation11 + $0x1f78] sm:$0xff]
    %v3941 = vld [vmem:[#allocation11 + $0x1f80] sm:$0xff]
    %v3942 = vld [vmem:[#allocation11 + $0x1f88] sm:$0xff]
    %v3943 = vld [vmem:[#allocation11 + $0x1f90] sm:$0xff]
    %v3944 = vld [vmem:[#allocation11 + $0x1f98] sm:$0xff]
    %v3945 = vld [vmem:[#allocation11 + $0x1fa0] sm:$0xff]
    %v3946 = vld [vmem:[#allocation11 + $0x1fa8] sm:$0xff]
    %v3947 = vld [vmem:[#allocation11 + $0x1fb0] sm:$0xff]
    %v3948 = vld [vmem:[#allocation11 + $0x1fb8] sm:$0xff]
    %v3949 = vld [vmem:[#allocation11 + $0x1fc0] sm:$0xff]
    %v3950 = vld [vmem:[#allocation11 + $0x1fc8] sm:$0xff]
    %v3951 = vld [vmem:[#allocation11 + $0x1fd0] sm:$0xff]
    %v3952 = vld [vmem:[#allocation11 + $0x1fd8] sm:$0xff]
    %v3953 = vld [vmem:[#allocation11 + $0x1fe0] sm:$0xff]
    %v3954 = vld [vmem:[#allocation11 + $0x1fe8] sm:$0xff]
    %v3955 = vld [vmem:[#allocation11 + $0x1ff0] sm:$0xff]
    %v3956 = vld [vmem:[#allocation11 + $0x1ff8] sm:$0xff]
    %v3957 = vld [vmem:[#allocation13] sm:$0xff]
    %v3959 = vlaneseq
    %v3960 = vshrl.u32 %v3959, 7
    %v3961 = vsub.s32 0, %v3960
    %v3962 = vrot.slane %v3957, %v3961
    %v3963 = vlaneseq
    %v3964 = vshrl.u32 %v3963, 7
    %v3965 = vsub.s32 1, %v3964
    %v3966 = vrot.slane %v3957, %v3965
    %v3967 = vlaneseq
    %v3968 = vshrl.u32 %v3967, 7
    %v3969 = vsub.s32 2, %v3968
    %v3970 = vrot.slane %v3957, %v3969
    %v3971 = vlaneseq
    %v3972 = vshrl.u32 %v3971, 7
    %v3973 = vsub.s32 3, %v3972
    %v3974 = vrot.slane %v3957, %v3973
    %v3975 = vlaneseq
    %v3976 = vshrl.u32 %v3975, 7
    %v3977 = vsub.s32 4, %v3976
    %v3978 = vrot.slane %v3957, %v3977
    %v3979 = vlaneseq
    %v3980 = vshrl.u32 %v3979, 7
    %v3981 = vsub.s32 5, %v3980
    %v3982 = vrot.slane %v3957, %v3981
    %v3983 = vlaneseq
    %v3984 = vshrl.u32 %v3983, 7
    %v3985 = vsub.s32 6, %v3984
    %v3986 = vrot.slane %v3957, %v3985
    %v3987 = vlaneseq
    %v3988 = vshrl.u32 %v3987, 7
    %v3989 = vsub.s32 7, %v3988
    %v3990 = vrot.slane %v3957, %v3989
    %3999 = vmatprep.subr.mxu0 %v2934
    %4000 = vmatpush1.msra.mxu0 %v2933
    %4001 = vmatprep.subr.mxu0 %v2942
    %4002 = vmatpush1.msra.mxu0 %v2941
    %4003 = vmatprep.subr.mxu0 %v2950
    %4004 = vmatpush1.msra.mxu0 %v2949
    %4005 = vmatprep.subr.mxu0 %v2958
    %4006 = vmatpush1.msra.mxu0 %v2957
    %4007 = vmatprep.subr.mxu0 %v2966
    %4008 = vmatpush1.msra.mxu0 %v2965
    %4009 = vmatprep.subr.mxu0 %v2974
    %4010 = vmatpush1.msra.mxu0 %v2973
    %4011 = vmatprep.subr.mxu0 %v2982
    %4012 = vmatpush1.msra.mxu0 %v2981
    %4013 = vmatprep.subr.mxu0 %v2990
    %4014 = vmatpush1.msra.mxu0 %v2989
    %4015 = vmatprep.subr.mxu0 %v2998
    %4016 = vmatpush1.msra.mxu0 %v2997
    %4017 = vmatprep.subr.mxu0 %v3006
    %4018 = vmatpush1.msra.mxu0 %v3005
    %4019 = vmatprep.subr.mxu0 %v3014
    %4020 = vmatpush1.msra.mxu0 %v3013
    %4021 = vmatprep.subr.mxu0 %v3022
    %4022 = vmatpush1.msra.mxu0 %v3021
    %4023 = vmatprep.subr.mxu0 %v3030
    %4024 = vmatpush1.msra.mxu0 %v3029
    %4025 = vmatprep.subr.mxu0 %v3038
    %4026 = vmatpush1.msra.mxu0 %v3037
    %4027 = vmatprep.subr.mxu0 %v3046
    %4028 = vmatpush1.msra.mxu0 %v3045
    %4029 = vmatprep.subr.mxu0 %v3054
    %4030 = vmatpush1.msra.mxu0 %v3053
    %4031 = vmatprep.subr.mxu0 %v3062
    %4032 = vmatpush1.msra.mxu0 %v3061
    %4033 = vmatprep.subr.mxu0 %v3070
    %4034 = vmatpush1.msra.mxu0 %v3069
    %4035 = vmatprep.subr.mxu0 %v3078
    %4036 = vmatpush1.msra.mxu0 %v3077
    %4037 = vmatprep.subr.mxu0 %v3086
    %4038 = vmatpush1.msra.mxu0 %v3085
    %4039 = vmatprep.subr.mxu0 %v3094
    %4040 = vmatpush1.msra.mxu0 %v3093
    %4041 = vmatprep.subr.mxu0 %v3102
    %4042 = vmatpush1.msra.mxu0 %v3101
    %4043 = vmatprep.subr.mxu0 %v3110
    %4044 = vmatpush1.msra.mxu0 %v3109
    %4045 = vmatprep.subr.mxu0 %v3118
    %4046 = vmatpush1.msra.mxu0 %v3117
    %4047 = vmatprep.subr.mxu0 %v3126
    %4048 = vmatpush1.msra.mxu0 %v3125
    %4049 = vmatprep.subr.mxu0 %v3134
    %4050 = vmatpush1.msra.mxu0 %v3133
    %4051 = vmatprep.subr.mxu0 %v3142
    %4052 = vmatpush1.msra.mxu0 %v3141
    %4053 = vmatprep.subr.mxu0 %v3150
    %4054 = vmatpush1.msra.mxu0 %v3149
    %4055 = vmatprep.subr.mxu0 %v3158
    %4056 = vmatpush1.msra.mxu0 %v3157
    %4057 = vmatprep.subr.mxu0 %v3166
    %4058 = vmatpush1.msra.mxu0 %v3165
    %4059 = vmatprep.subr.mxu0 %v3174
    %4060 = vmatpush1.msra.mxu0 %v3173
    %4061 = vmatprep.subr.mxu0 %v3182
    %4062 = vmatpush1.msra.mxu0 %v3181
    %4063 = vmatprep.mubr.f32.mxu0 %v2918
    %4064 = vmatmul.mubr.f32.gmra.mrb[0].mxu0 %v2917
    %v4065 = vpop.f32.mrb[0].mxu0
    %v4066 = vadd.f32 %v3962, %v4065
    %v4067 = vpop.f32.mrb[0].mxu0
    %v4068 = vadd.f32 %v3966, %v4067
    %4069 = vmatprep.mubr.f32.mxu0 %v2926
    %4070 = vmatmul.mubr.f32.gmra.mrb[0].mxu0 %v2925
    %v4071 = vpop.f32.mrb[0].mxu0
    %v4072 = vadd.f32 %v3962, %v4071
    %v4073 = vpop.f32.mrb[0].mxu0
    %v4074 = vadd.f32 %v3966, %v4073
    %4075 = vdwg.mxu0
    %4076 = vmatprep.subr.mxu0 %v3190
    %4077 = vmatpush1.msra.mxu0 %v3189
    %4078 = vmatprep.subr.mxu0 %v3198
    %4079 = vmatpush1.msra.mxu0 %v3197
    %4080 = vmatprep.subr.mxu0 %v3206
    %4081 = vmatpush1.msra.mxu0 %v3205
    %4082 = vmatprep.subr.mxu0 %v3214
    %4083 = vmatpush1.msra.mxu0 %v3213
    %4084 = vmatprep.subr.mxu0 %v3222
    %4085 = vmatpush1.msra.mxu0 %v3221
    %4086 = vmatprep.subr.mxu0 %v3230
    %4087 = vmatpush1.msra.mxu0 %v3229
    %4088 = vmatprep.subr.mxu0 %v3238
    %4089 = vmatpush1.msra.mxu0 %v3237
    %4090 = vmatprep.subr.mxu0 %v3246
    %4091 = vmatpush1.msra.mxu0 %v3245
    %4092 = vmatprep.subr.mxu0 %v3254
    %4093 = vmatpush1.msra.mxu0 %v3253
    %4094 = vmatprep.subr.mxu0 %v3262
    %4095 = vmatpush1.msra.mxu0 %v3261
    %4096 = vmatprep.subr.mxu0 %v3270
    %4097 = vmatpush1.msra.mxu0 %v3269
    %4098 = vmatprep.subr.mxu0 %v3278
    %4099 = vmatpush1.msra.mxu0 %v3277
    %4100 = vmatprep.subr.mxu0 %v3286
    %4101 = vmatpush1.msra.mxu0 %v3285
    %4102 = vmatprep.subr.mxu0 %v3294
    %4103 = vmatpush1.msra.mxu0 %v3293
    %4104 = vmatprep.subr.mxu0 %v3302
    %4105 = vmatpush1.msra.mxu0 %v3301
    %4106 = vmatprep.subr.mxu0 %v3310
    %4107 = vmatpush1.msra.mxu0 %v3309
    %4108 = vmatprep.subr.mxu0 %v3318
    %4109 = vmatpush1.msra.mxu0 %v3317
    %4110 = vmatprep.subr.mxu0 %v3326
    %4111 = vmatpush1.msra.mxu0 %v3325
    %4112 = vmatprep.subr.mxu0 %v3334
    %4113 = vmatpush1.msra.mxu0 %v3333
    %4114 = vmatprep.subr.mxu0 %v3342
    %4115 = vmatpush1.msra.mxu0 %v3341
    %4116 = vmatprep.subr.mxu0 %v3350
    %4117 = vmatpush1.msra.mxu0 %v3349
    %4118 = vmatprep.subr.mxu0 %v3358
    %4119 = vmatpush1.msra.mxu0 %v3357
    %4120 = vmatprep.subr.mxu0 %v3366
    %4121 = vmatpush1.msra.mxu0 %v3365
    %4122 = vmatprep.subr.mxu0 %v3374
    %4123 = vmatpush1.msra.mxu0 %v3373
    %4124 = vmatprep.subr.mxu0 %v3382
    %4125 = vmatpush1.msra.mxu0 %v3381
    %4126 = vmatprep.subr.mxu0 %v3390
    %4127 = vmatpush1.msra.mxu0 %v3389
    %4128 = vmatprep.subr.mxu0 %v3398
    %4129 = vmatpush1.msra.mxu0 %v3397
    %4130 = vmatprep.subr.mxu0 %v3406
    %4131 = vmatpush1.msra.mxu0 %v3405
    %4132 = vmatprep.subr.mxu0 %v3414
    %4133 = vmatpush1.msra.mxu0 %v3413
    %4134 = vmatprep.subr.mxu0 %v3422
    %4135 = vmatpush1.msra.mxu0 %v3421
    %4136 = vmatprep.subr.mxu0 %v3430
    %4137 = vmatpush1.msra.mxu0 %v3429
    %4138 = vmatprep.subr.mxu0 %v3438
    %4139 = vmatpush1.msra.mxu0 %v3437
    %4140 = vmatprep.mubr.f32.mxu0 %v2920
    %4141 = vmatmul.mubr.f32.gmra.mrb[0].mxu0 %v2919
    %v4142 = vpop.f32.mrb[0].mxu0
    %v4143 = vadd.f32 %v4066, %v4142
    %v4144 = vpop.f32.mrb[0].mxu0
    %v4145 = vadd.f32 %v4068, %v4144
    %4146 = vmatprep.mubr.f32.mxu0 %v2928
    %4147 = vmatmul.mubr.f32.gmra.mrb[0].mxu0 %v2927
    %v4148 = vpop.f32.mrb[0].mxu0
    %v4149 = vadd.f32 %v4072, %v4148
    %v4150 = vpop.f32.mrb[0].mxu0
    %v4151 = vadd.f32 %v4074, %v4150
    %4152 = vdwg.mxu0
    %4153 = vmatprep.subr.mxu0 %v3446
    %4154 = vmatpush1.msra.mxu0 %v3445
    %4155 = vmatprep.subr.mxu0 %v3454
    %4156 = vmatpush1.msra.mxu0 %v3453
    %4157 = vmatprep.subr.mxu0 %v3462
    %4158 = vmatpush1.msra.mxu0 %v3461
    %4159 = vmatprep.subr.mxu0 %v3470
    %4160 = vmatpush1.msra.mxu0 %v3469
    %4161 = vmatprep.subr.mxu0 %v3478
    %4162 = vmatpush1.msra.mxu0 %v3477
    %4163 = vmatprep.subr.mxu0 %v3486
    %4164 = vmatpush1.msra.mxu0 %v3485
    %4165 = vmatprep.subr.mxu0 %v3494
    %4166 = vmatpush1.msra.mxu0 %v3493
    %4167 = vmatprep.subr.mxu0 %v3502
    %4168 = vmatpush1.msra.mxu0 %v3501
    %4169 = vmatprep.subr.mxu0 %v3510
    %4170 = vmatpush1.msra.mxu0 %v3509
    %4171 = vmatprep.subr.mxu0 %v3518
    %4172 = vmatpush1.msra.mxu0 %v3517
    %4173 = vmatprep.subr.mxu0 %v3526
    %4174 = vmatpush1.msra.mxu0 %v3525
    %4175 = vmatprep.subr.mxu0 %v3534
    %4176 = vmatpush1.msra.mxu0 %v3533
    %4177 = vmatprep.subr.mxu0 %v3542
    %4178 = vmatpush1.msra.mxu0 %v3541
    %4179 = vmatprep.subr.mxu0 %v3550
    %4180 = vmatpush1.msra.mxu0 %v3549
    %4181 = vmatprep.subr.mxu0 %v3558
    %4182 = vmatpush1.msra.mxu0 %v3557
    %4183 = vmatprep.subr.mxu0 %v3566
    %4184 = vmatpush1.msra.mxu0 %v3565
    %4185 = vmatprep.subr.mxu0 %v3574
    %4186 = vmatpush1.msra.mxu0 %v3573
    %4187 = vmatprep.subr.mxu0 %v3582
    %4188 = vmatpush1.msra.mxu0 %v3581
    %4189 = vmatprep.subr.mxu0 %v3590
    %4190 = vmatpush1.msra.mxu0 %v3589
    %4191 = vmatprep.subr.mxu0 %v3598
    %4192 = vmatpush1.msra.mxu0 %v3597
    %4193 = vmatprep.subr.mxu0 %v3606
    %4194 = vmatpush1.msra.mxu0 %v3605
    %4195 = vmatprep.subr.mxu0 %v3614
    %4196 = vmatpush1.msra.mxu0 %v3613
    %4197 = vmatprep.subr.mxu0 %v3622
    %4198 = vmatpush1.msra.mxu0 %v3621
    %4199 = vmatprep.subr.mxu0 %v3630
    %4200 = vmatpush1.msra.mxu0 %v3629
    %4201 = vmatprep.subr.mxu0 %v3638
    %4202 = vmatpush1.msra.mxu0 %v3637
    %4203 = vmatprep.subr.mxu0 %v3646
    %4204 = vmatpush1.msra.mxu0 %v3645
    %4205 = vmatprep.subr.mxu0 %v3654
    %4206 = vmatpush1.msra.mxu0 %v3653
    %4207 = vmatprep.subr.mxu0 %v3662
    %4208 = vmatpush1.msra.mxu0 %v3661
    %4209 = vmatprep.subr.mxu0 %v3670
    %4210 = vmatpush1.msra.mxu0 %v3669
    %4211 = vmatprep.subr.mxu0 %v3678
    %4212 = vmatpush1.msra.mxu0 %v3677
    %4213 = vmatprep.subr.mxu0 %v3686
    %4214 = vmatpush1.msra.mxu0 %v3685
    %4215 = vmatprep.subr.mxu0 %v3694
    %4216 = vmatpush1.msra.mxu0 %v3693
    %4217 = vmatprep.mubr.f32.mxu0 %v2922
    %4218 = vmatmul.mubr.f32.gmra.mrb[0].mxu0 %v2921
    %v4219 = vpop.f32.mrb[0].mxu0
    %v4220 = vadd.f32 %v4143, %v4219
    %v4221 = vpop.f32.mrb[0].mxu0
    %v4222 = vadd.f32 %v4145, %v4221
    %4223 = vmatprep.mubr.f32.mxu0 %v2930
    %4224 = vmatmul.mubr.f32.gmra.mrb[0].mxu0 %v2929
    %v4225 = vpop.f32.mrb[0].mxu0
    %v4226 = vadd.f32 %v4149, %v4225
    %v4227 = vpop.f32.mrb[0].mxu0
    %v4228 = vadd.f32 %v4151, %v4227
    %4229 = vdwg.mxu0
    %4230 = vmatprep.subr.mxu0 %v3702
    %4231 = vmatpush1.msra.mxu0 %v3701
    %4232 = vmatprep.subr.mxu0 %v3710
    %4233 = vmatpush1.msra.mxu0 %v3709
    %4234 = vmatprep.subr.mxu0 %v3718
    %4235 = vmatpush1.msra.mxu0 %v3717
    %4236 = vmatprep.subr.mxu0 %v3726
    %4237 = vmatpush1.msra.mxu0 %v3725
    %4238 = vmatprep.subr.mxu0 %v3734
    %4239 = vmatpush1.msra.mxu0 %v3733
    %4240 = vmatprep.subr.mxu0 %v3742
    %4241 = vmatpush1.msra.mxu0 %v3741
    %4242 = vmatprep.subr.mxu0 %v3750
    %4243 = vmatpush1.msra.mxu0 %v3749
    %4244 = vmatprep.subr.mxu0 %v3758
    %4245 = vmatpush1.msra.mxu0 %v3757
    %4246 = vmatprep.subr.mxu0 %v3766
    %4247 = vmatpush1.msra.mxu0 %v3765
    %4248 = vmatprep.subr.mxu0 %v3774
    %4249 = vmatpush1.msra.mxu0 %v3773
    %4250 = vmatprep.subr.mxu0 %v3782
    %4251 = vmatpush1.msra.mxu0 %v3781
    %4252 = vmatprep.subr.mxu0 %v3790
    %4253 = vmatpush1.msra.mxu0 %v3789
    %4254 = vmatprep.subr.mxu0 %v3798
    %4255 = vmatpush1.msra.mxu0 %v3797
    %4256 = vmatprep.subr.mxu0 %v3806
    %4257 = vmatpush1.msra.mxu0 %v3805
    %4258 = vmatprep.subr.mxu0 %v3814
    %4259 = vmatpush1.msra.mxu0 %v3813
    %4260 = vmatprep.subr.mxu0 %v3822
    %4261 = vmatpush1.msra.mxu0 %v3821
    %4262 = vmatprep.subr.mxu0 %v3830
    %4263 = vmatpush1.msra.mxu0 %v3829
    %4264 = vmatprep.subr.mxu0 %v3838
    %4265 = vmatpush1.msra.mxu0 %v3837
    %4266 = vmatprep.subr.mxu0 %v3846
    %4267 = vmatpush1.msra.mxu0 %v3845
    %4268 = vmatprep.subr.mxu0 %v3854
    %4269 = vmatpush1.msra.mxu0 %v3853
    %4270 = vmatprep.subr.mxu0 %v3862
    %4271 = vmatpush1.msra.mxu0 %v3861
    %4272 = vmatprep.subr.mxu0 %v3870
    %4273 = vmatpush1.msra.mxu0 %v3869
    %4274 = vmatprep.subr.mxu0 %v3878
    %4275 = vmatpush1.msra.mxu0 %v3877
    %4276 = vmatprep.subr.mxu0 %v3886
    %4277 = vmatpush1.msra.mxu0 %v3885
    %4278 = vmatprep.subr.mxu0 %v3894
    %4279 = vmatpush1.msra.mxu0 %v3893
    %4280 = vmatprep.subr.mxu0 %v3902
    %4281 = vmatpush1.msra.mxu0 %v3901
    %4282 = vmatprep.subr.mxu0 %v3910
    %4283 = vmatpush1.msra.mxu0 %v3909
    %4284 = vmatprep.subr.mxu0 %v3918
    %4285 = vmatpush1.msra.mxu0 %v3917
    %4286 = vmatprep.subr.mxu0 %v3926
    %4287 = vmatpush1.msra.mxu0 %v3925
    %4288 = vmatprep.subr.mxu0 %v3934
    %4289 = vmatpush1.msra.mxu0 %v3933
    %4290 = vmatprep.subr.mxu0 %v3942
    %4291 = vmatpush1.msra.mxu0 %v3941
    %4292 = vmatprep.subr.mxu0 %v3950
    %4293 = vmatpush1.msra.mxu0 %v3949
    %4294 = vmatprep.mubr.f32.mxu0 %v2924
    %4295 = vmatmul.mubr.f32.gmra.mrb[0].mxu0 %v2923
    %v4296 = vpop.f32.mrb[0].mxu0
    %v4297 = vadd.f32 %v4220, %v4296
    %v4298 = vpop.f32.mrb[0].mxu0
    %v4299 = vadd.f32 %v4222, %v4298
    %4300 = vmatprep.mubr.f32.mxu0 %v2932
    %4301 = vmatmul.mubr.f32.gmra.mrb[0].mxu0 %v2931
    %v4302 = vpop.f32.mrb[0].mxu0
    %v4303 = vadd.f32 %v4226, %v4302
    %v4304 = vpop.f32.mrb[0].mxu0
    %v4305 = vadd.f32 %v4228, %v4304
    %4306 = vdwg.mxu0
    %4307 = vmatprep.subr.mxu0 %v2936
    %4308 = vmatpush1.msra.mxu0 %v2935
    %4309 = vmatprep.subr.mxu0 %v2944
    %4310 = vmatpush1.msra.mxu0 %v2943
    %4311 = vmatprep.subr.mxu0 %v2952
    %4312 = vmatpush1.msra.mxu0 %v2951
    %4313 = vmatprep.subr.mxu0 %v2960
    %4314 = vmatpush1.msra.mxu0 %v2959
    %4315 = vmatprep.subr.mxu0 %v2968
    %4316 = vmatpush1.msra.mxu0 %v2967
    %4317 = vmatprep.subr.mxu0 %v2976
    %4318 = vmatpush1.msra.mxu0 %v2975
    %4319 = vmatprep.subr.mxu0 %v2984
    %4320 = vmatpush1.msra.mxu0 %v2983
    %4321 = vmatprep.subr.mxu0 %v2992
    %4322 = vmatpush1.msra.mxu0 %v2991
    %4323 = vmatprep.subr.mxu0 %v3000
    %4324 = vmatpush1.msra.mxu0 %v2999
    %4325 = vmatprep.subr.mxu0 %v3008
    %4326 = vmatpush1.msra.mxu0 %v3007
    %4327 = vmatprep.subr.mxu0 %v3016
    %4328 = vmatpush1.msra.mxu0 %v3015
    %4329 = vmatprep.subr.mxu0 %v3024
    %4330 = vmatpush1.msra.mxu0 %v3023
    %4331 = vmatprep.subr.mxu0 %v3032
    %4332 = vmatpush1.msra.mxu0 %v3031
    %4333 = vmatprep.subr.mxu0 %v3040
    %4334 = vmatpush1.msra.mxu0 %v3039
    %4335 = vmatprep.subr.mxu0 %v3048
    %4336 = vmatpush1.msra.mxu0 %v3047
    %4337 = vmatprep.subr.mxu0 %v3056
    %4338 = vmatpush1.msra.mxu0 %v3055
    %4339 = vmatprep.subr.mxu0 %v3064
    %4340 = vmatpush1.msra.mxu0 %v3063
    %4341 = vmatprep.subr.mxu0 %v3072
    %4342 = vmatpush1.msra.mxu0 %v3071
    %4343 = vmatprep.subr.mxu0 %v3080
    %4344 = vmatpush1.msra.mxu0 %v3079
    %4345 = vmatprep.subr.mxu0 %v3088
    %4346 = vmatpush1.msra.mxu0 %v3087
    %4347 = vmatprep.subr.mxu0 %v3096
    %4348 = vmatpush1.msra.mxu0 %v3095
    %4349 = vmatprep.subr.mxu0 %v3104
    %4350 = vmatpush1.msra.mxu0 %v3103
    %4351 = vmatprep.subr.mxu0 %v3112
    %4352 = vmatpush1.msra.mxu0 %v3111
    %4353 = vmatprep.subr.mxu0 %v3120
    %4354 = vmatpush1.msra.mxu0 %v3119
    %4355 = vmatprep.subr.mxu0 %v3128
    %4356 = vmatpush1.msra.mxu0 %v3127
    %4357 = vmatprep.subr.mxu0 %v3136
    %4358 = vmatpush1.msra.mxu0 %v3135
    %4359 = vmatprep.subr.mxu0 %v3144
    %4360 = vmatpush1.msra.mxu0 %v3143
    %4361 = vmatprep.subr.mxu0 %v3152
    %4362 = vmatpush1.msra.mxu0 %v3151
    %4363 = vmatprep.subr.mxu0 %v3160
    %4364 = vmatpush1.msra.mxu0 %v3159
    %4365 = vmatprep.subr.mxu0 %v3168
    %4366 = vmatpush1.msra.mxu0 %v3167
    %4367 = vmatprep.subr.mxu0 %v3176
    %4368 = vmatpush1.msra.mxu0 %v3175
    %4369 = vmatprep.subr.mxu0 %v3184
    %4370 = vmatpush1.msra.mxu0 %v3183
    %4371 = vmatprep.mubr.f32.mxu0 %v2918
    %4372 = vmatmul.mubr.f32.gmra.mrb[0].mxu0 %v2917
    %v4373 = vpop.f32.mrb[0].mxu0
    %v4374 = vadd.f32 %v3970, %v4373
    %v4375 = vpop.f32.mrb[0].mxu0
    %v4376 = vadd.f32 %v3974, %v4375
    %4377 = vmatprep.mubr.f32.mxu0 %v2926
    %4378 = vmatmul.mubr.f32.gmra.mrb[0].mxu0 %v2925
    %v4379 = vpop.f32.mrb[0].mxu0
    %v4380 = vadd.f32 %v3970, %v4379
    %v4381 = vpop.f32.mrb[0].mxu0
    %v4382 = vadd.f32 %v3974, %v4381
    %4383 = vdwg.mxu0
    %4384 = vmatprep.subr.mxu0 %v3192
    %4385 = vmatpush1.msra.mxu0 %v3191
    %4386 = vmatprep.subr.mxu0 %v3200
    %4387 = vmatpush1.msra.mxu0 %v3199
    %4388 = vmatprep.subr.mxu0 %v3208
    %4389 = vmatpush1.msra.mxu0 %v3207
    %4390 = vmatprep.subr.mxu0 %v3216
    %4391 = vmatpush1.msra.mxu0 %v3215
    %4392 = vmatprep.subr.mxu0 %v3224
    %4393 = vmatpush1.msra.mxu0 %v3223
    %4394 = vmatprep.subr.mxu0 %v3232
    %4395 = vmatpush1.msra.mxu0 %v3231
    %4396 = vmatprep.subr.mxu0 %v3240
    %4397 = vmatpush1.msra.mxu0 %v3239
    %4398 = vmatprep.subr.mxu0 %v3248
    %4399 = vmatpush1.msra.mxu0 %v3247
    %4400 = vmatprep.subr.mxu0 %v3256
    %4401 = vmatpush1.msra.mxu0 %v3255
    %4402 = vmatprep.subr.mxu0 %v3264
    %4403 = vmatpush1.msra.mxu0 %v3263
    %4404 = vmatprep.subr.mxu0 %v3272
    %4405 = vmatpush1.msra.mxu0 %v3271
    %4406 = vmatprep.subr.mxu0 %v3280
    %4407 = vmatpush1.msra.mxu0 %v3279
    %4408 = vmatprep.subr.mxu0 %v3288
    %4409 = vmatpush1.msra.mxu0 %v3287
    %4410 = vmatprep.subr.mxu0 %v3296
    %4411 = vmatpush1.msra.mxu0 %v3295
    %4412 = vmatprep.subr.mxu0 %v3304
    %4413 = vmatpush1.msra.mxu0 %v3303
    %4414 = vmatprep.subr.mxu0 %v3312
    %4415 = vmatpush1.msra.mxu0 %v3311
    %4416 = vmatprep.subr.mxu0 %v3320
    %4417 = vmatpush1.msra.mxu0 %v3319
    %4418 = vmatprep.subr.mxu0 %v3328
    %4419 = vmatpush1.msra.mxu0 %v3327
    %4420 = vmatprep.subr.mxu0 %v3336
    %4421 = vmatpush1.msra.mxu0 %v3335
    %4422 = vmatprep.subr.mxu0 %v3344
    %4423 = vmatpush1.msra.mxu0 %v3343
    %4424 = vmatprep.subr.mxu0 %v3352
    %4425 = vmatpush1.msra.mxu0 %v3351
    %4426 = vmatprep.subr.mxu0 %v3360
    %4427 = vmatpush1.msra.mxu0 %v3359
    %4428 = vmatprep.subr.mxu0 %v3368
    %4429 = vmatpush1.msra.mxu0 %v3367
    %4430 = vmatprep.subr.mxu0 %v3376
    %4431 = vmatpush1.msra.mxu0 %v3375
    %4432 = vmatprep.subr.mxu0 %v3384
    %4433 = vmatpush1.msra.mxu0 %v3383
    %4434 = vmatprep.subr.mxu0 %v3392
    %4435 = vmatpush1.msra.mxu0 %v3391
    %4436 = vmatprep.subr.mxu0 %v3400
    %4437 = vmatpush1.msra.mxu0 %v3399
    %4438 = vmatprep.subr.mxu0 %v3408
    %4439 = vmatpush1.msra.mxu0 %v3407
    %4440 = vmatprep.subr.mxu0 %v3416
    %4441 = vmatpush1.msra.mxu0 %v3415
    %4442 = vmatprep.subr.mxu0 %v3424
    %4443 = vmatpush1.msra.mxu0 %v3423
    %4444 = vmatprep.subr.mxu0 %v3432
    %4445 = vmatpush1.msra.mxu0 %v3431
    %4446 = vmatprep.subr.mxu0 %v3440
    %4447 = vmatpush1.msra.mxu0 %v3439
    %4448 = vmatprep.mubr.f32.mxu0 %v2920
    %4449 = vmatmul.mubr.f32.gmra.mrb[0].mxu0 %v2919
    %v4450 = vpop.f32.mrb[0].mxu0
    %v4451 = vadd.f32 %v4374, %v4450
    %v4452 = vpop.f32.mrb[0].mxu0
    %v4453 = vadd.f32 %v4376, %v4452
    %4454 = vmatprep.mubr.f32.mxu0 %v2928
    %4455 = vmatmul.mubr.f32.gmra.mrb[0].mxu0 %v2927
    %v4456 = vpop.f32.mrb[0].mxu0
    %v4457 = vadd.f32 %v4380, %v4456
    %v4458 = vpop.f32.mrb[0].mxu0
    %v4459 = vadd.f32 %v4382, %v4458
    %4460 = vdwg.mxu0
    %4461 = vmatprep.subr.mxu0 %v3448
    %4462 = vmatpush1.msra.mxu0 %v3447
    %4463 = vmatprep.subr.mxu0 %v3456
    %4464 = vmatpush1.msra.mxu0 %v3455
    %4465 = vmatprep.subr.mxu0 %v3464
    %4466 = vmatpush1.msra.mxu0 %v3463
    %4467 = vmatprep.subr.mxu0 %v3472
    %4468 = vmatpush1.msra.mxu0 %v3471
    %4469 = vmatprep.subr.mxu0 %v3480
    %4470 = vmatpush1.msra.mxu0 %v3479
    %4471 = vmatprep.subr.mxu0 %v3488
    %4472 = vmatpush1.msra.mxu0 %v3487
    %4473 = vmatprep.subr.mxu0 %v3496
    %4474 = vmatpush1.msra.mxu0 %v3495
    %4475 = vmatprep.subr.mxu0 %v3504
    %4476 = vmatpush1.msra.mxu0 %v3503
    %4477 = vmatprep.subr.mxu0 %v3512
    %4478 = vmatpush1.msra.mxu0 %v3511
    %4479 = vmatprep.subr.mxu0 %v3520
    %4480 = vmatpush1.msra.mxu0 %v3519
    %4481 = vmatprep.subr.mxu0 %v3528
    %4482 = vmatpush1.msra.mxu0 %v3527
    %4483 = vmatprep.subr.mxu0 %v3536
    %4484 = vmatpush1.msra.mxu0 %v3535
    %4485 = vmatprep.subr.mxu0 %v3544
    %4486 = vmatpush1.msra.mxu0 %v3543
    %4487 = vmatprep.subr.mxu0 %v3552
    %4488 = vmatpush1.msra.mxu0 %v3551
    %4489 = vmatprep.subr.mxu0 %v3560
    %4490 = vmatpush1.msra.mxu0 %v3559
    %4491 = vmatprep.subr.mxu0 %v3568
    %4492 = vmatpush1.msra.mxu0 %v3567
    %4493 = vmatprep.subr.mxu0 %v3576
    %4494 = vmatpush1.msra.mxu0 %v3575
    %4495 = vmatprep.subr.mxu0 %v3584
    %4496 = vmatpush1.msra.mxu0 %v3583
    %4497 = vmatprep.subr.mxu0 %v3592
    %4498 = vmatpush1.msra.mxu0 %v3591
    %4499 = vmatprep.subr.mxu0 %v3600
    %4500 = vmatpush1.msra.mxu0 %v3599
    %4501 = vmatprep.subr.mxu0 %v3608
    %4502 = vmatpush1.msra.mxu0 %v3607
    %4503 = vmatprep.subr.mxu0 %v3616
    %4504 = vmatpush1.msra.mxu0 %v3615
    %4505 = vmatprep.subr.mxu0 %v3624
    %4506 = vmatpush1.msra.mxu0 %v3623
    %4507 = vmatprep.subr.mxu0 %v3632
    %4508 = vmatpush1.msra.mxu0 %v3631
    %4509 = vmatprep.subr.mxu0 %v3640
    %4510 = vmatpush1.msra.mxu0 %v3639
    %4511 = vmatprep.subr.mxu0 %v3648
    %4512 = vmatpush1.msra.mxu0 %v3647
    %4513 = vmatprep.subr.mxu0 %v3656
    %4514 = vmatpush1.msra.mxu0 %v3655
    %4515 = vmatprep.subr.mxu0 %v3664
    %4516 = vmatpush1.msra.mxu0 %v3663
    %4517 = vmatprep.subr.mxu0 %v3672
    %4518 = vmatpush1.msra.mxu0 %v3671
    %4519 = vmatprep.subr.mxu0 %v3680
    %4520 = vmatpush1.msra.mxu0 %v3679
    %4521 = vmatprep.subr.mxu0 %v3688
    %4522 = vmatpush1.msra.mxu0 %v3687
    %4523 = vmatprep.subr.mxu0 %v3696
    %4524 = vmatpush1.msra.mxu0 %v3695
    %4525 = vmatprep.mubr.f32.mxu0 %v2922
    %4526 = vmatmul.mubr.f32.gmra.mrb[0].mxu0 %v2921
    %v4527 = vpop.f32.mrb[0].mxu0
    %v4528 = vadd.f32 %v4451, %v4527
    %v4529 = vpop.f32.mrb[0].mxu0
    %v4530 = vadd.f32 %v4453, %v4529
    %4531 = vmatprep.mubr.f32.mxu0 %v2930
    %4532 = vmatmul.mubr.f32.gmra.mrb[0].mxu0 %v2929
    %v4533 = vpop.f32.mrb[0].mxu0
    %v4534 = vadd.f32 %v4457, %v4533
    %v4535 = vpop.f32.mrb[0].mxu0
    %v4536 = vadd.f32 %v4459, %v4535
    %4537 = vdwg.mxu0
    %4538 = vmatprep.subr.mxu0 %v3704
    %4539 = vmatpush1.msra.mxu0 %v3703
    %4540 = vmatprep.subr.mxu0 %v3712
    %4541 = vmatpush1.msra.mxu0 %v3711
    %4542 = vmatprep.subr.mxu0 %v3720
    %4543 = vmatpush1.msra.mxu0 %v3719
    %4544 = vmatprep.subr.mxu0 %v3728
    %4545 = vmatpush1.msra.mxu0 %v3727
    %4546 = vmatprep.subr.mxu0 %v3736
    %4547 = vmatpush1.msra.mxu0 %v3735
    %4548 = vmatprep.subr.mxu0 %v3744
    %4549 = vmatpush1.msra.mxu0 %v3743
    %4550 = vmatprep.subr.mxu0 %v3752
    %4551 = vmatpush1.msra.mxu0 %v3751
    %4552 = vmatprep.subr.mxu0 %v3760
    %4553 = vmatpush1.msra.mxu0 %v3759
    %4554 = vmatprep.subr.mxu0 %v3768
    %4555 = vmatpush1.msra.mxu0 %v3767
    %4556 = vmatprep.subr.mxu0 %v3776
    %4557 = vmatpush1.msra.mxu0 %v3775
    %4558 = vmatprep.subr.mxu0 %v3784
    %4559 = vmatpush1.msra.mxu0 %v3783
    %4560 = vmatprep.subr.mxu0 %v3792
    %4561 = vmatpush1.msra.mxu0 %v3791
    %4562 = vmatprep.subr.mxu0 %v3800
    %4563 = vmatpush1.msra.mxu0 %v3799
    %4564 = vmatprep.subr.mxu0 %v3808
    %4565 = vmatpush1.msra.mxu0 %v3807
    %4566 = vmatprep.subr.mxu0 %v3816
    %4567 = vmatpush1.msra.mxu0 %v3815
    %4568 = vmatprep.subr.mxu0 %v3824
    %4569 = vmatpush1.msra.mxu0 %v3823
    %4570 = vmatprep.subr.mxu0 %v3832
    %4571 = vmatpush1.msra.mxu0 %v3831
    %4572 = vmatprep.subr.mxu0 %v3840
    %4573 = vmatpush1.msra.mxu0 %v3839
    %4574 = vmatprep.subr.mxu0 %v3848
    %4575 = vmatpush1.msra.mxu0 %v3847
    %4576 = vmatprep.subr.mxu0 %v3856
    %4577 = vmatpush1.msra.mxu0 %v3855
    %4578 = vmatprep.subr.mxu0 %v3864
    %4579 = vmatpush1.msra.mxu0 %v3863
    %4580 = vmatprep.subr.mxu0 %v3872
    %4581 = vmatpush1.msra.mxu0 %v3871
    %4582 = vmatprep.subr.mxu0 %v3880
    %4583 = vmatpush1.msra.mxu0 %v3879
    %4584 = vmatprep.subr.mxu0 %v3888
    %4585 = vmatpush1.msra.mxu0 %v3887
    %4586 = vmatprep.subr.mxu0 %v3896
    %4587 = vmatpush1.msra.mxu0 %v3895
    %4588 = vmatprep.subr.mxu0 %v3904
    %4589 = vmatpush1.msra.mxu0 %v3903
    %4590 = vmatprep.subr.mxu0 %v3912
    %4591 = vmatpush1.msra.mxu0 %v3911
    %4592 = vmatprep.subr.mxu0 %v3920
    %4593 = vmatpush1.msra.mxu0 %v3919
    %4594 = vmatprep.subr.mxu0 %v3928
    %4595 = vmatpush1.msra.mxu0 %v3927
    %4596 = vmatprep.subr.mxu0 %v3936
    %4597 = vmatpush1.msra.mxu0 %v3935
    %4598 = vmatprep.subr.mxu0 %v3944
    %4599 = vmatpush1.msra.mxu0 %v3943
    %4600 = vmatprep.subr.mxu0 %v3952
    %4601 = vmatpush1.msra.mxu0 %v3951
    %4602 = vmatprep.mubr.f32.mxu0 %v2924
    %4603 = vmatmul.mubr.f32.gmra.mrb[0].mxu0 %v2923
    %v4604 = vpop.f32.mrb[0].mxu0
    %v4605 = vadd.f32 %v4528, %v4604
    %v4606 = vpop.f32.mrb[0].mxu0
    %v4607 = vadd.f32 %v4530, %v4606
    %4608 = vmatprep.mubr.f32.mxu0 %v2932
    %4609 = vmatmul.mubr.f32.gmra.mrb[0].mxu0 %v2931
    %v4610 = vpop.f32.mrb[0].mxu0
    %v4611 = vadd.f32 %v4534, %v4610
    %v4612 = vpop.f32.mrb[0].mxu0
    %v4613 = vadd.f32 %v4536, %v4612
    %4614 = vdwg.mxu0
    %4615 = vmatprep.subr.mxu0 %v2938
    %4616 = vmatpush1.msra.mxu0 %v2937
    %4617 = vmatprep.subr.mxu0 %v2946
    %4618 = vmatpush1.msra.mxu0 %v2945
    %4619 = vmatprep.subr.mxu0 %v2954
    %4620 = vmatpush1.msra.mxu0 %v2953
    %4621 = vmatprep.subr.mxu0 %v2962
    %4622 = vmatpush1.msra.mxu0 %v2961
    %4623 = vmatprep.subr.mxu0 %v2970
    %4624 = vmatpush1.msra.mxu0 %v2969
    %4625 = vmatprep.subr.mxu0 %v2978
    %4626 = vmatpush1.msra.mxu0 %v2977
    %4627 = vmatprep.subr.mxu0 %v2986
    %4628 = vmatpush1.msra.mxu0 %v2985
    %4629 = vmatprep.subr.mxu0 %v2994
    %4630 = vmatpush1.msra.mxu0 %v2993
    %4631 = vmatprep.subr.mxu0 %v3002
    %4632 = vmatpush1.msra.mxu0 %v3001
    %4633 = vmatprep.subr.mxu0 %v3010
    %4634 = vmatpush1.msra.mxu0 %v3009
    %4635 = vmatprep.subr.mxu0 %v3018
    %4636 = vmatpush1.msra.mxu0 %v3017
    %4637 = vmatprep.subr.mxu0 %v3026
    %4638 = vmatpush1.msra.mxu0 %v3025
    %4639 = vmatprep.subr.mxu0 %v3034
    %4640 = vmatpush1.msra.mxu0 %v3033
    %4641 = vmatprep.subr.mxu0 %v3042
    %4642 = vmatpush1.msra.mxu0 %v3041
    %4643 = vmatprep.subr.mxu0 %v3050
    %4644 = vmatpush1.msra.mxu0 %v3049
    %4645 = vmatprep.subr.mxu0 %v3058
    %4646 = vmatpush1.msra.mxu0 %v3057
    %4647 = vmatprep.subr.mxu0 %v3066
    %4648 = vmatpush1.msra.mxu0 %v3065
    %4649 = vmatprep.subr.mxu0 %v3074
    %4650 = vmatpush1.msra.mxu0 %v3073
    %4651 = vmatprep.subr.mxu0 %v3082
    %4652 = vmatpush1.msra.mxu0 %v3081
    %4653 = vmatprep.subr.mxu0 %v3090
    %4654 = vmatpush1.msra.mxu0 %v3089
    %4655 = vmatprep.subr.mxu0 %v3098
    %4656 = vmatpush1.msra.mxu0 %v3097
    %4657 = vmatprep.subr.mxu0 %v3106
    %4658 = vmatpush1.msra.mxu0 %v3105
    %4659 = vmatprep.subr.mxu0 %v3114
    %4660 = vmatpush1.msra.mxu0 %v3113
    %4661 = vmatprep.subr.mxu0 %v3122
    %4662 = vmatpush1.msra.mxu0 %v3121
    %4663 = vmatprep.subr.mxu0 %v3130
    %4664 = vmatpush1.msra.mxu0 %v3129
    %4665 = vmatprep.subr.mxu0 %v3138
    %4666 = vmatpush1.msra.mxu0 %v3137
    %4667 = vmatprep.subr.mxu0 %v3146
    %4668 = vmatpush1.msra.mxu0 %v3145
    %4669 = vmatprep.subr.mxu0 %v3154
    %4670 = vmatpush1.msra.mxu0 %v3153
    %4671 = vmatprep.subr.mxu0 %v3162
    %4672 = vmatpush1.msra.mxu0 %v3161
    %4673 = vmatprep.subr.mxu0 %v3170
    %4674 = vmatpush1.msra.mxu0 %v3169
    %4675 = vmatprep.subr.mxu0 %v3178
    %4676 = vmatpush1.msra.mxu0 %v3177
    %4677 = vmatprep.subr.mxu0 %v3186
    %4678 = vmatpush1.msra.mxu0 %v3185
    %4679 = vmatprep.mubr.f32.mxu0 %v2918
    %4680 = vmatmul.mubr.f32.gmra.mrb[0].mxu0 %v2917
    %v4681 = vpop.f32.mrb[0].mxu0
    %v4682 = vadd.f32 %v3978, %v4681
    %v4683 = vpop.f32.mrb[0].mxu0
    %v4684 = vadd.f32 %v3982, %v4683
    %4685 = vmatprep.mubr.f32.mxu0 %v2926
    %4686 = vmatmul.mubr.f32.gmra.mrb[0].mxu0 %v2925
    %v4687 = vpop.f32.mrb[0].mxu0
    %v4688 = vadd.f32 %v3978, %v4687
    %v4689 = vpop.f32.mrb[0].mxu0
    %v4690 = vadd.f32 %v3982, %v4689
    %4691 = vdwg.mxu0
    %4692 = vmatprep.subr.mxu0 %v3194
    %4693 = vmatpush1.msra.mxu0 %v3193
    %4694 = vmatprep.subr.mxu0 %v3202
    %4695 = vmatpush1.msra.mxu0 %v3201
    %4696 = vmatprep.subr.mxu0 %v3210
    %4697 = vmatpush1.msra.mxu0 %v3209
    %4698 = vmatprep.subr.mxu0 %v3218
    %4699 = vmatpush1.msra.mxu0 %v3217
    %4700 = vmatprep.subr.mxu0 %v3226
    %4701 = vmatpush1.msra.mxu0 %v3225
    %4702 = vmatprep.subr.mxu0 %v3234
    %4703 = vmatpush1.msra.mxu0 %v3233
    %4704 = vmatprep.subr.mxu0 %v3242
    %4705 = vmatpush1.msra.mxu0 %v3241
    %4706 = vmatprep.subr.mxu0 %v3250
    %4707 = vmatpush1.msra.mxu0 %v3249
    %4708 = vmatprep.subr.mxu0 %v3258
    %4709 = vmatpush1.msra.mxu0 %v3257
    %4710 = vmatprep.subr.mxu0 %v3266
    %4711 = vmatpush1.msra.mxu0 %v3265
    %4712 = vmatprep.subr.mxu0 %v3274
    %4713 = vmatpush1.msra.mxu0 %v3273
    %4714 = vmatprep.subr.mxu0 %v3282
    %4715 = vmatpush1.msra.mxu0 %v3281
    %4716 = vmatprep.subr.mxu0 %v3290
    %4717 = vmatpush1.msra.mxu0 %v3289
    %4718 = vmatprep.subr.mxu0 %v3298
    %4719 = vmatpush1.msra.mxu0 %v3297
    %4720 = vmatprep.subr.mxu0 %v3306
    %4721 = vmatpush1.msra.mxu0 %v3305
    %4722 = vmatprep.subr.mxu0 %v3314
    %4723 = vmatpush1.msra.mxu0 %v3313
    %4724 = vmatprep.subr.mxu0 %v3322
    %4725 = vmatpush1.msra.mxu0 %v3321
    %4726 = vmatprep.subr.mxu0 %v3330
    %4727 = vmatpush1.msra.mxu0 %v3329
    %4728 = vmatprep.subr.mxu0 %v3338
    %4729 = vmatpush1.msra.mxu0 %v3337
    %4730 = vmatprep.subr.mxu0 %v3346
    %4731 = vmatpush1.msra.mxu0 %v3345
    %4732 = vmatprep.subr.mxu0 %v3354
    %4733 = vmatpush1.msra.mxu0 %v3353
    %4734 = vmatprep.subr.mxu0 %v3362
    %4735 = vmatpush1.msra.mxu0 %v3361
    %4736 = vmatprep.subr.mxu0 %v3370
    %4737 = vmatpush1.msra.mxu0 %v3369
    %4738 = vmatprep.subr.mxu0 %v3378
    %4739 = vmatpush1.msra.mxu0 %v3377
    %4740 = vmatprep.subr.mxu0 %v3386
    %4741 = vmatpush1.msra.mxu0 %v3385
    %4742 = vmatprep.subr.mxu0 %v3394
    %4743 = vmatpush1.msra.mxu0 %v3393
    %4744 = vmatprep.subr.mxu0 %v3402
    %4745 = vmatpush1.msra.mxu0 %v3401
    %4746 = vmatprep.subr.mxu0 %v3410
    %4747 = vmatpush1.msra.mxu0 %v3409
    %4748 = vmatprep.subr.mxu0 %v3418
    %4749 = vmatpush1.msra.mxu0 %v3417
    %4750 = vmatprep.subr.mxu0 %v3426
    %4751 = vmatpush1.msra.mxu0 %v3425
    %4752 = vmatprep.subr.mxu0 %v3434
    %4753 = vmatpush1.msra.mxu0 %v3433
    %4754 = vmatprep.subr.mxu0 %v3442
    %4755 = vmatpush1.msra.mxu0 %v3441
    %4756 = vmatprep.mubr.f32.mxu0 %v2920
    %4757 = vmatmul.mubr.f32.gmra.mrb[0].mxu0 %v2919
    %v4758 = vpop.f32.mrb[0].mxu0
    %v4759 = vadd.f32 %v4682, %v4758
    %v4760 = vpop.f32.mrb[0].mxu0
    %v4761 = vadd.f32 %v4684, %v4760
    %4762 = vmatprep.mubr.f32.mxu0 %v2928
    %4763 = vmatmul.mubr.f32.gmra.mrb[0].mxu0 %v2927
    %v4764 = vpop.f32.mrb[0].mxu0
    %v4765 = vadd.f32 %v4688, %v4764
    %v4766 = vpop.f32.mrb[0].mxu0
    %v4767 = vadd.f32 %v4690, %v4766
    %4768 = vdwg.mxu0
    %4769 = vmatprep.subr.mxu0 %v3450
    %4770 = vmatpush1.msra.mxu0 %v3449
    %4771 = vmatprep.subr.mxu0 %v3458
    %4772 = vmatpush1.msra.mxu0 %v3457
    %4773 = vmatprep.subr.mxu0 %v3466
    %4774 = vmatpush1.msra.mxu0 %v3465
    %4775 = vmatprep.subr.mxu0 %v3474
    %4776 = vmatpush1.msra.mxu0 %v3473
    %4777 = vmatprep.subr.mxu0 %v3482
    %4778 = vmatpush1.msra.mxu0 %v3481
    %4779 = vmatprep.subr.mxu0 %v3490
    %4780 = vmatpush1.msra.mxu0 %v3489
    %4781 = vmatprep.subr.mxu0 %v3498
    %4782 = vmatpush1.msra.mxu0 %v3497
    %4783 = vmatprep.subr.mxu0 %v3506
    %4784 = vmatpush1.msra.mxu0 %v3505
    %4785 = vmatprep.subr.mxu0 %v3514
    %4786 = vmatpush1.msra.mxu0 %v3513
    %4787 = vmatprep.subr.mxu0 %v3522
    %4788 = vmatpush1.msra.mxu0 %v3521
    %4789 = vmatprep.subr.mxu0 %v3530
    %4790 = vmatpush1.msra.mxu0 %v3529
    %4791 = vmatprep.subr.mxu0 %v3538
    %4792 = vmatpush1.msra.mxu0 %v3537
    %4793 = vmatprep.subr.mxu0 %v3546
    %4794 = vmatpush1.msra.mxu0 %v3545
    %4795 = vmatprep.subr.mxu0 %v3554
    %4796 = vmatpush1.msra.mxu0 %v3553
    %4797 = vmatprep.subr.mxu0 %v3562
    %4798 = vmatpush1.msra.mxu0 %v3561
    %4799 = vmatprep.subr.mxu0 %v3570
    %4800 = vmatpush1.msra.mxu0 %v3569
    %4801 = vmatprep.subr.mxu0 %v3578
    %4802 = vmatpush1.msra.mxu0 %v3577
    %4803 = vmatprep.subr.mxu0 %v3586
    %4804 = vmatpush1.msra.mxu0 %v3585
    %4805 = vmatprep.subr.mxu0 %v3594
    %4806 = vmatpush1.msra.mxu0 %v3593
    %4807 = vmatprep.subr.mxu0 %v3602
    %4808 = vmatpush1.msra.mxu0 %v3601
    %4809 = vmatprep.subr.mxu0 %v3610
    %4810 = vmatpush1.msra.mxu0 %v3609
    %4811 = vmatprep.subr.mxu0 %v3618
    %4812 = vmatpush1.msra.mxu0 %v3617
    %4813 = vmatprep.subr.mxu0 %v3626
    %4814 = vmatpush1.msra.mxu0 %v3625
    %4815 = vmatprep.subr.mxu0 %v3634
    %4816 = vmatpush1.msra.mxu0 %v3633
    %4817 = vmatprep.subr.mxu0 %v3642
    %4818 = vmatpush1.msra.mxu0 %v3641
    %4819 = vmatprep.subr.mxu0 %v3650
    %4820 = vmatpush1.msra.mxu0 %v3649
    %4821 = vmatprep.subr.mxu0 %v3658
    %4822 = vmatpush1.msra.mxu0 %v3657
    %4823 = vmatprep.subr.mxu0 %v3666
    %4824 = vmatpush1.msra.mxu0 %v3665
    %4825 = vmatprep.subr.mxu0 %v3674
    %4826 = vmatpush1.msra.mxu0 %v3673
    %4827 = vmatprep.subr.mxu0 %v3682
    %4828 = vmatpush1.msra.mxu0 %v3681
    %4829 = vmatprep.subr.mxu0 %v3690
    %4830 = vmatpush1.msra.mxu0 %v3689
    %4831 = vmatprep.subr.mxu0 %v3698
    %4832 = vmatpush1.msra.mxu0 %v3697
    %4833 = vmatprep.mubr.f32.mxu0 %v2922
    %4834 = vmatmul.mubr.f32.gmra.mrb[0].mxu0 %v2921
    %v4835 = vpop.f32.mrb[0].mxu0
    %v4836 = vadd.f32 %v4759, %v4835
    %v4837 = vpop.f32.mrb[0].mxu0
    %v4838 = vadd.f32 %v4761, %v4837
    %4839 = vmatprep.mubr.f32.mxu0 %v2930
    %4840 = vmatmul.mubr.f32.gmra.mrb[0].mxu0 %v2929
    %v4841 = vpop.f32.mrb[0].mxu0
    %v4842 = vadd.f32 %v4765, %v4841
    %v4843 = vpop.f32.mrb[0].mxu0
    %v4844 = vadd.f32 %v4767, %v4843
    %4845 = vdwg.mxu0
    %4846 = vmatprep.subr.mxu0 %v3706
    %4847 = vmatpush1.msra.mxu0 %v3705
    %4848 = vmatprep.subr.mxu0 %v3714
    %4849 = vmatpush1.msra.mxu0 %v3713
    %4850 = vmatprep.subr.mxu0 %v3722
    %4851 = vmatpush1.msra.mxu0 %v3721
    %4852 = vmatprep.subr.mxu0 %v3730
    %4853 = vmatpush1.msra.mxu0 %v3729
    %4854 = vmatprep.subr.mxu0 %v3738
    %4855 = vmatpush1.msra.mxu0 %v3737
    %4856 = vmatprep.subr.mxu0 %v3746
    %4857 = vmatpush1.msra.mxu0 %v3745
    %4858 = vmatprep.subr.mxu0 %v3754
    %4859 = vmatpush1.msra.mxu0 %v3753
    %4860 = vmatprep.subr.mxu0 %v3762
    %4861 = vmatpush1.msra.mxu0 %v3761
    %4862 = vmatprep.subr.mxu0 %v3770
    %4863 = vmatpush1.msra.mxu0 %v3769
    %4864 = vmatprep.subr.mxu0 %v3778
    %4865 = vmatpush1.msra.mxu0 %v3777
    %4866 = vmatprep.subr.mxu0 %v3786
    %4867 = vmatpush1.msra.mxu0 %v3785
    %4868 = vmatprep.subr.mxu0 %v3794
    %4869 = vmatpush1.msra.mxu0 %v3793
    %4870 = vmatprep.subr.mxu0 %v3802
    %4871 = vmatpush1.msra.mxu0 %v3801
    %4872 = vmatprep.subr.mxu0 %v3810
    %4873 = vmatpush1.msra.mxu0 %v3809
    %4874 = vmatprep.subr.mxu0 %v3818
    %4875 = vmatpush1.msra.mxu0 %v3817
    %4876 = vmatprep.subr.mxu0 %v3826
    %4877 = vmatpush1.msra.mxu0 %v3825
    %4878 = vmatprep.subr.mxu0 %v3834
    %4879 = vmatpush1.msra.mxu0 %v3833
    %4880 = vmatprep.subr.mxu0 %v3842
    %4881 = vmatpush1.msra.mxu0 %v3841
    %4882 = vmatprep.subr.mxu0 %v3850
    %4883 = vmatpush1.msra.mxu0 %v3849
    %4884 = vmatprep.subr.mxu0 %v3858
    %4885 = vmatpush1.msra.mxu0 %v3857
    %4886 = vmatprep.subr.mxu0 %v3866
    %4887 = vmatpush1.msra.mxu0 %v3865
    %4888 = vmatprep.subr.mxu0 %v3874
    %4889 = vmatpush1.msra.mxu0 %v3873
    %4890 = vmatprep.subr.mxu0 %v3882
    %4891 = vmatpush1.msra.mxu0 %v3881
    %4892 = vmatprep.subr.mxu0 %v3890
    %4893 = vmatpush1.msra.mxu0 %v3889
    %4894 = vmatprep.subr.mxu0 %v3898
    %4895 = vmatpush1.msra.mxu0 %v3897
    %4896 = vmatprep.subr.mxu0 %v3906
    %4897 = vmatpush1.msra.mxu0 %v3905
    %4898 = vmatprep.subr.mxu0 %v3914
    %4899 = vmatpush1.msra.mxu0 %v3913
    %4900 = vmatprep.subr.mxu0 %v3922
    %4901 = vmatpush1.msra.mxu0 %v3921
    %4902 = vmatprep.subr.mxu0 %v3930
    %4903 = vmatpush1.msra.mxu0 %v3929
    %4904 = vmatprep.subr.mxu0 %v3938
    %4905 = vmatpush1.msra.mxu0 %v3937
    %4906 = vmatprep.subr.mxu0 %v3946
    %4907 = vmatpush1.msra.mxu0 %v3945
    %4908 = vmatprep.subr.mxu0 %v3954
    %4909 = vmatpush1.msra.mxu0 %v3953
    %4910 = vmatprep.mubr.f32.mxu0 %v2924
    %4911 = vmatmul.mubr.f32.gmra.mrb[0].mxu0 %v2923
    %v4912 = vpop.f32.mrb[0].mxu0
    %v4913 = vadd.f32 %v4836, %v4912
    %v4914 = vpop.f32.mrb[0].mxu0
    %v4915 = vadd.f32 %v4838, %v4914
    %4916 = vmatprep.mubr.f32.mxu0 %v2932
    %4917 = vmatmul.mubr.f32.gmra.mrb[0].mxu0 %v2931
    %v4918 = vpop.f32.mrb[0].mxu0
    %v4919 = vadd.f32 %v4842, %v4918
    %v4920 = vpop.f32.mrb[0].mxu0
    %v4921 = vadd.f32 %v4844, %v4920
    %4922 = vdwg.mxu0
    %4923 = vmatprep.subr.mxu0 %v2940
    %4924 = vmatpush1.msra.mxu0 %v2939
    %4925 = vmatprep.subr.mxu0 %v2948
    %4926 = vmatpush1.msra.mxu0 %v2947
    %4927 = vmatprep.subr.mxu0 %v2956
    %4928 = vmatpush1.msra.mxu0 %v2955
    %4929 = vmatprep.subr.mxu0 %v2964
    %4930 = vmatpush1.msra.mxu0 %v2963
    %4931 = vmatprep.subr.mxu0 %v2972
    %4932 = vmatpush1.msra.mxu0 %v2971
    %4933 = vmatprep.subr.mxu0 %v2980
    %4934 = vmatpush1.msra.mxu0 %v2979
    %4935 = vmatprep.subr.mxu0 %v2988
    %4936 = vmatpush1.msra.mxu0 %v2987
    %4937 = vmatprep.subr.mxu0 %v2996
    %4938 = vmatpush1.msra.mxu0 %v2995
    %4939 = vmatprep.subr.mxu0 %v3004
    %4940 = vmatpush1.msra.mxu0 %v3003
    %4941 = vmatprep.subr.mxu0 %v3012
    %4942 = vmatpush1.msra.mxu0 %v3011
    %4943 = vmatprep.subr.mxu0 %v3020
    %4944 = vmatpush1.msra.mxu0 %v3019
    %4945 = vmatprep.subr.mxu0 %v3028
    %4946 = vmatpush1.msra.mxu0 %v3027
    %4947 = vmatprep.subr.mxu0 %v3036
    %4948 = vmatpush1.msra.mxu0 %v3035
    %4949 = vmatprep.subr.mxu0 %v3044
    %4950 = vmatpush1.msra.mxu0 %v3043
    %4951 = vmatprep.subr.mxu0 %v3052
    %4952 = vmatpush1.msra.mxu0 %v3051
    %4953 = vmatprep.subr.mxu0 %v3060
    %4954 = vmatpush1.msra.mxu0 %v3059
    %4955 = vmatprep.subr.mxu0 %v3068
    %4956 = vmatpush1.msra.mxu0 %v3067
    %4957 = vmatprep.subr.mxu0 %v3076
    %4958 = vmatpush1.msra.mxu0 %v3075
    %4959 = vmatprep.subr.mxu0 %v3084
    %4960 = vmatpush1.msra.mxu0 %v3083
    %4961 = vmatprep.subr.mxu0 %v3092
    %4962 = vmatpush1.msra.mxu0 %v3091
    %4963 = vmatprep.subr.mxu0 %v3100
    %4964 = vmatpush1.msra.mxu0 %v3099
    %4965 = vmatprep.subr.mxu0 %v3108
    %4966 = vmatpush1.msra.mxu0 %v3107
    %4967 = vmatprep.subr.mxu0 %v3116
    %4968 = vmatpush1.msra.mxu0 %v3115
    %4969 = vmatprep.subr.mxu0 %v3124
    %4970 = vmatpush1.msra.mxu0 %v3123
    %4971 = vmatprep.subr.mxu0 %v3132
    %4972 = vmatpush1.msra.mxu0 %v3131
    %4973 = vmatprep.subr.mxu0 %v3140
    %4974 = vmatpush1.msra.mxu0 %v3139
    %4975 = vmatprep.subr.mxu0 %v3148
    %4976 = vmatpush1.msra.mxu0 %v3147
    %4977 = vmatprep.subr.mxu0 %v3156
    %4978 = vmatpush1.msra.mxu0 %v3155
    %4979 = vmatprep.subr.mxu0 %v3164
    %4980 = vmatpush1.msra.mxu0 %v3163
    %4981 = vmatprep.subr.mxu0 %v3172
    %4982 = vmatpush1.msra.mxu0 %v3171
    %4983 = vmatprep.subr.mxu0 %v3180
    %4984 = vmatpush1.msra.mxu0 %v3179
    %4985 = vmatprep.subr.mxu0 %v3188
    %4986 = vmatpush1.msra.mxu0 %v3187
    %4987 = vmatprep.mubr.f32.mxu0 %v2918
    %4988 = vmatmul.mubr.f32.gmra.mrb[0].mxu0 %v2917
    %v4989 = vpop.f32.mrb[0].mxu0
    %v4990 = vadd.f32 %v3986, %v4989
    %v4991 = vpop.f32.mrb[0].mxu0
    %v4992 = vadd.f32 %v3990, %v4991
    %4993 = vmatprep.mubr.f32.mxu0 %v2926
    %4994 = vmatmul.mubr.f32.gmra.mrb[0].mxu0 %v2925
    %v4995 = vpop.f32.mrb[0].mxu0
    %v4996 = vadd.f32 %v3986, %v4995
    %v4997 = vpop.f32.mrb[0].mxu0
    %v4998 = vadd.f32 %v3990, %v4997
    %4999 = vdwg.mxu0
    %5000 = vmatprep.subr.mxu0 %v3196
    %5001 = vmatpush1.msra.mxu0 %v3195
    %5002 = vmatprep.subr.mxu0 %v3204
    %5003 = vmatpush1.msra.mxu0 %v3203
    %5004 = vmatprep.subr.mxu0 %v3212
    %5005 = vmatpush1.msra.mxu0 %v3211
    %5006 = vmatprep.subr.mxu0 %v3220
    %5007 = vmatpush1.msra.mxu0 %v3219
    %5008 = vmatprep.subr.mxu0 %v3228
    %5009 = vmatpush1.msra.mxu0 %v3227
    %5010 = vmatprep.subr.mxu0 %v3236
    %5011 = vmatpush1.msra.mxu0 %v3235
    %5012 = vmatprep.subr.mxu0 %v3244
    %5013 = vmatpush1.msra.mxu0 %v3243
    %5014 = vmatprep.subr.mxu0 %v3252
    %5015 = vmatpush1.msra.mxu0 %v3251
    %5016 = vmatprep.subr.mxu0 %v3260
    %5017 = vmatpush1.msra.mxu0 %v3259
    %5018 = vmatprep.subr.mxu0 %v3268
    %5019 = vmatpush1.msra.mxu0 %v3267
    %5020 = vmatprep.subr.mxu0 %v3276
    %5021 = vmatpush1.msra.mxu0 %v3275
    %5022 = vmatprep.subr.mxu0 %v3284
    %5023 = vmatpush1.msra.mxu0 %v3283
    %5024 = vmatprep.subr.mxu0 %v3292
    %5025 = vmatpush1.msra.mxu0 %v3291
    %5026 = vmatprep.subr.mxu0 %v3300
    %5027 = vmatpush1.msra.mxu0 %v3299
    %5028 = vmatprep.subr.mxu0 %v3308
    %5029 = vmatpush1.msra.mxu0 %v3307
    %5030 = vmatprep.subr.mxu0 %v3316
    %5031 = vmatpush1.msra.mxu0 %v3315
    %5032 = vmatprep.subr.mxu0 %v3324
    %5033 = vmatpush1.msra.mxu0 %v3323
    %5034 = vmatprep.subr.mxu0 %v3332
    %5035 = vmatpush1.msra.mxu0 %v3331
    %5036 = vmatprep.subr.mxu0 %v3340
    %5037 = vmatpush1.msra.mxu0 %v3339
    %5038 = vmatprep.subr.mxu0 %v3348
    %5039 = vmatpush1.msra.mxu0 %v3347
    %5040 = vmatprep.subr.mxu0 %v3356
    %5041 = vmatpush1.msra.mxu0 %v3355
    %5042 = vmatprep.subr.mxu0 %v3364
    %5043 = vmatpush1.msra.mxu0 %v3363
    %5044 = vmatprep.subr.mxu0 %v3372
    %5045 = vmatpush1.msra.mxu0 %v3371
    %5046 = vmatprep.subr.mxu0 %v3380
    %5047 = vmatpush1.msra.mxu0 %v3379
    %5048 = vmatprep.subr.mxu0 %v3388
    %5049 = vmatpush1.msra.mxu0 %v3387
    %5050 = vmatprep.subr.mxu0 %v3396
    %5051 = vmatpush1.msra.mxu0 %v3395
    %5052 = vmatprep.subr.mxu0 %v3404
    %5053 = vmatpush1.msra.mxu0 %v3403
    %5054 = vmatprep.subr.mxu0 %v3412
    %5055 = vmatpush1.msra.mxu0 %v3411
    %5056 = vmatprep.subr.mxu0 %v3420
    %5057 = vmatpush1.msra.mxu0 %v3419
    %5058 = vmatprep.subr.mxu0 %v3428
    %5059 = vmatpush1.msra.mxu0 %v3427
    %5060 = vmatprep.subr.mxu0 %v3436
    %5061 = vmatpush1.msra.mxu0 %v3435
    %5062 = vmatprep.subr.mxu0 %v3444
    %5063 = vmatpush1.msra.mxu0 %v3443
    %5064 = vmatprep.mubr.f32.mxu0 %v2920
    %5065 = vmatmul.mubr.f32.gmra.mrb[0].mxu0 %v2919
    %v5066 = vpop.f32.mrb[0].mxu0
    %v5067 = vadd.f32 %v4990, %v5066
    %v5068 = vpop.f32.mrb[0].mxu0
    %v5069 = vadd.f32 %v4992, %v5068
    %5070 = vmatprep.mubr.f32.mxu0 %v2928
    %5071 = vmatmul.mubr.f32.gmra.mrb[0].mxu0 %v2927
    %v5072 = vpop.f32.mrb[0].mxu0
    %v5073 = vadd.f32 %v4996, %v5072
    %v5074 = vpop.f32.mrb[0].mxu0
    %v5075 = vadd.f32 %v4998, %v5074
    %5076 = vdwg.mxu0
    %5077 = vmatprep.subr.mxu0 %v3452
    %5078 = vmatpush1.msra.mxu0 %v3451
    %5079 = vmatprep.subr.mxu0 %v3460
    %5080 = vmatpush1.msra.mxu0 %v3459
    %5081 = vmatprep.subr.mxu0 %v3468
    %5082 = vmatpush1.msra.mxu0 %v3467
    %5083 = vmatprep.subr.mxu0 %v3476
    %5084 = vmatpush1.msra.mxu0 %v3475
    %5085 = vmatprep.subr.mxu0 %v3484
    %5086 = vmatpush1.msra.mxu0 %v3483
    %5087 = vmatprep.subr.mxu0 %v3492
    %5088 = vmatpush1.msra.mxu0 %v3491
    %5089 = vmatprep.subr.mxu0 %v3500
    %5090 = vmatpush1.msra.mxu0 %v3499
    %5091 = vmatprep.subr.mxu0 %v3508
    %5092 = vmatpush1.msra.mxu0 %v3507
    %5093 = vmatprep.subr.mxu0 %v3516
    %5094 = vmatpush1.msra.mxu0 %v3515
    %5095 = vmatprep.subr.mxu0 %v3524
    %5096 = vmatpush1.msra.mxu0 %v3523
    %5097 = vmatprep.subr.mxu0 %v3532
    %5098 = vmatpush1.msra.mxu0 %v3531
    %5099 = vmatprep.subr.mxu0 %v3540
    %5100 = vmatpush1.msra.mxu0 %v3539
    %5101 = vmatprep.subr.mxu0 %v3548
    %5102 = vmatpush1.msra.mxu0 %v3547
    %5103 = vmatprep.subr.mxu0 %v3556
    %5104 = vmatpush1.msra.mxu0 %v3555
    %5105 = vmatprep.subr.mxu0 %v3564
    %5106 = vmatpush1.msra.mxu0 %v3563
    %5107 = vmatprep.subr.mxu0 %v3572
    %5108 = vmatpush1.msra.mxu0 %v3571
    %5109 = vmatprep.subr.mxu0 %v3580
    %5110 = vmatpush1.msra.mxu0 %v3579
    %5111 = vmatprep.subr.mxu0 %v3588
    %5112 = vmatpush1.msra.mxu0 %v3587
    %5113 = vmatprep.subr.mxu0 %v3596
    %5114 = vmatpush1.msra.mxu0 %v3595
    %5115 = vmatprep.subr.mxu0 %v3604
    %5116 = vmatpush1.msra.mxu0 %v3603
    %5117 = vmatprep.subr.mxu0 %v3612
    %5118 = vmatpush1.msra.mxu0 %v3611
    %5119 = vmatprep.subr.mxu0 %v3620
    %5120 = vmatpush1.msra.mxu0 %v3619
    %5121 = vmatprep.subr.mxu0 %v3628
    %5122 = vmatpush1.msra.mxu0 %v3627
    %5123 = vmatprep.subr.mxu0 %v3636
    %5124 = vmatpush1.msra.mxu0 %v3635
    %5125 = vmatprep.subr.mxu0 %v3644
    %5126 = vmatpush1.msra.mxu0 %v3643
    %5127 = vmatprep.subr.mxu0 %v3652
    %5128 = vmatpush1.msra.mxu0 %v3651
    %5129 = vmatprep.subr.mxu0 %v3660
    %5130 = vmatpush1.msra.mxu0 %v3659
    %5131 = vmatprep.subr.mxu0 %v3668
    %5132 = vmatpush1.msra.mxu0 %v3667
    %5133 = vmatprep.subr.mxu0 %v3676
    %5134 = vmatpush1.msra.mxu0 %v3675
    %5135 = vmatprep.subr.mxu0 %v3684
    %5136 = vmatpush1.msra.mxu0 %v3683
    %5137 = vmatprep.subr.mxu0 %v3692
    %5138 = vmatpush1.msra.mxu0 %v3691
    %5139 = vmatprep.subr.mxu0 %v3700
    %5140 = vmatpush1.msra.mxu0 %v3699
    %5141 = vmatprep.mubr.f32.mxu0 %v2922
    %5142 = vmatmul.mubr.f32.gmra.mrb[0].mxu0 %v2921
    %v5143 = vpop.f32.mrb[0].mxu0
    %v5144 = vadd.f32 %v5067, %v5143
    %v5145 = vpop.f32.mrb[0].mxu0
    %v5146 = vadd.f32 %v5069, %v5145
    %5147 = vmatprep.mubr.f32.mxu0 %v2930
    %5148 = vmatmul.mubr.f32.gmra.mrb[0].mxu0 %v2929
    %v5149 = vpop.f32.mrb[0].mxu0
    %v5150 = vadd.f32 %v5073, %v5149
    %v5151 = vpop.f32.mrb[0].mxu0
    %v5152 = vadd.f32 %v5075, %v5151
    %5153 = vdwg.mxu0
    %5154 = vmatprep.subr.mxu0 %v3708
    %5155 = vmatpush1.msra.mxu0 %v3707
    %5156 = vmatprep.subr.mxu0 %v3716
    %5157 = vmatpush1.msra.mxu0 %v3715
    %5158 = vmatprep.subr.mxu0 %v3724
    %5159 = vmatpush1.msra.mxu0 %v3723
    %5160 = vmatprep.subr.mxu0 %v3732
    %5161 = vmatpush1.msra.mxu0 %v3731
    %5162 = vmatprep.subr.mxu0 %v3740
    %5163 = vmatpush1.msra.mxu0 %v3739
    %5164 = vmatprep.subr.mxu0 %v3748
    %5165 = vmatpush1.msra.mxu0 %v3747
    %5166 = vmatprep.subr.mxu0 %v3756
    %5167 = vmatpush1.msra.mxu0 %v3755
    %5168 = vmatprep.subr.mxu0 %v3764
    %5169 = vmatpush1.msra.mxu0 %v3763
    %5170 = vmatprep.subr.mxu0 %v3772
    %5171 = vmatpush1.msra.mxu0 %v3771
    %5172 = vmatprep.subr.mxu0 %v3780
    %5173 = vmatpush1.msra.mxu0 %v3779
    %5174 = vmatprep.subr.mxu0 %v3788
    %5175 = vmatpush1.msra.mxu0 %v3787
    %5176 = vmatprep.subr.mxu0 %v3796
    %5177 = vmatpush1.msra.mxu0 %v3795
    %5178 = vmatprep.subr.mxu0 %v3804
    %5179 = vmatpush1.msra.mxu0 %v3803
    %5180 = vmatprep.subr.mxu0 %v3812
    %5181 = vmatpush1.msra.mxu0 %v3811
    %5182 = vmatprep.subr.mxu0 %v3820
    %5183 = vmatpush1.msra.mxu0 %v3819
    %5184 = vmatprep.subr.mxu0 %v3828
    %5185 = vmatpush1.msra.mxu0 %v3827
    %5186 = vmatprep.subr.mxu0 %v3836
    %5187 = vmatpush1.msra.mxu0 %v3835
    %5188 = vmatprep.subr.mxu0 %v3844
    %5189 = vmatpush1.msra.mxu0 %v3843
    %5190 = vmatprep.subr.mxu0 %v3852
    %5191 = vmatpush1.msra.mxu0 %v3851
    %5192 = vmatprep.subr.mxu0 %v3860
    %5193 = vmatpush1.msra.mxu0 %v3859
    %5194 = vmatprep.subr.mxu0 %v3868
    %5195 = vmatpush1.msra.mxu0 %v3867
    %5196 = vmatprep.subr.mxu0 %v3876
    %5197 = vmatpush1.msra.mxu0 %v3875
    %5198 = vmatprep.subr.mxu0 %v3884
    %5199 = vmatpush1.msra.mxu0 %v3883
    %5200 = vmatprep.subr.mxu0 %v3892
    %5201 = vmatpush1.msra.mxu0 %v3891
    %5202 = vmatprep.subr.mxu0 %v3900
    %5203 = vmatpush1.msra.mxu0 %v3899
    %5204 = vmatprep.subr.mxu0 %v3908
    %5205 = vmatpush1.msra.mxu0 %v3907
    %5206 = vmatprep.subr.mxu0 %v3916
    %5207 = vmatpush1.msra.mxu0 %v3915
    %5208 = vmatprep.subr.mxu0 %v3924
    %5209 = vmatpush1.msra.mxu0 %v3923
    %5210 = vmatprep.subr.mxu0 %v3932
    %5211 = vmatpush1.msra.mxu0 %v3931
    %5212 = vmatprep.subr.mxu0 %v3940
    %5213 = vmatpush1.msra.mxu0 %v3939
    %5214 = vmatprep.subr.mxu0 %v3948
    %5215 = vmatpush1.msra.mxu0 %v3947
    %5216 = vmatprep.subr.mxu0 %v3956
    %5217 = vmatpush1.msra.mxu0 %v3955
    %5218 = vmatprep.mubr.f32.mxu0 %v2924
    %5219 = vmatmul.mubr.f32.gmra.mrb[0].mxu0 %v2923
    %v5220 = vpop.f32.mrb[0].mxu0
    %v5221 = vadd.f32 %v5144, %v5220
    %v5222 = vpop.f32.mrb[0].mxu0
    %v5223 = vadd.f32 %v5146, %v5222
    %5224 = vmatprep.mubr.f32.mxu0 %v2932
    %5225 = vmatmul.mubr.f32.gmra.mrb[0].mxu0 %v2931
    %v5226 = vpop.f32.mrb[0].mxu0
    %v5227 = vadd.f32 %v5150, %v5226
    %v5228 = vpop.f32.mrb[0].mxu0
    %v5229 = vadd.f32 %v5152, %v5228
    %5230 = vdwg.mxu0
    %v5231 = vmax.f32 %v4297, 0.0
    %v5232 = vmax.f32 %v4299, 0.0
    %v5233 = vmax.f32 %v4605, 0.0
    %v5234 = vmax.f32 %v4607, 0.0
    %v5235 = vmax.f32 %v4913, 0.0
    %v5236 = vmax.f32 %v4915, 0.0
    %v5237 = vmax.f32 %v5221, 0.0
    %v5238 = vmax.f32 %v5223, 0.0
    %v5239 = vmax.f32 %v4303, 0.0
    %v5240 = vmax.f32 %v4305, 0.0
    %v5241 = vmax.f32 %v4611, 0.0
    %v5242 = vmax.f32 %v4613, 0.0
    %v5243 = vmax.f32 %v4919, 0.0
    %v5244 = vmax.f32 %v4921, 0.0
    %v5245 = vmax.f32 %v5227, 0.0
    %v5246 = vmax.f32 %v5229, 0.0
    %v5247 = vld [vmem:[#allocation14] sm:$0xff]
    %v5248 = vld [vmem:[#allocation14 + $0x8] sm:$0xff]
    %v5249 = vld [vmem:[#allocation14 + $0x10] sm:$0xff]
    %v5250 = vld [vmem:[#allocation14 + $0x18] sm:$0xff]
    %v5251 = vld [vmem:[#allocation14 + $0x20] sm:$0xff]
    %v5252 = vld [vmem:[#allocation14 + $0x28] sm:$0xff]
    %v5253 = vld [vmem:[#allocation14 + $0x30] sm:$0xff]
    %v5254 = vld [vmem:[#allocation14 + $0x38] sm:$0xff]
    %v5255 = vld [vmem:[#allocation14 + $0x40] sm:$0xff]
    %v5256 = vld [vmem:[#allocation14 + $0x48] sm:$0xff]
    %v5257 = vld [vmem:[#allocation14 + $0x50] sm:$0xff]
    %v5258 = vld [vmem:[#allocation14 + $0x58] sm:$0xff]
    %v5259 = vld [vmem:[#allocation14 + $0x60] sm:$0xff]
    %v5260 = vld [vmem:[#allocation14 + $0x68] sm:$0xff]
    %v5261 = vld [vmem:[#allocation14 + $0x70] sm:$0xff]
    %v5262 = vld [vmem:[#allocation14 + $0x78] sm:$0xff]
    %v5263 = vld [vmem:[#allocation14 + $0x80] sm:$0xff]
    %v5264 = vld [vmem:[#allocation14 + $0x88] sm:$0xff]
    %v5265 = vld [vmem:[#allocation14 + $0x90] sm:$0xff]
    %v5266 = vld [vmem:[#allocation14 + $0x98] sm:$0xff]
    %v5267 = vld [vmem:[#allocation14 + $0xa0] sm:$0xff]
    %v5268 = vld [vmem:[#allocation14 + $0xa8] sm:$0xff]
    %v5269 = vld [vmem:[#allocation14 + $0xb0] sm:$0xff]
    %v5270 = vld [vmem:[#allocation14 + $0xb8] sm:$0xff]
    %v5271 = vld [vmem:[#allocation14 + $0xc0] sm:$0xff]
    %v5272 = vld [vmem:[#allocation14 + $0xc8] sm:$0xff]
    %v5273 = vld [vmem:[#allocation14 + $0xd0] sm:$0xff]
    %v5274 = vld [vmem:[#allocation14 + $0xd8] sm:$0xff]
    %v5275 = vld [vmem:[#allocation14 + $0xe0] sm:$0xff]
    %v5276 = vld [vmem:[#allocation14 + $0xe8] sm:$0xff]
    %v5277 = vld [vmem:[#allocation14 + $0xf0] sm:$0xff]
    %v5278 = vld [vmem:[#allocation14 + $0xf8] sm:$0xff]
    %v5279 = vld [vmem:[#allocation14 + $0x100] sm:$0xff]
    %v5280 = vld [vmem:[#allocation14 + $0x108] sm:$0xff]
    %v5281 = vld [vmem:[#allocation14 + $0x110] sm:$0xff]
    %v5282 = vld [vmem:[#allocation14 + $0x118] sm:$0xff]
    %v5283 = vld [vmem:[#allocation14 + $0x120] sm:$0xff]
    %v5284 = vld [vmem:[#allocation14 + $0x128] sm:$0xff]
    %v5285 = vld [vmem:[#allocation14 + $0x130] sm:$0xff]
    %v5286 = vld [vmem:[#allocation14 + $0x138] sm:$0xff]
    %v5287 = vld [vmem:[#allocation14 + $0x140] sm:$0xff]
    %v5288 = vld [vmem:[#allocation14 + $0x148] sm:$0xff]
    %v5289 = vld [vmem:[#allocation14 + $0x150] sm:$0xff]
    %v5290 = vld [vmem:[#allocation14 + $0x158] sm:$0xff]
    %v5291 = vld [vmem:[#allocation14 + $0x160] sm:$0xff]
    %v5292 = vld [vmem:[#allocation14 + $0x168] sm:$0xff]
    %v5293 = vld [vmem:[#allocation14 + $0x170] sm:$0xff]
    %v5294 = vld [vmem:[#allocation14 + $0x178] sm:$0xff]
    %v5295 = vld [vmem:[#allocation14 + $0x180] sm:$0xff]
    %v5296 = vld [vmem:[#allocation14 + $0x188] sm:$0xff]
    %v5297 = vld [vmem:[#allocation14 + $0x190] sm:$0xff]
    %v5298 = vld [vmem:[#allocation14 + $0x198] sm:$0xff]
    %v5299 = vld [vmem:[#allocation14 + $0x1a0] sm:$0xff]
    %v5300 = vld [vmem:[#allocation14 + $0x1a8] sm:$0xff]
    %v5301 = vld [vmem:[#allocation14 + $0x1b0] sm:$0xff]
    %v5302 = vld [vmem:[#allocation14 + $0x1b8] sm:$0xff]
    %v5303 = vld [vmem:[#allocation14 + $0x1c0] sm:$0xff]
    %v5304 = vld [vmem:[#allocation14 + $0x1c8] sm:$0xff]
    %v5305 = vld [vmem:[#allocation14 + $0x1d0] sm:$0xff]
    %v5306 = vld [vmem:[#allocation14 + $0x1d8] sm:$0xff]
    %v5307 = vld [vmem:[#allocation14 + $0x1e0] sm:$0xff]
    %v5308 = vld [vmem:[#allocation14 + $0x1e8] sm:$0xff]
    %v5309 = vld [vmem:[#allocation14 + $0x1f0] sm:$0xff]
    %v5310 = vld [vmem:[#allocation14 + $0x1f8] sm:$0xff]
    %v5311 = vld [vmem:[#allocation14 + $0x200] sm:$0xff]
    %v5312 = vld [vmem:[#allocation14 + $0x208] sm:$0xff]
    %v5313 = vld [vmem:[#allocation14 + $0x210] sm:$0xff]
    %v5314 = vld [vmem:[#allocation14 + $0x218] sm:$0xff]
    %v5315 = vld [vmem:[#allocation14 + $0x220] sm:$0xff]
    %v5316 = vld [vmem:[#allocation14 + $0x228] sm:$0xff]
    %v5317 = vld [vmem:[#allocation14 + $0x230] sm:$0xff]
    %v5318 = vld [vmem:[#allocation14 + $0x238] sm:$0xff]
    %v5319 = vld [vmem:[#allocation14 + $0x240] sm:$0xff]
    %v5320 = vld [vmem:[#allocation14 + $0x248] sm:$0xff]
    %v5321 = vld [vmem:[#allocation14 + $0x250] sm:$0xff]
    %v5322 = vld [vmem:[#allocation14 + $0x258] sm:$0xff]
    %v5323 = vld [vmem:[#allocation14 + $0x260] sm:$0xff]
    %v5324 = vld [vmem:[#allocation14 + $0x268] sm:$0xff]
    %v5325 = vld [vmem:[#allocation14 + $0x270] sm:$0xff]
    %v5326 = vld [vmem:[#allocation14 + $0x278] sm:$0xff]
    %v5327 = vld [vmem:[#allocation14 + $0x280] sm:$0xff]
    %v5328 = vld [vmem:[#allocation14 + $0x288] sm:$0xff]
    %v5329 = vld [vmem:[#allocation14 + $0x290] sm:$0xff]
    %v5330 = vld [vmem:[#allocation14 + $0x298] sm:$0xff]
    %v5331 = vld [vmem:[#allocation14 + $0x2a0] sm:$0xff]
    %v5332 = vld [vmem:[#allocation14 + $0x2a8] sm:$0xff]
    %v5333 = vld [vmem:[#allocation14 + $0x2b0] sm:$0xff]
    %v5334 = vld [vmem:[#allocation14 + $0x2b8] sm:$0xff]
    %v5335 = vld [vmem:[#allocation14 + $0x2c0] sm:$0xff]
    %v5336 = vld [vmem:[#allocation14 + $0x2c8] sm:$0xff]
    %v5337 = vld [vmem:[#allocation14 + $0x2d0] sm:$0xff]
    %v5338 = vld [vmem:[#allocation14 + $0x2d8] sm:$0xff]
    %v5339 = vld [vmem:[#allocation14 + $0x2e0] sm:$0xff]
    %v5340 = vld [vmem:[#allocation14 + $0x2e8] sm:$0xff]
    %v5341 = vld [vmem:[#allocation14 + $0x2f0] sm:$0xff]
    %v5342 = vld [vmem:[#allocation14 + $0x2f8] sm:$0xff]
    %v5343 = vld [vmem:[#allocation14 + $0x300] sm:$0xff]
    %v5344 = vld [vmem:[#allocation14 + $0x308] sm:$0xff]
    %v5345 = vld [vmem:[#allocation14 + $0x310] sm:$0xff]
    %v5346 = vld [vmem:[#allocation14 + $0x318] sm:$0xff]
    %v5347 = vld [vmem:[#allocation14 + $0x320] sm:$0xff]
    %v5348 = vld [vmem:[#allocation14 + $0x328] sm:$0xff]
    %v5349 = vld [vmem:[#allocation14 + $0x330] sm:$0xff]
    %v5350 = vld [vmem:[#allocation14 + $0x338] sm:$0xff]
    %v5351 = vld [vmem:[#allocation14 + $0x340] sm:$0xff]
    %v5352 = vld [vmem:[#allocation14 + $0x348] sm:$0xff]
    %v5353 = vld [vmem:[#allocation14 + $0x350] sm:$0xff]
    %v5354 = vld [vmem:[#allocation14 + $0x358] sm:$0xff]
    %v5355 = vld [vmem:[#allocation14 + $0x360] sm:$0xff]
    %v5356 = vld [vmem:[#allocation14 + $0x368] sm:$0xff]
    %v5357 = vld [vmem:[#allocation14 + $0x370] sm:$0xff]
    %v5358 = vld [vmem:[#allocation14 + $0x378] sm:$0xff]
    %v5359 = vld [vmem:[#allocation14 + $0x380] sm:$0xff]
    %v5360 = vld [vmem:[#allocation14 + $0x388] sm:$0xff]
    %v5361 = vld [vmem:[#allocation14 + $0x390] sm:$0xff]
    %v5362 = vld [vmem:[#allocation14 + $0x398] sm:$0xff]
    %v5363 = vld [vmem:[#allocation14 + $0x3a0] sm:$0xff]
    %v5364 = vld [vmem:[#allocation14 + $0x3a8] sm:$0xff]
    %v5365 = vld [vmem:[#allocation14 + $0x3b0] sm:$0xff]
    %v5366 = vld [vmem:[#allocation14 + $0x3b8] sm:$0xff]
    %v5367 = vld [vmem:[#allocation14 + $0x3c0] sm:$0xff]
    %v5368 = vld [vmem:[#allocation14 + $0x3c8] sm:$0xff]
    %v5369 = vld [vmem:[#allocation14 + $0x3d0] sm:$0xff]
    %v5370 = vld [vmem:[#allocation14 + $0x3d8] sm:$0xff]
    %v5371 = vld [vmem:[#allocation14 + $0x3e0] sm:$0xff]
    %v5372 = vld [vmem:[#allocation14 + $0x3e8] sm:$0xff]
    %v5373 = vld [vmem:[#allocation14 + $0x3f0] sm:$0xff]
    %v5374 = vld [vmem:[#allocation14 + $0x3f8] sm:$0xff]
    %v5375 = vld [vmem:[#allocation14 + $0x400] sm:$0xff]
    %v5376 = vld [vmem:[#allocation14 + $0x408] sm:$0xff]
    %v5377 = vld [vmem:[#allocation14 + $0x410] sm:$0xff]
    %v5378 = vld [vmem:[#allocation14 + $0x418] sm:$0xff]
    %v5379 = vld [vmem:[#allocation14 + $0x420] sm:$0xff]
    %v5380 = vld [vmem:[#allocation14 + $0x428] sm:$0xff]
    %v5381 = vld [vmem:[#allocation14 + $0x430] sm:$0xff]
    %v5382 = vld [vmem:[#allocation14 + $0x438] sm:$0xff]
    %v5383 = vld [vmem:[#allocation14 + $0x440] sm:$0xff]
    %v5384 = vld [vmem:[#allocation14 + $0x448] sm:$0xff]
    %v5385 = vld [vmem:[#allocation14 + $0x450] sm:$0xff]
    %v5386 = vld [vmem:[#allocation14 + $0x458] sm:$0xff]
    %v5387 = vld [vmem:[#allocation14 + $0x460] sm:$0xff]
    %v5388 = vld [vmem:[#allocation14 + $0x468] sm:$0xff]
    %v5389 = vld [vmem:[#allocation14 + $0x470] sm:$0xff]
    %v5390 = vld [vmem:[#allocation14 + $0x478] sm:$0xff]
    %v5391 = vld [vmem:[#allocation14 + $0x480] sm:$0xff]
    %v5392 = vld [vmem:[#allocation14 + $0x488] sm:$0xff]
    %v5393 = vld [vmem:[#allocation14 + $0x490] sm:$0xff]
    %v5394 = vld [vmem:[#allocation14 + $0x498] sm:$0xff]
    %v5395 = vld [vmem:[#allocation14 + $0x4a0] sm:$0xff]
    %v5396 = vld [vmem:[#allocation14 + $0x4a8] sm:$0xff]
    %v5397 = vld [vmem:[#allocation14 + $0x4b0] sm:$0xff]
    %v5398 = vld [vmem:[#allocation14 + $0x4b8] sm:$0xff]
    %v5399 = vld [vmem:[#allocation14 + $0x4c0] sm:$0xff]
    %v5400 = vld [vmem:[#allocation14 + $0x4c8] sm:$0xff]
    %v5401 = vld [vmem:[#allocation14 + $0x4d0] sm:$0xff]
    %v5402 = vld [vmem:[#allocation14 + $0x4d8] sm:$0xff]
    %v5403 = vld [vmem:[#allocation14 + $0x4e0] sm:$0xff]
    %v5404 = vld [vmem:[#allocation14 + $0x4e8] sm:$0xff]
    %v5405 = vld [vmem:[#allocation14 + $0x4f0] sm:$0xff]
    %v5406 = vld [vmem:[#allocation14 + $0x4f8] sm:$0xff]
    %v5407 = vld [vmem:[#allocation14 + $0x500] sm:$0xff]
    %v5408 = vld [vmem:[#allocation14 + $0x508] sm:$0xff]
    %v5409 = vld [vmem:[#allocation14 + $0x510] sm:$0xff]
    %v5410 = vld [vmem:[#allocation14 + $0x518] sm:$0xff]
    %v5411 = vld [vmem:[#allocation14 + $0x520] sm:$0xff]
    %v5412 = vld [vmem:[#allocation14 + $0x528] sm:$0xff]
    %v5413 = vld [vmem:[#allocation14 + $0x530] sm:$0xff]
    %v5414 = vld [vmem:[#allocation14 + $0x538] sm:$0xff]
    %v5415 = vld [vmem:[#allocation14 + $0x540] sm:$0xff]
    %v5416 = vld [vmem:[#allocation14 + $0x548] sm:$0xff]
    %v5417 = vld [vmem:[#allocation14 + $0x550] sm:$0xff]
    %v5418 = vld [vmem:[#allocation14 + $0x558] sm:$0xff]
    %v5419 = vld [vmem:[#allocation14 + $0x560] sm:$0xff]
    %v5420 = vld [vmem:[#allocation14 + $0x568] sm:$0xff]
    %v5421 = vld [vmem:[#allocation14 + $0x570] sm:$0xff]
    %v5422 = vld [vmem:[#allocation14 + $0x578] sm:$0xff]
    %v5423 = vld [vmem:[#allocation14 + $0x580] sm:$0xff]
    %v5424 = vld [vmem:[#allocation14 + $0x588] sm:$0xff]
    %v5425 = vld [vmem:[#allocation14 + $0x590] sm:$0xff]
    %v5426 = vld [vmem:[#allocation14 + $0x598] sm:$0xff]
    %v5427 = vld [vmem:[#allocation14 + $0x5a0] sm:$0xff]
    %v5428 = vld [vmem:[#allocation14 + $0x5a8] sm:$0xff]
    %v5429 = vld [vmem:[#allocation14 + $0x5b0] sm:$0xff]
    %v5430 = vld [vmem:[#allocation14 + $0x5b8] sm:$0xff]
    %v5431 = vld [vmem:[#allocation14 + $0x5c0] sm:$0xff]
    %v5432 = vld [vmem:[#allocation14 + $0x5c8] sm:$0xff]
    %v5433 = vld [vmem:[#allocation14 + $0x5d0] sm:$0xff]
    %v5434 = vld [vmem:[#allocation14 + $0x5d8] sm:$0xff]
    %v5435 = vld [vmem:[#allocation14 + $0x5e0] sm:$0xff]
    %v5436 = vld [vmem:[#allocation14 + $0x5e8] sm:$0xff]
    %v5437 = vld [vmem:[#allocation14 + $0x5f0] sm:$0xff]
    %v5438 = vld [vmem:[#allocation14 + $0x5f8] sm:$0xff]
    %v5439 = vld [vmem:[#allocation14 + $0x600] sm:$0xff]
    %v5440 = vld [vmem:[#allocation14 + $0x608] sm:$0xff]
    %v5441 = vld [vmem:[#allocation14 + $0x610] sm:$0xff]
    %v5442 = vld [vmem:[#allocation14 + $0x618] sm:$0xff]
    %v5443 = vld [vmem:[#allocation14 + $0x620] sm:$0xff]
    %v5444 = vld [vmem:[#allocation14 + $0x628] sm:$0xff]
    %v5445 = vld [vmem:[#allocation14 + $0x630] sm:$0xff]
    %v5446 = vld [vmem:[#allocation14 + $0x638] sm:$0xff]
    %v5447 = vld [vmem:[#allocation14 + $0x640] sm:$0xff]
    %v5448 = vld [vmem:[#allocation14 + $0x648] sm:$0xff]
    %v5449 = vld [vmem:[#allocation14 + $0x650] sm:$0xff]
    %v5450 = vld [vmem:[#allocation14 + $0x658] sm:$0xff]
    %v5451 = vld [vmem:[#allocation14 + $0x660] sm:$0xff]
    %v5452 = vld [vmem:[#allocation14 + $0x668] sm:$0xff]
    %v5453 = vld [vmem:[#allocation14 + $0x670] sm:$0xff]
    %v5454 = vld [vmem:[#allocation14 + $0x678] sm:$0xff]
    %v5455 = vld [vmem:[#allocation14 + $0x680] sm:$0xff]
    %v5456 = vld [vmem:[#allocation14 + $0x688] sm:$0xff]
    %v5457 = vld [vmem:[#allocation14 + $0x690] sm:$0xff]
    %v5458 = vld [vmem:[#allocation14 + $0x698] sm:$0xff]
    %v5459 = vld [vmem:[#allocation14 + $0x6a0] sm:$0xff]
    %v5460 = vld [vmem:[#allocation14 + $0x6a8] sm:$0xff]
    %v5461 = vld [vmem:[#allocation14 + $0x6b0] sm:$0xff]
    %v5462 = vld [vmem:[#allocation14 + $0x6b8] sm:$0xff]
    %v5463 = vld [vmem:[#allocation14 + $0x6c0] sm:$0xff]
    %v5464 = vld [vmem:[#allocation14 + $0x6c8] sm:$0xff]
    %v5465 = vld [vmem:[#allocation14 + $0x6d0] sm:$0xff]
    %v5466 = vld [vmem:[#allocation14 + $0x6d8] sm:$0xff]
    %v5467 = vld [vmem:[#allocation14 + $0x6e0] sm:$0xff]
    %v5468 = vld [vmem:[#allocation14 + $0x6e8] sm:$0xff]
    %v5469 = vld [vmem:[#allocation14 + $0x6f0] sm:$0xff]
    %v5470 = vld [vmem:[#allocation14 + $0x6f8] sm:$0xff]
    %v5471 = vld [vmem:[#allocation14 + $0x700] sm:$0xff]
    %v5472 = vld [vmem:[#allocation14 + $0x708] sm:$0xff]
    %v5473 = vld [vmem:[#allocation14 + $0x710] sm:$0xff]
    %v5474 = vld [vmem:[#allocation14 + $0x718] sm:$0xff]
    %v5475 = vld [vmem:[#allocation14 + $0x720] sm:$0xff]
    %v5476 = vld [vmem:[#allocation14 + $0x728] sm:$0xff]
    %v5477 = vld [vmem:[#allocation14 + $0x730] sm:$0xff]
    %v5478 = vld [vmem:[#allocation14 + $0x738] sm:$0xff]
    %v5479 = vld [vmem:[#allocation14 + $0x740] sm:$0xff]
    %v5480 = vld [vmem:[#allocation14 + $0x748] sm:$0xff]
    %v5481 = vld [vmem:[#allocation14 + $0x750] sm:$0xff]
    %v5482 = vld [vmem:[#allocation14 + $0x758] sm:$0xff]
    %v5483 = vld [vmem:[#allocation14 + $0x760] sm:$0xff]
    %v5484 = vld [vmem:[#allocation14 + $0x768] sm:$0xff]
    %v5485 = vld [vmem:[#allocation14 + $0x770] sm:$0xff]
    %v5486 = vld [vmem:[#allocation14 + $0x778] sm:$0xff]
    %v5487 = vld [vmem:[#allocation14 + $0x780] sm:$0xff]
    %v5488 = vld [vmem:[#allocation14 + $0x788] sm:$0xff]
    %v5489 = vld [vmem:[#allocation14 + $0x790] sm:$0xff]
    %v5490 = vld [vmem:[#allocation14 + $0x798] sm:$0xff]
    %v5491 = vld [vmem:[#allocation14 + $0x7a0] sm:$0xff]
    %v5492 = vld [vmem:[#allocation14 + $0x7a8] sm:$0xff]
    %v5493 = vld [vmem:[#allocation14 + $0x7b0] sm:$0xff]
    %v5494 = vld [vmem:[#allocation14 + $0x7b8] sm:$0xff]
    %v5495 = vld [vmem:[#allocation14 + $0x7c0] sm:$0xff]
    %v5496 = vld [vmem:[#allocation14 + $0x7c8] sm:$0xff]
    %v5497 = vld [vmem:[#allocation14 + $0x7d0] sm:$0xff]
    %v5498 = vld [vmem:[#allocation14 + $0x7d8] sm:$0xff]
    %v5499 = vld [vmem:[#allocation14 + $0x7e0] sm:$0xff]
    %v5500 = vld [vmem:[#allocation14 + $0x7e8] sm:$0xff]
    %v5501 = vld [vmem:[#allocation14 + $0x7f0] sm:$0xff]
    %v5502 = vld [vmem:[#allocation14 + $0x7f8] sm:$0xff]
    %v5503 = vld [vmem:[#allocation14 + $0x800] sm:$0xff]
    %v5504 = vld [vmem:[#allocation14 + $0x808] sm:$0xff]
    %v5505 = vld [vmem:[#allocation14 + $0x810] sm:$0xff]
    %v5506 = vld [vmem:[#allocation14 + $0x818] sm:$0xff]
    %v5507 = vld [vmem:[#allocation14 + $0x820] sm:$0xff]
    %v5508 = vld [vmem:[#allocation14 + $0x828] sm:$0xff]
    %v5509 = vld [vmem:[#allocation14 + $0x830] sm:$0xff]
    %v5510 = vld [vmem:[#allocation14 + $0x838] sm:$0xff]
    %v5511 = vld [vmem:[#allocation14 + $0x840] sm:$0xff]
    %v5512 = vld [vmem:[#allocation14 + $0x848] sm:$0xff]
    %v5513 = vld [vmem:[#allocation14 + $0x850] sm:$0xff]
    %v5514 = vld [vmem:[#allocation14 + $0x858] sm:$0xff]
    %v5515 = vld [vmem:[#allocation14 + $0x860] sm:$0xff]
    %v5516 = vld [vmem:[#allocation14 + $0x868] sm:$0xff]
    %v5517 = vld [vmem:[#allocation14 + $0x870] sm:$0xff]
    %v5518 = vld [vmem:[#allocation14 + $0x878] sm:$0xff]
    %v5519 = vld [vmem:[#allocation14 + $0x880] sm:$0xff]
    %v5520 = vld [vmem:[#allocation14 + $0x888] sm:$0xff]
    %v5521 = vld [vmem:[#allocation14 + $0x890] sm:$0xff]
    %v5522 = vld [vmem:[#allocation14 + $0x898] sm:$0xff]
    %v5523 = vld [vmem:[#allocation14 + $0x8a0] sm:$0xff]
    %v5524 = vld [vmem:[#allocation14 + $0x8a8] sm:$0xff]
    %v5525 = vld [vmem:[#allocation14 + $0x8b0] sm:$0xff]
    %v5526 = vld [vmem:[#allocation14 + $0x8b8] sm:$0xff]
    %v5527 = vld [vmem:[#allocation14 + $0x8c0] sm:$0xff]
    %v5528 = vld [vmem:[#allocation14 + $0x8c8] sm:$0xff]
    %v5529 = vld [vmem:[#allocation14 + $0x8d0] sm:$0xff]
    %v5530 = vld [vmem:[#allocation14 + $0x8d8] sm:$0xff]
    %v5531 = vld [vmem:[#allocation14 + $0x8e0] sm:$0xff]
    %v5532 = vld [vmem:[#allocation14 + $0x8e8] sm:$0xff]
    %v5533 = vld [vmem:[#allocation14 + $0x8f0] sm:$0xff]
    %v5534 = vld [vmem:[#allocation14 + $0x8f8] sm:$0xff]
    %v5535 = vld [vmem:[#allocation14 + $0x900] sm:$0xff]
    %v5536 = vld [vmem:[#allocation14 + $0x908] sm:$0xff]
    %v5537 = vld [vmem:[#allocation14 + $0x910] sm:$0xff]
    %v5538 = vld [vmem:[#allocation14 + $0x918] sm:$0xff]
    %v5539 = vld [vmem:[#allocation14 + $0x920] sm:$0xff]
    %v5540 = vld [vmem:[#allocation14 + $0x928] sm:$0xff]
    %v5541 = vld [vmem:[#allocation14 + $0x930] sm:$0xff]
    %v5542 = vld [vmem:[#allocation14 + $0x938] sm:$0xff]
    %v5543 = vld [vmem:[#allocation14 + $0x940] sm:$0xff]
    %v5544 = vld [vmem:[#allocation14 + $0x948] sm:$0xff]
    %v5545 = vld [vmem:[#allocation14 + $0x950] sm:$0xff]
    %v5546 = vld [vmem:[#allocation14 + $0x958] sm:$0xff]
    %v5547 = vld [vmem:[#allocation14 + $0x960] sm:$0xff]
    %v5548 = vld [vmem:[#allocation14 + $0x968] sm:$0xff]
    %v5549 = vld [vmem:[#allocation14 + $0x970] sm:$0xff]
    %v5550 = vld [vmem:[#allocation14 + $0x978] sm:$0xff]
    %v5551 = vld [vmem:[#allocation14 + $0x980] sm:$0xff]
    %v5552 = vld [vmem:[#allocation14 + $0x988] sm:$0xff]
    %v5553 = vld [vmem:[#allocation14 + $0x990] sm:$0xff]
    %v5554 = vld [vmem:[#allocation14 + $0x998] sm:$0xff]
    %v5555 = vld [vmem:[#allocation14 + $0x9a0] sm:$0xff]
    %v5556 = vld [vmem:[#allocation14 + $0x9a8] sm:$0xff]
    %v5557 = vld [vmem:[#allocation14 + $0x9b0] sm:$0xff]
    %v5558 = vld [vmem:[#allocation14 + $0x9b8] sm:$0xff]
    %v5559 = vld [vmem:[#allocation14 + $0x9c0] sm:$0xff]
    %v5560 = vld [vmem:[#allocation14 + $0x9c8] sm:$0xff]
    %v5561 = vld [vmem:[#allocation14 + $0x9d0] sm:$0xff]
    %v5562 = vld [vmem:[#allocation14 + $0x9d8] sm:$0xff]
    %v5563 = vld [vmem:[#allocation14 + $0x9e0] sm:$0xff]
    %v5564 = vld [vmem:[#allocation14 + $0x9e8] sm:$0xff]
    %v5565 = vld [vmem:[#allocation14 + $0x9f0] sm:$0xff]
    %v5566 = vld [vmem:[#allocation14 + $0x9f8] sm:$0xff]
    %v5567 = vld [vmem:[#allocation14 + $0xa00] sm:$0xff]
    %v5568 = vld [vmem:[#allocation14 + $0xa08] sm:$0xff]
    %v5569 = vld [vmem:[#allocation14 + $0xa10] sm:$0xff]
    %v5570 = vld [vmem:[#allocation14 + $0xa18] sm:$0xff]
    %v5571 = vld [vmem:[#allocation14 + $0xa20] sm:$0xff]
    %v5572 = vld [vmem:[#allocation14 + $0xa28] sm:$0xff]
    %v5573 = vld [vmem:[#allocation14 + $0xa30] sm:$0xff]
    %v5574 = vld [vmem:[#allocation14 + $0xa38] sm:$0xff]
    %v5575 = vld [vmem:[#allocation14 + $0xa40] sm:$0xff]
    %v5576 = vld [vmem:[#allocation14 + $0xa48] sm:$0xff]
    %v5577 = vld [vmem:[#allocation14 + $0xa50] sm:$0xff]
    %v5578 = vld [vmem:[#allocation14 + $0xa58] sm:$0xff]
    %v5579 = vld [vmem:[#allocation14 + $0xa60] sm:$0xff]
    %v5580 = vld [vmem:[#allocation14 + $0xa68] sm:$0xff]
    %v5581 = vld [vmem:[#allocation14 + $0xa70] sm:$0xff]
    %v5582 = vld [vmem:[#allocation14 + $0xa78] sm:$0xff]
    %v5583 = vld [vmem:[#allocation14 + $0xa80] sm:$0xff]
    %v5584 = vld [vmem:[#allocation14 + $0xa88] sm:$0xff]
    %v5585 = vld [vmem:[#allocation14 + $0xa90] sm:$0xff]
    %v5586 = vld [vmem:[#allocation14 + $0xa98] sm:$0xff]
    %v5587 = vld [vmem:[#allocation14 + $0xaa0] sm:$0xff]
    %v5588 = vld [vmem:[#allocation14 + $0xaa8] sm:$0xff]
    %v5589 = vld [vmem:[#allocation14 + $0xab0] sm:$0xff]
    %v5590 = vld [vmem:[#allocation14 + $0xab8] sm:$0xff]
    %v5591 = vld [vmem:[#allocation14 + $0xac0] sm:$0xff]
    %v5592 = vld [vmem:[#allocation14 + $0xac8] sm:$0xff]
    %v5593 = vld [vmem:[#allocation14 + $0xad0] sm:$0xff]
    %v5594 = vld [vmem:[#allocation14 + $0xad8] sm:$0xff]
    %v5595 = vld [vmem:[#allocation14 + $0xae0] sm:$0xff]
    %v5596 = vld [vmem:[#allocation14 + $0xae8] sm:$0xff]
    %v5597 = vld [vmem:[#allocation14 + $0xaf0] sm:$0xff]
    %v5598 = vld [vmem:[#allocation14 + $0xaf8] sm:$0xff]
    %v5599 = vld [vmem:[#allocation14 + $0xb00] sm:$0xff]
    %v5600 = vld [vmem:[#allocation14 + $0xb08] sm:$0xff]
    %v5601 = vld [vmem:[#allocation14 + $0xb10] sm:$0xff]
    %v5602 = vld [vmem:[#allocation14 + $0xb18] sm:$0xff]
    %v5603 = vld [vmem:[#allocation14 + $0xb20] sm:$0xff]
    %v5604 = vld [vmem:[#allocation14 + $0xb28] sm:$0xff]
    %v5605 = vld [vmem:[#allocation14 + $0xb30] sm:$0xff]
    %v5606 = vld [vmem:[#allocation14 + $0xb38] sm:$0xff]
    %v5607 = vld [vmem:[#allocation14 + $0xb40] sm:$0xff]
    %v5608 = vld [vmem:[#allocation14 + $0xb48] sm:$0xff]
    %v5609 = vld [vmem:[#allocation14 + $0xb50] sm:$0xff]
    %v5610 = vld [vmem:[#allocation14 + $0xb58] sm:$0xff]
    %v5611 = vld [vmem:[#allocation14 + $0xb60] sm:$0xff]
    %v5612 = vld [vmem:[#allocation14 + $0xb68] sm:$0xff]
    %v5613 = vld [vmem:[#allocation14 + $0xb70] sm:$0xff]
    %v5614 = vld [vmem:[#allocation14 + $0xb78] sm:$0xff]
    %v5615 = vld [vmem:[#allocation14 + $0xb80] sm:$0xff]
    %v5616 = vld [vmem:[#allocation14 + $0xb88] sm:$0xff]
    %v5617 = vld [vmem:[#allocation14 + $0xb90] sm:$0xff]
    %v5618 = vld [vmem:[#allocation14 + $0xb98] sm:$0xff]
    %v5619 = vld [vmem:[#allocation14 + $0xba0] sm:$0xff]
    %v5620 = vld [vmem:[#allocation14 + $0xba8] sm:$0xff]
    %v5621 = vld [vmem:[#allocation14 + $0xbb0] sm:$0xff]
    %v5622 = vld [vmem:[#allocation14 + $0xbb8] sm:$0xff]
    %v5623 = vld [vmem:[#allocation14 + $0xbc0] sm:$0xff]
    %v5624 = vld [vmem:[#allocation14 + $0xbc8] sm:$0xff]
    %v5625 = vld [vmem:[#allocation14 + $0xbd0] sm:$0xff]
    %v5626 = vld [vmem:[#allocation14 + $0xbd8] sm:$0xff]
    %v5627 = vld [vmem:[#allocation14 + $0xbe0] sm:$0xff]
    %v5628 = vld [vmem:[#allocation14 + $0xbe8] sm:$0xff]
    %v5629 = vld [vmem:[#allocation14 + $0xbf0] sm:$0xff]
    %v5630 = vld [vmem:[#allocation14 + $0xbf8] sm:$0xff]
    %v5631 = vld [vmem:[#allocation14 + $0xc00] sm:$0xff]
    %v5632 = vld [vmem:[#allocation14 + $0xc08] sm:$0xff]
    %v5633 = vld [vmem:[#allocation14 + $0xc10] sm:$0xff]
    %v5634 = vld [vmem:[#allocation14 + $0xc18] sm:$0xff]
    %v5635 = vld [vmem:[#allocation14 + $0xc20] sm:$0xff]
    %v5636 = vld [vmem:[#allocation14 + $0xc28] sm:$0xff]
    %v5637 = vld [vmem:[#allocation14 + $0xc30] sm:$0xff]
    %v5638 = vld [vmem:[#allocation14 + $0xc38] sm:$0xff]
    %v5639 = vld [vmem:[#allocation14 + $0xc40] sm:$0xff]
    %v5640 = vld [vmem:[#allocation14 + $0xc48] sm:$0xff]
    %v5641 = vld [vmem:[#allocation14 + $0xc50] sm:$0xff]
    %v5642 = vld [vmem:[#allocation14 + $0xc58] sm:$0xff]
    %v5643 = vld [vmem:[#allocation14 + $0xc60] sm:$0xff]
    %v5644 = vld [vmem:[#allocation14 + $0xc68] sm:$0xff]
    %v5645 = vld [vmem:[#allocation14 + $0xc70] sm:$0xff]
    %v5646 = vld [vmem:[#allocation14 + $0xc78] sm:$0xff]
    %v5647 = vld [vmem:[#allocation14 + $0xc80] sm:$0xff]
    %v5648 = vld [vmem:[#allocation14 + $0xc88] sm:$0xff]
    %v5649 = vld [vmem:[#allocation14 + $0xc90] sm:$0xff]
    %v5650 = vld [vmem:[#allocation14 + $0xc98] sm:$0xff]
    %v5651 = vld [vmem:[#allocation14 + $0xca0] sm:$0xff]
    %v5652 = vld [vmem:[#allocation14 + $0xca8] sm:$0xff]
    %v5653 = vld [vmem:[#allocation14 + $0xcb0] sm:$0xff]
    %v5654 = vld [vmem:[#allocation14 + $0xcb8] sm:$0xff]
    %v5655 = vld [vmem:[#allocation14 + $0xcc0] sm:$0xff]
    %v5656 = vld [vmem:[#allocation14 + $0xcc8] sm:$0xff]
    %v5657 = vld [vmem:[#allocation14 + $0xcd0] sm:$0xff]
    %v5658 = vld [vmem:[#allocation14 + $0xcd8] sm:$0xff]
    %v5659 = vld [vmem:[#allocation14 + $0xce0] sm:$0xff]
    %v5660 = vld [vmem:[#allocation14 + $0xce8] sm:$0xff]
    %v5661 = vld [vmem:[#allocation14 + $0xcf0] sm:$0xff]
    %v5662 = vld [vmem:[#allocation14 + $0xcf8] sm:$0xff]
    %v5663 = vld [vmem:[#allocation14 + $0xd00] sm:$0xff]
    %v5664 = vld [vmem:[#allocation14 + $0xd08] sm:$0xff]
    %v5665 = vld [vmem:[#allocation14 + $0xd10] sm:$0xff]
    %v5666 = vld [vmem:[#allocation14 + $0xd18] sm:$0xff]
    %v5667 = vld [vmem:[#allocation14 + $0xd20] sm:$0xff]
    %v5668 = vld [vmem:[#allocation14 + $0xd28] sm:$0xff]
    %v5669 = vld [vmem:[#allocation14 + $0xd30] sm:$0xff]
    %v5670 = vld [vmem:[#allocation14 + $0xd38] sm:$0xff]
    %v5671 = vld [vmem:[#allocation14 + $0xd40] sm:$0xff]
    %v5672 = vld [vmem:[#allocation14 + $0xd48] sm:$0xff]
    %v5673 = vld [vmem:[#allocation14 + $0xd50] sm:$0xff]
    %v5674 = vld [vmem:[#allocation14 + $0xd58] sm:$0xff]
    %v5675 = vld [vmem:[#allocation14 + $0xd60] sm:$0xff]
    %v5676 = vld [vmem:[#allocation14 + $0xd68] sm:$0xff]
    %v5677 = vld [vmem:[#allocation14 + $0xd70] sm:$0xff]
    %v5678 = vld [vmem:[#allocation14 + $0xd78] sm:$0xff]
    %v5679 = vld [vmem:[#allocation14 + $0xd80] sm:$0xff]
    %v5680 = vld [vmem:[#allocation14 + $0xd88] sm:$0xff]
    %v5681 = vld [vmem:[#allocation14 + $0xd90] sm:$0xff]
    %v5682 = vld [vmem:[#allocation14 + $0xd98] sm:$0xff]
    %v5683 = vld [vmem:[#allocation14 + $0xda0] sm:$0xff]
    %v5684 = vld [vmem:[#allocation14 + $0xda8] sm:$0xff]
    %v5685 = vld [vmem:[#allocation14 + $0xdb0] sm:$0xff]
    %v5686 = vld [vmem:[#allocation14 + $0xdb8] sm:$0xff]
    %v5687 = vld [vmem:[#allocation14 + $0xdc0] sm:$0xff]
    %v5688 = vld [vmem:[#allocation14 + $0xdc8] sm:$0xff]
    %v5689 = vld [vmem:[#allocation14 + $0xdd0] sm:$0xff]
    %v5690 = vld [vmem:[#allocation14 + $0xdd8] sm:$0xff]
    %v5691 = vld [vmem:[#allocation14 + $0xde0] sm:$0xff]
    %v5692 = vld [vmem:[#allocation14 + $0xde8] sm:$0xff]
    %v5693 = vld [vmem:[#allocation14 + $0xdf0] sm:$0xff]
    %v5694 = vld [vmem:[#allocation14 + $0xdf8] sm:$0xff]
    %v5695 = vld [vmem:[#allocation14 + $0xe00] sm:$0xff]
    %v5696 = vld [vmem:[#allocation14 + $0xe08] sm:$0xff]
    %v5697 = vld [vmem:[#allocation14 + $0xe10] sm:$0xff]
    %v5698 = vld [vmem:[#allocation14 + $0xe18] sm:$0xff]
    %v5699 = vld [vmem:[#allocation14 + $0xe20] sm:$0xff]
    %v5700 = vld [vmem:[#allocation14 + $0xe28] sm:$0xff]
    %v5701 = vld [vmem:[#allocation14 + $0xe30] sm:$0xff]
    %v5702 = vld [vmem:[#allocation14 + $0xe38] sm:$0xff]
    %v5703 = vld [vmem:[#allocation14 + $0xe40] sm:$0xff]
    %v5704 = vld [vmem:[#allocation14 + $0xe48] sm:$0xff]
    %v5705 = vld [vmem:[#allocation14 + $0xe50] sm:$0xff]
    %v5706 = vld [vmem:[#allocation14 + $0xe58] sm:$0xff]
    %v5707 = vld [vmem:[#allocation14 + $0xe60] sm:$0xff]
    %v5708 = vld [vmem:[#allocation14 + $0xe68] sm:$0xff]
    %v5709 = vld [vmem:[#allocation14 + $0xe70] sm:$0xff]
    %v5710 = vld [vmem:[#allocation14 + $0xe78] sm:$0xff]
    %v5711 = vld [vmem:[#allocation14 + $0xe80] sm:$0xff]
    %v5712 = vld [vmem:[#allocation14 + $0xe88] sm:$0xff]
    %v5713 = vld [vmem:[#allocation14 + $0xe90] sm:$0xff]
    %v5714 = vld [vmem:[#allocation14 + $0xe98] sm:$0xff]
    %v5715 = vld [vmem:[#allocation14 + $0xea0] sm:$0xff]
    %v5716 = vld [vmem:[#allocation14 + $0xea8] sm:$0xff]
    %v5717 = vld [vmem:[#allocation14 + $0xeb0] sm:$0xff]
    %v5718 = vld [vmem:[#allocation14 + $0xeb8] sm:$0xff]
    %v5719 = vld [vmem:[#allocation14 + $0xec0] sm:$0xff]
    %v5720 = vld [vmem:[#allocation14 + $0xec8] sm:$0xff]
    %v5721 = vld [vmem:[#allocation14 + $0xed0] sm:$0xff]
    %v5722 = vld [vmem:[#allocation14 + $0xed8] sm:$0xff]
    %v5723 = vld [vmem:[#allocation14 + $0xee0] sm:$0xff]
    %v5724 = vld [vmem:[#allocation14 + $0xee8] sm:$0xff]
    %v5725 = vld [vmem:[#allocation14 + $0xef0] sm:$0xff]
    %v5726 = vld [vmem:[#allocation14 + $0xef8] sm:$0xff]
    %v5727 = vld [vmem:[#allocation14 + $0xf00] sm:$0xff]
    %v5728 = vld [vmem:[#allocation14 + $0xf08] sm:$0xff]
    %v5729 = vld [vmem:[#allocation14 + $0xf10] sm:$0xff]
    %v5730 = vld [vmem:[#allocation14 + $0xf18] sm:$0xff]
    %v5731 = vld [vmem:[#allocation14 + $0xf20] sm:$0xff]
    %v5732 = vld [vmem:[#allocation14 + $0xf28] sm:$0xff]
    %v5733 = vld [vmem:[#allocation14 + $0xf30] sm:$0xff]
    %v5734 = vld [vmem:[#allocation14 + $0xf38] sm:$0xff]
    %v5735 = vld [vmem:[#allocation14 + $0xf40] sm:$0xff]
    %v5736 = vld [vmem:[#allocation14 + $0xf48] sm:$0xff]
    %v5737 = vld [vmem:[#allocation14 + $0xf50] sm:$0xff]
    %v5738 = vld [vmem:[#allocation14 + $0xf58] sm:$0xff]
    %v5739 = vld [vmem:[#allocation14 + $0xf60] sm:$0xff]
    %v5740 = vld [vmem:[#allocation14 + $0xf68] sm:$0xff]
    %v5741 = vld [vmem:[#allocation14 + $0xf70] sm:$0xff]
    %v5742 = vld [vmem:[#allocation14 + $0xf78] sm:$0xff]
    %v5743 = vld [vmem:[#allocation14 + $0xf80] sm:$0xff]
    %v5744 = vld [vmem:[#allocation14 + $0xf88] sm:$0xff]
    %v5745 = vld [vmem:[#allocation14 + $0xf90] sm:$0xff]
    %v5746 = vld [vmem:[#allocation14 + $0xf98] sm:$0xff]
    %v5747 = vld [vmem:[#allocation14 + $0xfa0] sm:$0xff]
    %v5748 = vld [vmem:[#allocation14 + $0xfa8] sm:$0xff]
    %v5749 = vld [vmem:[#allocation14 + $0xfb0] sm:$0xff]
    %v5750 = vld [vmem:[#allocation14 + $0xfb8] sm:$0xff]
    %v5751 = vld [vmem:[#allocation14 + $0xfc0] sm:$0xff]
    %v5752 = vld [vmem:[#allocation14 + $0xfc8] sm:$0xff]
    %v5753 = vld [vmem:[#allocation14 + $0xfd0] sm:$0xff]
    %v5754 = vld [vmem:[#allocation14 + $0xfd8] sm:$0xff]
    %v5755 = vld [vmem:[#allocation14 + $0xfe0] sm:$0xff]
    %v5756 = vld [vmem:[#allocation14 + $0xfe8] sm:$0xff]
    %v5757 = vld [vmem:[#allocation14 + $0xff0] sm:$0xff]
    %v5758 = vld [vmem:[#allocation14 + $0xff8] sm:$0xff]
    %v5759 = vld [vmem:[#allocation14 + $0x1000] sm:$0xff]
    %v5760 = vld [vmem:[#allocation14 + $0x1008] sm:$0xff]
    %v5761 = vld [vmem:[#allocation14 + $0x1010] sm:$0xff]
    %v5762 = vld [vmem:[#allocation14 + $0x1018] sm:$0xff]
    %v5763 = vld [vmem:[#allocation14 + $0x1020] sm:$0xff]
    %v5764 = vld [vmem:[#allocation14 + $0x1028] sm:$0xff]
    %v5765 = vld [vmem:[#allocation14 + $0x1030] sm:$0xff]
    %v5766 = vld [vmem:[#allocation14 + $0x1038] sm:$0xff]
    %v5767 = vld [vmem:[#allocation14 + $0x1040] sm:$0xff]
    %v5768 = vld [vmem:[#allocation14 + $0x1048] sm:$0xff]
    %v5769 = vld [vmem:[#allocation14 + $0x1050] sm:$0xff]
    %v5770 = vld [vmem:[#allocation14 + $0x1058] sm:$0xff]
    %v5771 = vld [vmem:[#allocation14 + $0x1060] sm:$0xff]
    %v5772 = vld [vmem:[#allocation14 + $0x1068] sm:$0xff]
    %v5773 = vld [vmem:[#allocation14 + $0x1070] sm:$0xff]
    %v5774 = vld [vmem:[#allocation14 + $0x1078] sm:$0xff]
    %v5775 = vld [vmem:[#allocation14 + $0x1080] sm:$0xff]
    %v5776 = vld [vmem:[#allocation14 + $0x1088] sm:$0xff]
    %v5777 = vld [vmem:[#allocation14 + $0x1090] sm:$0xff]
    %v5778 = vld [vmem:[#allocation14 + $0x1098] sm:$0xff]
    %v5779 = vld [vmem:[#allocation14 + $0x10a0] sm:$0xff]
    %v5780 = vld [vmem:[#allocation14 + $0x10a8] sm:$0xff]
    %v5781 = vld [vmem:[#allocation14 + $0x10b0] sm:$0xff]
    %v5782 = vld [vmem:[#allocation14 + $0x10b8] sm:$0xff]
    %v5783 = vld [vmem:[#allocation14 + $0x10c0] sm:$0xff]
    %v5784 = vld [vmem:[#allocation14 + $0x10c8] sm:$0xff]
    %v5785 = vld [vmem:[#allocation14 + $0x10d0] sm:$0xff]
    %v5786 = vld [vmem:[#allocation14 + $0x10d8] sm:$0xff]
    %v5787 = vld [vmem:[#allocation14 + $0x10e0] sm:$0xff]
    %v5788 = vld [vmem:[#allocation14 + $0x10e8] sm:$0xff]
    %v5789 = vld [vmem:[#allocation14 + $0x10f0] sm:$0xff]
    %v5790 = vld [vmem:[#allocation14 + $0x10f8] sm:$0xff]
    %v5791 = vld [vmem:[#allocation14 + $0x1100] sm:$0xff]
    %v5792 = vld [vmem:[#allocation14 + $0x1108] sm:$0xff]
    %v5793 = vld [vmem:[#allocation14 + $0x1110] sm:$0xff]
    %v5794 = vld [vmem:[#allocation14 + $0x1118] sm:$0xff]
    %v5795 = vld [vmem:[#allocation14 + $0x1120] sm:$0xff]
    %v5796 = vld [vmem:[#allocation14 + $0x1128] sm:$0xff]
    %v5797 = vld [vmem:[#allocation14 + $0x1130] sm:$0xff]
    %v5798 = vld [vmem:[#allocation14 + $0x1138] sm:$0xff]
    %v5799 = vld [vmem:[#allocation14 + $0x1140] sm:$0xff]
    %v5800 = vld [vmem:[#allocation14 + $0x1148] sm:$0xff]
    %v5801 = vld [vmem:[#allocation14 + $0x1150] sm:$0xff]
    %v5802 = vld [vmem:[#allocation14 + $0x1158] sm:$0xff]
    %v5803 = vld [vmem:[#allocation14 + $0x1160] sm:$0xff]
    %v5804 = vld [vmem:[#allocation14 + $0x1168] sm:$0xff]
    %v5805 = vld [vmem:[#allocation14 + $0x1170] sm:$0xff]
    %v5806 = vld [vmem:[#allocation14 + $0x1178] sm:$0xff]
    %v5807 = vld [vmem:[#allocation14 + $0x1180] sm:$0xff]
    %v5808 = vld [vmem:[#allocation14 + $0x1188] sm:$0xff]
    %v5809 = vld [vmem:[#allocation14 + $0x1190] sm:$0xff]
    %v5810 = vld [vmem:[#allocation14 + $0x1198] sm:$0xff]
    %v5811 = vld [vmem:[#allocation14 + $0x11a0] sm:$0xff]
    %v5812 = vld [vmem:[#allocation14 + $0x11a8] sm:$0xff]
    %v5813 = vld [vmem:[#allocation14 + $0x11b0] sm:$0xff]
    %v5814 = vld [vmem:[#allocation14 + $0x11b8] sm:$0xff]
    %v5815 = vld [vmem:[#allocation14 + $0x11c0] sm:$0xff]
    %v5816 = vld [vmem:[#allocation14 + $0x11c8] sm:$0xff]
    %v5817 = vld [vmem:[#allocation14 + $0x11d0] sm:$0xff]
    %v5818 = vld [vmem:[#allocation14 + $0x11d8] sm:$0xff]
    %v5819 = vld [vmem:[#allocation14 + $0x11e0] sm:$0xff]
    %v5820 = vld [vmem:[#allocation14 + $0x11e8] sm:$0xff]
    %v5821 = vld [vmem:[#allocation14 + $0x11f0] sm:$0xff]
    %v5822 = vld [vmem:[#allocation14 + $0x11f8] sm:$0xff]
    %v5823 = vld [vmem:[#allocation14 + $0x1200] sm:$0xff]
    %v5824 = vld [vmem:[#allocation14 + $0x1208] sm:$0xff]
    %v5825 = vld [vmem:[#allocation14 + $0x1210] sm:$0xff]
    %v5826 = vld [vmem:[#allocation14 + $0x1218] sm:$0xff]
    %v5827 = vld [vmem:[#allocation14 + $0x1220] sm:$0xff]
    %v5828 = vld [vmem:[#allocation14 + $0x1228] sm:$0xff]
    %v5829 = vld [vmem:[#allocation14 + $0x1230] sm:$0xff]
    %v5830 = vld [vmem:[#allocation14 + $0x1238] sm:$0xff]
    %v5831 = vld [vmem:[#allocation14 + $0x1240] sm:$0xff]
    %v5832 = vld [vmem:[#allocation14 + $0x1248] sm:$0xff]
    %v5833 = vld [vmem:[#allocation14 + $0x1250] sm:$0xff]
    %v5834 = vld [vmem:[#allocation14 + $0x1258] sm:$0xff]
    %v5835 = vld [vmem:[#allocation14 + $0x1260] sm:$0xff]
    %v5836 = vld [vmem:[#allocation14 + $0x1268] sm:$0xff]
    %v5837 = vld [vmem:[#allocation14 + $0x1270] sm:$0xff]
    %v5838 = vld [vmem:[#allocation14 + $0x1278] sm:$0xff]
    %v5839 = vld [vmem:[#allocation14 + $0x1280] sm:$0xff]
    %v5840 = vld [vmem:[#allocation14 + $0x1288] sm:$0xff]
    %v5841 = vld [vmem:[#allocation14 + $0x1290] sm:$0xff]
    %v5842 = vld [vmem:[#allocation14 + $0x1298] sm:$0xff]
    %v5843 = vld [vmem:[#allocation14 + $0x12a0] sm:$0xff]
    %v5844 = vld [vmem:[#allocation14 + $0x12a8] sm:$0xff]
    %v5845 = vld [vmem:[#allocation14 + $0x12b0] sm:$0xff]
    %v5846 = vld [vmem:[#allocation14 + $0x12b8] sm:$0xff]
    %v5847 = vld [vmem:[#allocation14 + $0x12c0] sm:$0xff]
    %v5848 = vld [vmem:[#allocation14 + $0x12c8] sm:$0xff]
    %v5849 = vld [vmem:[#allocation14 + $0x12d0] sm:$0xff]
    %v5850 = vld [vmem:[#allocation14 + $0x12d8] sm:$0xff]
    %v5851 = vld [vmem:[#allocation14 + $0x12e0] sm:$0xff]
    %v5852 = vld [vmem:[#allocation14 + $0x12e8] sm:$0xff]
    %v5853 = vld [vmem:[#allocation14 + $0x12f0] sm:$0xff]
    %v5854 = vld [vmem:[#allocation14 + $0x12f8] sm:$0xff]
    %v5855 = vld [vmem:[#allocation14 + $0x1300] sm:$0xff]
    %v5856 = vld [vmem:[#allocation14 + $0x1308] sm:$0xff]
    %v5857 = vld [vmem:[#allocation14 + $0x1310] sm:$0xff]
    %v5858 = vld [vmem:[#allocation14 + $0x1318] sm:$0xff]
    %v5859 = vld [vmem:[#allocation14 + $0x1320] sm:$0xff]
    %v5860 = vld [vmem:[#allocation14 + $0x1328] sm:$0xff]
    %v5861 = vld [vmem:[#allocation14 + $0x1330] sm:$0xff]
    %v5862 = vld [vmem:[#allocation14 + $0x1338] sm:$0xff]
    %v5863 = vld [vmem:[#allocation14 + $0x1340] sm:$0xff]
    %v5864 = vld [vmem:[#allocation14 + $0x1348] sm:$0xff]
    %v5865 = vld [vmem:[#allocation14 + $0x1350] sm:$0xff]
    %v5866 = vld [vmem:[#allocation14 + $0x1358] sm:$0xff]
    %v5867 = vld [vmem:[#allocation14 + $0x1360] sm:$0xff]
    %v5868 = vld [vmem:[#allocation14 + $0x1368] sm:$0xff]
    %v5869 = vld [vmem:[#allocation14 + $0x1370] sm:$0xff]
    %v5870 = vld [vmem:[#allocation14 + $0x1378] sm:$0xff]
    %v5871 = vld [vmem:[#allocation14 + $0x1380] sm:$0xff]
    %v5872 = vld [vmem:[#allocation14 + $0x1388] sm:$0xff]
    %v5873 = vld [vmem:[#allocation14 + $0x1390] sm:$0xff]
    %v5874 = vld [vmem:[#allocation14 + $0x1398] sm:$0xff]
    %v5875 = vld [vmem:[#allocation14 + $0x13a0] sm:$0xff]
    %v5876 = vld [vmem:[#allocation14 + $0x13a8] sm:$0xff]
    %v5877 = vld [vmem:[#allocation14 + $0x13b0] sm:$0xff]
    %v5878 = vld [vmem:[#allocation14 + $0x13b8] sm:$0xff]
    %v5879 = vld [vmem:[#allocation14 + $0x13c0] sm:$0xff]
    %v5880 = vld [vmem:[#allocation14 + $0x13c8] sm:$0xff]
    %v5881 = vld [vmem:[#allocation14 + $0x13d0] sm:$0xff]
    %v5882 = vld [vmem:[#allocation14 + $0x13d8] sm:$0xff]
    %v5883 = vld [vmem:[#allocation14 + $0x13e0] sm:$0xff]
    %v5884 = vld [vmem:[#allocation14 + $0x13e8] sm:$0xff]
    %v5885 = vld [vmem:[#allocation14 + $0x13f0] sm:$0xff]
    %v5886 = vld [vmem:[#allocation14 + $0x13f8] sm:$0xff]
    %v5887 = vld [vmem:[#allocation14 + $0x1400] sm:$0xff]
    %v5888 = vld [vmem:[#allocation14 + $0x1408] sm:$0xff]
    %v5889 = vld [vmem:[#allocation14 + $0x1410] sm:$0xff]
    %v5890 = vld [vmem:[#allocation14 + $0x1418] sm:$0xff]
    %v5891 = vld [vmem:[#allocation14 + $0x1420] sm:$0xff]
    %v5892 = vld [vmem:[#allocation14 + $0x1428] sm:$0xff]
    %v5893 = vld [vmem:[#allocation14 + $0x1430] sm:$0xff]
    %v5894 = vld [vmem:[#allocation14 + $0x1438] sm:$0xff]
    %v5895 = vld [vmem:[#allocation14 + $0x1440] sm:$0xff]
    %v5896 = vld [vmem:[#allocation14 + $0x1448] sm:$0xff]
    %v5897 = vld [vmem:[#allocation14 + $0x1450] sm:$0xff]
    %v5898 = vld [vmem:[#allocation14 + $0x1458] sm:$0xff]
    %v5899 = vld [vmem:[#allocation14 + $0x1460] sm:$0xff]
    %v5900 = vld [vmem:[#allocation14 + $0x1468] sm:$0xff]
    %v5901 = vld [vmem:[#allocation14 + $0x1470] sm:$0xff]
    %v5902 = vld [vmem:[#allocation14 + $0x1478] sm:$0xff]
    %v5903 = vld [vmem:[#allocation14 + $0x1480] sm:$0xff]
    %v5904 = vld [vmem:[#allocation14 + $0x1488] sm:$0xff]
    %v5905 = vld [vmem:[#allocation14 + $0x1490] sm:$0xff]
    %v5906 = vld [vmem:[#allocation14 + $0x1498] sm:$0xff]
    %v5907 = vld [vmem:[#allocation14 + $0x14a0] sm:$0xff]
    %v5908 = vld [vmem:[#allocation14 + $0x14a8] sm:$0xff]
    %v5909 = vld [vmem:[#allocation14 + $0x14b0] sm:$0xff]
    %v5910 = vld [vmem:[#allocation14 + $0x14b8] sm:$0xff]
    %v5911 = vld [vmem:[#allocation14 + $0x14c0] sm:$0xff]
    %v5912 = vld [vmem:[#allocation14 + $0x14c8] sm:$0xff]
    %v5913 = vld [vmem:[#allocation14 + $0x14d0] sm:$0xff]
    %v5914 = vld [vmem:[#allocation14 + $0x14d8] sm:$0xff]
    %v5915 = vld [vmem:[#allocation14 + $0x14e0] sm:$0xff]
    %v5916 = vld [vmem:[#allocation14 + $0x14e8] sm:$0xff]
    %v5917 = vld [vmem:[#allocation14 + $0x14f0] sm:$0xff]
    %v5918 = vld [vmem:[#allocation14 + $0x14f8] sm:$0xff]
    %v5919 = vld [vmem:[#allocation14 + $0x1500] sm:$0xff]
    %v5920 = vld [vmem:[#allocation14 + $0x1508] sm:$0xff]
    %v5921 = vld [vmem:[#allocation14 + $0x1510] sm:$0xff]
    %v5922 = vld [vmem:[#allocation14 + $0x1518] sm:$0xff]
    %v5923 = vld [vmem:[#allocation14 + $0x1520] sm:$0xff]
    %v5924 = vld [vmem:[#allocation14 + $0x1528] sm:$0xff]
    %v5925 = vld [vmem:[#allocation14 + $0x1530] sm:$0xff]
    %v5926 = vld [vmem:[#allocation14 + $0x1538] sm:$0xff]
    %v5927 = vld [vmem:[#allocation14 + $0x1540] sm:$0xff]
    %v5928 = vld [vmem:[#allocation14 + $0x1548] sm:$0xff]
    %v5929 = vld [vmem:[#allocation14 + $0x1550] sm:$0xff]
    %v5930 = vld [vmem:[#allocation14 + $0x1558] sm:$0xff]
    %v5931 = vld [vmem:[#allocation14 + $0x1560] sm:$0xff]
    %v5932 = vld [vmem:[#allocation14 + $0x1568] sm:$0xff]
    %v5933 = vld [vmem:[#allocation14 + $0x1570] sm:$0xff]
    %v5934 = vld [vmem:[#allocation14 + $0x1578] sm:$0xff]
    %v5935 = vld [vmem:[#allocation14 + $0x1580] sm:$0xff]
    %v5936 = vld [vmem:[#allocation14 + $0x1588] sm:$0xff]
    %v5937 = vld [vmem:[#allocation14 + $0x1590] sm:$0xff]
    %v5938 = vld [vmem:[#allocation14 + $0x1598] sm:$0xff]
    %v5939 = vld [vmem:[#allocation14 + $0x15a0] sm:$0xff]
    %v5940 = vld [vmem:[#allocation14 + $0x15a8] sm:$0xff]
    %v5941 = vld [vmem:[#allocation14 + $0x15b0] sm:$0xff]
    %v5942 = vld [vmem:[#allocation14 + $0x15b8] sm:$0xff]
    %v5943 = vld [vmem:[#allocation14 + $0x15c0] sm:$0xff]
    %v5944 = vld [vmem:[#allocation14 + $0x15c8] sm:$0xff]
    %v5945 = vld [vmem:[#allocation14 + $0x15d0] sm:$0xff]
    %v5946 = vld [vmem:[#allocation14 + $0x15d8] sm:$0xff]
    %v5947 = vld [vmem:[#allocation14 + $0x15e0] sm:$0xff]
    %v5948 = vld [vmem:[#allocation14 + $0x15e8] sm:$0xff]
    %v5949 = vld [vmem:[#allocation14 + $0x15f0] sm:$0xff]
    %v5950 = vld [vmem:[#allocation14 + $0x15f8] sm:$0xff]
    %v5951 = vld [vmem:[#allocation14 + $0x1600] sm:$0xff]
    %v5952 = vld [vmem:[#allocation14 + $0x1608] sm:$0xff]
    %v5953 = vld [vmem:[#allocation14 + $0x1610] sm:$0xff]
    %v5954 = vld [vmem:[#allocation14 + $0x1618] sm:$0xff]
    %v5955 = vld [vmem:[#allocation14 + $0x1620] sm:$0xff]
    %v5956 = vld [vmem:[#allocation14 + $0x1628] sm:$0xff]
    %v5957 = vld [vmem:[#allocation14 + $0x1630] sm:$0xff]
    %v5958 = vld [vmem:[#allocation14 + $0x1638] sm:$0xff]
    %v5959 = vld [vmem:[#allocation14 + $0x1640] sm:$0xff]
    %v5960 = vld [vmem:[#allocation14 + $0x1648] sm:$0xff]
    %v5961 = vld [vmem:[#allocation14 + $0x1650] sm:$0xff]
    %v5962 = vld [vmem:[#allocation14 + $0x1658] sm:$0xff]
    %v5963 = vld [vmem:[#allocation14 + $0x1660] sm:$0xff]
    %v5964 = vld [vmem:[#allocation14 + $0x1668] sm:$0xff]
    %v5965 = vld [vmem:[#allocation14 + $0x1670] sm:$0xff]
    %v5966 = vld [vmem:[#allocation14 + $0x1678] sm:$0xff]
    %v5967 = vld [vmem:[#allocation14 + $0x1680] sm:$0xff]
    %v5968 = vld [vmem:[#allocation14 + $0x1688] sm:$0xff]
    %v5969 = vld [vmem:[#allocation14 + $0x1690] sm:$0xff]
    %v5970 = vld [vmem:[#allocation14 + $0x1698] sm:$0xff]
    %v5971 = vld [vmem:[#allocation14 + $0x16a0] sm:$0xff]
    %v5972 = vld [vmem:[#allocation14 + $0x16a8] sm:$0xff]
    %v5973 = vld [vmem:[#allocation14 + $0x16b0] sm:$0xff]
    %v5974 = vld [vmem:[#allocation14 + $0x16b8] sm:$0xff]
    %v5975 = vld [vmem:[#allocation14 + $0x16c0] sm:$0xff]
    %v5976 = vld [vmem:[#allocation14 + $0x16c8] sm:$0xff]
    %v5977 = vld [vmem:[#allocation14 + $0x16d0] sm:$0xff]
    %v5978 = vld [vmem:[#allocation14 + $0x16d8] sm:$0xff]
    %v5979 = vld [vmem:[#allocation14 + $0x16e0] sm:$0xff]
    %v5980 = vld [vmem:[#allocation14 + $0x16e8] sm:$0xff]
    %v5981 = vld [vmem:[#allocation14 + $0x16f0] sm:$0xff]
    %v5982 = vld [vmem:[#allocation14 + $0x16f8] sm:$0xff]
    %v5983 = vld [vmem:[#allocation14 + $0x1700] sm:$0xff]
    %v5984 = vld [vmem:[#allocation14 + $0x1708] sm:$0xff]
    %v5985 = vld [vmem:[#allocation14 + $0x1710] sm:$0xff]
    %v5986 = vld [vmem:[#allocation14 + $0x1718] sm:$0xff]
    %v5987 = vld [vmem:[#allocation14 + $0x1720] sm:$0xff]
    %v5988 = vld [vmem:[#allocation14 + $0x1728] sm:$0xff]
    %v5989 = vld [vmem:[#allocation14 + $0x1730] sm:$0xff]
    %v5990 = vld [vmem:[#allocation14 + $0x1738] sm:$0xff]
    %v5991 = vld [vmem:[#allocation14 + $0x1740] sm:$0xff]
    %v5992 = vld [vmem:[#allocation14 + $0x1748] sm:$0xff]
    %v5993 = vld [vmem:[#allocation14 + $0x1750] sm:$0xff]
    %v5994 = vld [vmem:[#allocation14 + $0x1758] sm:$0xff]
    %v5995 = vld [vmem:[#allocation14 + $0x1760] sm:$0xff]
    %v5996 = vld [vmem:[#allocation14 + $0x1768] sm:$0xff]
    %v5997 = vld [vmem:[#allocation14 + $0x1770] sm:$0xff]
    %v5998 = vld [vmem:[#allocation14 + $0x1778] sm:$0xff]
    %v5999 = vld [vmem:[#allocation14 + $0x1780] sm:$0xff]
    %v6000 = vld [vmem:[#allocation14 + $0x1788] sm:$0xff]
    %v6001 = vld [vmem:[#allocation14 + $0x1790] sm:$0xff]
    %v6002 = vld [vmem:[#allocation14 + $0x1798] sm:$0xff]
    %v6003 = vld [vmem:[#allocation14 + $0x17a0] sm:$0xff]
    %v6004 = vld [vmem:[#allocation14 + $0x17a8] sm:$0xff]
    %v6005 = vld [vmem:[#allocation14 + $0x17b0] sm:$0xff]
    %v6006 = vld [vmem:[#allocation14 + $0x17b8] sm:$0xff]
    %v6007 = vld [vmem:[#allocation14 + $0x17c0] sm:$0xff]
    %v6008 = vld [vmem:[#allocation14 + $0x17c8] sm:$0xff]
    %v6009 = vld [vmem:[#allocation14 + $0x17d0] sm:$0xff]
    %v6010 = vld [vmem:[#allocation14 + $0x17d8] sm:$0xff]
    %v6011 = vld [vmem:[#allocation14 + $0x17e0] sm:$0xff]
    %v6012 = vld [vmem:[#allocation14 + $0x17e8] sm:$0xff]
    %v6013 = vld [vmem:[#allocation14 + $0x17f0] sm:$0xff]
    %v6014 = vld [vmem:[#allocation14 + $0x17f8] sm:$0xff]
    %v6015 = vld [vmem:[#allocation14 + $0x1800] sm:$0xff]
    %v6016 = vld [vmem:[#allocation14 + $0x1808] sm:$0xff]
    %v6017 = vld [vmem:[#allocation14 + $0x1810] sm:$0xff]
    %v6018 = vld [vmem:[#allocation14 + $0x1818] sm:$0xff]
    %v6019 = vld [vmem:[#allocation14 + $0x1820] sm:$0xff]
    %v6020 = vld [vmem:[#allocation14 + $0x1828] sm:$0xff]
    %v6021 = vld [vmem:[#allocation14 + $0x1830] sm:$0xff]
    %v6022 = vld [vmem:[#allocation14 + $0x1838] sm:$0xff]
    %v6023 = vld [vmem:[#allocation14 + $0x1840] sm:$0xff]
    %v6024 = vld [vmem:[#allocation14 + $0x1848] sm:$0xff]
    %v6025 = vld [vmem:[#allocation14 + $0x1850] sm:$0xff]
    %v6026 = vld [vmem:[#allocation14 + $0x1858] sm:$0xff]
    %v6027 = vld [vmem:[#allocation14 + $0x1860] sm:$0xff]
    %v6028 = vld [vmem:[#allocation14 + $0x1868] sm:$0xff]
    %v6029 = vld [vmem:[#allocation14 + $0x1870] sm:$0xff]
    %v6030 = vld [vmem:[#allocation14 + $0x1878] sm:$0xff]
    %v6031 = vld [vmem:[#allocation14 + $0x1880] sm:$0xff]
    %v6032 = vld [vmem:[#allocation14 + $0x1888] sm:$0xff]
    %v6033 = vld [vmem:[#allocation14 + $0x1890] sm:$0xff]
    %v6034 = vld [vmem:[#allocation14 + $0x1898] sm:$0xff]
    %v6035 = vld [vmem:[#allocation14 + $0x18a0] sm:$0xff]
    %v6036 = vld [vmem:[#allocation14 + $0x18a8] sm:$0xff]
    %v6037 = vld [vmem:[#allocation14 + $0x18b0] sm:$0xff]
    %v6038 = vld [vmem:[#allocation14 + $0x18b8] sm:$0xff]
    %v6039 = vld [vmem:[#allocation14 + $0x18c0] sm:$0xff]
    %v6040 = vld [vmem:[#allocation14 + $0x18c8] sm:$0xff]
    %v6041 = vld [vmem:[#allocation14 + $0x18d0] sm:$0xff]
    %v6042 = vld [vmem:[#allocation14 + $0x18d8] sm:$0xff]
    %v6043 = vld [vmem:[#allocation14 + $0x18e0] sm:$0xff]
    %v6044 = vld [vmem:[#allocation14 + $0x18e8] sm:$0xff]
    %v6045 = vld [vmem:[#allocation14 + $0x18f0] sm:$0xff]
    %v6046 = vld [vmem:[#allocation14 + $0x18f8] sm:$0xff]
    %v6047 = vld [vmem:[#allocation14 + $0x1900] sm:$0xff]
    %v6048 = vld [vmem:[#allocation14 + $0x1908] sm:$0xff]
    %v6049 = vld [vmem:[#allocation14 + $0x1910] sm:$0xff]
    %v6050 = vld [vmem:[#allocation14 + $0x1918] sm:$0xff]
    %v6051 = vld [vmem:[#allocation14 + $0x1920] sm:$0xff]
    %v6052 = vld [vmem:[#allocation14 + $0x1928] sm:$0xff]
    %v6053 = vld [vmem:[#allocation14 + $0x1930] sm:$0xff]
    %v6054 = vld [vmem:[#allocation14 + $0x1938] sm:$0xff]
    %v6055 = vld [vmem:[#allocation14 + $0x1940] sm:$0xff]
    %v6056 = vld [vmem:[#allocation14 + $0x1948] sm:$0xff]
    %v6057 = vld [vmem:[#allocation14 + $0x1950] sm:$0xff]
    %v6058 = vld [vmem:[#allocation14 + $0x1958] sm:$0xff]
    %v6059 = vld [vmem:[#allocation14 + $0x1960] sm:$0xff]
    %v6060 = vld [vmem:[#allocation14 + $0x1968] sm:$0xff]
    %v6061 = vld [vmem:[#allocation14 + $0x1970] sm:$0xff]
    %v6062 = vld [vmem:[#allocation14 + $0x1978] sm:$0xff]
    %v6063 = vld [vmem:[#allocation14 + $0x1980] sm:$0xff]
    %v6064 = vld [vmem:[#allocation14 + $0x1988] sm:$0xff]
    %v6065 = vld [vmem:[#allocation14 + $0x1990] sm:$0xff]
    %v6066 = vld [vmem:[#allocation14 + $0x1998] sm:$0xff]
    %v6067 = vld [vmem:[#allocation14 + $0x19a0] sm:$0xff]
    %v6068 = vld [vmem:[#allocation14 + $0x19a8] sm:$0xff]
    %v6069 = vld [vmem:[#allocation14 + $0x19b0] sm:$0xff]
    %v6070 = vld [vmem:[#allocation14 + $0x19b8] sm:$0xff]
    %v6071 = vld [vmem:[#allocation14 + $0x19c0] sm:$0xff]
    %v6072 = vld [vmem:[#allocation14 + $0x19c8] sm:$0xff]
    %v6073 = vld [vmem:[#allocation14 + $0x19d0] sm:$0xff]
    %v6074 = vld [vmem:[#allocation14 + $0x19d8] sm:$0xff]
    %v6075 = vld [vmem:[#allocation14 + $0x19e0] sm:$0xff]
    %v6076 = vld [vmem:[#allocation14 + $0x19e8] sm:$0xff]
    %v6077 = vld [vmem:[#allocation14 + $0x19f0] sm:$0xff]
    %v6078 = vld [vmem:[#allocation14 + $0x19f8] sm:$0xff]
    %v6079 = vld [vmem:[#allocation14 + $0x1a00] sm:$0xff]
    %v6080 = vld [vmem:[#allocation14 + $0x1a08] sm:$0xff]
    %v6081 = vld [vmem:[#allocation14 + $0x1a10] sm:$0xff]
    %v6082 = vld [vmem:[#allocation14 + $0x1a18] sm:$0xff]
    %v6083 = vld [vmem:[#allocation14 + $0x1a20] sm:$0xff]
    %v6084 = vld [vmem:[#allocation14 + $0x1a28] sm:$0xff]
    %v6085 = vld [vmem:[#allocation14 + $0x1a30] sm:$0xff]
    %v6086 = vld [vmem:[#allocation14 + $0x1a38] sm:$0xff]
    %v6087 = vld [vmem:[#allocation14 + $0x1a40] sm:$0xff]
    %v6088 = vld [vmem:[#allocation14 + $0x1a48] sm:$0xff]
    %v6089 = vld [vmem:[#allocation14 + $0x1a50] sm:$0xff]
    %v6090 = vld [vmem:[#allocation14 + $0x1a58] sm:$0xff]
    %v6091 = vld [vmem:[#allocation14 + $0x1a60] sm:$0xff]
    %v6092 = vld [vmem:[#allocation14 + $0x1a68] sm:$0xff]
    %v6093 = vld [vmem:[#allocation14 + $0x1a70] sm:$0xff]
    %v6094 = vld [vmem:[#allocation14 + $0x1a78] sm:$0xff]
    %v6095 = vld [vmem:[#allocation14 + $0x1a80] sm:$0xff]
    %v6096 = vld [vmem:[#allocation14 + $0x1a88] sm:$0xff]
    %v6097 = vld [vmem:[#allocation14 + $0x1a90] sm:$0xff]
    %v6098 = vld [vmem:[#allocation14 + $0x1a98] sm:$0xff]
    %v6099 = vld [vmem:[#allocation14 + $0x1aa0] sm:$0xff]
    %v6100 = vld [vmem:[#allocation14 + $0x1aa8] sm:$0xff]
    %v6101 = vld [vmem:[#allocation14 + $0x1ab0] sm:$0xff]
    %v6102 = vld [vmem:[#allocation14 + $0x1ab8] sm:$0xff]
    %v6103 = vld [vmem:[#allocation14 + $0x1ac0] sm:$0xff]
    %v6104 = vld [vmem:[#allocation14 + $0x1ac8] sm:$0xff]
    %v6105 = vld [vmem:[#allocation14 + $0x1ad0] sm:$0xff]
    %v6106 = vld [vmem:[#allocation14 + $0x1ad8] sm:$0xff]
    %v6107 = vld [vmem:[#allocation14 + $0x1ae0] sm:$0xff]
    %v6108 = vld [vmem:[#allocation14 + $0x1ae8] sm:$0xff]
    %v6109 = vld [vmem:[#allocation14 + $0x1af0] sm:$0xff]
    %v6110 = vld [vmem:[#allocation14 + $0x1af8] sm:$0xff]
    %v6111 = vld [vmem:[#allocation14 + $0x1b00] sm:$0xff]
    %v6112 = vld [vmem:[#allocation14 + $0x1b08] sm:$0xff]
    %v6113 = vld [vmem:[#allocation14 + $0x1b10] sm:$0xff]
    %v6114 = vld [vmem:[#allocation14 + $0x1b18] sm:$0xff]
    %v6115 = vld [vmem:[#allocation14 + $0x1b20] sm:$0xff]
    %v6116 = vld [vmem:[#allocation14 + $0x1b28] sm:$0xff]
    %v6117 = vld [vmem:[#allocation14 + $0x1b30] sm:$0xff]
    %v6118 = vld [vmem:[#allocation14 + $0x1b38] sm:$0xff]
    %v6119 = vld [vmem:[#allocation14 + $0x1b40] sm:$0xff]
    %v6120 = vld [vmem:[#allocation14 + $0x1b48] sm:$0xff]
    %v6121 = vld [vmem:[#allocation14 + $0x1b50] sm:$0xff]
    %v6122 = vld [vmem:[#allocation14 + $0x1b58] sm:$0xff]
    %v6123 = vld [vmem:[#allocation14 + $0x1b60] sm:$0xff]
    %v6124 = vld [vmem:[#allocation14 + $0x1b68] sm:$0xff]
    %v6125 = vld [vmem:[#allocation14 + $0x1b70] sm:$0xff]
    %v6126 = vld [vmem:[#allocation14 + $0x1b78] sm:$0xff]
    %v6127 = vld [vmem:[#allocation14 + $0x1b80] sm:$0xff]
    %v6128 = vld [vmem:[#allocation14 + $0x1b88] sm:$0xff]
    %v6129 = vld [vmem:[#allocation14 + $0x1b90] sm:$0xff]
    %v6130 = vld [vmem:[#allocation14 + $0x1b98] sm:$0xff]
    %v6131 = vld [vmem:[#allocation14 + $0x1ba0] sm:$0xff]
    %v6132 = vld [vmem:[#allocation14 + $0x1ba8] sm:$0xff]
    %v6133 = vld [vmem:[#allocation14 + $0x1bb0] sm:$0xff]
    %v6134 = vld [vmem:[#allocation14 + $0x1bb8] sm:$0xff]
    %v6135 = vld [vmem:[#allocation14 + $0x1bc0] sm:$0xff]
    %v6136 = vld [vmem:[#allocation14 + $0x1bc8] sm:$0xff]
    %v6137 = vld [vmem:[#allocation14 + $0x1bd0] sm:$0xff]
    %v6138 = vld [vmem:[#allocation14 + $0x1bd8] sm:$0xff]
    %v6139 = vld [vmem:[#allocation14 + $0x1be0] sm:$0xff]
    %v6140 = vld [vmem:[#allocation14 + $0x1be8] sm:$0xff]
    %v6141 = vld [vmem:[#allocation14 + $0x1bf0] sm:$0xff]
    %v6142 = vld [vmem:[#allocation14 + $0x1bf8] sm:$0xff]
    %v6143 = vld [vmem:[#allocation14 + $0x1c00] sm:$0xff]
    %v6144 = vld [vmem:[#allocation14 + $0x1c08] sm:$0xff]
    %v6145 = vld [vmem:[#allocation14 + $0x1c10] sm:$0xff]
    %v6146 = vld [vmem:[#allocation14 + $0x1c18] sm:$0xff]
    %v6147 = vld [vmem:[#allocation14 + $0x1c20] sm:$0xff]
    %v6148 = vld [vmem:[#allocation14 + $0x1c28] sm:$0xff]
    %v6149 = vld [vmem:[#allocation14 + $0x1c30] sm:$0xff]
    %v6150 = vld [vmem:[#allocation14 + $0x1c38] sm:$0xff]
    %v6151 = vld [vmem:[#allocation14 + $0x1c40] sm:$0xff]
    %v6152 = vld [vmem:[#allocation14 + $0x1c48] sm:$0xff]
    %v6153 = vld [vmem:[#allocation14 + $0x1c50] sm:$0xff]
    %v6154 = vld [vmem:[#allocation14 + $0x1c58] sm:$0xff]
    %v6155 = vld [vmem:[#allocation14 + $0x1c60] sm:$0xff]
    %v6156 = vld [vmem:[#allocation14 + $0x1c68] sm:$0xff]
    %v6157 = vld [vmem:[#allocation14 + $0x1c70] sm:$0xff]
    %v6158 = vld [vmem:[#allocation14 + $0x1c78] sm:$0xff]
    %v6159 = vld [vmem:[#allocation14 + $0x1c80] sm:$0xff]
    %v6160 = vld [vmem:[#allocation14 + $0x1c88] sm:$0xff]
    %v6161 = vld [vmem:[#allocation14 + $0x1c90] sm:$0xff]
    %v6162 = vld [vmem:[#allocation14 + $0x1c98] sm:$0xff]
    %v6163 = vld [vmem:[#allocation14 + $0x1ca0] sm:$0xff]
    %v6164 = vld [vmem:[#allocation14 + $0x1ca8] sm:$0xff]
    %v6165 = vld [vmem:[#allocation14 + $0x1cb0] sm:$0xff]
    %v6166 = vld [vmem:[#allocation14 + $0x1cb8] sm:$0xff]
    %v6167 = vld [vmem:[#allocation14 + $0x1cc0] sm:$0xff]
    %v6168 = vld [vmem:[#allocation14 + $0x1cc8] sm:$0xff]
    %v6169 = vld [vmem:[#allocation14 + $0x1cd0] sm:$0xff]
    %v6170 = vld [vmem:[#allocation14 + $0x1cd8] sm:$0xff]
    %v6171 = vld [vmem:[#allocation14 + $0x1ce0] sm:$0xff]
    %v6172 = vld [vmem:[#allocation14 + $0x1ce8] sm:$0xff]
    %v6173 = vld [vmem:[#allocation14 + $0x1cf0] sm:$0xff]
    %v6174 = vld [vmem:[#allocation14 + $0x1cf8] sm:$0xff]
    %v6175 = vld [vmem:[#allocation14 + $0x1d00] sm:$0xff]
    %v6176 = vld [vmem:[#allocation14 + $0x1d08] sm:$0xff]
    %v6177 = vld [vmem:[#allocation14 + $0x1d10] sm:$0xff]
    %v6178 = vld [vmem:[#allocation14 + $0x1d18] sm:$0xff]
    %v6179 = vld [vmem:[#allocation14 + $0x1d20] sm:$0xff]
    %v6180 = vld [vmem:[#allocation14 + $0x1d28] sm:$0xff]
    %v6181 = vld [vmem:[#allocation14 + $0x1d30] sm:$0xff]
    %v6182 = vld [vmem:[#allocation14 + $0x1d38] sm:$0xff]
    %v6183 = vld [vmem:[#allocation14 + $0x1d40] sm:$0xff]
    %v6184 = vld [vmem:[#allocation14 + $0x1d48] sm:$0xff]
    %v6185 = vld [vmem:[#allocation14 + $0x1d50] sm:$0xff]
    %v6186 = vld [vmem:[#allocation14 + $0x1d58] sm:$0xff]
    %v6187 = vld [vmem:[#allocation14 + $0x1d60] sm:$0xff]
    %v6188 = vld [vmem:[#allocation14 + $0x1d68] sm:$0xff]
    %v6189 = vld [vmem:[#allocation14 + $0x1d70] sm:$0xff]
    %v6190 = vld [vmem:[#allocation14 + $0x1d78] sm:$0xff]
    %v6191 = vld [vmem:[#allocation14 + $0x1d80] sm:$0xff]
    %v6192 = vld [vmem:[#allocation14 + $0x1d88] sm:$0xff]
    %v6193 = vld [vmem:[#allocation14 + $0x1d90] sm:$0xff]
    %v6194 = vld [vmem:[#allocation14 + $0x1d98] sm:$0xff]
    %v6195 = vld [vmem:[#allocation14 + $0x1da0] sm:$0xff]
    %v6196 = vld [vmem:[#allocation14 + $0x1da8] sm:$0xff]
    %v6197 = vld [vmem:[#allocation14 + $0x1db0] sm:$0xff]
    %v6198 = vld [vmem:[#allocation14 + $0x1db8] sm:$0xff]
    %v6199 = vld [vmem:[#allocation14 + $0x1dc0] sm:$0xff]
    %v6200 = vld [vmem:[#allocation14 + $0x1dc8] sm:$0xff]
    %v6201 = vld [vmem:[#allocation14 + $0x1dd0] sm:$0xff]
    %v6202 = vld [vmem:[#allocation14 + $0x1dd8] sm:$0xff]
    %v6203 = vld [vmem:[#allocation14 + $0x1de0] sm:$0xff]
    %v6204 = vld [vmem:[#allocation14 + $0x1de8] sm:$0xff]
    %v6205 = vld [vmem:[#allocation14 + $0x1df0] sm:$0xff]
    %v6206 = vld [vmem:[#allocation14 + $0x1df8] sm:$0xff]
    %v6207 = vld [vmem:[#allocation14 + $0x1e00] sm:$0xff]
    %v6208 = vld [vmem:[#allocation14 + $0x1e08] sm:$0xff]
    %v6209 = vld [vmem:[#allocation14 + $0x1e10] sm:$0xff]
    %v6210 = vld [vmem:[#allocation14 + $0x1e18] sm:$0xff]
    %v6211 = vld [vmem:[#allocation14 + $0x1e20] sm:$0xff]
    %v6212 = vld [vmem:[#allocation14 + $0x1e28] sm:$0xff]
    %v6213 = vld [vmem:[#allocation14 + $0x1e30] sm:$0xff]
    %v6214 = vld [vmem:[#allocation14 + $0x1e38] sm:$0xff]
    %v6215 = vld [vmem:[#allocation14 + $0x1e40] sm:$0xff]
    %v6216 = vld [vmem:[#allocation14 + $0x1e48] sm:$0xff]
    %v6217 = vld [vmem:[#allocation14 + $0x1e50] sm:$0xff]
    %v6218 = vld [vmem:[#allocation14 + $0x1e58] sm:$0xff]
    %v6219 = vld [vmem:[#allocation14 + $0x1e60] sm:$0xff]
    %v6220 = vld [vmem:[#allocation14 + $0x1e68] sm:$0xff]
    %v6221 = vld [vmem:[#allocation14 + $0x1e70] sm:$0xff]
    %v6222 = vld [vmem:[#allocation14 + $0x1e78] sm:$0xff]
    %v6223 = vld [vmem:[#allocation14 + $0x1e80] sm:$0xff]
    %v6224 = vld [vmem:[#allocation14 + $0x1e88] sm:$0xff]
    %v6225 = vld [vmem:[#allocation14 + $0x1e90] sm:$0xff]
    %v6226 = vld [vmem:[#allocation14 + $0x1e98] sm:$0xff]
    %v6227 = vld [vmem:[#allocation14 + $0x1ea0] sm:$0xff]
    %v6228 = vld [vmem:[#allocation14 + $0x1ea8] sm:$0xff]
    %v6229 = vld [vmem:[#allocation14 + $0x1eb0] sm:$0xff]
    %v6230 = vld [vmem:[#allocation14 + $0x1eb8] sm:$0xff]
    %v6231 = vld [vmem:[#allocation14 + $0x1ec0] sm:$0xff]
    %v6232 = vld [vmem:[#allocation14 + $0x1ec8] sm:$0xff]
    %v6233 = vld [vmem:[#allocation14 + $0x1ed0] sm:$0xff]
    %v6234 = vld [vmem:[#allocation14 + $0x1ed8] sm:$0xff]
    %v6235 = vld [vmem:[#allocation14 + $0x1ee0] sm:$0xff]
    %v6236 = vld [vmem:[#allocation14 + $0x1ee8] sm:$0xff]
    %v6237 = vld [vmem:[#allocation14 + $0x1ef0] sm:$0xff]
    %v6238 = vld [vmem:[#allocation14 + $0x1ef8] sm:$0xff]
    %v6239 = vld [vmem:[#allocation14 + $0x1f00] sm:$0xff]
    %v6240 = vld [vmem:[#allocation14 + $0x1f08] sm:$0xff]
    %v6241 = vld [vmem:[#allocation14 + $0x1f10] sm:$0xff]
    %v6242 = vld [vmem:[#allocation14 + $0x1f18] sm:$0xff]
    %v6243 = vld [vmem:[#allocation14 + $0x1f20] sm:$0xff]
    %v6244 = vld [vmem:[#allocation14 + $0x1f28] sm:$0xff]
    %v6245 = vld [vmem:[#allocation14 + $0x1f30] sm:$0xff]
    %v6246 = vld [vmem:[#allocation14 + $0x1f38] sm:$0xff]
    %v6247 = vld [vmem:[#allocation14 + $0x1f40] sm:$0xff]
    %v6248 = vld [vmem:[#allocation14 + $0x1f48] sm:$0xff]
    %v6249 = vld [vmem:[#allocation14 + $0x1f50] sm:$0xff]
    %v6250 = vld [vmem:[#allocation14 + $0x1f58] sm:$0xff]
    %v6251 = vld [vmem:[#allocation14 + $0x1f60] sm:$0xff]
    %v6252 = vld [vmem:[#allocation14 + $0x1f68] sm:$0xff]
    %v6253 = vld [vmem:[#allocation14 + $0x1f70] sm:$0xff]
    %v6254 = vld [vmem:[#allocation14 + $0x1f78] sm:$0xff]
    %v6255 = vld [vmem:[#allocation14 + $0x1f80] sm:$0xff]
    %v6256 = vld [vmem:[#allocation14 + $0x1f88] sm:$0xff]
    %v6257 = vld [vmem:[#allocation14 + $0x1f90] sm:$0xff]
    %v6258 = vld [vmem:[#allocation14 + $0x1f98] sm:$0xff]
    %v6259 = vld [vmem:[#allocation14 + $0x1fa0] sm:$0xff]
    %v6260 = vld [vmem:[#allocation14 + $0x1fa8] sm:$0xff]
    %v6261 = vld [vmem:[#allocation14 + $0x1fb0] sm:$0xff]
    %v6262 = vld [vmem:[#allocation14 + $0x1fb8] sm:$0xff]
    %v6263 = vld [vmem:[#allocation14 + $0x1fc0] sm:$0xff]
    %v6264 = vld [vmem:[#allocation14 + $0x1fc8] sm:$0xff]
    %v6265 = vld [vmem:[#allocation14 + $0x1fd0] sm:$0xff]
    %v6266 = vld [vmem:[#allocation14 + $0x1fd8] sm:$0xff]
    %v6267 = vld [vmem:[#allocation14 + $0x1fe0] sm:$0xff]
    %v6268 = vld [vmem:[#allocation14 + $0x1fe8] sm:$0xff]
    %v6269 = vld [vmem:[#allocation14 + $0x1ff0] sm:$0xff]
    %v6270 = vld [vmem:[#allocation14 + $0x1ff8] sm:$0xff]
    %v6271 = vld [vmem:[#allocation16] sm:$0xff]
    %v6273 = vlaneseq
    %v6274 = vshrl.u32 %v6273, 7
    %v6275 = vsub.s32 0, %v6274
    %v6276 = vrot.slane %v6271, %v6275
    %v6277 = vlaneseq
    %v6278 = vshrl.u32 %v6277, 7
    %v6279 = vsub.s32 1, %v6278
    %v6280 = vrot.slane %v6271, %v6279
    %v6281 = vlaneseq
    %v6282 = vshrl.u32 %v6281, 7
    %v6283 = vsub.s32 2, %v6282
    %v6284 = vrot.slane %v6271, %v6283
    %v6285 = vlaneseq
    %v6286 = vshrl.u32 %v6285, 7
    %v6287 = vsub.s32 3, %v6286
    %v6288 = vrot.slane %v6271, %v6287
    %v6289 = vlaneseq
    %v6290 = vshrl.u32 %v6289, 7
    %v6291 = vsub.s32 4, %v6290
    %v6292 = vrot.slane %v6271, %v6291
    %v6293 = vlaneseq
    %v6294 = vshrl.u32 %v6293, 7
    %v6295 = vsub.s32 5, %v6294
    %v6296 = vrot.slane %v6271, %v6295
    %v6297 = vlaneseq
    %v6298 = vshrl.u32 %v6297, 7
    %v6299 = vsub.s32 6, %v6298
    %v6300 = vrot.slane %v6271, %v6299
    %v6301 = vlaneseq
    %v6302 = vshrl.u32 %v6301, 7
    %v6303 = vsub.s32 7, %v6302
    %v6304 = vrot.slane %v6271, %v6303
    %6313 = vmatprep.subr.mxu0 %v5248
    %6314 = vmatpush1.msra.mxu0 %v5247
    %6315 = vmatprep.subr.mxu0 %v5256
    %6316 = vmatpush1.msra.mxu0 %v5255
    %6317 = vmatprep.subr.mxu0 %v5264
    %6318 = vmatpush1.msra.mxu0 %v5263
    %6319 = vmatprep.subr.mxu0 %v5272
    %6320 = vmatpush1.msra.mxu0 %v5271
    %6321 = vmatprep.subr.mxu0 %v5280
    %6322 = vmatpush1.msra.mxu0 %v5279
    %6323 = vmatprep.subr.mxu0 %v5288
    %6324 = vmatpush1.msra.mxu0 %v5287
    %6325 = vmatprep.subr.mxu0 %v5296
    %6326 = vmatpush1.msra.mxu0 %v5295
    %6327 = vmatprep.subr.mxu0 %v5304
    %6328 = vmatpush1.msra.mxu0 %v5303
    %6329 = vmatprep.subr.mxu0 %v5312
    %6330 = vmatpush1.msra.mxu0 %v5311
    %6331 = vmatprep.subr.mxu0 %v5320
    %6332 = vmatpush1.msra.mxu0 %v5319
    %6333 = vmatprep.subr.mxu0 %v5328
    %6334 = vmatpush1.msra.mxu0 %v5327
    %6335 = vmatprep.subr.mxu0 %v5336
    %6336 = vmatpush1.msra.mxu0 %v5335
    %6337 = vmatprep.subr.mxu0 %v5344
    %6338 = vmatpush1.msra.mxu0 %v5343
    %6339 = vmatprep.subr.mxu0 %v5352
    %6340 = vmatpush1.msra.mxu0 %v5351
    %6341 = vmatprep.subr.mxu0 %v5360
    %6342 = vmatpush1.msra.mxu0 %v5359
    %6343 = vmatprep.subr.mxu0 %v5368
    %6344 = vmatpush1.msra.mxu0 %v5367
    %6345 = vmatprep.subr.mxu0 %v5376
    %6346 = vmatpush1.msra.mxu0 %v5375
    %6347 = vmatprep.subr.mxu0 %v5384
    %6348 = vmatpush1.msra.mxu0 %v5383
    %6349 = vmatprep.subr.mxu0 %v5392
    %6350 = vmatpush1.msra.mxu0 %v5391
    %6351 = vmatprep.subr.mxu0 %v5400
    %6352 = vmatpush1.msra.mxu0 %v5399
    %6353 = vmatprep.subr.mxu0 %v5408
    %6354 = vmatpush1.msra.mxu0 %v5407
    %6355 = vmatprep.subr.mxu0 %v5416
    %6356 = vmatpush1.msra.mxu0 %v5415
    %6357 = vmatprep.subr.mxu0 %v5424
    %6358 = vmatpush1.msra.mxu0 %v5423
    %6359 = vmatprep.subr.mxu0 %v5432
    %6360 = vmatpush1.msra.mxu0 %v5431
    %6361 = vmatprep.subr.mxu0 %v5440
    %6362 = vmatpush1.msra.mxu0 %v5439
    %6363 = vmatprep.subr.mxu0 %v5448
    %6364 = vmatpush1.msra.mxu0 %v5447
    %6365 = vmatprep.subr.mxu0 %v5456
    %6366 = vmatpush1.msra.mxu0 %v5455
    %6367 = vmatprep.subr.mxu0 %v5464
    %6368 = vmatpush1.msra.mxu0 %v5463
    %6369 = vmatprep.subr.mxu0 %v5472
    %6370 = vmatpush1.msra.mxu0 %v5471
    %6371 = vmatprep.subr.mxu0 %v5480
    %6372 = vmatpush1.msra.mxu0 %v5479
    %6373 = vmatprep.subr.mxu0 %v5488
    %6374 = vmatpush1.msra.mxu0 %v5487
    %6375 = vmatprep.subr.mxu0 %v5496
    %6376 = vmatpush1.msra.mxu0 %v5495
    %6377 = vmatprep.mubr.f32.mxu0 %v5232
    %6378 = vmatmul.mubr.f32.gmra.mrb[0].mxu0 %v5231
    %v6379 = vpop.f32.mrb[0].mxu0
    %v6380 = vadd.f32 %v6276, %v6379
    %v6381 = vpop.f32.mrb[0].mxu0
    %v6382 = vadd.f32 %v6280, %v6381
    %6383 = vmatprep.mubr.f32.mxu0 %v5240
    %6384 = vmatmul.mubr.f32.gmra.mrb[0].mxu0 %v5239
    %v6385 = vpop.f32.mrb[0].mxu0
    %v6386 = vadd.f32 %v6276, %v6385
    %v6387 = vpop.f32.mrb[0].mxu0
    %v6388 = vadd.f32 %v6280, %v6387
    %6389 = vdwg.mxu0
    %6390 = vmatprep.subr.mxu0 %v5504
    %6391 = vmatpush1.msra.mxu0 %v5503
    %6392 = vmatprep.subr.mxu0 %v5512
    %6393 = vmatpush1.msra.mxu0 %v5511
    %6394 = vmatprep.subr.mxu0 %v5520
    %6395 = vmatpush1.msra.mxu0 %v5519
    %6396 = vmatprep.subr.mxu0 %v5528
    %6397 = vmatpush1.msra.mxu0 %v5527
    %6398 = vmatprep.subr.mxu0 %v5536
    %6399 = vmatpush1.msra.mxu0 %v5535
    %6400 = vmatprep.subr.mxu0 %v5544
    %6401 = vmatpush1.msra.mxu0 %v5543
    %6402 = vmatprep.subr.mxu0 %v5552
    %6403 = vmatpush1.msra.mxu0 %v5551
    %6404 = vmatprep.subr.mxu0 %v5560
    %6405 = vmatpush1.msra.mxu0 %v5559
    %6406 = vmatprep.subr.mxu0 %v5568
    %6407 = vmatpush1.msra.mxu0 %v5567
    %6408 = vmatprep.subr.mxu0 %v5576
    %6409 = vmatpush1.msra.mxu0 %v5575
    %6410 = vmatprep.subr.mxu0 %v5584
    %6411 = vmatpush1.msra.mxu0 %v5583
    %6412 = vmatprep.subr.mxu0 %v5592
    %6413 = vmatpush1.msra.mxu0 %v5591
    %6414 = vmatprep.subr.mxu0 %v5600
    %6415 = vmatpush1.msra.mxu0 %v5599
    %6416 = vmatprep.subr.mxu0 %v5608
    %6417 = vmatpush1.msra.mxu0 %v5607
    %6418 = vmatprep.subr.mxu0 %v5616
    %6419 = vmatpush1.msra.mxu0 %v5615
    %6420 = vmatprep.subr.mxu0 %v5624
    %6421 = vmatpush1.msra.mxu0 %v5623
    %6422 = vmatprep.subr.mxu0 %v5632
    %6423 = vmatpush1.msra.mxu0 %v5631
    %6424 = vmatprep.subr.mxu0 %v5640
    %6425 = vmatpush1.msra.mxu0 %v5639
    %6426 = vmatprep.subr.mxu0 %v5648
    %6427 = vmatpush1.msra.mxu0 %v5647
    %6428 = vmatprep.subr.mxu0 %v5656
    %6429 = vmatpush1.msra.mxu0 %v5655
    %6430 = vmatprep.subr.mxu0 %v5664
    %6431 = vmatpush1.msra.mxu0 %v5663
    %6432 = vmatprep.subr.mxu0 %v5672
    %6433 = vmatpush1.msra.mxu0 %v5671
    %6434 = vmatprep.subr.mxu0 %v5680
    %6435 = vmatpush1.msra.mxu0 %v5679
    %6436 = vmatprep.subr.mxu0 %v5688
    %6437 = vmatpush1.msra.mxu0 %v5687
    %6438 = vmatprep.subr.mxu0 %v5696
    %6439 = vmatpush1.msra.mxu0 %v5695
    %6440 = vmatprep.subr.mxu0 %v5704
    %6441 = vmatpush1.msra.mxu0 %v5703
    %6442 = vmatprep.subr.mxu0 %v5712
    %6443 = vmatpush1.msra.mxu0 %v5711
    %6444 = vmatprep.subr.mxu0 %v5720
    %6445 = vmatpush1.msra.mxu0 %v5719
    %6446 = vmatprep.subr.mxu0 %v5728
    %6447 = vmatpush1.msra.mxu0 %v5727
    %6448 = vmatprep.subr.mxu0 %v5736
    %6449 = vmatpush1.msra.mxu0 %v5735
    %6450 = vmatprep.subr.mxu0 %v5744
    %6451 = vmatpush1.msra.mxu0 %v5743
    %6452 = vmatprep.subr.mxu0 %v5752
    %6453 = vmatpush1.msra.mxu0 %v5751
    %6454 = vmatprep.mubr.f32.mxu0 %v5234
    %6455 = vmatmul.mubr.f32.gmra.mrb[0].mxu0 %v5233
    %v6456 = vpop.f32.mrb[0].mxu0
    %v6457 = vadd.f32 %v6380, %v6456
    %v6458 = vpop.f32.mrb[0].mxu0
    %v6459 = vadd.f32 %v6382, %v6458
    %6460 = vmatprep.mubr.f32.mxu0 %v5242
    %6461 = vmatmul.mubr.f32.gmra.mrb[0].mxu0 %v5241
    %v6462 = vpop.f32.mrb[0].mxu0
    %v6463 = vadd.f32 %v6386, %v6462
    %v6464 = vpop.f32.mrb[0].mxu0
    %v6465 = vadd.f32 %v6388, %v6464
    %6466 = vdwg.mxu0
    %6467 = vmatprep.subr.mxu0 %v5760
    %6468 = vmatpush1.msra.mxu0 %v5759
    %6469 = vmatprep.subr.mxu0 %v5768
    %6470 = vmatpush1.msra.mxu0 %v5767
    %6471 = vmatprep.subr.mxu0 %v5776
    %6472 = vmatpush1.msra.mxu0 %v5775
    %6473 = vmatprep.subr.mxu0 %v5784
    %6474 = vmatpush1.msra.mxu0 %v5783
    %6475 = vmatprep.subr.mxu0 %v5792
    %6476 = vmatpush1.msra.mxu0 %v5791
    %6477 = vmatprep.subr.mxu0 %v5800
    %6478 = vmatpush1.msra.mxu0 %v5799
    %6479 = vmatprep.subr.mxu0 %v5808
    %6480 = vmatpush1.msra.mxu0 %v5807
    %6481 = vmatprep.subr.mxu0 %v5816
    %6482 = vmatpush1.msra.mxu0 %v5815
    %6483 = vmatprep.subr.mxu0 %v5824
    %6484 = vmatpush1.msra.mxu0 %v5823
    %6485 = vmatprep.subr.mxu0 %v5832
    %6486 = vmatpush1.msra.mxu0 %v5831
    %6487 = vmatprep.subr.mxu0 %v5840
    %6488 = vmatpush1.msra.mxu0 %v5839
    %6489 = vmatprep.subr.mxu0 %v5848
    %6490 = vmatpush1.msra.mxu0 %v5847
    %6491 = vmatprep.subr.mxu0 %v5856
    %6492 = vmatpush1.msra.mxu0 %v5855
    %6493 = vmatprep.subr.mxu0 %v5864
    %6494 = vmatpush1.msra.mxu0 %v5863
    %6495 = vmatprep.subr.mxu0 %v5872
    %6496 = vmatpush1.msra.mxu0 %v5871
    %6497 = vmatprep.subr.mxu0 %v5880
    %6498 = vmatpush1.msra.mxu0 %v5879
    %6499 = vmatprep.subr.mxu0 %v5888
    %6500 = vmatpush1.msra.mxu0 %v5887
    %6501 = vmatprep.subr.mxu0 %v5896
    %6502 = vmatpush1.msra.mxu0 %v5895
    %6503 = vmatprep.subr.mxu0 %v5904
    %6504 = vmatpush1.msra.mxu0 %v5903
    %6505 = vmatprep.subr.mxu0 %v5912
    %6506 = vmatpush1.msra.mxu0 %v5911
    %6507 = vmatprep.subr.mxu0 %v5920
    %6508 = vmatpush1.msra.mxu0 %v5919
    %6509 = vmatprep.subr.mxu0 %v5928
    %6510 = vmatpush1.msra.mxu0 %v5927
    %6511 = vmatprep.subr.mxu0 %v5936
    %6512 = vmatpush1.msra.mxu0 %v5935
    %6513 = vmatprep.subr.mxu0 %v5944
    %6514 = vmatpush1.msra.mxu0 %v5943
    %6515 = vmatprep.subr.mxu0 %v5952
    %6516 = vmatpush1.msra.mxu0 %v5951
    %6517 = vmatprep.subr.mxu0 %v5960
    %6518 = vmatpush1.msra.mxu0 %v5959
    %6519 = vmatprep.subr.mxu0 %v5968
    %6520 = vmatpush1.msra.mxu0 %v5967
    %6521 = vmatprep.subr.mxu0 %v5976
    %6522 = vmatpush1.msra.mxu0 %v5975
    %6523 = vmatprep.subr.mxu0 %v5984
    %6524 = vmatpush1.msra.mxu0 %v5983
    %6525 = vmatprep.subr.mxu0 %v5992
    %6526 = vmatpush1.msra.mxu0 %v5991
    %6527 = vmatprep.subr.mxu0 %v6000
    %6528 = vmatpush1.msra.mxu0 %v5999
    %6529 = vmatprep.subr.mxu0 %v6008
    %6530 = vmatpush1.msra.mxu0 %v6007
    %6531 = vmatprep.mubr.f32.mxu0 %v5236
    %6532 = vmatmul.mubr.f32.gmra.mrb[0].mxu0 %v5235
    %v6533 = vpop.f32.mrb[0].mxu0
    %v6534 = vadd.f32 %v6457, %v6533
    %v6535 = vpop.f32.mrb[0].mxu0
    %v6536 = vadd.f32 %v6459, %v6535
    %6537 = vmatprep.mubr.f32.mxu0 %v5244
    %6538 = vmatmul.mubr.f32.gmra.mrb[0].mxu0 %v5243
    %v6539 = vpop.f32.mrb[0].mxu0
    %v6540 = vadd.f32 %v6463, %v6539
    %v6541 = vpop.f32.mrb[0].mxu0
    %v6542 = vadd.f32 %v6465, %v6541
    %6543 = vdwg.mxu0
    %6544 = vmatprep.subr.mxu0 %v6016
    %6545 = vmatpush1.msra.mxu0 %v6015
    %6546 = vmatprep.subr.mxu0 %v6024
    %6547 = vmatpush1.msra.mxu0 %v6023
    %6548 = vmatprep.subr.mxu0 %v6032
    %6549 = vmatpush1.msra.mxu0 %v6031
    %6550 = vmatprep.subr.mxu0 %v6040
    %6551 = vmatpush1.msra.mxu0 %v6039
    %6552 = vmatprep.subr.mxu0 %v6048
    %6553 = vmatpush1.msra.mxu0 %v6047
    %6554 = vmatprep.subr.mxu0 %v6056
    %6555 = vmatpush1.msra.mxu0 %v6055
    %6556 = vmatprep.subr.mxu0 %v6064
    %6557 = vmatpush1.msra.mxu0 %v6063
    %6558 = vmatprep.subr.mxu0 %v6072
    %6559 = vmatpush1.msra.mxu0 %v6071
    %6560 = vmatprep.subr.mxu0 %v6080
    %6561 = vmatpush1.msra.mxu0 %v6079
    %6562 = vmatprep.subr.mxu0 %v6088
    %6563 = vmatpush1.msra.mxu0 %v6087
    %6564 = vmatprep.subr.mxu0 %v6096
    %6565 = vmatpush1.msra.mxu0 %v6095
    %6566 = vmatprep.subr.mxu0 %v6104
    %6567 = vmatpush1.msra.mxu0 %v6103
    %6568 = vmatprep.subr.mxu0 %v6112
    %6569 = vmatpush1.msra.mxu0 %v6111
    %6570 = vmatprep.subr.mxu0 %v6120
    %6571 = vmatpush1.msra.mxu0 %v6119
    %6572 = vmatprep.subr.mxu0 %v6128
    %6573 = vmatpush1.msra.mxu0 %v6127
    %6574 = vmatprep.subr.mxu0 %v6136
    %6575 = vmatpush1.msra.mxu0 %v6135
    %6576 = vmatprep.subr.mxu0 %v6144
    %6577 = vmatpush1.msra.mxu0 %v6143
    %6578 = vmatprep.subr.mxu0 %v6152
    %6579 = vmatpush1.msra.mxu0 %v6151
    %6580 = vmatprep.subr.mxu0 %v6160
    %6581 = vmatpush1.msra.mxu0 %v6159
    %6582 = vmatprep.subr.mxu0 %v6168
    %6583 = vmatpush1.msra.mxu0 %v6167
    %6584 = vmatprep.subr.mxu0 %v6176
    %6585 = vmatpush1.msra.mxu0 %v6175
    %6586 = vmatprep.subr.mxu0 %v6184
    %6587 = vmatpush1.msra.mxu0 %v6183
    %6588 = vmatprep.subr.mxu0 %v6192
    %6589 = vmatpush1.msra.mxu0 %v6191
    %6590 = vmatprep.subr.mxu0 %v6200
    %6591 = vmatpush1.msra.mxu0 %v6199
    %6592 = vmatprep.subr.mxu0 %v6208
    %6593 = vmatpush1.msra.mxu0 %v6207
    %6594 = vmatprep.subr.mxu0 %v6216
    %6595 = vmatpush1.msra.mxu0 %v6215
    %6596 = vmatprep.subr.mxu0 %v6224
    %6597 = vmatpush1.msra.mxu0 %v6223
    %6598 = vmatprep.subr.mxu0 %v6232
    %6599 = vmatpush1.msra.mxu0 %v6231
    %6600 = vmatprep.subr.mxu0 %v6240
    %6601 = vmatpush1.msra.mxu0 %v6239
    %6602 = vmatprep.subr.mxu0 %v6248
    %6603 = vmatpush1.msra.mxu0 %v6247
    %6604 = vmatprep.subr.mxu0 %v6256
    %6605 = vmatpush1.msra.mxu0 %v6255
    %6606 = vmatprep.subr.mxu0 %v6264
    %6607 = vmatpush1.msra.mxu0 %v6263
    %6608 = vmatprep.mubr.f32.mxu0 %v5238
    %6609 = vmatmul.mubr.f32.gmra.mrb[0].mxu0 %v5237
    %v6610 = vpop.f32.mrb[0].mxu0
    %v6611 = vadd.f32 %v6534, %v6610
    %v6612 = vpop.f32.mrb[0].mxu0
    %v6613 = vadd.f32 %v6536, %v6612
    %6614 = vmatprep.mubr.f32.mxu0 %v5246
    %6615 = vmatmul.mubr.f32.gmra.mrb[0].mxu0 %v5245
    %v6616 = vpop.f32.mrb[0].mxu0
    %v6617 = vadd.f32 %v6540, %v6616
    %v6618 = vpop.f32.mrb[0].mxu0
    %v6619 = vadd.f32 %v6542, %v6618
    %6620 = vdwg.mxu0
    %6621 = vmatprep.subr.mxu0 %v5250
    %6622 = vmatpush1.msra.mxu0 %v5249
    %6623 = vmatprep.subr.mxu0 %v5258
    %6624 = vmatpush1.msra.mxu0 %v5257
    %6625 = vmatprep.subr.mxu0 %v5266
    %6626 = vmatpush1.msra.mxu0 %v5265
    %6627 = vmatprep.subr.mxu0 %v5274
    %6628 = vmatpush1.msra.mxu0 %v5273
    %6629 = vmatprep.subr.mxu0 %v5282
    %6630 = vmatpush1.msra.mxu0 %v5281
    %6631 = vmatprep.subr.mxu0 %v5290
    %6632 = vmatpush1.msra.mxu0 %v5289
    %6633 = vmatprep.subr.mxu0 %v5298
    %6634 = vmatpush1.msra.mxu0 %v5297
    %6635 = vmatprep.subr.mxu0 %v5306
    %6636 = vmatpush1.msra.mxu0 %v5305
    %6637 = vmatprep.subr.mxu0 %v5314
    %6638 = vmatpush1.msra.mxu0 %v5313
    %6639 = vmatprep.subr.mxu0 %v5322
    %6640 = vmatpush1.msra.mxu0 %v5321
    %6641 = vmatprep.subr.mxu0 %v5330
    %6642 = vmatpush1.msra.mxu0 %v5329
    %6643 = vmatprep.subr.mxu0 %v5338
    %6644 = vmatpush1.msra.mxu0 %v5337
    %6645 = vmatprep.subr.mxu0 %v5346
    %6646 = vmatpush1.msra.mxu0 %v5345
    %6647 = vmatprep.subr.mxu0 %v5354
    %6648 = vmatpush1.msra.mxu0 %v5353
    %6649 = vmatprep.subr.mxu0 %v5362
    %6650 = vmatpush1.msra.mxu0 %v5361
    %6651 = vmatprep.subr.mxu0 %v5370
    %6652 = vmatpush1.msra.mxu0 %v5369
    %6653 = vmatprep.subr.mxu0 %v5378
    %6654 = vmatpush1.msra.mxu0 %v5377
    %6655 = vmatprep.subr.mxu0 %v5386
    %6656 = vmatpush1.msra.mxu0 %v5385
    %6657 = vmatprep.subr.mxu0 %v5394
    %6658 = vmatpush1.msra.mxu0 %v5393
    %6659 = vmatprep.subr.mxu0 %v5402
    %6660 = vmatpush1.msra.mxu0 %v5401
    %6661 = vmatprep.subr.mxu0 %v5410
    %6662 = vmatpush1.msra.mxu0 %v5409
    %6663 = vmatprep.subr.mxu0 %v5418
    %6664 = vmatpush1.msra.mxu0 %v5417
    %6665 = vmatprep.subr.mxu0 %v5426
    %6666 = vmatpush1.msra.mxu0 %v5425
    %6667 = vmatprep.subr.mxu0 %v5434
    %6668 = vmatpush1.msra.mxu0 %v5433
    %6669 = vmatprep.subr.mxu0 %v5442
    %6670 = vmatpush1.msra.mxu0 %v5441
    %6671 = vmatprep.subr.mxu0 %v5450
    %6672 = vmatpush1.msra.mxu0 %v5449
    %6673 = vmatprep.subr.mxu0 %v5458
    %6674 = vmatpush1.msra.mxu0 %v5457
    %6675 = vmatprep.subr.mxu0 %v5466
    %6676 = vmatpush1.msra.mxu0 %v5465
    %6677 = vmatprep.subr.mxu0 %v5474
    %6678 = vmatpush1.msra.mxu0 %v5473
    %6679 = vmatprep.subr.mxu0 %v5482
    %6680 = vmatpush1.msra.mxu0 %v5481
    %6681 = vmatprep.subr.mxu0 %v5490
    %6682 = vmatpush1.msra.mxu0 %v5489
    %6683 = vmatprep.subr.mxu0 %v5498
    %6684 = vmatpush1.msra.mxu0 %v5497
    %6685 = vmatprep.mubr.f32.mxu0 %v5232
    %6686 = vmatmul.mubr.f32.gmra.mrb[0].mxu0 %v5231
    %v6687 = vpop.f32.mrb[0].mxu0
    %v6688 = vadd.f32 %v6284, %v6687
    %v6689 = vpop.f32.mrb[0].mxu0
    %v6690 = vadd.f32 %v6288, %v6689
    %6691 = vmatprep.mubr.f32.mxu0 %v5240
    %6692 = vmatmul.mubr.f32.gmra.mrb[0].mxu0 %v5239
    %v6693 = vpop.f32.mrb[0].mxu0
    %v6694 = vadd.f32 %v6284, %v6693
    %v6695 = vpop.f32.mrb[0].mxu0
    %v6696 = vadd.f32 %v6288, %v6695
    %6697 = vdwg.mxu0
    %6698 = vmatprep.subr.mxu0 %v5506
    %6699 = vmatpush1.msra.mxu0 %v5505
    %6700 = vmatprep.subr.mxu0 %v5514
    %6701 = vmatpush1.msra.mxu0 %v5513
    %6702 = vmatprep.subr.mxu0 %v5522
    %6703 = vmatpush1.msra.mxu0 %v5521
    %6704 = vmatprep.subr.mxu0 %v5530
    %6705 = vmatpush1.msra.mxu0 %v5529
    %6706 = vmatprep.subr.mxu0 %v5538
    %6707 = vmatpush1.msra.mxu0 %v5537
    %6708 = vmatprep.subr.mxu0 %v5546
    %6709 = vmatpush1.msra.mxu0 %v5545
    %6710 = vmatprep.subr.mxu0 %v5554
    %6711 = vmatpush1.msra.mxu0 %v5553
    %6712 = vmatprep.subr.mxu0 %v5562
    %6713 = vmatpush1.msra.mxu0 %v5561
    %6714 = vmatprep.subr.mxu0 %v5570
    %6715 = vmatpush1.msra.mxu0 %v5569
    %6716 = vmatprep.subr.mxu0 %v5578
    %6717 = vmatpush1.msra.mxu0 %v5577
    %6718 = vmatprep.subr.mxu0 %v5586
    %6719 = vmatpush1.msra.mxu0 %v5585
    %6720 = vmatprep.subr.mxu0 %v5594
    %6721 = vmatpush1.msra.mxu0 %v5593
    %6722 = vmatprep.subr.mxu0 %v5602
    %6723 = vmatpush1.msra.mxu0 %v5601
    %6724 = vmatprep.subr.mxu0 %v5610
    %6725 = vmatpush1.msra.mxu0 %v5609
    %6726 = vmatprep.subr.mxu0 %v5618
    %6727 = vmatpush1.msra.mxu0 %v5617
    %6728 = vmatprep.subr.mxu0 %v5626
    %6729 = vmatpush1.msra.mxu0 %v5625
    %6730 = vmatprep.subr.mxu0 %v5634
    %6731 = vmatpush1.msra.mxu0 %v5633
    %6732 = vmatprep.subr.mxu0 %v5642
    %6733 = vmatpush1.msra.mxu0 %v5641
    %6734 = vmatprep.subr.mxu0 %v5650
    %6735 = vmatpush1.msra.mxu0 %v5649
    %6736 = vmatprep.subr.mxu0 %v5658
    %6737 = vmatpush1.msra.mxu0 %v5657
    %6738 = vmatprep.subr.mxu0 %v5666
    %6739 = vmatpush1.msra.mxu0 %v5665
    %6740 = vmatprep.subr.mxu0 %v5674
    %6741 = vmatpush1.msra.mxu0 %v5673
    %6742 = vmatprep.subr.mxu0 %v5682
    %6743 = vmatpush1.msra.mxu0 %v5681
    %6744 = vmatprep.subr.mxu0 %v5690
    %6745 = vmatpush1.msra.mxu0 %v5689
    %6746 = vmatprep.subr.mxu0 %v5698
    %6747 = vmatpush1.msra.mxu0 %v5697
    %6748 = vmatprep.subr.mxu0 %v5706
    %6749 = vmatpush1.msra.mxu0 %v5705
    %6750 = vmatprep.subr.mxu0 %v5714
    %6751 = vmatpush1.msra.mxu0 %v5713
    %6752 = vmatprep.subr.mxu0 %v5722
    %6753 = vmatpush1.msra.mxu0 %v5721
    %6754 = vmatprep.subr.mxu0 %v5730
    %6755 = vmatpush1.msra.mxu0 %v5729
    %6756 = vmatprep.subr.mxu0 %v5738
    %6757 = vmatpush1.msra.mxu0 %v5737
    %6758 = vmatprep.subr.mxu0 %v5746
    %6759 = vmatpush1.msra.mxu0 %v5745
    %6760 = vmatprep.subr.mxu0 %v5754
    %6761 = vmatpush1.msra.mxu0 %v5753
    %6762 = vmatprep.mubr.f32.mxu0 %v5234
    %6763 = vmatmul.mubr.f32.gmra.mrb[0].mxu0 %v5233
    %v6764 = vpop.f32.mrb[0].mxu0
    %v6765 = vadd.f32 %v6688, %v6764
    %v6766 = vpop.f32.mrb[0].mxu0
    %v6767 = vadd.f32 %v6690, %v6766
    %6768 = vmatprep.mubr.f32.mxu0 %v5242
    %6769 = vmatmul.mubr.f32.gmra.mrb[0].mxu0 %v5241
    %v6770 = vpop.f32.mrb[0].mxu0
    %v6771 = vadd.f32 %v6694, %v6770
    %v6772 = vpop.f32.mrb[0].mxu0
    %v6773 = vadd.f32 %v6696, %v6772
    %6774 = vdwg.mxu0
    %6775 = vmatprep.subr.mxu0 %v5762
    %6776 = vmatpush1.msra.mxu0 %v5761
    %6777 = vmatprep.subr.mxu0 %v5770
    %6778 = vmatpush1.msra.mxu0 %v5769
    %6779 = vmatprep.subr.mxu0 %v5778
    %6780 = vmatpush1.msra.mxu0 %v5777
    %6781 = vmatprep.subr.mxu0 %v5786
    %6782 = vmatpush1.msra.mxu0 %v5785
    %6783 = vmatprep.subr.mxu0 %v5794
    %6784 = vmatpush1.msra.mxu0 %v5793
    %6785 = vmatprep.subr.mxu0 %v5802
    %6786 = vmatpush1.msra.mxu0 %v5801
    %6787 = vmatprep.subr.mxu0 %v5810
    %6788 = vmatpush1.msra.mxu0 %v5809
    %6789 = vmatprep.subr.mxu0 %v5818
    %6790 = vmatpush1.msra.mxu0 %v5817
    %6791 = vmatprep.subr.mxu0 %v5826
    %6792 = vmatpush1.msra.mxu0 %v5825
    %6793 = vmatprep.subr.mxu0 %v5834
    %6794 = vmatpush1.msra.mxu0 %v5833
    %6795 = vmatprep.subr.mxu0 %v5842
    %6796 = vmatpush1.msra.mxu0 %v5841
    %6797 = vmatprep.subr.mxu0 %v5850
    %6798 = vmatpush1.msra.mxu0 %v5849
    %6799 = vmatprep.subr.mxu0 %v5858
    %6800 = vmatpush1.msra.mxu0 %v5857
    %6801 = vmatprep.subr.mxu0 %v5866
    %6802 = vmatpush1.msra.mxu0 %v5865
    %6803 = vmatprep.subr.mxu0 %v5874
    %6804 = vmatpush1.msra.mxu0 %v5873
    %6805 = vmatprep.subr.mxu0 %v5882
    %6806 = vmatpush1.msra.mxu0 %v5881
    %6807 = vmatprep.subr.mxu0 %v5890
    %6808 = vmatpush1.msra.mxu0 %v5889
    %6809 = vmatprep.subr.mxu0 %v5898
    %6810 = vmatpush1.msra.mxu0 %v5897
    %6811 = vmatprep.subr.mxu0 %v5906
    %6812 = vmatpush1.msra.mxu0 %v5905
    %6813 = vmatprep.subr.mxu0 %v5914
    %6814 = vmatpush1.msra.mxu0 %v5913
    %6815 = vmatprep.subr.mxu0 %v5922
    %6816 = vmatpush1.msra.mxu0 %v5921
    %6817 = vmatprep.subr.mxu0 %v5930
    %6818 = vmatpush1.msra.mxu0 %v5929
    %6819 = vmatprep.subr.mxu0 %v5938
    %6820 = vmatpush1.msra.mxu0 %v5937
    %6821 = vmatprep.subr.mxu0 %v5946
    %6822 = vmatpush1.msra.mxu0 %v5945
    %6823 = vmatprep.subr.mxu0 %v5954
    %6824 = vmatpush1.msra.mxu0 %v5953
    %6825 = vmatprep.subr.mxu0 %v5962
    %6826 = vmatpush1.msra.mxu0 %v5961
    %6827 = vmatprep.subr.mxu0 %v5970
    %6828 = vmatpush1.msra.mxu0 %v5969
    %6829 = vmatprep.subr.mxu0 %v5978
    %6830 = vmatpush1.msra.mxu0 %v5977
    %6831 = vmatprep.subr.mxu0 %v5986
    %6832 = vmatpush1.msra.mxu0 %v5985
    %6833 = vmatprep.subr.mxu0 %v5994
    %6834 = vmatpush1.msra.mxu0 %v5993
    %6835 = vmatprep.subr.mxu0 %v6002
    %6836 = vmatpush1.msra.mxu0 %v6001
    %6837 = vmatprep.subr.mxu0 %v6010
    %6838 = vmatpush1.msra.mxu0 %v6009
    %6839 = vmatprep.mubr.f32.mxu0 %v5236
    %6840 = vmatmul.mubr.f32.gmra.mrb[0].mxu0 %v5235
    %v6841 = vpop.f32.mrb[0].mxu0
    %v6842 = vadd.f32 %v6765, %v6841
    %v6843 = vpop.f32.mrb[0].mxu0
    %v6844 = vadd.f32 %v6767, %v6843
    %6845 = vmatprep.mubr.f32.mxu0 %v5244
    %6846 = vmatmul.mubr.f32.gmra.mrb[0].mxu0 %v5243
    %v6847 = vpop.f32.mrb[0].mxu0
    %v6848 = vadd.f32 %v6771, %v6847
    %v6849 = vpop.f32.mrb[0].mxu0
    %v6850 = vadd.f32 %v6773, %v6849
    %6851 = vdwg.mxu0
    %6852 = vmatprep.subr.mxu0 %v6018
    %6853 = vmatpush1.msra.mxu0 %v6017
    %6854 = vmatprep.subr.mxu0 %v6026
    %6855 = vmatpush1.msra.mxu0 %v6025
    %6856 = vmatprep.subr.mxu0 %v6034
    %6857 = vmatpush1.msra.mxu0 %v6033
    %6858 = vmatprep.subr.mxu0 %v6042
    %6859 = vmatpush1.msra.mxu0 %v6041
    %6860 = vmatprep.subr.mxu0 %v6050
    %6861 = vmatpush1.msra.mxu0 %v6049
    %6862 = vmatprep.subr.mxu0 %v6058
    %6863 = vmatpush1.msra.mxu0 %v6057
    %6864 = vmatprep.subr.mxu0 %v6066
    %6865 = vmatpush1.msra.mxu0 %v6065
    %6866 = vmatprep.subr.mxu0 %v6074
    %6867 = vmatpush1.msra.mxu0 %v6073
    %6868 = vmatprep.subr.mxu0 %v6082
    %6869 = vmatpush1.msra.mxu0 %v6081
    %6870 = vmatprep.subr.mxu0 %v6090
    %6871 = vmatpush1.msra.mxu0 %v6089
    %6872 = vmatprep.subr.mxu0 %v6098
    %6873 = vmatpush1.msra.mxu0 %v6097
    %6874 = vmatprep.subr.mxu0 %v6106
    %6875 = vmatpush1.msra.mxu0 %v6105
    %6876 = vmatprep.subr.mxu0 %v6114
    %6877 = vmatpush1.msra.mxu0 %v6113
    %6878 = vmatprep.subr.mxu0 %v6122
    %6879 = vmatpush1.msra.mxu0 %v6121
    %6880 = vmatprep.subr.mxu0 %v6130
    %6881 = vmatpush1.msra.mxu0 %v6129
    %6882 = vmatprep.subr.mxu0 %v6138
    %6883 = vmatpush1.msra.mxu0 %v6137
    %6884 = vmatprep.subr.mxu0 %v6146
    %6885 = vmatpush1.msra.mxu0 %v6145
    %6886 = vmatprep.subr.mxu0 %v6154
    %6887 = vmatpush1.msra.mxu0 %v6153
    %6888 = vmatprep.subr.mxu0 %v6162
    %6889 = vmatpush1.msra.mxu0 %v6161
    %6890 = vmatprep.subr.mxu0 %v6170
    %6891 = vmatpush1.msra.mxu0 %v6169
    %6892 = vmatprep.subr.mxu0 %v6178
    %6893 = vmatpush1.msra.mxu0 %v6177
    %6894 = vmatprep.subr.mxu0 %v6186
    %6895 = vmatpush1.msra.mxu0 %v6185
    %6896 = vmatprep.subr.mxu0 %v6194
    %6897 = vmatpush1.msra.mxu0 %v6193
    %6898 = vmatprep.subr.mxu0 %v6202
    %6899 = vmatpush1.msra.mxu0 %v6201
    %6900 = vmatprep.subr.mxu0 %v6210
    %6901 = vmatpush1.msra.mxu0 %v6209
    %6902 = vmatprep.subr.mxu0 %v6218
    %6903 = vmatpush1.msra.mxu0 %v6217
    %6904 = vmatprep.subr.mxu0 %v6226
    %6905 = vmatpush1.msra.mxu0 %v6225
    %6906 = vmatprep.subr.mxu0 %v6234
    %6907 = vmatpush1.msra.mxu0 %v6233
    %6908 = vmatprep.subr.mxu0 %v6242
    %6909 = vmatpush1.msra.mxu0 %v6241
    %6910 = vmatprep.subr.mxu0 %v6250
    %6911 = vmatpush1.msra.mxu0 %v6249
    %6912 = vmatprep.subr.mxu0 %v6258
    %6913 = vmatpush1.msra.mxu0 %v6257
    %6914 = vmatprep.subr.mxu0 %v6266
    %6915 = vmatpush1.msra.mxu0 %v6265
    %6916 = vmatprep.mubr.f32.mxu0 %v5238
    %6917 = vmatmul.mubr.f32.gmra.mrb[0].mxu0 %v5237
    %v6918 = vpop.f32.mrb[0].mxu0
    %v6919 = vadd.f32 %v6842, %v6918
    %v6920 = vpop.f32.mrb[0].mxu0
    %v6921 = vadd.f32 %v6844, %v6920
    %6922 = vmatprep.mubr.f32.mxu0 %v5246
    %6923 = vmatmul.mubr.f32.gmra.mrb[0].mxu0 %v5245
    %v6924 = vpop.f32.mrb[0].mxu0
    %v6925 = vadd.f32 %v6848, %v6924
    %v6926 = vpop.f32.mrb[0].mxu0
    %v6927 = vadd.f32 %v6850, %v6926
    %6928 = vdwg.mxu0
    %6929 = vmatprep.subr.mxu0 %v5252
    %6930 = vmatpush1.msra.mxu0 %v5251
    %6931 = vmatprep.subr.mxu0 %v5260
    %6932 = vmatpush1.msra.mxu0 %v5259
    %6933 = vmatprep.subr.mxu0 %v5268
    %6934 = vmatpush1.msra.mxu0 %v5267
    %6935 = vmatprep.subr.mxu0 %v5276
    %6936 = vmatpush1.msra.mxu0 %v5275
    %6937 = vmatprep.subr.mxu0 %v5284
    %6938 = vmatpush1.msra.mxu0 %v5283
    %6939 = vmatprep.subr.mxu0 %v5292
    %6940 = vmatpush1.msra.mxu0 %v5291
    %6941 = vmatprep.subr.mxu0 %v5300
    %6942 = vmatpush1.msra.mxu0 %v5299
    %6943 = vmatprep.subr.mxu0 %v5308
    %6944 = vmatpush1.msra.mxu0 %v5307
    %6945 = vmatprep.subr.mxu0 %v5316
    %6946 = vmatpush1.msra.mxu0 %v5315
    %6947 = vmatprep.subr.mxu0 %v5324
    %6948 = vmatpush1.msra.mxu0 %v5323
    %6949 = vmatprep.subr.mxu0 %v5332
    %6950 = vmatpush1.msra.mxu0 %v5331
    %6951 = vmatprep.subr.mxu0 %v5340
    %6952 = vmatpush1.msra.mxu0 %v5339
    %6953 = vmatprep.subr.mxu0 %v5348
    %6954 = vmatpush1.msra.mxu0 %v5347
    %6955 = vmatprep.subr.mxu0 %v5356
    %6956 = vmatpush1.msra.mxu0 %v5355
    %6957 = vmatprep.subr.mxu0 %v5364
    %6958 = vmatpush1.msra.mxu0 %v5363
    %6959 = vmatprep.subr.mxu0 %v5372
    %6960 = vmatpush1.msra.mxu0 %v5371
    %6961 = vmatprep.subr.mxu0 %v5380
    %6962 = vmatpush1.msra.mxu0 %v5379
    %6963 = vmatprep.subr.mxu0 %v5388
    %6964 = vmatpush1.msra.mxu0 %v5387
    %6965 = vmatprep.subr.mxu0 %v5396
    %6966 = vmatpush1.msra.mxu0 %v5395
    %6967 = vmatprep.subr.mxu0 %v5404
    %6968 = vmatpush1.msra.mxu0 %v5403
    %6969 = vmatprep.subr.mxu0 %v5412
    %6970 = vmatpush1.msra.mxu0 %v5411
    %6971 = vmatprep.subr.mxu0 %v5420
    %6972 = vmatpush1.msra.mxu0 %v5419
    %6973 = vmatprep.subr.mxu0 %v5428
    %6974 = vmatpush1.msra.mxu0 %v5427
    %6975 = vmatprep.subr.mxu0 %v5436
    %6976 = vmatpush1.msra.mxu0 %v5435
    %6977 = vmatprep.subr.mxu0 %v5444
    %6978 = vmatpush1.msra.mxu0 %v5443
    %6979 = vmatprep.subr.mxu0 %v5452
    %6980 = vmatpush1.msra.mxu0 %v5451
    %6981 = vmatprep.subr.mxu0 %v5460
    %6982 = vmatpush1.msra.mxu0 %v5459
    %6983 = vmatprep.subr.mxu0 %v5468
    %6984 = vmatpush1.msra.mxu0 %v5467
    %6985 = vmatprep.subr.mxu0 %v5476
    %6986 = vmatpush1.msra.mxu0 %v5475
    %6987 = vmatprep.subr.mxu0 %v5484
    %6988 = vmatpush1.msra.mxu0 %v5483
    %6989 = vmatprep.subr.mxu0 %v5492
    %6990 = vmatpush1.msra.mxu0 %v5491
    %6991 = vmatprep.subr.mxu0 %v5500
    %6992 = vmatpush1.msra.mxu0 %v5499
    %6993 = vmatprep.mubr.f32.mxu0 %v5232
    %6994 = vmatmul.mubr.f32.gmra.mrb[0].mxu0 %v5231
    %v6995 = vpop.f32.mrb[0].mxu0
    %v6996 = vadd.f32 %v6292, %v6995
    %v6997 = vpop.f32.mrb[0].mxu0
    %v6998 = vadd.f32 %v6296, %v6997
    %6999 = vmatprep.mubr.f32.mxu0 %v5240
    %7000 = vmatmul.mubr.f32.gmra.mrb[0].mxu0 %v5239
    %v7001 = vpop.f32.mrb[0].mxu0
    %v7002 = vadd.f32 %v6292, %v7001
    %v7003 = vpop.f32.mrb[0].mxu0
    %v7004 = vadd.f32 %v6296, %v7003
    %7005 = vdwg.mxu0
    %7006 = vmatprep.subr.mxu0 %v5508
    %7007 = vmatpush1.msra.mxu0 %v5507
    %7008 = vmatprep.subr.mxu0 %v5516
    %7009 = vmatpush1.msra.mxu0 %v5515
    %7010 = vmatprep.subr.mxu0 %v5524
    %7011 = vmatpush1.msra.mxu0 %v5523
    %7012 = vmatprep.subr.mxu0 %v5532
    %7013 = vmatpush1.msra.mxu0 %v5531
    %7014 = vmatprep.subr.mxu0 %v5540
    %7015 = vmatpush1.msra.mxu0 %v5539
    %7016 = vmatprep.subr.mxu0 %v5548
    %7017 = vmatpush1.msra.mxu0 %v5547
    %7018 = vmatprep.subr.mxu0 %v5556
    %7019 = vmatpush1.msra.mxu0 %v5555
    %7020 = vmatprep.subr.mxu0 %v5564
    %7021 = vmatpush1.msra.mxu0 %v5563
    %7022 = vmatprep.subr.mxu0 %v5572
    %7023 = vmatpush1.msra.mxu0 %v5571
    %7024 = vmatprep.subr.mxu0 %v5580
    %7025 = vmatpush1.msra.mxu0 %v5579
    %7026 = vmatprep.subr.mxu0 %v5588
    %7027 = vmatpush1.msra.mxu0 %v5587
    %7028 = vmatprep.subr.mxu0 %v5596
    %7029 = vmatpush1.msra.mxu0 %v5595
    %7030 = vmatprep.subr.mxu0 %v5604
    %7031 = vmatpush1.msra.mxu0 %v5603
    %7032 = vmatprep.subr.mxu0 %v5612
    %7033 = vmatpush1.msra.mxu0 %v5611
    %7034 = vmatprep.subr.mxu0 %v5620
    %7035 = vmatpush1.msra.mxu0 %v5619
    %7036 = vmatprep.subr.mxu0 %v5628
    %7037 = vmatpush1.msra.mxu0 %v5627
    %7038 = vmatprep.subr.mxu0 %v5636
    %7039 = vmatpush1.msra.mxu0 %v5635
    %7040 = vmatprep.subr.mxu0 %v5644
    %7041 = vmatpush1.msra.mxu0 %v5643
    %7042 = vmatprep.subr.mxu0 %v5652
    %7043 = vmatpush1.msra.mxu0 %v5651
    %7044 = vmatprep.subr.mxu0 %v5660
    %7045 = vmatpush1.msra.mxu0 %v5659
    %7046 = vmatprep.subr.mxu0 %v5668
    %7047 = vmatpush1.msra.mxu0 %v5667
    %7048 = vmatprep.subr.mxu0 %v5676
    %7049 = vmatpush1.msra.mxu0 %v5675
    %7050 = vmatprep.subr.mxu0 %v5684
    %7051 = vmatpush1.msra.mxu0 %v5683
    %7052 = vmatprep.subr.mxu0 %v5692
    %7053 = vmatpush1.msra.mxu0 %v5691
    %7054 = vmatprep.subr.mxu0 %v5700
    %7055 = vmatpush1.msra.mxu0 %v5699
    %7056 = vmatprep.subr.mxu0 %v5708
    %7057 = vmatpush1.msra.mxu0 %v5707
    %7058 = vmatprep.subr.mxu0 %v5716
    %7059 = vmatpush1.msra.mxu0 %v5715
    %7060 = vmatprep.subr.mxu0 %v5724
    %7061 = vmatpush1.msra.mxu0 %v5723
    %7062 = vmatprep.subr.mxu0 %v5732
    %7063 = vmatpush1.msra.mxu0 %v5731
    %7064 = vmatprep.subr.mxu0 %v5740
    %7065 = vmatpush1.msra.mxu0 %v5739
    %7066 = vmatprep.subr.mxu0 %v5748
    %7067 = vmatpush1.msra.mxu0 %v5747
    %7068 = vmatprep.subr.mxu0 %v5756
    %7069 = vmatpush1.msra.mxu0 %v5755
    %7070 = vmatprep.mubr.f32.mxu0 %v5234
    %7071 = vmatmul.mubr.f32.gmra.mrb[0].mxu0 %v5233
    %v7072 = vpop.f32.mrb[0].mxu0
    %v7073 = vadd.f32 %v6996, %v7072
    %v7074 = vpop.f32.mrb[0].mxu0
    %v7075 = vadd.f32 %v6998, %v7074
    %7076 = vmatprep.mubr.f32.mxu0 %v5242
    %7077 = vmatmul.mubr.f32.gmra.mrb[0].mxu0 %v5241
    %v7078 = vpop.f32.mrb[0].mxu0
    %v7079 = vadd.f32 %v7002, %v7078
    %v7080 = vpop.f32.mrb[0].mxu0
    %v7081 = vadd.f32 %v7004, %v7080
    %7082 = vdwg.mxu0
    %7083 = vmatprep.subr.mxu0 %v5764
    %7084 = vmatpush1.msra.mxu0 %v5763
    %7085 = vmatprep.subr.mxu0 %v5772
    %7086 = vmatpush1.msra.mxu0 %v5771
    %7087 = vmatprep.subr.mxu0 %v5780
    %7088 = vmatpush1.msra.mxu0 %v5779
    %7089 = vmatprep.subr.mxu0 %v5788
    %7090 = vmatpush1.msra.mxu0 %v5787
    %7091 = vmatprep.subr.mxu0 %v5796
    %7092 = vmatpush1.msra.mxu0 %v5795
    %7093 = vmatprep.subr.mxu0 %v5804
    %7094 = vmatpush1.msra.mxu0 %v5803
    %7095 = vmatprep.subr.mxu0 %v5812
    %7096 = vmatpush1.msra.mxu0 %v5811
    %7097 = vmatprep.subr.mxu0 %v5820
    %7098 = vmatpush1.msra.mxu0 %v5819
    %7099 = vmatprep.subr.mxu0 %v5828
    %7100 = vmatpush1.msra.mxu0 %v5827
    %7101 = vmatprep.subr.mxu0 %v5836
    %7102 = vmatpush1.msra.mxu0 %v5835
    %7103 = vmatprep.subr.mxu0 %v5844
    %7104 = vmatpush1.msra.mxu0 %v5843
    %7105 = vmatprep.subr.mxu0 %v5852
    %7106 = vmatpush1.msra.mxu0 %v5851
    %7107 = vmatprep.subr.mxu0 %v5860
    %7108 = vmatpush1.msra.mxu0 %v5859
    %7109 = vmatprep.subr.mxu0 %v5868
    %7110 = vmatpush1.msra.mxu0 %v5867
    %7111 = vmatprep.subr.mxu0 %v5876
    %7112 = vmatpush1.msra.mxu0 %v5875
    %7113 = vmatprep.subr.mxu0 %v5884
    %7114 = vmatpush1.msra.mxu0 %v5883
    %7115 = vmatprep.subr.mxu0 %v5892
    %7116 = vmatpush1.msra.mxu0 %v5891
    %7117 = vmatprep.subr.mxu0 %v5900
    %7118 = vmatpush1.msra.mxu0 %v5899
    %7119 = vmatprep.subr.mxu0 %v5908
    %7120 = vmatpush1.msra.mxu0 %v5907
    %7121 = vmatprep.subr.mxu0 %v5916
    %7122 = vmatpush1.msra.mxu0 %v5915
    %7123 = vmatprep.subr.mxu0 %v5924
    %7124 = vmatpush1.msra.mxu0 %v5923
    %7125 = vmatprep.subr.mxu0 %v5932
    %7126 = vmatpush1.msra.mxu0 %v5931
    %7127 = vmatprep.subr.mxu0 %v5940
    %7128 = vmatpush1.msra.mxu0 %v5939
    %7129 = vmatprep.subr.mxu0 %v5948
    %7130 = vmatpush1.msra.mxu0 %v5947
    %7131 = vmatprep.subr.mxu0 %v5956
    %7132 = vmatpush1.msra.mxu0 %v5955
    %7133 = vmatprep.subr.mxu0 %v5964
    %7134 = vmatpush1.msra.mxu0 %v5963
    %7135 = vmatprep.subr.mxu0 %v5972
    %7136 = vmatpush1.msra.mxu0 %v5971
    %7137 = vmatprep.subr.mxu0 %v5980
    %7138 = vmatpush1.msra.mxu0 %v5979
    %7139 = vmatprep.subr.mxu0 %v5988
    %7140 = vmatpush1.msra.mxu0 %v5987
    %7141 = vmatprep.subr.mxu0 %v5996
    %7142 = vmatpush1.msra.mxu0 %v5995
    %7143 = vmatprep.subr.mxu0 %v6004
    %7144 = vmatpush1.msra.mxu0 %v6003
    %7145 = vmatprep.subr.mxu0 %v6012
    %7146 = vmatpush1.msra.mxu0 %v6011
    %7147 = vmatprep.mubr.f32.mxu0 %v5236
    %7148 = vmatmul.mubr.f32.gmra.mrb[0].mxu0 %v5235
    %v7149 = vpop.f32.mrb[0].mxu0
    %v7150 = vadd.f32 %v7073, %v7149
    %v7151 = vpop.f32.mrb[0].mxu0
    %v7152 = vadd.f32 %v7075, %v7151
    %7153 = vmatprep.mubr.f32.mxu0 %v5244
    %7154 = vmatmul.mubr.f32.gmra.mrb[0].mxu0 %v5243
    %v7155 = vpop.f32.mrb[0].mxu0
    %v7156 = vadd.f32 %v7079, %v7155
    %v7157 = vpop.f32.mrb[0].mxu0
    %v7158 = vadd.f32 %v7081, %v7157
    %7159 = vdwg.mxu0
    %7160 = vmatprep.subr.mxu0 %v6020
    %7161 = vmatpush1.msra.mxu0 %v6019
    %7162 = vmatprep.subr.mxu0 %v6028
    %7163 = vmatpush1.msra.mxu0 %v6027
    %7164 = vmatprep.subr.mxu0 %v6036
    %7165 = vmatpush1.msra.mxu0 %v6035
    %7166 = vmatprep.subr.mxu0 %v6044
    %7167 = vmatpush1.msra.mxu0 %v6043
    %7168 = vmatprep.subr.mxu0 %v6052
    %7169 = vmatpush1.msra.mxu0 %v6051
    %7170 = vmatprep.subr.mxu0 %v6060
    %7171 = vmatpush1.msra.mxu0 %v6059
    %7172 = vmatprep.subr.mxu0 %v6068
    %7173 = vmatpush1.msra.mxu0 %v6067
    %7174 = vmatprep.subr.mxu0 %v6076
    %7175 = vmatpush1.msra.mxu0 %v6075
    %7176 = vmatprep.subr.mxu0 %v6084
    %7177 = vmatpush1.msra.mxu0 %v6083
    %7178 = vmatprep.subr.mxu0 %v6092
    %7179 = vmatpush1.msra.mxu0 %v6091
    %7180 = vmatprep.subr.mxu0 %v6100
    %7181 = vmatpush1.msra.mxu0 %v6099
    %7182 = vmatprep.subr.mxu0 %v6108
    %7183 = vmatpush1.msra.mxu0 %v6107
    %7184 = vmatprep.subr.mxu0 %v6116
    %7185 = vmatpush1.msra.mxu0 %v6115
    %7186 = vmatprep.subr.mxu0 %v6124
    %7187 = vmatpush1.msra.mxu0 %v6123
    %7188 = vmatprep.subr.mxu0 %v6132
    %7189 = vmatpush1.msra.mxu0 %v6131
    %7190 = vmatprep.subr.mxu0 %v6140
    %7191 = vmatpush1.msra.mxu0 %v6139
    %7192 = vmatprep.subr.mxu0 %v6148
    %7193 = vmatpush1.msra.mxu0 %v6147
    %7194 = vmatprep.subr.mxu0 %v6156
    %7195 = vmatpush1.msra.mxu0 %v6155
    %7196 = vmatprep.subr.mxu0 %v6164
    %7197 = vmatpush1.msra.mxu0 %v6163
    %7198 = vmatprep.subr.mxu0 %v6172
    %7199 = vmatpush1.msra.mxu0 %v6171
    %7200 = vmatprep.subr.mxu0 %v6180
    %7201 = vmatpush1.msra.mxu0 %v6179
    %7202 = vmatprep.subr.mxu0 %v6188
    %7203 = vmatpush1.msra.mxu0 %v6187
    %7204 = vmatprep.subr.mxu0 %v6196
    %7205 = vmatpush1.msra.mxu0 %v6195
    %7206 = vmatprep.subr.mxu0 %v6204
    %7207 = vmatpush1.msra.mxu0 %v6203
    %7208 = vmatprep.subr.mxu0 %v6212
    %7209 = vmatpush1.msra.mxu0 %v6211
    %7210 = vmatprep.subr.mxu0 %v6220
    %7211 = vmatpush1.msra.mxu0 %v6219
    %7212 = vmatprep.subr.mxu0 %v6228
    %7213 = vmatpush1.msra.mxu0 %v6227
    %7214 = vmatprep.subr.mxu0 %v6236
    %7215 = vmatpush1.msra.mxu0 %v6235
    %7216 = vmatprep.subr.mxu0 %v6244
    %7217 = vmatpush1.msra.mxu0 %v6243
    %7218 = vmatprep.subr.mxu0 %v6252
    %7219 = vmatpush1.msra.mxu0 %v6251
    %7220 = vmatprep.subr.mxu0 %v6260
    %7221 = vmatpush1.msra.mxu0 %v6259
    %7222 = vmatprep.subr.mxu0 %v6268
    %7223 = vmatpush1.msra.mxu0 %v6267
    %7224 = vmatprep.mubr.f32.mxu0 %v5238
    %7225 = vmatmul.mubr.f32.gmra.mrb[0].mxu0 %v5237
    %v7226 = vpop.f32.mrb[0].mxu0
    %v7227 = vadd.f32 %v7150, %v7226
    %v7228 = vpop.f32.mrb[0].mxu0
    %v7229 = vadd.f32 %v7152, %v7228
    %7230 = vmatprep.mubr.f32.mxu0 %v5246
    %7231 = vmatmul.mubr.f32.gmra.mrb[0].mxu0 %v5245
    %v7232 = vpop.f32.mrb[0].mxu0
    %v7233 = vadd.f32 %v7156, %v7232
    %v7234 = vpop.f32.mrb[0].mxu0
    %v7235 = vadd.f32 %v7158, %v7234
    %7236 = vdwg.mxu0
    %7237 = vmatprep.subr.mxu0 %v5254
    %7238 = vmatpush1.msra.mxu0 %v5253
    %7239 = vmatprep.subr.mxu0 %v5262
    %7240 = vmatpush1.msra.mxu0 %v5261
    %7241 = vmatprep.subr.mxu0 %v5270
    %7242 = vmatpush1.msra.mxu0 %v5269
    %7243 = vmatprep.subr.mxu0 %v5278
    %7244 = vmatpush1.msra.mxu0 %v5277
    %7245 = vmatprep.subr.mxu0 %v5286
    %7246 = vmatpush1.msra.mxu0 %v5285
    %7247 = vmatprep.subr.mxu0 %v5294
    %7248 = vmatpush1.msra.mxu0 %v5293
    %7249 = vmatprep.subr.mxu0 %v5302
    %7250 = vmatpush1.msra.mxu0 %v5301
    %7251 = vmatprep.subr.mxu0 %v5310
    %7252 = vmatpush1.msra.mxu0 %v5309
    %7253 = vmatprep.subr.mxu0 %v5318
    %7254 = vmatpush1.msra.mxu0 %v5317
    %7255 = vmatprep.subr.mxu0 %v5326
    %7256 = vmatpush1.msra.mxu0 %v5325
    %7257 = vmatprep.subr.mxu0 %v5334
    %7258 = vmatpush1.msra.mxu0 %v5333
    %7259 = vmatprep.subr.mxu0 %v5342
    %7260 = vmatpush1.msra.mxu0 %v5341
    %7261 = vmatprep.subr.mxu0 %v5350
    %7262 = vmatpush1.msra.mxu0 %v5349
    %7263 = vmatprep.subr.mxu0 %v5358
    %7264 = vmatpush1.msra.mxu0 %v5357
    %7265 = vmatprep.subr.mxu0 %v5366
    %7266 = vmatpush1.msra.mxu0 %v5365
    %7267 = vmatprep.subr.mxu0 %v5374
    %7268 = vmatpush1.msra.mxu0 %v5373
    %7269 = vmatprep.subr.mxu0 %v5382
    %7270 = vmatpush1.msra.mxu0 %v5381
    %7271 = vmatprep.subr.mxu0 %v5390
    %7272 = vmatpush1.msra.mxu0 %v5389
    %7273 = vmatprep.subr.mxu0 %v5398
    %7274 = vmatpush1.msra.mxu0 %v5397
    %7275 = vmatprep.subr.mxu0 %v5406
    %7276 = vmatpush1.msra.mxu0 %v5405
    %7277 = vmatprep.subr.mxu0 %v5414
    %7278 = vmatpush1.msra.mxu0 %v5413
    %7279 = vmatprep.subr.mxu0 %v5422
    %7280 = vmatpush1.msra.mxu0 %v5421
    %7281 = vmatprep.subr.mxu0 %v5430
    %7282 = vmatpush1.msra.mxu0 %v5429
    %7283 = vmatprep.subr.mxu0 %v5438
    %7284 = vmatpush1.msra.mxu0 %v5437
    %7285 = vmatprep.subr.mxu0 %v5446
    %7286 = vmatpush1.msra.mxu0 %v5445
    %7287 = vmatprep.subr.mxu0 %v5454
    %7288 = vmatpush1.msra.mxu0 %v5453
    %7289 = vmatprep.subr.mxu0 %v5462
    %7290 = vmatpush1.msra.mxu0 %v5461
    %7291 = vmatprep.subr.mxu0 %v5470
    %7292 = vmatpush1.msra.mxu0 %v5469
    %7293 = vmatprep.subr.mxu0 %v5478
    %7294 = vmatpush1.msra.mxu0 %v5477
    %7295 = vmatprep.subr.mxu0 %v5486
    %7296 = vmatpush1.msra.mxu0 %v5485
    %7297 = vmatprep.subr.mxu0 %v5494
    %7298 = vmatpush1.msra.mxu0 %v5493
    %7299 = vmatprep.subr.mxu0 %v5502
    %7300 = vmatpush1.msra.mxu0 %v5501
    %7301 = vmatprep.mubr.f32.mxu0 %v5232
    %7302 = vmatmul.mubr.f32.gmra.mrb[0].mxu0 %v5231
    %v7303 = vpop.f32.mrb[0].mxu0
    %v7304 = vadd.f32 %v6300, %v7303
    %v7305 = vpop.f32.mrb[0].mxu0
    %v7306 = vadd.f32 %v6304, %v7305
    %7307 = vmatprep.mubr.f32.mxu0 %v5240
    %7308 = vmatmul.mubr.f32.gmra.mrb[0].mxu0 %v5239
    %v7309 = vpop.f32.mrb[0].mxu0
    %v7310 = vadd.f32 %v6300, %v7309
    %v7311 = vpop.f32.mrb[0].mxu0
    %v7312 = vadd.f32 %v6304, %v7311
    %7313 = vdwg.mxu0
    %7314 = vmatprep.subr.mxu0 %v5510
    %7315 = vmatpush1.msra.mxu0 %v5509
    %7316 = vmatprep.subr.mxu0 %v5518
    %7317 = vmatpush1.msra.mxu0 %v5517
    %7318 = vmatprep.subr.mxu0 %v5526
    %7319 = vmatpush1.msra.mxu0 %v5525
    %7320 = vmatprep.subr.mxu0 %v5534
    %7321 = vmatpush1.msra.mxu0 %v5533
    %7322 = vmatprep.subr.mxu0 %v5542
    %7323 = vmatpush1.msra.mxu0 %v5541
    %7324 = vmatprep.subr.mxu0 %v5550
    %7325 = vmatpush1.msra.mxu0 %v5549
    %7326 = vmatprep.subr.mxu0 %v5558
    %7327 = vmatpush1.msra.mxu0 %v5557
    %7328 = vmatprep.subr.mxu0 %v5566
    %7329 = vmatpush1.msra.mxu0 %v5565
    %7330 = vmatprep.subr.mxu0 %v5574
    %7331 = vmatpush1.msra.mxu0 %v5573
    %7332 = vmatprep.subr.mxu0 %v5582
    %7333 = vmatpush1.msra.mxu0 %v5581
    %7334 = vmatprep.subr.mxu0 %v5590
    %7335 = vmatpush1.msra.mxu0 %v5589
    %7336 = vmatprep.subr.mxu0 %v5598
    %7337 = vmatpush1.msra.mxu0 %v5597
    %7338 = vmatprep.subr.mxu0 %v5606
    %7339 = vmatpush1.msra.mxu0 %v5605
    %7340 = vmatprep.subr.mxu0 %v5614
    %7341 = vmatpush1.msra.mxu0 %v5613
    %7342 = vmatprep.subr.mxu0 %v5622
    %7343 = vmatpush1.msra.mxu0 %v5621
    %7344 = vmatprep.subr.mxu0 %v5630
    %7345 = vmatpush1.msra.mxu0 %v5629
    %7346 = vmatprep.subr.mxu0 %v5638
    %7347 = vmatpush1.msra.mxu0 %v5637
    %7348 = vmatprep.subr.mxu0 %v5646
    %7349 = vmatpush1.msra.mxu0 %v5645
    %7350 = vmatprep.subr.mxu0 %v5654
    %7351 = vmatpush1.msra.mxu0 %v5653
    %7352 = vmatprep.subr.mxu0 %v5662
    %7353 = vmatpush1.msra.mxu0 %v5661
    %7354 = vmatprep.subr.mxu0 %v5670
    %7355 = vmatpush1.msra.mxu0 %v5669
    %7356 = vmatprep.subr.mxu0 %v5678
    %7357 = vmatpush1.msra.mxu0 %v5677
    %7358 = vmatprep.subr.mxu0 %v5686
    %7359 = vmatpush1.msra.mxu0 %v5685
    %7360 = vmatprep.subr.mxu0 %v5694
    %7361 = vmatpush1.msra.mxu0 %v5693
    %7362 = vmatprep.subr.mxu0 %v5702
    %7363 = vmatpush1.msra.mxu0 %v5701
    %7364 = vmatprep.subr.mxu0 %v5710
    %7365 = vmatpush1.msra.mxu0 %v5709
    %7366 = vmatprep.subr.mxu0 %v5718
    %7367 = vmatpush1.msra.mxu0 %v5717
    %7368 = vmatprep.subr.mxu0 %v5726
    %7369 = vmatpush1.msra.mxu0 %v5725
    %7370 = vmatprep.subr.mxu0 %v5734
    %7371 = vmatpush1.msra.mxu0 %v5733
    %7372 = vmatprep.subr.mxu0 %v5742
    %7373 = vmatpush1.msra.mxu0 %v5741
    %7374 = vmatprep.subr.mxu0 %v5750
    %7375 = vmatpush1.msra.mxu0 %v5749
    %7376 = vmatprep.subr.mxu0 %v5758
    %7377 = vmatpush1.msra.mxu0 %v5757
    %7378 = vmatprep.mubr.f32.mxu0 %v5234
    %7379 = vmatmul.mubr.f32.gmra.mrb[0].mxu0 %v5233
    %v7380 = vpop.f32.mrb[0].mxu0
    %v7381 = vadd.f32 %v7304, %v7380
    %v7382 = vpop.f32.mrb[0].mxu0
    %v7383 = vadd.f32 %v7306, %v7382
    %7384 = vmatprep.mubr.f32.mxu0 %v5242
    %7385 = vmatmul.mubr.f32.gmra.mrb[0].mxu0 %v5241
    %v7386 = vpop.f32.mrb[0].mxu0
    %v7387 = vadd.f32 %v7310, %v7386
    %v7388 = vpop.f32.mrb[0].mxu0
    %v7389 = vadd.f32 %v7312, %v7388
    %7390 = vdwg.mxu0
    %7391 = vmatprep.subr.mxu0 %v5766
    %7392 = vmatpush1.msra.mxu0 %v5765
    %7393 = vmatprep.subr.mxu0 %v5774
    %7394 = vmatpush1.msra.mxu0 %v5773
    %7395 = vmatprep.subr.mxu0 %v5782
    %7396 = vmatpush1.msra.mxu0 %v5781
    %7397 = vmatprep.subr.mxu0 %v5790
    %7398 = vmatpush1.msra.mxu0 %v5789
    %7399 = vmatprep.subr.mxu0 %v5798
    %7400 = vmatpush1.msra.mxu0 %v5797
    %7401 = vmatprep.subr.mxu0 %v5806
    %7402 = vmatpush1.msra.mxu0 %v5805
    %7403 = vmatprep.subr.mxu0 %v5814
    %7404 = vmatpush1.msra.mxu0 %v5813
    %7405 = vmatprep.subr.mxu0 %v5822
    %7406 = vmatpush1.msra.mxu0 %v5821
    %7407 = vmatprep.subr.mxu0 %v5830
    %7408 = vmatpush1.msra.mxu0 %v5829
    %7409 = vmatprep.subr.mxu0 %v5838
    %7410 = vmatpush1.msra.mxu0 %v5837
    %7411 = vmatprep.subr.mxu0 %v5846
    %7412 = vmatpush1.msra.mxu0 %v5845
    %7413 = vmatprep.subr.mxu0 %v5854
    %7414 = vmatpush1.msra.mxu0 %v5853
    %7415 = vmatprep.subr.mxu0 %v5862
    %7416 = vmatpush1.msra.mxu0 %v5861
    %7417 = vmatprep.subr.mxu0 %v5870
    %7418 = vmatpush1.msra.mxu0 %v5869
    %7419 = vmatprep.subr.mxu0 %v5878
    %7420 = vmatpush1.msra.mxu0 %v5877
    %7421 = vmatprep.subr.mxu0 %v5886
    %7422 = vmatpush1.msra.mxu0 %v5885
    %7423 = vmatprep.subr.mxu0 %v5894
    %7424 = vmatpush1.msra.mxu0 %v5893
    %7425 = vmatprep.subr.mxu0 %v5902
    %7426 = vmatpush1.msra.mxu0 %v5901
    %7427 = vmatprep.subr.mxu0 %v5910
    %7428 = vmatpush1.msra.mxu0 %v5909
    %7429 = vmatprep.subr.mxu0 %v5918
    %7430 = vmatpush1.msra.mxu0 %v5917
    %7431 = vmatprep.subr.mxu0 %v5926
    %7432 = vmatpush1.msra.mxu0 %v5925
    %7433 = vmatprep.subr.mxu0 %v5934
    %7434 = vmatpush1.msra.mxu0 %v5933
    %7435 = vmatprep.subr.mxu0 %v5942
    %7436 = vmatpush1.msra.mxu0 %v5941
    %7437 = vmatprep.subr.mxu0 %v5950
    %7438 = vmatpush1.msra.mxu0 %v5949
    %7439 = vmatprep.subr.mxu0 %v5958
    %7440 = vmatpush1.msra.mxu0 %v5957
    %7441 = vmatprep.subr.mxu0 %v5966
    %7442 = vmatpush1.msra.mxu0 %v5965
    %7443 = vmatprep.subr.mxu0 %v5974
    %7444 = vmatpush1.msra.mxu0 %v5973
    %7445 = vmatprep.subr.mxu0 %v5982
    %7446 = vmatpush1.msra.mxu0 %v5981
    %7447 = vmatprep.subr.mxu0 %v5990
    %7448 = vmatpush1.msra.mxu0 %v5989
    %7449 = vmatprep.subr.mxu0 %v5998
    %7450 = vmatpush1.msra.mxu0 %v5997
    %7451 = vmatprep.subr.mxu0 %v6006
    %7452 = vmatpush1.msra.mxu0 %v6005
    %7453 = vmatprep.subr.mxu0 %v6014
    %7454 = vmatpush1.msra.mxu0 %v6013
    %7455 = vmatprep.mubr.f32.mxu0 %v5236
    %7456 = vmatmul.mubr.f32.gmra.mrb[0].mxu0 %v5235
    %v7457 = vpop.f32.mrb[0].mxu0
    %v7458 = vadd.f32 %v7381, %v7457
    %v7459 = vpop.f32.mrb[0].mxu0
    %v7460 = vadd.f32 %v7383, %v7459
    %7461 = vmatprep.mubr.f32.mxu0 %v5244
    %7462 = vmatmul.mubr.f32.gmra.mrb[0].mxu0 %v5243
    %v7463 = vpop.f32.mrb[0].mxu0
    %v7464 = vadd.f32 %v7387, %v7463
    %v7465 = vpop.f32.mrb[0].mxu0
    %v7466 = vadd.f32 %v7389, %v7465
    %7467 = vdwg.mxu0
    %7468 = vmatprep.subr.mxu0 %v6022
    %7469 = vmatpush1.msra.mxu0 %v6021
    %7470 = vmatprep.subr.mxu0 %v6030
    %7471 = vmatpush1.msra.mxu0 %v6029
    %7472 = vmatprep.subr.mxu0 %v6038
    %7473 = vmatpush1.msra.mxu0 %v6037
    %7474 = vmatprep.subr.mxu0 %v6046
    %7475 = vmatpush1.msra.mxu0 %v6045
    %7476 = vmatprep.subr.mxu0 %v6054
    %7477 = vmatpush1.msra.mxu0 %v6053
    %7478 = vmatprep.subr.mxu0 %v6062
    %7479 = vmatpush1.msra.mxu0 %v6061
    %7480 = vmatprep.subr.mxu0 %v6070
    %7481 = vmatpush1.msra.mxu0 %v6069
    %7482 = vmatprep.subr.mxu0 %v6078
    %7483 = vmatpush1.msra.mxu0 %v6077
    %7484 = vmatprep.subr.mxu0 %v6086
    %7485 = vmatpush1.msra.mxu0 %v6085
    %7486 = vmatprep.subr.mxu0 %v6094
    %7487 = vmatpush1.msra.mxu0 %v6093
    %7488 = vmatprep.subr.mxu0 %v6102
    %7489 = vmatpush1.msra.mxu0 %v6101
    %7490 = vmatprep.subr.mxu0 %v6110
    %7491 = vmatpush1.msra.mxu0 %v6109
    %7492 = vmatprep.subr.mxu0 %v6118
    %7493 = vmatpush1.msra.mxu0 %v6117
    %7494 = vmatprep.subr.mxu0 %v6126
    %7495 = vmatpush1.msra.mxu0 %v6125
    %7496 = vmatprep.subr.mxu0 %v6134
    %7497 = vmatpush1.msra.mxu0 %v6133
    %7498 = vmatprep.subr.mxu0 %v6142
    %7499 = vmatpush1.msra.mxu0 %v6141
    %7500 = vmatprep.subr.mxu0 %v6150
    %7501 = vmatpush1.msra.mxu0 %v6149
    %7502 = vmatprep.subr.mxu0 %v6158
    %7503 = vmatpush1.msra.mxu0 %v6157
    %7504 = vmatprep.subr.mxu0 %v6166
    %7505 = vmatpush1.msra.mxu0 %v6165
    %7506 = vmatprep.subr.mxu0 %v6174
    %7507 = vmatpush1.msra.mxu0 %v6173
    %7508 = vmatprep.subr.mxu0 %v6182
    %7509 = vmatpush1.msra.mxu0 %v6181
    %7510 = vmatprep.subr.mxu0 %v6190
    %7511 = vmatpush1.msra.mxu0 %v6189
    %7512 = vmatprep.subr.mxu0 %v6198
    %7513 = vmatpush1.msra.mxu0 %v6197
    %7514 = vmatprep.subr.mxu0 %v6206
    %7515 = vmatpush1.msra.mxu0 %v6205
    %7516 = vmatprep.subr.mxu0 %v6214
    %7517 = vmatpush1.msra.mxu0 %v6213
    %7518 = vmatprep.subr.mxu0 %v6222
    %7519 = vmatpush1.msra.mxu0 %v6221
    %7520 = vmatprep.subr.mxu0 %v6230
    %7521 = vmatpush1.msra.mxu0 %v6229
    %7522 = vmatprep.subr.mxu0 %v6238
    %7523 = vmatpush1.msra.mxu0 %v6237
    %7524 = vmatprep.subr.mxu0 %v6246
    %7525 = vmatpush1.msra.mxu0 %v6245
    %7526 = vmatprep.subr.mxu0 %v6254
    %7527 = vmatpush1.msra.mxu0 %v6253
    %7528 = vmatprep.subr.mxu0 %v6262
    %7529 = vmatpush1.msra.mxu0 %v6261
    %7530 = vmatprep.subr.mxu0 %v6270
    %7531 = vmatpush1.msra.mxu0 %v6269
    %7532 = vmatprep.mubr.f32.mxu0 %v5238
    %7533 = vmatmul.mubr.f32.gmra.mrb[0].mxu0 %v5237
    %v7534 = vpop.f32.mrb[0].mxu0
    %v7535 = vadd.f32 %v7458, %v7534
    %v7536 = vpop.f32.mrb[0].mxu0
    %v7537 = vadd.f32 %v7460, %v7536
    %7538 = vmatprep.mubr.f32.mxu0 %v5246
    %7539 = vmatmul.mubr.f32.gmra.mrb[0].mxu0 %v5245
    %v7540 = vpop.f32.mrb[0].mxu0
    %v7541 = vadd.f32 %v7464, %v7540
    %v7542 = vpop.f32.mrb[0].mxu0
    %v7543 = vadd.f32 %v7466, %v7542
    %7544 = vdwg.mxu0
    %v7545 = vmax.f32 %v6611, 0.0
    %v7546 = vmax.f32 %v6613, 0.0
    %v7547 = vmax.f32 %v6919, 0.0
    %v7548 = vmax.f32 %v6921, 0.0
    %v7549 = vmax.f32 %v7227, 0.0
    %v7550 = vmax.f32 %v7229, 0.0
    %v7551 = vmax.f32 %v7535, 0.0
    %v7552 = vmax.f32 %v7537, 0.0
    %v7553 = vmax.f32 %v6617, 0.0
    %v7554 = vmax.f32 %v6619, 0.0
    %v7555 = vmax.f32 %v6925, 0.0
    %v7556 = vmax.f32 %v6927, 0.0
    %v7557 = vmax.f32 %v7233, 0.0
    %v7558 = vmax.f32 %v7235, 0.0
    %v7559 = vmax.f32 %v7541, 0.0
    %v7560 = vmax.f32 %v7543, 0.0
    %v7561 = vld [vmem:[#allocation17] sm:$0xff]
    %v7562 = vld [vmem:[#allocation17 + $0x8] sm:$0xff]
    %v7563 = vld [vmem:[#allocation17 + $0x10] sm:$0xff]
    %v7564 = vld [vmem:[#allocation17 + $0x18] sm:$0xff]
    %v7565 = vld [vmem:[#allocation17 + $0x20] sm:$0xff]
    %v7566 = vld [vmem:[#allocation17 + $0x28] sm:$0xff]
    %v7567 = vld [vmem:[#allocation17 + $0x30] sm:$0xff]
    %v7568 = vld [vmem:[#allocation17 + $0x38] sm:$0xff]
    %v7569 = vld [vmem:[#allocation17 + $0x40] sm:$0xff]
    %v7570 = vld [vmem:[#allocation17 + $0x48] sm:$0xff]
    %v7571 = vld [vmem:[#allocation17 + $0x50] sm:$0xff]
    %v7572 = vld [vmem:[#allocation17 + $0x58] sm:$0xff]
    %v7573 = vld [vmem:[#allocation17 + $0x60] sm:$0xff]
    %v7574 = vld [vmem:[#allocation17 + $0x68] sm:$0xff]
    %v7575 = vld [vmem:[#allocation17 + $0x70] sm:$0xff]
    %v7576 = vld [vmem:[#allocation17 + $0x78] sm:$0xff]
    %v7577 = vld [vmem:[#allocation17 + $0x80] sm:$0xff]
    %v7578 = vld [vmem:[#allocation17 + $0x88] sm:$0xff]
    %v7579 = vld [vmem:[#allocation17 + $0x90] sm:$0xff]
    %v7580 = vld [vmem:[#allocation17 + $0x98] sm:$0xff]
    %v7581 = vld [vmem:[#allocation17 + $0xa0] sm:$0xff]
    %v7582 = vld [vmem:[#allocation17 + $0xa8] sm:$0xff]
    %v7583 = vld [vmem:[#allocation17 + $0xb0] sm:$0xff]
    %v7584 = vld [vmem:[#allocation17 + $0xb8] sm:$0xff]
    %v7585 = vld [vmem:[#allocation17 + $0xc0] sm:$0xff]
    %v7586 = vld [vmem:[#allocation17 + $0xc8] sm:$0xff]
    %v7587 = vld [vmem:[#allocation17 + $0xd0] sm:$0xff]
    %v7588 = vld [vmem:[#allocation17 + $0xd8] sm:$0xff]
    %v7589 = vld [vmem:[#allocation17 + $0xe0] sm:$0xff]
    %v7590 = vld [vmem:[#allocation17 + $0xe8] sm:$0xff]
    %v7591 = vld [vmem:[#allocation17 + $0xf0] sm:$0xff]
    %v7592 = vld [vmem:[#allocation17 + $0xf8] sm:$0xff]
    %v7593 = vld [vmem:[#allocation17 + $0x100] sm:$0xff]
    %v7594 = vld [vmem:[#allocation17 + $0x108] sm:$0xff]
    %v7595 = vld [vmem:[#allocation17 + $0x110] sm:$0xff]
    %v7596 = vld [vmem:[#allocation17 + $0x118] sm:$0xff]
    %v7597 = vld [vmem:[#allocation17 + $0x120] sm:$0xff]
    %v7598 = vld [vmem:[#allocation17 + $0x128] sm:$0xff]
    %v7599 = vld [vmem:[#allocation17 + $0x130] sm:$0xff]
    %v7600 = vld [vmem:[#allocation17 + $0x138] sm:$0xff]
    %v7601 = vld [vmem:[#allocation17 + $0x140] sm:$0xff]
    %v7602 = vld [vmem:[#allocation17 + $0x148] sm:$0xff]
    %v7603 = vld [vmem:[#allocation17 + $0x150] sm:$0xff]
    %v7604 = vld [vmem:[#allocation17 + $0x158] sm:$0xff]
    %v7605 = vld [vmem:[#allocation17 + $0x160] sm:$0xff]
    %v7606 = vld [vmem:[#allocation17 + $0x168] sm:$0xff]
    %v7607 = vld [vmem:[#allocation17 + $0x170] sm:$0xff]
    %v7608 = vld [vmem:[#allocation17 + $0x178] sm:$0xff]
    %v7609 = vld [vmem:[#allocation17 + $0x180] sm:$0xff]
    %v7610 = vld [vmem:[#allocation17 + $0x188] sm:$0xff]
    %v7611 = vld [vmem:[#allocation17 + $0x190] sm:$0xff]
    %v7612 = vld [vmem:[#allocation17 + $0x198] sm:$0xff]
    %v7613 = vld [vmem:[#allocation17 + $0x1a0] sm:$0xff]
    %v7614 = vld [vmem:[#allocation17 + $0x1a8] sm:$0xff]
    %v7615 = vld [vmem:[#allocation17 + $0x1b0] sm:$0xff]
    %v7616 = vld [vmem:[#allocation17 + $0x1b8] sm:$0xff]
    %v7617 = vld [vmem:[#allocation17 + $0x1c0] sm:$0xff]
    %v7618 = vld [vmem:[#allocation17 + $0x1c8] sm:$0xff]
    %v7619 = vld [vmem:[#allocation17 + $0x1d0] sm:$0xff]
    %v7620 = vld [vmem:[#allocation17 + $0x1d8] sm:$0xff]
    %v7621 = vld [vmem:[#allocation17 + $0x1e0] sm:$0xff]
    %v7622 = vld [vmem:[#allocation17 + $0x1e8] sm:$0xff]
    %v7623 = vld [vmem:[#allocation17 + $0x1f0] sm:$0xff]
    %v7624 = vld [vmem:[#allocation17 + $0x1f8] sm:$0xff]
    %v7625 = vld [vmem:[#allocation17 + $0x200] sm:$0xff]
    %v7626 = vld [vmem:[#allocation17 + $0x208] sm:$0xff]
    %v7627 = vld [vmem:[#allocation17 + $0x210] sm:$0xff]
    %v7628 = vld [vmem:[#allocation17 + $0x218] sm:$0xff]
    %v7629 = vld [vmem:[#allocation17 + $0x220] sm:$0xff]
    %v7630 = vld [vmem:[#allocation17 + $0x228] sm:$0xff]
    %v7631 = vld [vmem:[#allocation17 + $0x230] sm:$0xff]
    %v7632 = vld [vmem:[#allocation17 + $0x238] sm:$0xff]
    %v7633 = vld [vmem:[#allocation17 + $0x240] sm:$0xff]
    %v7634 = vld [vmem:[#allocation17 + $0x248] sm:$0xff]
    %v7635 = vld [vmem:[#allocation17 + $0x250] sm:$0xff]
    %v7636 = vld [vmem:[#allocation17 + $0x258] sm:$0xff]
    %v7637 = vld [vmem:[#allocation17 + $0x260] sm:$0xff]
    %v7638 = vld [vmem:[#allocation17 + $0x268] sm:$0xff]
    %v7639 = vld [vmem:[#allocation17 + $0x270] sm:$0xff]
    %v7640 = vld [vmem:[#allocation17 + $0x278] sm:$0xff]
    %v7641 = vld [vmem:[#allocation17 + $0x280] sm:$0xff]
    %v7642 = vld [vmem:[#allocation17 + $0x288] sm:$0xff]
    %v7643 = vld [vmem:[#allocation17 + $0x290] sm:$0xff]
    %v7644 = vld [vmem:[#allocation17 + $0x298] sm:$0xff]
    %v7645 = vld [vmem:[#allocation17 + $0x2a0] sm:$0xff]
    %v7646 = vld [vmem:[#allocation17 + $0x2a8] sm:$0xff]
    %v7647 = vld [vmem:[#allocation17 + $0x2b0] sm:$0xff]
    %v7648 = vld [vmem:[#allocation17 + $0x2b8] sm:$0xff]
    %v7649 = vld [vmem:[#allocation17 + $0x2c0] sm:$0xff]
    %v7650 = vld [vmem:[#allocation17 + $0x2c8] sm:$0xff]
    %v7651 = vld [vmem:[#allocation17 + $0x2d0] sm:$0xff]
    %v7652 = vld [vmem:[#allocation17 + $0x2d8] sm:$0xff]
    %v7653 = vld [vmem:[#allocation17 + $0x2e0] sm:$0xff]
    %v7654 = vld [vmem:[#allocation17 + $0x2e8] sm:$0xff]
    %v7655 = vld [vmem:[#allocation17 + $0x2f0] sm:$0xff]
    %v7656 = vld [vmem:[#allocation17 + $0x2f8] sm:$0xff]
    %v7657 = vld [vmem:[#allocation17 + $0x300] sm:$0xff]
    %v7658 = vld [vmem:[#allocation17 + $0x308] sm:$0xff]
    %v7659 = vld [vmem:[#allocation17 + $0x310] sm:$0xff]
    %v7660 = vld [vmem:[#allocation17 + $0x318] sm:$0xff]
    %v7661 = vld [vmem:[#allocation17 + $0x320] sm:$0xff]
    %v7662 = vld [vmem:[#allocation17 + $0x328] sm:$0xff]
    %v7663 = vld [vmem:[#allocation17 + $0x330] sm:$0xff]
    %v7664 = vld [vmem:[#allocation17 + $0x338] sm:$0xff]
    %v7665 = vld [vmem:[#allocation17 + $0x340] sm:$0xff]
    %v7666 = vld [vmem:[#allocation17 + $0x348] sm:$0xff]
    %v7667 = vld [vmem:[#allocation17 + $0x350] sm:$0xff]
    %v7668 = vld [vmem:[#allocation17 + $0x358] sm:$0xff]
    %v7669 = vld [vmem:[#allocation17 + $0x360] sm:$0xff]
    %v7670 = vld [vmem:[#allocation17 + $0x368] sm:$0xff]
    %v7671 = vld [vmem:[#allocation17 + $0x370] sm:$0xff]
    %v7672 = vld [vmem:[#allocation17 + $0x378] sm:$0xff]
    %v7673 = vld [vmem:[#allocation17 + $0x380] sm:$0xff]
    %v7674 = vld [vmem:[#allocation17 + $0x388] sm:$0xff]
    %v7675 = vld [vmem:[#allocation17 + $0x390] sm:$0xff]
    %v7676 = vld [vmem:[#allocation17 + $0x398] sm:$0xff]
    %v7677 = vld [vmem:[#allocation17 + $0x3a0] sm:$0xff]
    %v7678 = vld [vmem:[#allocation17 + $0x3a8] sm:$0xff]
    %v7679 = vld [vmem:[#allocation17 + $0x3b0] sm:$0xff]
    %v7680 = vld [vmem:[#allocation17 + $0x3b8] sm:$0xff]
    %v7681 = vld [vmem:[#allocation17 + $0x3c0] sm:$0xff]
    %v7682 = vld [vmem:[#allocation17 + $0x3c8] sm:$0xff]
    %v7683 = vld [vmem:[#allocation17 + $0x3d0] sm:$0xff]
    %v7684 = vld [vmem:[#allocation17 + $0x3d8] sm:$0xff]
    %v7685 = vld [vmem:[#allocation17 + $0x3e0] sm:$0xff]
    %v7686 = vld [vmem:[#allocation17 + $0x3e8] sm:$0xff]
    %v7687 = vld [vmem:[#allocation17 + $0x3f0] sm:$0xff]
    %v7688 = vld [vmem:[#allocation17 + $0x3f8] sm:$0xff]
    %v7689 = vld [vmem:[#allocation17 + $0x400] sm:$0xff]
    %v7690 = vld [vmem:[#allocation17 + $0x408] sm:$0xff]
    %v7691 = vld [vmem:[#allocation17 + $0x410] sm:$0xff]
    %v7692 = vld [vmem:[#allocation17 + $0x418] sm:$0xff]
    %v7693 = vld [vmem:[#allocation17 + $0x420] sm:$0xff]
    %v7694 = vld [vmem:[#allocation17 + $0x428] sm:$0xff]
    %v7695 = vld [vmem:[#allocation17 + $0x430] sm:$0xff]
    %v7696 = vld [vmem:[#allocation17 + $0x438] sm:$0xff]
    %v7697 = vld [vmem:[#allocation17 + $0x440] sm:$0xff]
    %v7698 = vld [vmem:[#allocation17 + $0x448] sm:$0xff]
    %v7699 = vld [vmem:[#allocation17 + $0x450] sm:$0xff]
    %v7700 = vld [vmem:[#allocation17 + $0x458] sm:$0xff]
    %v7701 = vld [vmem:[#allocation17 + $0x460] sm:$0xff]
    %v7702 = vld [vmem:[#allocation17 + $0x468] sm:$0xff]
    %v7703 = vld [vmem:[#allocation17 + $0x470] sm:$0xff]
    %v7704 = vld [vmem:[#allocation17 + $0x478] sm:$0xff]
    %v7705 = vld [vmem:[#allocation17 + $0x480] sm:$0xff]
    %v7706 = vld [vmem:[#allocation17 + $0x488] sm:$0xff]
    %v7707 = vld [vmem:[#allocation17 + $0x490] sm:$0xff]
    %v7708 = vld [vmem:[#allocation17 + $0x498] sm:$0xff]
    %v7709 = vld [vmem:[#allocation17 + $0x4a0] sm:$0xff]
    %v7710 = vld [vmem:[#allocation17 + $0x4a8] sm:$0xff]
    %v7711 = vld [vmem:[#allocation17 + $0x4b0] sm:$0xff]
    %v7712 = vld [vmem:[#allocation17 + $0x4b8] sm:$0xff]
    %v7713 = vld [vmem:[#allocation17 + $0x4c0] sm:$0xff]
    %v7714 = vld [vmem:[#allocation17 + $0x4c8] sm:$0xff]
    %v7715 = vld [vmem:[#allocation17 + $0x4d0] sm:$0xff]
    %v7716 = vld [vmem:[#allocation17 + $0x4d8] sm:$0xff]
    %v7717 = vld [vmem:[#allocation17 + $0x4e0] sm:$0xff]
    %v7718 = vld [vmem:[#allocation17 + $0x4e8] sm:$0xff]
    %v7719 = vld [vmem:[#allocation17 + $0x4f0] sm:$0xff]
    %v7720 = vld [vmem:[#allocation17 + $0x4f8] sm:$0xff]
    %v7721 = vld [vmem:[#allocation17 + $0x500] sm:$0xff]
    %v7722 = vld [vmem:[#allocation17 + $0x508] sm:$0xff]
    %v7723 = vld [vmem:[#allocation17 + $0x510] sm:$0xff]
    %v7724 = vld [vmem:[#allocation17 + $0x518] sm:$0xff]
    %v7725 = vld [vmem:[#allocation17 + $0x520] sm:$0xff]
    %v7726 = vld [vmem:[#allocation17 + $0x528] sm:$0xff]
    %v7727 = vld [vmem:[#allocation17 + $0x530] sm:$0xff]
    %v7728 = vld [vmem:[#allocation17 + $0x538] sm:$0xff]
    %v7729 = vld [vmem:[#allocation17 + $0x540] sm:$0xff]
    %v7730 = vld [vmem:[#allocation17 + $0x548] sm:$0xff]
    %v7731 = vld [vmem:[#allocation17 + $0x550] sm:$0xff]
    %v7732 = vld [vmem:[#allocation17 + $0x558] sm:$0xff]
    %v7733 = vld [vmem:[#allocation17 + $0x560] sm:$0xff]
    %v7734 = vld [vmem:[#allocation17 + $0x568] sm:$0xff]
    %v7735 = vld [vmem:[#allocation17 + $0x570] sm:$0xff]
    %v7736 = vld [vmem:[#allocation17 + $0x578] sm:$0xff]
    %v7737 = vld [vmem:[#allocation17 + $0x580] sm:$0xff]
    %v7738 = vld [vmem:[#allocation17 + $0x588] sm:$0xff]
    %v7739 = vld [vmem:[#allocation17 + $0x590] sm:$0xff]
    %v7740 = vld [vmem:[#allocation17 + $0x598] sm:$0xff]
    %v7741 = vld [vmem:[#allocation17 + $0x5a0] sm:$0xff]
    %v7742 = vld [vmem:[#allocation17 + $0x5a8] sm:$0xff]
    %v7743 = vld [vmem:[#allocation17 + $0x5b0] sm:$0xff]
    %v7744 = vld [vmem:[#allocation17 + $0x5b8] sm:$0xff]
    %v7745 = vld [vmem:[#allocation17 + $0x5c0] sm:$0xff]
    %v7746 = vld [vmem:[#allocation17 + $0x5c8] sm:$0xff]
    %v7747 = vld [vmem:[#allocation17 + $0x5d0] sm:$0xff]
    %v7748 = vld [vmem:[#allocation17 + $0x5d8] sm:$0xff]
    %v7749 = vld [vmem:[#allocation17 + $0x5e0] sm:$0xff]
    %v7750 = vld [vmem:[#allocation17 + $0x5e8] sm:$0xff]
    %v7751 = vld [vmem:[#allocation17 + $0x5f0] sm:$0xff]
    %v7752 = vld [vmem:[#allocation17 + $0x5f8] sm:$0xff]
    %v7753 = vld [vmem:[#allocation17 + $0x600] sm:$0xff]
    %v7754 = vld [vmem:[#allocation17 + $0x608] sm:$0xff]
    %v7755 = vld [vmem:[#allocation17 + $0x610] sm:$0xff]
    %v7756 = vld [vmem:[#allocation17 + $0x618] sm:$0xff]
    %v7757 = vld [vmem:[#allocation17 + $0x620] sm:$0xff]
    %v7758 = vld [vmem:[#allocation17 + $0x628] sm:$0xff]
    %v7759 = vld [vmem:[#allocation17 + $0x630] sm:$0xff]
    %v7760 = vld [vmem:[#allocation17 + $0x638] sm:$0xff]
    %v7761 = vld [vmem:[#allocation17 + $0x640] sm:$0xff]
    %v7762 = vld [vmem:[#allocation17 + $0x648] sm:$0xff]
    %v7763 = vld [vmem:[#allocation17 + $0x650] sm:$0xff]
    %v7764 = vld [vmem:[#allocation17 + $0x658] sm:$0xff]
    %v7765 = vld [vmem:[#allocation17 + $0x660] sm:$0xff]
    %v7766 = vld [vmem:[#allocation17 + $0x668] sm:$0xff]
    %v7767 = vld [vmem:[#allocation17 + $0x670] sm:$0xff]
    %v7768 = vld [vmem:[#allocation17 + $0x678] sm:$0xff]
    %v7769 = vld [vmem:[#allocation17 + $0x680] sm:$0xff]
    %v7770 = vld [vmem:[#allocation17 + $0x688] sm:$0xff]
    %v7771 = vld [vmem:[#allocation17 + $0x690] sm:$0xff]
    %v7772 = vld [vmem:[#allocation17 + $0x698] sm:$0xff]
    %v7773 = vld [vmem:[#allocation17 + $0x6a0] sm:$0xff]
    %v7774 = vld [vmem:[#allocation17 + $0x6a8] sm:$0xff]
    %v7775 = vld [vmem:[#allocation17 + $0x6b0] sm:$0xff]
    %v7776 = vld [vmem:[#allocation17 + $0x6b8] sm:$0xff]
    %v7777 = vld [vmem:[#allocation17 + $0x6c0] sm:$0xff]
    %v7778 = vld [vmem:[#allocation17 + $0x6c8] sm:$0xff]
    %v7779 = vld [vmem:[#allocation17 + $0x6d0] sm:$0xff]
    %v7780 = vld [vmem:[#allocation17 + $0x6d8] sm:$0xff]
    %v7781 = vld [vmem:[#allocation17 + $0x6e0] sm:$0xff]
    %v7782 = vld [vmem:[#allocation17 + $0x6e8] sm:$0xff]
    %v7783 = vld [vmem:[#allocation17 + $0x6f0] sm:$0xff]
    %v7784 = vld [vmem:[#allocation17 + $0x6f8] sm:$0xff]
    %v7785 = vld [vmem:[#allocation17 + $0x700] sm:$0xff]
    %v7786 = vld [vmem:[#allocation17 + $0x708] sm:$0xff]
    %v7787 = vld [vmem:[#allocation17 + $0x710] sm:$0xff]
    %v7788 = vld [vmem:[#allocation17 + $0x718] sm:$0xff]
    %v7789 = vld [vmem:[#allocation17 + $0x720] sm:$0xff]
    %v7790 = vld [vmem:[#allocation17 + $0x728] sm:$0xff]
    %v7791 = vld [vmem:[#allocation17 + $0x730] sm:$0xff]
    %v7792 = vld [vmem:[#allocation17 + $0x738] sm:$0xff]
    %v7793 = vld [vmem:[#allocation17 + $0x740] sm:$0xff]
    %v7794 = vld [vmem:[#allocation17 + $0x748] sm:$0xff]
    %v7795 = vld [vmem:[#allocation17 + $0x750] sm:$0xff]
    %v7796 = vld [vmem:[#allocation17 + $0x758] sm:$0xff]
    %v7797 = vld [vmem:[#allocation17 + $0x760] sm:$0xff]
    %v7798 = vld [vmem:[#allocation17 + $0x768] sm:$0xff]
    %v7799 = vld [vmem:[#allocation17 + $0x770] sm:$0xff]
    %v7800 = vld [vmem:[#allocation17 + $0x778] sm:$0xff]
    %v7801 = vld [vmem:[#allocation17 + $0x780] sm:$0xff]
    %v7802 = vld [vmem:[#allocation17 + $0x788] sm:$0xff]
    %v7803 = vld [vmem:[#allocation17 + $0x790] sm:$0xff]
    %v7804 = vld [vmem:[#allocation17 + $0x798] sm:$0xff]
    %v7805 = vld [vmem:[#allocation17 + $0x7a0] sm:$0xff]
    %v7806 = vld [vmem:[#allocation17 + $0x7a8] sm:$0xff]
    %v7807 = vld [vmem:[#allocation17 + $0x7b0] sm:$0xff]
    %v7808 = vld [vmem:[#allocation17 + $0x7b8] sm:$0xff]
    %v7809 = vld [vmem:[#allocation17 + $0x7c0] sm:$0xff]
    %v7810 = vld [vmem:[#allocation17 + $0x7c8] sm:$0xff]
    %v7811 = vld [vmem:[#allocation17 + $0x7d0] sm:$0xff]
    %v7812 = vld [vmem:[#allocation17 + $0x7d8] sm:$0xff]
    %v7813 = vld [vmem:[#allocation17 + $0x7e0] sm:$0xff]
    %v7814 = vld [vmem:[#allocation17 + $0x7e8] sm:$0xff]
    %v7815 = vld [vmem:[#allocation17 + $0x7f0] sm:$0xff]
    %v7816 = vld [vmem:[#allocation17 + $0x7f8] sm:$0xff]
    %v7817 = vld [vmem:[#allocation17 + $0x800] sm:$0xff]
    %v7818 = vld [vmem:[#allocation17 + $0x808] sm:$0xff]
    %v7819 = vld [vmem:[#allocation17 + $0x810] sm:$0xff]
    %v7820 = vld [vmem:[#allocation17 + $0x818] sm:$0xff]
    %v7821 = vld [vmem:[#allocation17 + $0x820] sm:$0xff]
    %v7822 = vld [vmem:[#allocation17 + $0x828] sm:$0xff]
    %v7823 = vld [vmem:[#allocation17 + $0x830] sm:$0xff]
    %v7824 = vld [vmem:[#allocation17 + $0x838] sm:$0xff]
    %v7825 = vld [vmem:[#allocation17 + $0x840] sm:$0xff]
    %v7826 = vld [vmem:[#allocation17 + $0x848] sm:$0xff]
    %v7827 = vld [vmem:[#allocation17 + $0x850] sm:$0xff]
    %v7828 = vld [vmem:[#allocation17 + $0x858] sm:$0xff]
    %v7829 = vld [vmem:[#allocation17 + $0x860] sm:$0xff]
    %v7830 = vld [vmem:[#allocation17 + $0x868] sm:$0xff]
    %v7831 = vld [vmem:[#allocation17 + $0x870] sm:$0xff]
    %v7832 = vld [vmem:[#allocation17 + $0x878] sm:$0xff]
    %v7833 = vld [vmem:[#allocation17 + $0x880] sm:$0xff]
    %v7834 = vld [vmem:[#allocation17 + $0x888] sm:$0xff]
    %v7835 = vld [vmem:[#allocation17 + $0x890] sm:$0xff]
    %v7836 = vld [vmem:[#allocation17 + $0x898] sm:$0xff]
    %v7837 = vld [vmem:[#allocation17 + $0x8a0] sm:$0xff]
    %v7838 = vld [vmem:[#allocation17 + $0x8a8] sm:$0xff]
    %v7839 = vld [vmem:[#allocation17 + $0x8b0] sm:$0xff]
    %v7840 = vld [vmem:[#allocation17 + $0x8b8] sm:$0xff]
    %v7841 = vld [vmem:[#allocation17 + $0x8c0] sm:$0xff]
    %v7842 = vld [vmem:[#allocation17 + $0x8c8] sm:$0xff]
    %v7843 = vld [vmem:[#allocation17 + $0x8d0] sm:$0xff]
    %v7844 = vld [vmem:[#allocation17 + $0x8d8] sm:$0xff]
    %v7845 = vld [vmem:[#allocation17 + $0x8e0] sm:$0xff]
    %v7846 = vld [vmem:[#allocation17 + $0x8e8] sm:$0xff]
    %v7847 = vld [vmem:[#allocation17 + $0x8f0] sm:$0xff]
    %v7848 = vld [vmem:[#allocation17 + $0x8f8] sm:$0xff]
    %v7849 = vld [vmem:[#allocation17 + $0x900] sm:$0xff]
    %v7850 = vld [vmem:[#allocation17 + $0x908] sm:$0xff]
    %v7851 = vld [vmem:[#allocation17 + $0x910] sm:$0xff]
    %v7852 = vld [vmem:[#allocation17 + $0x918] sm:$0xff]
    %v7853 = vld [vmem:[#allocation17 + $0x920] sm:$0xff]
    %v7854 = vld [vmem:[#allocation17 + $0x928] sm:$0xff]
    %v7855 = vld [vmem:[#allocation17 + $0x930] sm:$0xff]
    %v7856 = vld [vmem:[#allocation17 + $0x938] sm:$0xff]
    %v7857 = vld [vmem:[#allocation17 + $0x940] sm:$0xff]
    %v7858 = vld [vmem:[#allocation17 + $0x948] sm:$0xff]
    %v7859 = vld [vmem:[#allocation17 + $0x950] sm:$0xff]
    %v7860 = vld [vmem:[#allocation17 + $0x958] sm:$0xff]
    %v7861 = vld [vmem:[#allocation17 + $0x960] sm:$0xff]
    %v7862 = vld [vmem:[#allocation17 + $0x968] sm:$0xff]
    %v7863 = vld [vmem:[#allocation17 + $0x970] sm:$0xff]
    %v7864 = vld [vmem:[#allocation17 + $0x978] sm:$0xff]
    %v7865 = vld [vmem:[#allocation17 + $0x980] sm:$0xff]
    %v7866 = vld [vmem:[#allocation17 + $0x988] sm:$0xff]
    %v7867 = vld [vmem:[#allocation17 + $0x990] sm:$0xff]
    %v7868 = vld [vmem:[#allocation17 + $0x998] sm:$0xff]
    %v7869 = vld [vmem:[#allocation17 + $0x9a0] sm:$0xff]
    %v7870 = vld [vmem:[#allocation17 + $0x9a8] sm:$0xff]
    %v7871 = vld [vmem:[#allocation17 + $0x9b0] sm:$0xff]
    %v7872 = vld [vmem:[#allocation17 + $0x9b8] sm:$0xff]
    %v7873 = vld [vmem:[#allocation17 + $0x9c0] sm:$0xff]
    %v7874 = vld [vmem:[#allocation17 + $0x9c8] sm:$0xff]
    %v7875 = vld [vmem:[#allocation17 + $0x9d0] sm:$0xff]
    %v7876 = vld [vmem:[#allocation17 + $0x9d8] sm:$0xff]
    %v7877 = vld [vmem:[#allocation17 + $0x9e0] sm:$0xff]
    %v7878 = vld [vmem:[#allocation17 + $0x9e8] sm:$0xff]
    %v7879 = vld [vmem:[#allocation17 + $0x9f0] sm:$0xff]
    %v7880 = vld [vmem:[#allocation17 + $0x9f8] sm:$0xff]
    %v7881 = vld [vmem:[#allocation17 + $0xa00] sm:$0xff]
    %v7882 = vld [vmem:[#allocation17 + $0xa08] sm:$0xff]
    %v7883 = vld [vmem:[#allocation17 + $0xa10] sm:$0xff]
    %v7884 = vld [vmem:[#allocation17 + $0xa18] sm:$0xff]
    %v7885 = vld [vmem:[#allocation17 + $0xa20] sm:$0xff]
    %v7886 = vld [vmem:[#allocation17 + $0xa28] sm:$0xff]
    %v7887 = vld [vmem:[#allocation17 + $0xa30] sm:$0xff]
    %v7888 = vld [vmem:[#allocation17 + $0xa38] sm:$0xff]
    %v7889 = vld [vmem:[#allocation17 + $0xa40] sm:$0xff]
    %v7890 = vld [vmem:[#allocation17 + $0xa48] sm:$0xff]
    %v7891 = vld [vmem:[#allocation17 + $0xa50] sm:$0xff]
    %v7892 = vld [vmem:[#allocation17 + $0xa58] sm:$0xff]
    %v7893 = vld [vmem:[#allocation17 + $0xa60] sm:$0xff]
    %v7894 = vld [vmem:[#allocation17 + $0xa68] sm:$0xff]
    %v7895 = vld [vmem:[#allocation17 + $0xa70] sm:$0xff]
    %v7896 = vld [vmem:[#allocation17 + $0xa78] sm:$0xff]
    %v7897 = vld [vmem:[#allocation17 + $0xa80] sm:$0xff]
    %v7898 = vld [vmem:[#allocation17 + $0xa88] sm:$0xff]
    %v7899 = vld [vmem:[#allocation17 + $0xa90] sm:$0xff]
    %v7900 = vld [vmem:[#allocation17 + $0xa98] sm:$0xff]
    %v7901 = vld [vmem:[#allocation17 + $0xaa0] sm:$0xff]
    %v7902 = vld [vmem:[#allocation17 + $0xaa8] sm:$0xff]
    %v7903 = vld [vmem:[#allocation17 + $0xab0] sm:$0xff]
    %v7904 = vld [vmem:[#allocation17 + $0xab8] sm:$0xff]
    %v7905 = vld [vmem:[#allocation17 + $0xac0] sm:$0xff]
    %v7906 = vld [vmem:[#allocation17 + $0xac8] sm:$0xff]
    %v7907 = vld [vmem:[#allocation17 + $0xad0] sm:$0xff]
    %v7908 = vld [vmem:[#allocation17 + $0xad8] sm:$0xff]
    %v7909 = vld [vmem:[#allocation17 + $0xae0] sm:$0xff]
    %v7910 = vld [vmem:[#allocation17 + $0xae8] sm:$0xff]
    %v7911 = vld [vmem:[#allocation17 + $0xaf0] sm:$0xff]
    %v7912 = vld [vmem:[#allocation17 + $0xaf8] sm:$0xff]
    %v7913 = vld [vmem:[#allocation17 + $0xb00] sm:$0xff]
    %v7914 = vld [vmem:[#allocation17 + $0xb08] sm:$0xff]
    %v7915 = vld [vmem:[#allocation17 + $0xb10] sm:$0xff]
    %v7916 = vld [vmem:[#allocation17 + $0xb18] sm:$0xff]
    %v7917 = vld [vmem:[#allocation17 + $0xb20] sm:$0xff]
    %v7918 = vld [vmem:[#allocation17 + $0xb28] sm:$0xff]
    %v7919 = vld [vmem:[#allocation17 + $0xb30] sm:$0xff]
    %v7920 = vld [vmem:[#allocation17 + $0xb38] sm:$0xff]
    %v7921 = vld [vmem:[#allocation17 + $0xb40] sm:$0xff]
    %v7922 = vld [vmem:[#allocation17 + $0xb48] sm:$0xff]
    %v7923 = vld [vmem:[#allocation17 + $0xb50] sm:$0xff]
    %v7924 = vld [vmem:[#allocation17 + $0xb58] sm:$0xff]
    %v7925 = vld [vmem:[#allocation17 + $0xb60] sm:$0xff]
    %v7926 = vld [vmem:[#allocation17 + $0xb68] sm:$0xff]
    %v7927 = vld [vmem:[#allocation17 + $0xb70] sm:$0xff]
    %v7928 = vld [vmem:[#allocation17 + $0xb78] sm:$0xff]
    %v7929 = vld [vmem:[#allocation17 + $0xb80] sm:$0xff]
    %v7930 = vld [vmem:[#allocation17 + $0xb88] sm:$0xff]
    %v7931 = vld [vmem:[#allocation17 + $0xb90] sm:$0xff]
    %v7932 = vld [vmem:[#allocation17 + $0xb98] sm:$0xff]
    %v7933 = vld [vmem:[#allocation17 + $0xba0] sm:$0xff]
    %v7934 = vld [vmem:[#allocation17 + $0xba8] sm:$0xff]
    %v7935 = vld [vmem:[#allocation17 + $0xbb0] sm:$0xff]
    %v7936 = vld [vmem:[#allocation17 + $0xbb8] sm:$0xff]
    %v7937 = vld [vmem:[#allocation17 + $0xbc0] sm:$0xff]
    %v7938 = vld [vmem:[#allocation17 + $0xbc8] sm:$0xff]
    %v7939 = vld [vmem:[#allocation17 + $0xbd0] sm:$0xff]
    %v7940 = vld [vmem:[#allocation17 + $0xbd8] sm:$0xff]
    %v7941 = vld [vmem:[#allocation17 + $0xbe0] sm:$0xff]
    %v7942 = vld [vmem:[#allocation17 + $0xbe8] sm:$0xff]
    %v7943 = vld [vmem:[#allocation17 + $0xbf0] sm:$0xff]
    %v7944 = vld [vmem:[#allocation17 + $0xbf8] sm:$0xff]
    %v7945 = vld [vmem:[#allocation17 + $0xc00] sm:$0xff]
    %v7946 = vld [vmem:[#allocation17 + $0xc08] sm:$0xff]
    %v7947 = vld [vmem:[#allocation17 + $0xc10] sm:$0xff]
    %v7948 = vld [vmem:[#allocation17 + $0xc18] sm:$0xff]
    %v7949 = vld [vmem:[#allocation17 + $0xc20] sm:$0xff]
    %v7950 = vld [vmem:[#allocation17 + $0xc28] sm:$0xff]
    %v7951 = vld [vmem:[#allocation17 + $0xc30] sm:$0xff]
    %v7952 = vld [vmem:[#allocation17 + $0xc38] sm:$0xff]
    %v7953 = vld [vmem:[#allocation17 + $0xc40] sm:$0xff]
    %v7954 = vld [vmem:[#allocation17 + $0xc48] sm:$0xff]
    %v7955 = vld [vmem:[#allocation17 + $0xc50] sm:$0xff]
    %v7956 = vld [vmem:[#allocation17 + $0xc58] sm:$0xff]
    %v7957 = vld [vmem:[#allocation17 + $0xc60] sm:$0xff]
    %v7958 = vld [vmem:[#allocation17 + $0xc68] sm:$0xff]
    %v7959 = vld [vmem:[#allocation17 + $0xc70] sm:$0xff]
    %v7960 = vld [vmem:[#allocation17 + $0xc78] sm:$0xff]
    %v7961 = vld [vmem:[#allocation17 + $0xc80] sm:$0xff]
    %v7962 = vld [vmem:[#allocation17 + $0xc88] sm:$0xff]
    %v7963 = vld [vmem:[#allocation17 + $0xc90] sm:$0xff]
    %v7964 = vld [vmem:[#allocation17 + $0xc98] sm:$0xff]
    %v7965 = vld [vmem:[#allocation17 + $0xca0] sm:$0xff]
    %v7966 = vld [vmem:[#allocation17 + $0xca8] sm:$0xff]
    %v7967 = vld [vmem:[#allocation17 + $0xcb0] sm:$0xff]
    %v7968 = vld [vmem:[#allocation17 + $0xcb8] sm:$0xff]
    %v7969 = vld [vmem:[#allocation17 + $0xcc0] sm:$0xff]
    %v7970 = vld [vmem:[#allocation17 + $0xcc8] sm:$0xff]
    %v7971 = vld [vmem:[#allocation17 + $0xcd0] sm:$0xff]
    %v7972 = vld [vmem:[#allocation17 + $0xcd8] sm:$0xff]
    %v7973 = vld [vmem:[#allocation17 + $0xce0] sm:$0xff]
    %v7974 = vld [vmem:[#allocation17 + $0xce8] sm:$0xff]
    %v7975 = vld [vmem:[#allocation17 + $0xcf0] sm:$0xff]
    %v7976 = vld [vmem:[#allocation17 + $0xcf8] sm:$0xff]
    %v7977 = vld [vmem:[#allocation17 + $0xd00] sm:$0xff]
    %v7978 = vld [vmem:[#allocation17 + $0xd08] sm:$0xff]
    %v7979 = vld [vmem:[#allocation17 + $0xd10] sm:$0xff]
    %v7980 = vld [vmem:[#allocation17 + $0xd18] sm:$0xff]
    %v7981 = vld [vmem:[#allocation17 + $0xd20] sm:$0xff]
    %v7982 = vld [vmem:[#allocation17 + $0xd28] sm:$0xff]
    %v7983 = vld [vmem:[#allocation17 + $0xd30] sm:$0xff]
    %v7984 = vld [vmem:[#allocation17 + $0xd38] sm:$0xff]
    %v7985 = vld [vmem:[#allocation17 + $0xd40] sm:$0xff]
    %v7986 = vld [vmem:[#allocation17 + $0xd48] sm:$0xff]
    %v7987 = vld [vmem:[#allocation17 + $0xd50] sm:$0xff]
    %v7988 = vld [vmem:[#allocation17 + $0xd58] sm:$0xff]
    %v7989 = vld [vmem:[#allocation17 + $0xd60] sm:$0xff]
    %v7990 = vld [vmem:[#allocation17 + $0xd68] sm:$0xff]
    %v7991 = vld [vmem:[#allocation17 + $0xd70] sm:$0xff]
    %v7992 = vld [vmem:[#allocation17 + $0xd78] sm:$0xff]
    %v7993 = vld [vmem:[#allocation17 + $0xd80] sm:$0xff]
    %v7994 = vld [vmem:[#allocation17 + $0xd88] sm:$0xff]
    %v7995 = vld [vmem:[#allocation17 + $0xd90] sm:$0xff]
    %v7996 = vld [vmem:[#allocation17 + $0xd98] sm:$0xff]
    %v7997 = vld [vmem:[#allocation17 + $0xda0] sm:$0xff]
    %v7998 = vld [vmem:[#allocation17 + $0xda8] sm:$0xff]
    %v7999 = vld [vmem:[#allocation17 + $0xdb0] sm:$0xff]
    %v8000 = vld [vmem:[#allocation17 + $0xdb8] sm:$0xff]
    %v8001 = vld [vmem:[#allocation17 + $0xdc0] sm:$0xff]
    %v8002 = vld [vmem:[#allocation17 + $0xdc8] sm:$0xff]
    %v8003 = vld [vmem:[#allocation17 + $0xdd0] sm:$0xff]
    %v8004 = vld [vmem:[#allocation17 + $0xdd8] sm:$0xff]
    %v8005 = vld [vmem:[#allocation17 + $0xde0] sm:$0xff]
    %v8006 = vld [vmem:[#allocation17 + $0xde8] sm:$0xff]
    %v8007 = vld [vmem:[#allocation17 + $0xdf0] sm:$0xff]
    %v8008 = vld [vmem:[#allocation17 + $0xdf8] sm:$0xff]
    %v8009 = vld [vmem:[#allocation17 + $0xe00] sm:$0xff]
    %v8010 = vld [vmem:[#allocation17 + $0xe08] sm:$0xff]
    %v8011 = vld [vmem:[#allocation17 + $0xe10] sm:$0xff]
    %v8012 = vld [vmem:[#allocation17 + $0xe18] sm:$0xff]
    %v8013 = vld [vmem:[#allocation17 + $0xe20] sm:$0xff]
    %v8014 = vld [vmem:[#allocation17 + $0xe28] sm:$0xff]
    %v8015 = vld [vmem:[#allocation17 + $0xe30] sm:$0xff]
    %v8016 = vld [vmem:[#allocation17 + $0xe38] sm:$0xff]
    %v8017 = vld [vmem:[#allocation17 + $0xe40] sm:$0xff]
    %v8018 = vld [vmem:[#allocation17 + $0xe48] sm:$0xff]
    %v8019 = vld [vmem:[#allocation17 + $0xe50] sm:$0xff]
    %v8020 = vld [vmem:[#allocation17 + $0xe58] sm:$0xff]
    %v8021 = vld [vmem:[#allocation17 + $0xe60] sm:$0xff]
    %v8022 = vld [vmem:[#allocation17 + $0xe68] sm:$0xff]
    %v8023 = vld [vmem:[#allocation17 + $0xe70] sm:$0xff]
    %v8024 = vld [vmem:[#allocation17 + $0xe78] sm:$0xff]
    %v8025 = vld [vmem:[#allocation17 + $0xe80] sm:$0xff]
    %v8026 = vld [vmem:[#allocation17 + $0xe88] sm:$0xff]
    %v8027 = vld [vmem:[#allocation17 + $0xe90] sm:$0xff]
    %v8028 = vld [vmem:[#allocation17 + $0xe98] sm:$0xff]
    %v8029 = vld [vmem:[#allocation17 + $0xea0] sm:$0xff]
    %v8030 = vld [vmem:[#allocation17 + $0xea8] sm:$0xff]
    %v8031 = vld [vmem:[#allocation17 + $0xeb0] sm:$0xff]
    %v8032 = vld [vmem:[#allocation17 + $0xeb8] sm:$0xff]
    %v8033 = vld [vmem:[#allocation17 + $0xec0] sm:$0xff]
    %v8034 = vld [vmem:[#allocation17 + $0xec8] sm:$0xff]
    %v8035 = vld [vmem:[#allocation17 + $0xed0] sm:$0xff]
    %v8036 = vld [vmem:[#allocation17 + $0xed8] sm:$0xff]
    %v8037 = vld [vmem:[#allocation17 + $0xee0] sm:$0xff]
    %v8038 = vld [vmem:[#allocation17 + $0xee8] sm:$0xff]
    %v8039 = vld [vmem:[#allocation17 + $0xef0] sm:$0xff]
    %v8040 = vld [vmem:[#allocation17 + $0xef8] sm:$0xff]
    %v8041 = vld [vmem:[#allocation17 + $0xf00] sm:$0xff]
    %v8042 = vld [vmem:[#allocation17 + $0xf08] sm:$0xff]
    %v8043 = vld [vmem:[#allocation17 + $0xf10] sm:$0xff]
    %v8044 = vld [vmem:[#allocation17 + $0xf18] sm:$0xff]
    %v8045 = vld [vmem:[#allocation17 + $0xf20] sm:$0xff]
    %v8046 = vld [vmem:[#allocation17 + $0xf28] sm:$0xff]
    %v8047 = vld [vmem:[#allocation17 + $0xf30] sm:$0xff]
    %v8048 = vld [vmem:[#allocation17 + $0xf38] sm:$0xff]
    %v8049 = vld [vmem:[#allocation17 + $0xf40] sm:$0xff]
    %v8050 = vld [vmem:[#allocation17 + $0xf48] sm:$0xff]
    %v8051 = vld [vmem:[#allocation17 + $0xf50] sm:$0xff]
    %v8052 = vld [vmem:[#allocation17 + $0xf58] sm:$0xff]
    %v8053 = vld [vmem:[#allocation17 + $0xf60] sm:$0xff]
    %v8054 = vld [vmem:[#allocation17 + $0xf68] sm:$0xff]
    %v8055 = vld [vmem:[#allocation17 + $0xf70] sm:$0xff]
    %v8056 = vld [vmem:[#allocation17 + $0xf78] sm:$0xff]
    %v8057 = vld [vmem:[#allocation17 + $0xf80] sm:$0xff]
    %v8058 = vld [vmem:[#allocation17 + $0xf88] sm:$0xff]
    %v8059 = vld [vmem:[#allocation17 + $0xf90] sm:$0xff]
    %v8060 = vld [vmem:[#allocation17 + $0xf98] sm:$0xff]
    %v8061 = vld [vmem:[#allocation17 + $0xfa0] sm:$0xff]
    %v8062 = vld [vmem:[#allocation17 + $0xfa8] sm:$0xff]
    %v8063 = vld [vmem:[#allocation17 + $0xfb0] sm:$0xff]
    %v8064 = vld [vmem:[#allocation17 + $0xfb8] sm:$0xff]
    %v8065 = vld [vmem:[#allocation17 + $0xfc0] sm:$0xff]
    %v8066 = vld [vmem:[#allocation17 + $0xfc8] sm:$0xff]
    %v8067 = vld [vmem:[#allocation17 + $0xfd0] sm:$0xff]
    %v8068 = vld [vmem:[#allocation17 + $0xfd8] sm:$0xff]
    %v8069 = vld [vmem:[#allocation17 + $0xfe0] sm:$0xff]
    %v8070 = vld [vmem:[#allocation17 + $0xfe8] sm:$0xff]
    %v8071 = vld [vmem:[#allocation17 + $0xff0] sm:$0xff]
    %v8072 = vld [vmem:[#allocation17 + $0xff8] sm:$0xff]
    %v8073 = vld [vmem:[#allocation17 + $0x1000] sm:$0xff]
    %v8074 = vld [vmem:[#allocation17 + $0x1008] sm:$0xff]
    %v8075 = vld [vmem:[#allocation17 + $0x1010] sm:$0xff]
    %v8076 = vld [vmem:[#allocation17 + $0x1018] sm:$0xff]
    %v8077 = vld [vmem:[#allocation17 + $0x1020] sm:$0xff]
    %v8078 = vld [vmem:[#allocation17 + $0x1028] sm:$0xff]
    %v8079 = vld [vmem:[#allocation17 + $0x1030] sm:$0xff]
    %v8080 = vld [vmem:[#allocation17 + $0x1038] sm:$0xff]
    %v8081 = vld [vmem:[#allocation17 + $0x1040] sm:$0xff]
    %v8082 = vld [vmem:[#allocation17 + $0x1048] sm:$0xff]
    %v8083 = vld [vmem:[#allocation17 + $0x1050] sm:$0xff]
    %v8084 = vld [vmem:[#allocation17 + $0x1058] sm:$0xff]
    %v8085 = vld [vmem:[#allocation17 + $0x1060] sm:$0xff]
    %v8086 = vld [vmem:[#allocation17 + $0x1068] sm:$0xff]
    %v8087 = vld [vmem:[#allocation17 + $0x1070] sm:$0xff]
    %v8088 = vld [vmem:[#allocation17 + $0x1078] sm:$0xff]
    %v8089 = vld [vmem:[#allocation17 + $0x1080] sm:$0xff]
    %v8090 = vld [vmem:[#allocation17 + $0x1088] sm:$0xff]
    %v8091 = vld [vmem:[#allocation17 + $0x1090] sm:$0xff]
    %v8092 = vld [vmem:[#allocation17 + $0x1098] sm:$0xff]
    %v8093 = vld [vmem:[#allocation17 + $0x10a0] sm:$0xff]
    %v8094 = vld [vmem:[#allocation17 + $0x10a8] sm:$0xff]
    %v8095 = vld [vmem:[#allocation17 + $0x10b0] sm:$0xff]
    %v8096 = vld [vmem:[#allocation17 + $0x10b8] sm:$0xff]
    %v8097 = vld [vmem:[#allocation17 + $0x10c0] sm:$0xff]
    %v8098 = vld [vmem:[#allocation17 + $0x10c8] sm:$0xff]
    %v8099 = vld [vmem:[#allocation17 + $0x10d0] sm:$0xff]
    %v8100 = vld [vmem:[#allocation17 + $0x10d8] sm:$0xff]
    %v8101 = vld [vmem:[#allocation17 + $0x10e0] sm:$0xff]
    %v8102 = vld [vmem:[#allocation17 + $0x10e8] sm:$0xff]
    %v8103 = vld [vmem:[#allocation17 + $0x10f0] sm:$0xff]
    %v8104 = vld [vmem:[#allocation17 + $0x10f8] sm:$0xff]
    %v8105 = vld [vmem:[#allocation17 + $0x1100] sm:$0xff]
    %v8106 = vld [vmem:[#allocation17 + $0x1108] sm:$0xff]
    %v8107 = vld [vmem:[#allocation17 + $0x1110] sm:$0xff]
    %v8108 = vld [vmem:[#allocation17 + $0x1118] sm:$0xff]
    %v8109 = vld [vmem:[#allocation17 + $0x1120] sm:$0xff]
    %v8110 = vld [vmem:[#allocation17 + $0x1128] sm:$0xff]
    %v8111 = vld [vmem:[#allocation17 + $0x1130] sm:$0xff]
    %v8112 = vld [vmem:[#allocation17 + $0x1138] sm:$0xff]
    %v8113 = vld [vmem:[#allocation17 + $0x1140] sm:$0xff]
    %v8114 = vld [vmem:[#allocation17 + $0x1148] sm:$0xff]
    %v8115 = vld [vmem:[#allocation17 + $0x1150] sm:$0xff]
    %v8116 = vld [vmem:[#allocation17 + $0x1158] sm:$0xff]
    %v8117 = vld [vmem:[#allocation17 + $0x1160] sm:$0xff]
    %v8118 = vld [vmem:[#allocation17 + $0x1168] sm:$0xff]
    %v8119 = vld [vmem:[#allocation17 + $0x1170] sm:$0xff]
    %v8120 = vld [vmem:[#allocation17 + $0x1178] sm:$0xff]
    %v8121 = vld [vmem:[#allocation17 + $0x1180] sm:$0xff]
    %v8122 = vld [vmem:[#allocation17 + $0x1188] sm:$0xff]
    %v8123 = vld [vmem:[#allocation17 + $0x1190] sm:$0xff]
    %v8124 = vld [vmem:[#allocation17 + $0x1198] sm:$0xff]
    %v8125 = vld [vmem:[#allocation17 + $0x11a0] sm:$0xff]
    %v8126 = vld [vmem:[#allocation17 + $0x11a8] sm:$0xff]
    %v8127 = vld [vmem:[#allocation17 + $0x11b0] sm:$0xff]
    %v8128 = vld [vmem:[#allocation17 + $0x11b8] sm:$0xff]
    %v8129 = vld [vmem:[#allocation17 + $0x11c0] sm:$0xff]
    %v8130 = vld [vmem:[#allocation17 + $0x11c8] sm:$0xff]
    %v8131 = vld [vmem:[#allocation17 + $0x11d0] sm:$0xff]
    %v8132 = vld [vmem:[#allocation17 + $0x11d8] sm:$0xff]
    %v8133 = vld [vmem:[#allocation17 + $0x11e0] sm:$0xff]
    %v8134 = vld [vmem:[#allocation17 + $0x11e8] sm:$0xff]
    %v8135 = vld [vmem:[#allocation17 + $0x11f0] sm:$0xff]
    %v8136 = vld [vmem:[#allocation17 + $0x11f8] sm:$0xff]
    %v8137 = vld [vmem:[#allocation17 + $0x1200] sm:$0xff]
    %v8138 = vld [vmem:[#allocation17 + $0x1208] sm:$0xff]
    %v8139 = vld [vmem:[#allocation17 + $0x1210] sm:$0xff]
    %v8140 = vld [vmem:[#allocation17 + $0x1218] sm:$0xff]
    %v8141 = vld [vmem:[#allocation17 + $0x1220] sm:$0xff]
    %v8142 = vld [vmem:[#allocation17 + $0x1228] sm:$0xff]
    %v8143 = vld [vmem:[#allocation17 + $0x1230] sm:$0xff]
    %v8144 = vld [vmem:[#allocation17 + $0x1238] sm:$0xff]
    %v8145 = vld [vmem:[#allocation17 + $0x1240] sm:$0xff]
    %v8146 = vld [vmem:[#allocation17 + $0x1248] sm:$0xff]
    %v8147 = vld [vmem:[#allocation17 + $0x1250] sm:$0xff]
    %v8148 = vld [vmem:[#allocation17 + $0x1258] sm:$0xff]
    %v8149 = vld [vmem:[#allocation17 + $0x1260] sm:$0xff]
    %v8150 = vld [vmem:[#allocation17 + $0x1268] sm:$0xff]
    %v8151 = vld [vmem:[#allocation17 + $0x1270] sm:$0xff]
    %v8152 = vld [vmem:[#allocation17 + $0x1278] sm:$0xff]
    %v8153 = vld [vmem:[#allocation17 + $0x1280] sm:$0xff]
    %v8154 = vld [vmem:[#allocation17 + $0x1288] sm:$0xff]
    %v8155 = vld [vmem:[#allocation17 + $0x1290] sm:$0xff]
    %v8156 = vld [vmem:[#allocation17 + $0x1298] sm:$0xff]
    %v8157 = vld [vmem:[#allocation17 + $0x12a0] sm:$0xff]
    %v8158 = vld [vmem:[#allocation17 + $0x12a8] sm:$0xff]
    %v8159 = vld [vmem:[#allocation17 + $0x12b0] sm:$0xff]
    %v8160 = vld [vmem:[#allocation17 + $0x12b8] sm:$0xff]
    %v8161 = vld [vmem:[#allocation17 + $0x12c0] sm:$0xff]
    %v8162 = vld [vmem:[#allocation17 + $0x12c8] sm:$0xff]
    %v8163 = vld [vmem:[#allocation17 + $0x12d0] sm:$0xff]
    %v8164 = vld [vmem:[#allocation17 + $0x12d8] sm:$0xff]
    %v8165 = vld [vmem:[#allocation17 + $0x12e0] sm:$0xff]
    %v8166 = vld [vmem:[#allocation17 + $0x12e8] sm:$0xff]
    %v8167 = vld [vmem:[#allocation17 + $0x12f0] sm:$0xff]
    %v8168 = vld [vmem:[#allocation17 + $0x12f8] sm:$0xff]
    %v8169 = vld [vmem:[#allocation17 + $0x1300] sm:$0xff]
    %v8170 = vld [vmem:[#allocation17 + $0x1308] sm:$0xff]
    %v8171 = vld [vmem:[#allocation17 + $0x1310] sm:$0xff]
    %v8172 = vld [vmem:[#allocation17 + $0x1318] sm:$0xff]
    %v8173 = vld [vmem:[#allocation17 + $0x1320] sm:$0xff]
    %v8174 = vld [vmem:[#allocation17 + $0x1328] sm:$0xff]
    %v8175 = vld [vmem:[#allocation17 + $0x1330] sm:$0xff]
    %v8176 = vld [vmem:[#allocation17 + $0x1338] sm:$0xff]
    %v8177 = vld [vmem:[#allocation17 + $0x1340] sm:$0xff]
    %v8178 = vld [vmem:[#allocation17 + $0x1348] sm:$0xff]
    %v8179 = vld [vmem:[#allocation17 + $0x1350] sm:$0xff]
    %v8180 = vld [vmem:[#allocation17 + $0x1358] sm:$0xff]
    %v8181 = vld [vmem:[#allocation17 + $0x1360] sm:$0xff]
    %v8182 = vld [vmem:[#allocation17 + $0x1368] sm:$0xff]
    %v8183 = vld [vmem:[#allocation17 + $0x1370] sm:$0xff]
    %v8184 = vld [vmem:[#allocation17 + $0x1378] sm:$0xff]
    %v8185 = vld [vmem:[#allocation17 + $0x1380] sm:$0xff]
    %v8186 = vld [vmem:[#allocation17 + $0x1388] sm:$0xff]
    %v8187 = vld [vmem:[#allocation17 + $0x1390] sm:$0xff]
    %v8188 = vld [vmem:[#allocation17 + $0x1398] sm:$0xff]
    %v8189 = vld [vmem:[#allocation17 + $0x13a0] sm:$0xff]
    %v8190 = vld [vmem:[#allocation17 + $0x13a8] sm:$0xff]
    %v8191 = vld [vmem:[#allocation17 + $0x13b0] sm:$0xff]
    %v8192 = vld [vmem:[#allocation17 + $0x13b8] sm:$0xff]
    %v8193 = vld [vmem:[#allocation17 + $0x13c0] sm:$0xff]
    %v8194 = vld [vmem:[#allocation17 + $0x13c8] sm:$0xff]
    %v8195 = vld [vmem:[#allocation17 + $0x13d0] sm:$0xff]
    %v8196 = vld [vmem:[#allocation17 + $0x13d8] sm:$0xff]
    %v8197 = vld [vmem:[#allocation17 + $0x13e0] sm:$0xff]
    %v8198 = vld [vmem:[#allocation17 + $0x13e8] sm:$0xff]
    %v8199 = vld [vmem:[#allocation17 + $0x13f0] sm:$0xff]
    %v8200 = vld [vmem:[#allocation17 + $0x13f8] sm:$0xff]
    %v8201 = vld [vmem:[#allocation17 + $0x1400] sm:$0xff]
    %v8202 = vld [vmem:[#allocation17 + $0x1408] sm:$0xff]
    %v8203 = vld [vmem:[#allocation17 + $0x1410] sm:$0xff]
    %v8204 = vld [vmem:[#allocation17 + $0x1418] sm:$0xff]
    %v8205 = vld [vmem:[#allocation17 + $0x1420] sm:$0xff]
    %v8206 = vld [vmem:[#allocation17 + $0x1428] sm:$0xff]
    %v8207 = vld [vmem:[#allocation17 + $0x1430] sm:$0xff]
    %v8208 = vld [vmem:[#allocation17 + $0x1438] sm:$0xff]
    %v8209 = vld [vmem:[#allocation17 + $0x1440] sm:$0xff]
    %v8210 = vld [vmem:[#allocation17 + $0x1448] sm:$0xff]
    %v8211 = vld [vmem:[#allocation17 + $0x1450] sm:$0xff]
    %v8212 = vld [vmem:[#allocation17 + $0x1458] sm:$0xff]
    %v8213 = vld [vmem:[#allocation17 + $0x1460] sm:$0xff]
    %v8214 = vld [vmem:[#allocation17 + $0x1468] sm:$0xff]
    %v8215 = vld [vmem:[#allocation17 + $0x1470] sm:$0xff]
    %v8216 = vld [vmem:[#allocation17 + $0x1478] sm:$0xff]
    %v8217 = vld [vmem:[#allocation17 + $0x1480] sm:$0xff]
    %v8218 = vld [vmem:[#allocation17 + $0x1488] sm:$0xff]
    %v8219 = vld [vmem:[#allocation17 + $0x1490] sm:$0xff]
    %v8220 = vld [vmem:[#allocation17 + $0x1498] sm:$0xff]
    %v8221 = vld [vmem:[#allocation17 + $0x14a0] sm:$0xff]
    %v8222 = vld [vmem:[#allocation17 + $0x14a8] sm:$0xff]
    %v8223 = vld [vmem:[#allocation17 + $0x14b0] sm:$0xff]
    %v8224 = vld [vmem:[#allocation17 + $0x14b8] sm:$0xff]
    %v8225 = vld [vmem:[#allocation17 + $0x14c0] sm:$0xff]
    %v8226 = vld [vmem:[#allocation17 + $0x14c8] sm:$0xff]
    %v8227 = vld [vmem:[#allocation17 + $0x14d0] sm:$0xff]
    %v8228 = vld [vmem:[#allocation17 + $0x14d8] sm:$0xff]
    %v8229 = vld [vmem:[#allocation17 + $0x14e0] sm:$0xff]
    %v8230 = vld [vmem:[#allocation17 + $0x14e8] sm:$0xff]
    %v8231 = vld [vmem:[#allocation17 + $0x14f0] sm:$0xff]
    %v8232 = vld [vmem:[#allocation17 + $0x14f8] sm:$0xff]
    %v8233 = vld [vmem:[#allocation17 + $0x1500] sm:$0xff]
    %v8234 = vld [vmem:[#allocation17 + $0x1508] sm:$0xff]
    %v8235 = vld [vmem:[#allocation17 + $0x1510] sm:$0xff]
    %v8236 = vld [vmem:[#allocation17 + $0x1518] sm:$0xff]
    %v8237 = vld [vmem:[#allocation17 + $0x1520] sm:$0xff]
    %v8238 = vld [vmem:[#allocation17 + $0x1528] sm:$0xff]
    %v8239 = vld [vmem:[#allocation17 + $0x1530] sm:$0xff]
    %v8240 = vld [vmem:[#allocation17 + $0x1538] sm:$0xff]
    %v8241 = vld [vmem:[#allocation17 + $0x1540] sm:$0xff]
    %v8242 = vld [vmem:[#allocation17 + $0x1548] sm:$0xff]
    %v8243 = vld [vmem:[#allocation17 + $0x1550] sm:$0xff]
    %v8244 = vld [vmem:[#allocation17 + $0x1558] sm:$0xff]
    %v8245 = vld [vmem:[#allocation17 + $0x1560] sm:$0xff]
    %v8246 = vld [vmem:[#allocation17 + $0x1568] sm:$0xff]
    %v8247 = vld [vmem:[#allocation17 + $0x1570] sm:$0xff]
    %v8248 = vld [vmem:[#allocation17 + $0x1578] sm:$0xff]
    %v8249 = vld [vmem:[#allocation17 + $0x1580] sm:$0xff]
    %v8250 = vld [vmem:[#allocation17 + $0x1588] sm:$0xff]
    %v8251 = vld [vmem:[#allocation17 + $0x1590] sm:$0xff]
    %v8252 = vld [vmem:[#allocation17 + $0x1598] sm:$0xff]
    %v8253 = vld [vmem:[#allocation17 + $0x15a0] sm:$0xff]
    %v8254 = vld [vmem:[#allocation17 + $0x15a8] sm:$0xff]
    %v8255 = vld [vmem:[#allocation17 + $0x15b0] sm:$0xff]
    %v8256 = vld [vmem:[#allocation17 + $0x15b8] sm:$0xff]
    %v8257 = vld [vmem:[#allocation17 + $0x15c0] sm:$0xff]
    %v8258 = vld [vmem:[#allocation17 + $0x15c8] sm:$0xff]
    %v8259 = vld [vmem:[#allocation17 + $0x15d0] sm:$0xff]
    %v8260 = vld [vmem:[#allocation17 + $0x15d8] sm:$0xff]
    %v8261 = vld [vmem:[#allocation17 + $0x15e0] sm:$0xff]
    %v8262 = vld [vmem:[#allocation17 + $0x15e8] sm:$0xff]
    %v8263 = vld [vmem:[#allocation17 + $0x15f0] sm:$0xff]
    %v8264 = vld [vmem:[#allocation17 + $0x15f8] sm:$0xff]
    %v8265 = vld [vmem:[#allocation17 + $0x1600] sm:$0xff]
    %v8266 = vld [vmem:[#allocation17 + $0x1608] sm:$0xff]
    %v8267 = vld [vmem:[#allocation17 + $0x1610] sm:$0xff]
    %v8268 = vld [vmem:[#allocation17 + $0x1618] sm:$0xff]
    %v8269 = vld [vmem:[#allocation17 + $0x1620] sm:$0xff]
    %v8270 = vld [vmem:[#allocation17 + $0x1628] sm:$0xff]
    %v8271 = vld [vmem:[#allocation17 + $0x1630] sm:$0xff]
    %v8272 = vld [vmem:[#allocation17 + $0x1638] sm:$0xff]
    %v8273 = vld [vmem:[#allocation17 + $0x1640] sm:$0xff]
    %v8274 = vld [vmem:[#allocation17 + $0x1648] sm:$0xff]
    %v8275 = vld [vmem:[#allocation17 + $0x1650] sm:$0xff]
    %v8276 = vld [vmem:[#allocation17 + $0x1658] sm:$0xff]
    %v8277 = vld [vmem:[#allocation17 + $0x1660] sm:$0xff]
    %v8278 = vld [vmem:[#allocation17 + $0x1668] sm:$0xff]
    %v8279 = vld [vmem:[#allocation17 + $0x1670] sm:$0xff]
    %v8280 = vld [vmem:[#allocation17 + $0x1678] sm:$0xff]
    %v8281 = vld [vmem:[#allocation17 + $0x1680] sm:$0xff]
    %v8282 = vld [vmem:[#allocation17 + $0x1688] sm:$0xff]
    %v8283 = vld [vmem:[#allocation17 + $0x1690] sm:$0xff]
    %v8284 = vld [vmem:[#allocation17 + $0x1698] sm:$0xff]
    %v8285 = vld [vmem:[#allocation17 + $0x16a0] sm:$0xff]
    %v8286 = vld [vmem:[#allocation17 + $0x16a8] sm:$0xff]
    %v8287 = vld [vmem:[#allocation17 + $0x16b0] sm:$0xff]
    %v8288 = vld [vmem:[#allocation17 + $0x16b8] sm:$0xff]
    %v8289 = vld [vmem:[#allocation17 + $0x16c0] sm:$0xff]
    %v8290 = vld [vmem:[#allocation17 + $0x16c8] sm:$0xff]
    %v8291 = vld [vmem:[#allocation17 + $0x16d0] sm:$0xff]
    %v8292 = vld [vmem:[#allocation17 + $0x16d8] sm:$0xff]
    %v8293 = vld [vmem:[#allocation17 + $0x16e0] sm:$0xff]
    %v8294 = vld [vmem:[#allocation17 + $0x16e8] sm:$0xff]
    %v8295 = vld [vmem:[#allocation17 + $0x16f0] sm:$0xff]
    %v8296 = vld [vmem:[#allocation17 + $0x16f8] sm:$0xff]
    %v8297 = vld [vmem:[#allocation17 + $0x1700] sm:$0xff]
    %v8298 = vld [vmem:[#allocation17 + $0x1708] sm:$0xff]
    %v8299 = vld [vmem:[#allocation17 + $0x1710] sm:$0xff]
    %v8300 = vld [vmem:[#allocation17 + $0x1718] sm:$0xff]
    %v8301 = vld [vmem:[#allocation17 + $0x1720] sm:$0xff]
    %v8302 = vld [vmem:[#allocation17 + $0x1728] sm:$0xff]
    %v8303 = vld [vmem:[#allocation17 + $0x1730] sm:$0xff]
    %v8304 = vld [vmem:[#allocation17 + $0x1738] sm:$0xff]
    %v8305 = vld [vmem:[#allocation17 + $0x1740] sm:$0xff]
    %v8306 = vld [vmem:[#allocation17 + $0x1748] sm:$0xff]
    %v8307 = vld [vmem:[#allocation17 + $0x1750] sm:$0xff]
    %v8308 = vld [vmem:[#allocation17 + $0x1758] sm:$0xff]
    %v8309 = vld [vmem:[#allocation17 + $0x1760] sm:$0xff]
    %v8310 = vld [vmem:[#allocation17 + $0x1768] sm:$0xff]
    %v8311 = vld [vmem:[#allocation17 + $0x1770] sm:$0xff]
    %v8312 = vld [vmem:[#allocation17 + $0x1778] sm:$0xff]
    %v8313 = vld [vmem:[#allocation17 + $0x1780] sm:$0xff]
    %v8314 = vld [vmem:[#allocation17 + $0x1788] sm:$0xff]
    %v8315 = vld [vmem:[#allocation17 + $0x1790] sm:$0xff]
    %v8316 = vld [vmem:[#allocation17 + $0x1798] sm:$0xff]
    %v8317 = vld [vmem:[#allocation17 + $0x17a0] sm:$0xff]
    %v8318 = vld [vmem:[#allocation17 + $0x17a8] sm:$0xff]
    %v8319 = vld [vmem:[#allocation17 + $0x17b0] sm:$0xff]
    %v8320 = vld [vmem:[#allocation17 + $0x17b8] sm:$0xff]
    %v8321 = vld [vmem:[#allocation17 + $0x17c0] sm:$0xff]
    %v8322 = vld [vmem:[#allocation17 + $0x17c8] sm:$0xff]
    %v8323 = vld [vmem:[#allocation17 + $0x17d0] sm:$0xff]
    %v8324 = vld [vmem:[#allocation17 + $0x17d8] sm:$0xff]
    %v8325 = vld [vmem:[#allocation17 + $0x17e0] sm:$0xff]
    %v8326 = vld [vmem:[#allocation17 + $0x17e8] sm:$0xff]
    %v8327 = vld [vmem:[#allocation17 + $0x17f0] sm:$0xff]
    %v8328 = vld [vmem:[#allocation17 + $0x17f8] sm:$0xff]
    %v8329 = vld [vmem:[#allocation17 + $0x1800] sm:$0xff]
    %v8330 = vld [vmem:[#allocation17 + $0x1808] sm:$0xff]
    %v8331 = vld [vmem:[#allocation17 + $0x1810] sm:$0xff]
    %v8332 = vld [vmem:[#allocation17 + $0x1818] sm:$0xff]
    %v8333 = vld [vmem:[#allocation17 + $0x1820] sm:$0xff]
    %v8334 = vld [vmem:[#allocation17 + $0x1828] sm:$0xff]
    %v8335 = vld [vmem:[#allocation17 + $0x1830] sm:$0xff]
    %v8336 = vld [vmem:[#allocation17 + $0x1838] sm:$0xff]
    %v8337 = vld [vmem:[#allocation17 + $0x1840] sm:$0xff]
    %v8338 = vld [vmem:[#allocation17 + $0x1848] sm:$0xff]
    %v8339 = vld [vmem:[#allocation17 + $0x1850] sm:$0xff]
    %v8340 = vld [vmem:[#allocation17 + $0x1858] sm:$0xff]
    %v8341 = vld [vmem:[#allocation17 + $0x1860] sm:$0xff]
    %v8342 = vld [vmem:[#allocation17 + $0x1868] sm:$0xff]
    %v8343 = vld [vmem:[#allocation17 + $0x1870] sm:$0xff]
    %v8344 = vld [vmem:[#allocation17 + $0x1878] sm:$0xff]
    %v8345 = vld [vmem:[#allocation17 + $0x1880] sm:$0xff]
    %v8346 = vld [vmem:[#allocation17 + $0x1888] sm:$0xff]
    %v8347 = vld [vmem:[#allocation17 + $0x1890] sm:$0xff]
    %v8348 = vld [vmem:[#allocation17 + $0x1898] sm:$0xff]
    %v8349 = vld [vmem:[#allocation17 + $0x18a0] sm:$0xff]
    %v8350 = vld [vmem:[#allocation17 + $0x18a8] sm:$0xff]
    %v8351 = vld [vmem:[#allocation17 + $0x18b0] sm:$0xff]
    %v8352 = vld [vmem:[#allocation17 + $0x18b8] sm:$0xff]
    %v8353 = vld [vmem:[#allocation17 + $0x18c0] sm:$0xff]
    %v8354 = vld [vmem:[#allocation17 + $0x18c8] sm:$0xff]
    %v8355 = vld [vmem:[#allocation17 + $0x18d0] sm:$0xff]
    %v8356 = vld [vmem:[#allocation17 + $0x18d8] sm:$0xff]
    %v8357 = vld [vmem:[#allocation17 + $0x18e0] sm:$0xff]
    %v8358 = vld [vmem:[#allocation17 + $0x18e8] sm:$0xff]
    %v8359 = vld [vmem:[#allocation17 + $0x18f0] sm:$0xff]
    %v8360 = vld [vmem:[#allocation17 + $0x18f8] sm:$0xff]
    %v8361 = vld [vmem:[#allocation17 + $0x1900] sm:$0xff]
    %v8362 = vld [vmem:[#allocation17 + $0x1908] sm:$0xff]
    %v8363 = vld [vmem:[#allocation17 + $0x1910] sm:$0xff]
    %v8364 = vld [vmem:[#allocation17 + $0x1918] sm:$0xff]
    %v8365 = vld [vmem:[#allocation17 + $0x1920] sm:$0xff]
    %v8366 = vld [vmem:[#allocation17 + $0x1928] sm:$0xff]
    %v8367 = vld [vmem:[#allocation17 + $0x1930] sm:$0xff]
    %v8368 = vld [vmem:[#allocation17 + $0x1938] sm:$0xff]
    %v8369 = vld [vmem:[#allocation17 + $0x1940] sm:$0xff]
    %v8370 = vld [vmem:[#allocation17 + $0x1948] sm:$0xff]
    %v8371 = vld [vmem:[#allocation17 + $0x1950] sm:$0xff]
    %v8372 = vld [vmem:[#allocation17 + $0x1958] sm:$0xff]
    %v8373 = vld [vmem:[#allocation17 + $0x1960] sm:$0xff]
    %v8374 = vld [vmem:[#allocation17 + $0x1968] sm:$0xff]
    %v8375 = vld [vmem:[#allocation17 + $0x1970] sm:$0xff]
    %v8376 = vld [vmem:[#allocation17 + $0x1978] sm:$0xff]
    %v8377 = vld [vmem:[#allocation17 + $0x1980] sm:$0xff]
    %v8378 = vld [vmem:[#allocation17 + $0x1988] sm:$0xff]
    %v8379 = vld [vmem:[#allocation17 + $0x1990] sm:$0xff]
    %v8380 = vld [vmem:[#allocation17 + $0x1998] sm:$0xff]
    %v8381 = vld [vmem:[#allocation17 + $0x19a0] sm:$0xff]
    %v8382 = vld [vmem:[#allocation17 + $0x19a8] sm:$0xff]
    %v8383 = vld [vmem:[#allocation17 + $0x19b0] sm:$0xff]
    %v8384 = vld [vmem:[#allocation17 + $0x19b8] sm:$0xff]
    %v8385 = vld [vmem:[#allocation17 + $0x19c0] sm:$0xff]
    %v8386 = vld [vmem:[#allocation17 + $0x19c8] sm:$0xff]
    %v8387 = vld [vmem:[#allocation17 + $0x19d0] sm:$0xff]
    %v8388 = vld [vmem:[#allocation17 + $0x19d8] sm:$0xff]
    %v8389 = vld [vmem:[#allocation17 + $0x19e0] sm:$0xff]
    %v8390 = vld [vmem:[#allocation17 + $0x19e8] sm:$0xff]
    %v8391 = vld [vmem:[#allocation17 + $0x19f0] sm:$0xff]
    %v8392 = vld [vmem:[#allocation17 + $0x19f8] sm:$0xff]
    %v8393 = vld [vmem:[#allocation17 + $0x1a00] sm:$0xff]
    %v8394 = vld [vmem:[#allocation17 + $0x1a08] sm:$0xff]
    %v8395 = vld [vmem:[#allocation17 + $0x1a10] sm:$0xff]
    %v8396 = vld [vmem:[#allocation17 + $0x1a18] sm:$0xff]
    %v8397 = vld [vmem:[#allocation17 + $0x1a20] sm:$0xff]
    %v8398 = vld [vmem:[#allocation17 + $0x1a28] sm:$0xff]
    %v8399 = vld [vmem:[#allocation17 + $0x1a30] sm:$0xff]
    %v8400 = vld [vmem:[#allocation17 + $0x1a38] sm:$0xff]
    %v8401 = vld [vmem:[#allocation17 + $0x1a40] sm:$0xff]
    %v8402 = vld [vmem:[#allocation17 + $0x1a48] sm:$0xff]
    %v8403 = vld [vmem:[#allocation17 + $0x1a50] sm:$0xff]
    %v8404 = vld [vmem:[#allocation17 + $0x1a58] sm:$0xff]
    %v8405 = vld [vmem:[#allocation17 + $0x1a60] sm:$0xff]
    %v8406 = vld [vmem:[#allocation17 + $0x1a68] sm:$0xff]
    %v8407 = vld [vmem:[#allocation17 + $0x1a70] sm:$0xff]
    %v8408 = vld [vmem:[#allocation17 + $0x1a78] sm:$0xff]
    %v8409 = vld [vmem:[#allocation17 + $0x1a80] sm:$0xff]
    %v8410 = vld [vmem:[#allocation17 + $0x1a88] sm:$0xff]
    %v8411 = vld [vmem:[#allocation17 + $0x1a90] sm:$0xff]
    %v8412 = vld [vmem:[#allocation17 + $0x1a98] sm:$0xff]
    %v8413 = vld [vmem:[#allocation17 + $0x1aa0] sm:$0xff]
    %v8414 = vld [vmem:[#allocation17 + $0x1aa8] sm:$0xff]
    %v8415 = vld [vmem:[#allocation17 + $0x1ab0] sm:$0xff]
    %v8416 = vld [vmem:[#allocation17 + $0x1ab8] sm:$0xff]
    %v8417 = vld [vmem:[#allocation17 + $0x1ac0] sm:$0xff]
    %v8418 = vld [vmem:[#allocation17 + $0x1ac8] sm:$0xff]
    %v8419 = vld [vmem:[#allocation17 + $0x1ad0] sm:$0xff]
    %v8420 = vld [vmem:[#allocation17 + $0x1ad8] sm:$0xff]
    %v8421 = vld [vmem:[#allocation17 + $0x1ae0] sm:$0xff]
    %v8422 = vld [vmem:[#allocation17 + $0x1ae8] sm:$0xff]
    %v8423 = vld [vmem:[#allocation17 + $0x1af0] sm:$0xff]
    %v8424 = vld [vmem:[#allocation17 + $0x1af8] sm:$0xff]
    %v8425 = vld [vmem:[#allocation17 + $0x1b00] sm:$0xff]
    %v8426 = vld [vmem:[#allocation17 + $0x1b08] sm:$0xff]
    %v8427 = vld [vmem:[#allocation17 + $0x1b10] sm:$0xff]
    %v8428 = vld [vmem:[#allocation17 + $0x1b18] sm:$0xff]
    %v8429 = vld [vmem:[#allocation17 + $0x1b20] sm:$0xff]
    %v8430 = vld [vmem:[#allocation17 + $0x1b28] sm:$0xff]
    %v8431 = vld [vmem:[#allocation17 + $0x1b30] sm:$0xff]
    %v8432 = vld [vmem:[#allocation17 + $0x1b38] sm:$0xff]
    %v8433 = vld [vmem:[#allocation17 + $0x1b40] sm:$0xff]
    %v8434 = vld [vmem:[#allocation17 + $0x1b48] sm:$0xff]
    %v8435 = vld [vmem:[#allocation17 + $0x1b50] sm:$0xff]
    %v8436 = vld [vmem:[#allocation17 + $0x1b58] sm:$0xff]
    %v8437 = vld [vmem:[#allocation17 + $0x1b60] sm:$0xff]
    %v8438 = vld [vmem:[#allocation17 + $0x1b68] sm:$0xff]
    %v8439 = vld [vmem:[#allocation17 + $0x1b70] sm:$0xff]
    %v8440 = vld [vmem:[#allocation17 + $0x1b78] sm:$0xff]
    %v8441 = vld [vmem:[#allocation17 + $0x1b80] sm:$0xff]
    %v8442 = vld [vmem:[#allocation17 + $0x1b88] sm:$0xff]
    %v8443 = vld [vmem:[#allocation17 + $0x1b90] sm:$0xff]
    %v8444 = vld [vmem:[#allocation17 + $0x1b98] sm:$0xff]
    %v8445 = vld [vmem:[#allocation17 + $0x1ba0] sm:$0xff]
    %v8446 = vld [vmem:[#allocation17 + $0x1ba8] sm:$0xff]
    %v8447 = vld [vmem:[#allocation17 + $0x1bb0] sm:$0xff]
    %v8448 = vld [vmem:[#allocation17 + $0x1bb8] sm:$0xff]
    %v8449 = vld [vmem:[#allocation17 + $0x1bc0] sm:$0xff]
    %v8450 = vld [vmem:[#allocation17 + $0x1bc8] sm:$0xff]
    %v8451 = vld [vmem:[#allocation17 + $0x1bd0] sm:$0xff]
    %v8452 = vld [vmem:[#allocation17 + $0x1bd8] sm:$0xff]
    %v8453 = vld [vmem:[#allocation17 + $0x1be0] sm:$0xff]
    %v8454 = vld [vmem:[#allocation17 + $0x1be8] sm:$0xff]
    %v8455 = vld [vmem:[#allocation17 + $0x1bf0] sm:$0xff]
    %v8456 = vld [vmem:[#allocation17 + $0x1bf8] sm:$0xff]
    %v8457 = vld [vmem:[#allocation17 + $0x1c00] sm:$0xff]
    %v8458 = vld [vmem:[#allocation17 + $0x1c08] sm:$0xff]
    %v8459 = vld [vmem:[#allocation17 + $0x1c10] sm:$0xff]
    %v8460 = vld [vmem:[#allocation17 + $0x1c18] sm:$0xff]
    %v8461 = vld [vmem:[#allocation17 + $0x1c20] sm:$0xff]
    %v8462 = vld [vmem:[#allocation17 + $0x1c28] sm:$0xff]
    %v8463 = vld [vmem:[#allocation17 + $0x1c30] sm:$0xff]
    %v8464 = vld [vmem:[#allocation17 + $0x1c38] sm:$0xff]
    %v8465 = vld [vmem:[#allocation17 + $0x1c40] sm:$0xff]
    %v8466 = vld [vmem:[#allocation17 + $0x1c48] sm:$0xff]
    %v8467 = vld [vmem:[#allocation17 + $0x1c50] sm:$0xff]
    %v8468 = vld [vmem:[#allocation17 + $0x1c58] sm:$0xff]
    %v8469 = vld [vmem:[#allocation17 + $0x1c60] sm:$0xff]
    %v8470 = vld [vmem:[#allocation17 + $0x1c68] sm:$0xff]
    %v8471 = vld [vmem:[#allocation17 + $0x1c70] sm:$0xff]
    %v8472 = vld [vmem:[#allocation17 + $0x1c78] sm:$0xff]
    %v8473 = vld [vmem:[#allocation17 + $0x1c80] sm:$0xff]
    %v8474 = vld [vmem:[#allocation17 + $0x1c88] sm:$0xff]
    %v8475 = vld [vmem:[#allocation17 + $0x1c90] sm:$0xff]
    %v8476 = vld [vmem:[#allocation17 + $0x1c98] sm:$0xff]
    %v8477 = vld [vmem:[#allocation17 + $0x1ca0] sm:$0xff]
    %v8478 = vld [vmem:[#allocation17 + $0x1ca8] sm:$0xff]
    %v8479 = vld [vmem:[#allocation17 + $0x1cb0] sm:$0xff]
    %v8480 = vld [vmem:[#allocation17 + $0x1cb8] sm:$0xff]
    %v8481 = vld [vmem:[#allocation17 + $0x1cc0] sm:$0xff]
    %v8482 = vld [vmem:[#allocation17 + $0x1cc8] sm:$0xff]
    %v8483 = vld [vmem:[#allocation17 + $0x1cd0] sm:$0xff]
    %v8484 = vld [vmem:[#allocation17 + $0x1cd8] sm:$0xff]
    %v8485 = vld [vmem:[#allocation17 + $0x1ce0] sm:$0xff]
    %v8486 = vld [vmem:[#allocation17 + $0x1ce8] sm:$0xff]
    %v8487 = vld [vmem:[#allocation17 + $0x1cf0] sm:$0xff]
    %v8488 = vld [vmem:[#allocation17 + $0x1cf8] sm:$0xff]
    %v8489 = vld [vmem:[#allocation17 + $0x1d00] sm:$0xff]
    %v8490 = vld [vmem:[#allocation17 + $0x1d08] sm:$0xff]
    %v8491 = vld [vmem:[#allocation17 + $0x1d10] sm:$0xff]
    %v8492 = vld [vmem:[#allocation17 + $0x1d18] sm:$0xff]
    %v8493 = vld [vmem:[#allocation17 + $0x1d20] sm:$0xff]
    %v8494 = vld [vmem:[#allocation17 + $0x1d28] sm:$0xff]
    %v8495 = vld [vmem:[#allocation17 + $0x1d30] sm:$0xff]
    %v8496 = vld [vmem:[#allocation17 + $0x1d38] sm:$0xff]
    %v8497 = vld [vmem:[#allocation17 + $0x1d40] sm:$0xff]
    %v8498 = vld [vmem:[#allocation17 + $0x1d48] sm:$0xff]
    %v8499 = vld [vmem:[#allocation17 + $0x1d50] sm:$0xff]
    %v8500 = vld [vmem:[#allocation17 + $0x1d58] sm:$0xff]
    %v8501 = vld [vmem:[#allocation17 + $0x1d60] sm:$0xff]
    %v8502 = vld [vmem:[#allocation17 + $0x1d68] sm:$0xff]
    %v8503 = vld [vmem:[#allocation17 + $0x1d70] sm:$0xff]
    %v8504 = vld [vmem:[#allocation17 + $0x1d78] sm:$0xff]
    %v8505 = vld [vmem:[#allocation17 + $0x1d80] sm:$0xff]
    %v8506 = vld [vmem:[#allocation17 + $0x1d88] sm:$0xff]
    %v8507 = vld [vmem:[#allocation17 + $0x1d90] sm:$0xff]
    %v8508 = vld [vmem:[#allocation17 + $0x1d98] sm:$0xff]
    %v8509 = vld [vmem:[#allocation17 + $0x1da0] sm:$0xff]
    %v8510 = vld [vmem:[#allocation17 + $0x1da8] sm:$0xff]
    %v8511 = vld [vmem:[#allocation17 + $0x1db0] sm:$0xff]
    %v8512 = vld [vmem:[#allocation17 + $0x1db8] sm:$0xff]
    %v8513 = vld [vmem:[#allocation17 + $0x1dc0] sm:$0xff]
    %v8514 = vld [vmem:[#allocation17 + $0x1dc8] sm:$0xff]
    %v8515 = vld [vmem:[#allocation17 + $0x1dd0] sm:$0xff]
    %v8516 = vld [vmem:[#allocation17 + $0x1dd8] sm:$0xff]
    %v8517 = vld [vmem:[#allocation17 + $0x1de0] sm:$0xff]
    %v8518 = vld [vmem:[#allocation17 + $0x1de8] sm:$0xff]
    %v8519 = vld [vmem:[#allocation17 + $0x1df0] sm:$0xff]
    %v8520 = vld [vmem:[#allocation17 + $0x1df8] sm:$0xff]
    %v8521 = vld [vmem:[#allocation17 + $0x1e00] sm:$0xff]
    %v8522 = vld [vmem:[#allocation17 + $0x1e08] sm:$0xff]
    %v8523 = vld [vmem:[#allocation17 + $0x1e10] sm:$0xff]
    %v8524 = vld [vmem:[#allocation17 + $0x1e18] sm:$0xff]
    %v8525 = vld [vmem:[#allocation17 + $0x1e20] sm:$0xff]
    %v8526 = vld [vmem:[#allocation17 + $0x1e28] sm:$0xff]
    %v8527 = vld [vmem:[#allocation17 + $0x1e30] sm:$0xff]
    %v8528 = vld [vmem:[#allocation17 + $0x1e38] sm:$0xff]
    %v8529 = vld [vmem:[#allocation17 + $0x1e40] sm:$0xff]
    %v8530 = vld [vmem:[#allocation17 + $0x1e48] sm:$0xff]
    %v8531 = vld [vmem:[#allocation17 + $0x1e50] sm:$0xff]
    %v8532 = vld [vmem:[#allocation17 + $0x1e58] sm:$0xff]
    %v8533 = vld [vmem:[#allocation17 + $0x1e60] sm:$0xff]
    %v8534 = vld [vmem:[#allocation17 + $0x1e68] sm:$0xff]
    %v8535 = vld [vmem:[#allocation17 + $0x1e70] sm:$0xff]
    %v8536 = vld [vmem:[#allocation17 + $0x1e78] sm:$0xff]
    %v8537 = vld [vmem:[#allocation17 + $0x1e80] sm:$0xff]
    %v8538 = vld [vmem:[#allocation17 + $0x1e88] sm:$0xff]
    %v8539 = vld [vmem:[#allocation17 + $0x1e90] sm:$0xff]
    %v8540 = vld [vmem:[#allocation17 + $0x1e98] sm:$0xff]
    %v8541 = vld [vmem:[#allocation17 + $0x1ea0] sm:$0xff]
    %v8542 = vld [vmem:[#allocation17 + $0x1ea8] sm:$0xff]
    %v8543 = vld [vmem:[#allocation17 + $0x1eb0] sm:$0xff]
    %v8544 = vld [vmem:[#allocation17 + $0x1eb8] sm:$0xff]
    %v8545 = vld [vmem:[#allocation17 + $0x1ec0] sm:$0xff]
    %v8546 = vld [vmem:[#allocation17 + $0x1ec8] sm:$0xff]
    %v8547 = vld [vmem:[#allocation17 + $0x1ed0] sm:$0xff]
    %v8548 = vld [vmem:[#allocation17 + $0x1ed8] sm:$0xff]
    %v8549 = vld [vmem:[#allocation17 + $0x1ee0] sm:$0xff]
    %v8550 = vld [vmem:[#allocation17 + $0x1ee8] sm:$0xff]
    %v8551 = vld [vmem:[#allocation17 + $0x1ef0] sm:$0xff]
    %v8552 = vld [vmem:[#allocation17 + $0x1ef8] sm:$0xff]
    %v8553 = vld [vmem:[#allocation17 + $0x1f00] sm:$0xff]
    %v8554 = vld [vmem:[#allocation17 + $0x1f08] sm:$0xff]
    %v8555 = vld [vmem:[#allocation17 + $0x1f10] sm:$0xff]
    %v8556 = vld [vmem:[#allocation17 + $0x1f18] sm:$0xff]
    %v8557 = vld [vmem:[#allocation17 + $0x1f20] sm:$0xff]
    %v8558 = vld [vmem:[#allocation17 + $0x1f28] sm:$0xff]
    %v8559 = vld [vmem:[#allocation17 + $0x1f30] sm:$0xff]
    %v8560 = vld [vmem:[#allocation17 + $0x1f38] sm:$0xff]
    %v8561 = vld [vmem:[#allocation17 + $0x1f40] sm:$0xff]
    %v8562 = vld [vmem:[#allocation17 + $0x1f48] sm:$0xff]
    %v8563 = vld [vmem:[#allocation17 + $0x1f50] sm:$0xff]
    %v8564 = vld [vmem:[#allocation17 + $0x1f58] sm:$0xff]
    %v8565 = vld [vmem:[#allocation17 + $0x1f60] sm:$0xff]
    %v8566 = vld [vmem:[#allocation17 + $0x1f68] sm:$0xff]
    %v8567 = vld [vmem:[#allocation17 + $0x1f70] sm:$0xff]
    %v8568 = vld [vmem:[#allocation17 + $0x1f78] sm:$0xff]
    %v8569 = vld [vmem:[#allocation17 + $0x1f80] sm:$0xff]
    %v8570 = vld [vmem:[#allocation17 + $0x1f88] sm:$0xff]
    %v8571 = vld [vmem:[#allocation17 + $0x1f90] sm:$0xff]
    %v8572 = vld [vmem:[#allocation17 + $0x1f98] sm:$0xff]
    %v8573 = vld [vmem:[#allocation17 + $0x1fa0] sm:$0xff]
    %v8574 = vld [vmem:[#allocation17 + $0x1fa8] sm:$0xff]
    %v8575 = vld [vmem:[#allocation17 + $0x1fb0] sm:$0xff]
    %v8576 = vld [vmem:[#allocation17 + $0x1fb8] sm:$0xff]
    %v8577 = vld [vmem:[#allocation17 + $0x1fc0] sm:$0xff]
    %v8578 = vld [vmem:[#allocation17 + $0x1fc8] sm:$0xff]
    %v8579 = vld [vmem:[#allocation17 + $0x1fd0] sm:$0xff]
    %v8580 = vld [vmem:[#allocation17 + $0x1fd8] sm:$0xff]
    %v8581 = vld [vmem:[#allocation17 + $0x1fe0] sm:$0xff]
    %v8582 = vld [vmem:[#allocation17 + $0x1fe8] sm:$0xff]
    %v8583 = vld [vmem:[#allocation17 + $0x1ff0] sm:$0xff]
    %v8584 = vld [vmem:[#allocation17 + $0x1ff8] sm:$0xff]
    %v8585 = vld [vmem:[#allocation19] sm:$0xff]
    %v8587 = vlaneseq
    %v8588 = vshrl.u32 %v8587, 7
    %v8589 = vsub.s32 0, %v8588
    %v8590 = vrot.slane %v8585, %v8589
    %v8591 = vlaneseq
    %v8592 = vshrl.u32 %v8591, 7
    %v8593 = vsub.s32 1, %v8592
    %v8594 = vrot.slane %v8585, %v8593
    %v8595 = vlaneseq
    %v8596 = vshrl.u32 %v8595, 7
    %v8597 = vsub.s32 2, %v8596
    %v8598 = vrot.slane %v8585, %v8597
    %v8599 = vlaneseq
    %v8600 = vshrl.u32 %v8599, 7
    %v8601 = vsub.s32 3, %v8600
    %v8602 = vrot.slane %v8585, %v8601
    %v8603 = vlaneseq
    %v8604 = vshrl.u32 %v8603, 7
    %v8605 = vsub.s32 4, %v8604
    %v8606 = vrot.slane %v8585, %v8605
    %v8607 = vlaneseq
    %v8608 = vshrl.u32 %v8607, 7
    %v8609 = vsub.s32 5, %v8608
    %v8610 = vrot.slane %v8585, %v8609
    %v8611 = vlaneseq
    %v8612 = vshrl.u32 %v8611, 7
    %v8613 = vsub.s32 6, %v8612
    %v8614 = vrot.slane %v8585, %v8613
    %v8615 = vlaneseq
    %v8616 = vshrl.u32 %v8615, 7
    %v8617 = vsub.s32 7, %v8616
    %v8618 = vrot.slane %v8585, %v8617
    %8627 = vmatprep.subr.mxu0 %v7562
    %8628 = vmatpush1.msra.mxu0 %v7561
    %8629 = vmatprep.subr.mxu0 %v7570
    %8630 = vmatpush1.msra.mxu0 %v7569
    %8631 = vmatprep.subr.mxu0 %v7578
    %8632 = vmatpush1.msra.mxu0 %v7577
    %8633 = vmatprep.subr.mxu0 %v7586
    %8634 = vmatpush1.msra.mxu0 %v7585
    %8635 = vmatprep.subr.mxu0 %v7594
    %8636 = vmatpush1.msra.mxu0 %v7593
    %8637 = vmatprep.subr.mxu0 %v7602
    %8638 = vmatpush1.msra.mxu0 %v7601
    %8639 = vmatprep.subr.mxu0 %v7610
    %8640 = vmatpush1.msra.mxu0 %v7609
    %8641 = vmatprep.subr.mxu0 %v7618
    %8642 = vmatpush1.msra.mxu0 %v7617
    %8643 = vmatprep.subr.mxu0 %v7626
    %8644 = vmatpush1.msra.mxu0 %v7625
    %8645 = vmatprep.subr.mxu0 %v7634
    %8646 = vmatpush1.msra.mxu0 %v7633
    %8647 = vmatprep.subr.mxu0 %v7642
    %8648 = vmatpush1.msra.mxu0 %v7641
    %8649 = vmatprep.subr.mxu0 %v7650
    %8650 = vmatpush1.msra.mxu0 %v7649
    %8651 = vmatprep.subr.mxu0 %v7658
    %8652 = vmatpush1.msra.mxu0 %v7657
    %8653 = vmatprep.subr.mxu0 %v7666
    %8654 = vmatpush1.msra.mxu0 %v7665
    %8655 = vmatprep.subr.mxu0 %v7674
    %8656 = vmatpush1.msra.mxu0 %v7673
    %8657 = vmatprep.subr.mxu0 %v7682
    %8658 = vmatpush1.msra.mxu0 %v7681
    %8659 = vmatprep.subr.mxu0 %v7690
    %8660 = vmatpush1.msra.mxu0 %v7689
    %8661 = vmatprep.subr.mxu0 %v7698
    %8662 = vmatpush1.msra.mxu0 %v7697
    %8663 = vmatprep.subr.mxu0 %v7706
    %8664 = vmatpush1.msra.mxu0 %v7705
    %8665 = vmatprep.subr.mxu0 %v7714
    %8666 = vmatpush1.msra.mxu0 %v7713
    %8667 = vmatprep.subr.mxu0 %v7722
    %8668 = vmatpush1.msra.mxu0 %v7721
    %8669 = vmatprep.subr.mxu0 %v7730
    %8670 = vmatpush1.msra.mxu0 %v7729
    %8671 = vmatprep.subr.mxu0 %v7738
    %8672 = vmatpush1.msra.mxu0 %v7737
    %8673 = vmatprep.subr.mxu0 %v7746
    %8674 = vmatpush1.msra.mxu0 %v7745
    %8675 = vmatprep.subr.mxu0 %v7754
    %8676 = vmatpush1.msra.mxu0 %v7753
    %8677 = vmatprep.subr.mxu0 %v7762
    %8678 = vmatpush1.msra.mxu0 %v7761
    %8679 = vmatprep.subr.mxu0 %v7770
    %8680 = vmatpush1.msra.mxu0 %v7769
    %8681 = vmatprep.subr.mxu0 %v7778
    %8682 = vmatpush1.msra.mxu0 %v7777
    %8683 = vmatprep.subr.mxu0 %v7786
    %8684 = vmatpush1.msra.mxu0 %v7785
    %8685 = vmatprep.subr.mxu0 %v7794
    %8686 = vmatpush1.msra.mxu0 %v7793
    %8687 = vmatprep.subr.mxu0 %v7802
    %8688 = vmatpush1.msra.mxu0 %v7801
    %8689 = vmatprep.subr.mxu0 %v7810
    %8690 = vmatpush1.msra.mxu0 %v7809
    %8691 = vmatprep.mubr.f32.mxu0 %v7546
    %8692 = vmatmul.mubr.f32.gmra.mrb[0].mxu0 %v7545
    %v8693 = vpop.f32.mrb[0].mxu0
    %v8694 = vadd.f32 %v8590, %v8693
    %v8695 = vpop.f32.mrb[0].mxu0
    %v8696 = vadd.f32 %v8594, %v8695
    %8697 = vmatprep.mubr.f32.mxu0 %v7554
    %8698 = vmatmul.mubr.f32.gmra.mrb[0].mxu0 %v7553
    %v8699 = vpop.f32.mrb[0].mxu0
    %v8700 = vadd.f32 %v8590, %v8699
    %v8701 = vpop.f32.mrb[0].mxu0
    %v8702 = vadd.f32 %v8594, %v8701
    %8703 = vdwg.mxu0
    %8704 = vmatprep.subr.mxu0 %v7818
    %8705 = vmatpush1.msra.mxu0 %v7817
    %8706 = vmatprep.subr.mxu0 %v7826
    %8707 = vmatpush1.msra.mxu0 %v7825
    %8708 = vmatprep.subr.mxu0 %v7834
    %8709 = vmatpush1.msra.mxu0 %v7833
    %8710 = vmatprep.subr.mxu0 %v7842
    %8711 = vmatpush1.msra.mxu0 %v7841
    %8712 = vmatprep.subr.mxu0 %v7850
    %8713 = vmatpush1.msra.mxu0 %v7849
    %8714 = vmatprep.subr.mxu0 %v7858
    %8715 = vmatpush1.msra.mxu0 %v7857
    %8716 = vmatprep.subr.mxu0 %v7866
    %8717 = vmatpush1.msra.mxu0 %v7865
    %8718 = vmatprep.subr.mxu0 %v7874
    %8719 = vmatpush1.msra.mxu0 %v7873
    %8720 = vmatprep.subr.mxu0 %v7882
    %8721 = vmatpush1.msra.mxu0 %v7881
    %8722 = vmatprep.subr.mxu0 %v7890
    %8723 = vmatpush1.msra.mxu0 %v7889
    %8724 = vmatprep.subr.mxu0 %v7898
    %8725 = vmatpush1.msra.mxu0 %v7897
    %8726 = vmatprep.subr.mxu0 %v7906
    %8727 = vmatpush1.msra.mxu0 %v7905
    %8728 = vmatprep.subr.mxu0 %v7914
    %8729 = vmatpush1.msra.mxu0 %v7913
    %8730 = vmatprep.subr.mxu0 %v7922
    %8731 = vmatpush1.msra.mxu0 %v7921
    %8732 = vmatprep.subr.mxu0 %v7930
    %8733 = vmatpush1.msra.mxu0 %v7929
    %8734 = vmatprep.subr.mxu0 %v7938
    %8735 = vmatpush1.msra.mxu0 %v7937
    %8736 = vmatprep.subr.mxu0 %v7946
    %8737 = vmatpush1.msra.mxu0 %v7945
    %8738 = vmatprep.subr.mxu0 %v7954
    %8739 = vmatpush1.msra.mxu0 %v7953
    %8740 = vmatprep.subr.mxu0 %v7962
    %8741 = vmatpush1.msra.mxu0 %v7961
    %8742 = vmatprep.subr.mxu0 %v7970
    %8743 = vmatpush1.msra.mxu0 %v7969
    %8744 = vmatprep.subr.mxu0 %v7978
    %8745 = vmatpush1.msra.mxu0 %v7977
    %8746 = vmatprep.subr.mxu0 %v7986
    %8747 = vmatpush1.msra.mxu0 %v7985
    %8748 = vmatprep.subr.mxu0 %v7994
    %8749 = vmatpush1.msra.mxu0 %v7993
    %8750 = vmatprep.subr.mxu0 %v8002
    %8751 = vmatpush1.msra.mxu0 %v8001
    %8752 = vmatprep.subr.mxu0 %v8010
    %8753 = vmatpush1.msra.mxu0 %v8009
    %8754 = vmatprep.subr.mxu0 %v8018
    %8755 = vmatpush1.msra.mxu0 %v8017
    %8756 = vmatprep.subr.mxu0 %v8026
    %8757 = vmatpush1.msra.mxu0 %v8025
    %8758 = vmatprep.subr.mxu0 %v8034
    %8759 = vmatpush1.msra.mxu0 %v8033
    %8760 = vmatprep.subr.mxu0 %v8042
    %8761 = vmatpush1.msra.mxu0 %v8041
    %8762 = vmatprep.subr.mxu0 %v8050
    %8763 = vmatpush1.msra.mxu0 %v8049
    %8764 = vmatprep.subr.mxu0 %v8058
    %8765 = vmatpush1.msra.mxu0 %v8057
    %8766 = vmatprep.subr.mxu0 %v8066
    %8767 = vmatpush1.msra.mxu0 %v8065
    %8768 = vmatprep.mubr.f32.mxu0 %v7548
    %8769 = vmatmul.mubr.f32.gmra.mrb[0].mxu0 %v7547
    %v8770 = vpop.f32.mrb[0].mxu0
    %v8771 = vadd.f32 %v8694, %v8770
    %v8772 = vpop.f32.mrb[0].mxu0
    %v8773 = vadd.f32 %v8696, %v8772
    %8774 = vmatprep.mubr.f32.mxu0 %v7556
    %8775 = vmatmul.mubr.f32.gmra.mrb[0].mxu0 %v7555
    %v8776 = vpop.f32.mrb[0].mxu0
    %v8777 = vadd.f32 %v8700, %v8776
    %v8778 = vpop.f32.mrb[0].mxu0
    %v8779 = vadd.f32 %v8702, %v8778
    %8780 = vdwg.mxu0
    %8781 = vmatprep.subr.mxu0 %v8074
    %8782 = vmatpush1.msra.mxu0 %v8073
    %8783 = vmatprep.subr.mxu0 %v8082
    %8784 = vmatpush1.msra.mxu0 %v8081
    %8785 = vmatprep.subr.mxu0 %v8090
    %8786 = vmatpush1.msra.mxu0 %v8089
    %8787 = vmatprep.subr.mxu0 %v8098
    %8788 = vmatpush1.msra.mxu0 %v8097
    %8789 = vmatprep.subr.mxu0 %v8106
    %8790 = vmatpush1.msra.mxu0 %v8105
    %8791 = vmatprep.subr.mxu0 %v8114
    %8792 = vmatpush1.msra.mxu0 %v8113
    %8793 = vmatprep.subr.mxu0 %v8122
    %8794 = vmatpush1.msra.mxu0 %v8121
    %8795 = vmatprep.subr.mxu0 %v8130
    %8796 = vmatpush1.msra.mxu0 %v8129
    %8797 = vmatprep.subr.mxu0 %v8138
    %8798 = vmatpush1.msra.mxu0 %v8137
    %8799 = vmatprep.subr.mxu0 %v8146
    %8800 = vmatpush1.msra.mxu0 %v8145
    %8801 = vmatprep.subr.mxu0 %v8154
    %8802 = vmatpush1.msra.mxu0 %v8153
    %8803 = vmatprep.subr.mxu0 %v8162
    %8804 = vmatpush1.msra.mxu0 %v8161
    %8805 = vmatprep.subr.mxu0 %v8170
    %8806 = vmatpush1.msra.mxu0 %v8169
    %8807 = vmatprep.subr.mxu0 %v8178
    %8808 = vmatpush1.msra.mxu0 %v8177
    %8809 = vmatprep.subr.mxu0 %v8186
    %8810 = vmatpush1.msra.mxu0 %v8185
    %8811 = vmatprep.subr.mxu0 %v8194
    %8812 = vmatpush1.msra.mxu0 %v8193
    %8813 = vmatprep.subr.mxu0 %v8202
    %8814 = vmatpush1.msra.mxu0 %v8201
    %8815 = vmatprep.subr.mxu0 %v8210
    %8816 = vmatpush1.msra.mxu0 %v8209
    %8817 = vmatprep.subr.mxu0 %v8218
    %8818 = vmatpush1.msra.mxu0 %v8217
    %8819 = vmatprep.subr.mxu0 %v8226
    %8820 = vmatpush1.msra.mxu0 %v8225
    %8821 = vmatprep.subr.mxu0 %v8234
    %8822 = vmatpush1.msra.mxu0 %v8233
    %8823 = vmatprep.subr.mxu0 %v8242
    %8824 = vmatpush1.msra.mxu0 %v8241
    %8825 = vmatprep.subr.mxu0 %v8250
    %8826 = vmatpush1.msra.mxu0 %v8249
    %8827 = vmatprep.subr.mxu0 %v8258
    %8828 = vmatpush1.msra.mxu0 %v8257
    %8829 = vmatprep.subr.mxu0 %v8266
    %8830 = vmatpush1.msra.mxu0 %v8265
    %8831 = vmatprep.subr.mxu0 %v8274
    %8832 = vmatpush1.msra.mxu0 %v8273
    %8833 = vmatprep.subr.mxu0 %v8282
    %8834 = vmatpush1.msra.mxu0 %v8281
    %8835 = vmatprep.subr.mxu0 %v8290
    %8836 = vmatpush1.msra.mxu0 %v8289
    %8837 = vmatprep.subr.mxu0 %v8298
    %8838 = vmatpush1.msra.mxu0 %v8297
    %8839 = vmatprep.subr.mxu0 %v8306
    %8840 = vmatpush1.msra.mxu0 %v8305
    %8841 = vmatprep.subr.mxu0 %v8314
    %8842 = vmatpush1.msra.mxu0 %v8313
    %8843 = vmatprep.subr.mxu0 %v8322
    %8844 = vmatpush1.msra.mxu0 %v8321
    %8845 = vmatprep.mubr.f32.mxu0 %v7550
    %8846 = vmatmul.mubr.f32.gmra.mrb[0].mxu0 %v7549
    %v8847 = vpop.f32.mrb[0].mxu0
    %v8848 = vadd.f32 %v8771, %v8847
    %v8849 = vpop.f32.mrb[0].mxu0
    %v8850 = vadd.f32 %v8773, %v8849
    %8851 = vmatprep.mubr.f32.mxu0 %v7558
    %8852 = vmatmul.mubr.f32.gmra.mrb[0].mxu0 %v7557
    %v8853 = vpop.f32.mrb[0].mxu0
    %v8854 = vadd.f32 %v8777, %v8853
    %v8855 = vpop.f32.mrb[0].mxu0
    %v8856 = vadd.f32 %v8779, %v8855
    %8857 = vdwg.mxu0
    %8858 = vmatprep.subr.mxu0 %v8330
    %8859 = vmatpush1.msra.mxu0 %v8329
    %8860 = vmatprep.subr.mxu0 %v8338
    %8861 = vmatpush1.msra.mxu0 %v8337
    %8862 = vmatprep.subr.mxu0 %v8346
    %8863 = vmatpush1.msra.mxu0 %v8345
    %8864 = vmatprep.subr.mxu0 %v8354
    %8865 = vmatpush1.msra.mxu0 %v8353
    %8866 = vmatprep.subr.mxu0 %v8362
    %8867 = vmatpush1.msra.mxu0 %v8361
    %8868 = vmatprep.subr.mxu0 %v8370
    %8869 = vmatpush1.msra.mxu0 %v8369
    %8870 = vmatprep.subr.mxu0 %v8378
    %8871 = vmatpush1.msra.mxu0 %v8377
    %8872 = vmatprep.subr.mxu0 %v8386
    %8873 = vmatpush1.msra.mxu0 %v8385
    %8874 = vmatprep.subr.mxu0 %v8394
    %8875 = vmatpush1.msra.mxu0 %v8393
    %8876 = vmatprep.subr.mxu0 %v8402
    %8877 = vmatpush1.msra.mxu0 %v8401
    %8878 = vmatprep.subr.mxu0 %v8410
    %8879 = vmatpush1.msra.mxu0 %v8409
    %8880 = vmatprep.subr.mxu0 %v8418
    %8881 = vmatpush1.msra.mxu0 %v8417
    %8882 = vmatprep.subr.mxu0 %v8426
    %8883 = vmatpush1.msra.mxu0 %v8425
    %8884 = vmatprep.subr.mxu0 %v8434
    %8885 = vmatpush1.msra.mxu0 %v8433
    %8886 = vmatprep.subr.mxu0 %v8442
    %8887 = vmatpush1.msra.mxu0 %v8441
    %8888 = vmatprep.subr.mxu0 %v8450
    %8889 = vmatpush1.msra.mxu0 %v8449
    %8890 = vmatprep.subr.mxu0 %v8458
    %8891 = vmatpush1.msra.mxu0 %v8457
    %8892 = vmatprep.subr.mxu0 %v8466
    %8893 = vmatpush1.msra.mxu0 %v8465
    %8894 = vmatprep.subr.mxu0 %v8474
    %8895 = vmatpush1.msra.mxu0 %v8473
    %8896 = vmatprep.subr.mxu0 %v8482
    %8897 = vmatpush1.msra.mxu0 %v8481
    %8898 = vmatprep.subr.mxu0 %v8490
    %8899 = vmatpush1.msra.mxu0 %v8489
    %8900 = vmatprep.subr.mxu0 %v8498
    %8901 = vmatpush1.msra.mxu0 %v8497
    %8902 = vmatprep.subr.mxu0 %v8506
    %8903 = vmatpush1.msra.mxu0 %v8505
    %8904 = vmatprep.subr.mxu0 %v8514
    %8905 = vmatpush1.msra.mxu0 %v8513
    %8906 = vmatprep.subr.mxu0 %v8522
    %8907 = vmatpush1.msra.mxu0 %v8521
    %8908 = vmatprep.subr.mxu0 %v8530
    %8909 = vmatpush1.msra.mxu0 %v8529
    %8910 = vmatprep.subr.mxu0 %v8538
    %8911 = vmatpush1.msra.mxu0 %v8537
    %8912 = vmatprep.subr.mxu0 %v8546
    %8913 = vmatpush1.msra.mxu0 %v8545
    %8914 = vmatprep.subr.mxu0 %v8554
    %8915 = vmatpush1.msra.mxu0 %v8553
    %8916 = vmatprep.subr.mxu0 %v8562
    %8917 = vmatpush1.msra.mxu0 %v8561
    %8918 = vmatprep.subr.mxu0 %v8570
    %8919 = vmatpush1.msra.mxu0 %v8569
    %8920 = vmatprep.subr.mxu0 %v8578
    %8921 = vmatpush1.msra.mxu0 %v8577
    %8922 = vmatprep.mubr.f32.mxu0 %v7552
    %8923 = vmatmul.mubr.f32.gmra.mrb[0].mxu0 %v7551
    %v8924 = vpop.f32.mrb[0].mxu0
    %v8925 = vadd.f32 %v8848, %v8924
    %v8926 = vpop.f32.mrb[0].mxu0
    %v8927 = vadd.f32 %v8850, %v8926
    %8928 = vmatprep.mubr.f32.mxu0 %v7560
    %8929 = vmatmul.mubr.f32.gmra.mrb[0].mxu0 %v7559
    %v8930 = vpop.f32.mrb[0].mxu0
    %v8931 = vadd.f32 %v8854, %v8930
    %v8932 = vpop.f32.mrb[0].mxu0
    %v8933 = vadd.f32 %v8856, %v8932
    %8934 = vdwg.mxu0
    %8935 = vmatprep.subr.mxu0 %v7564
    %8936 = vmatpush1.msra.mxu0 %v7563
    %8937 = vmatprep.subr.mxu0 %v7572
    %8938 = vmatpush1.msra.mxu0 %v7571
    %8939 = vmatprep.subr.mxu0 %v7580
    %8940 = vmatpush1.msra.mxu0 %v7579
    %8941 = vmatprep.subr.mxu0 %v7588
    %8942 = vmatpush1.msra.mxu0 %v7587
    %8943 = vmatprep.subr.mxu0 %v7596
    %8944 = vmatpush1.msra.mxu0 %v7595
    %8945 = vmatprep.subr.mxu0 %v7604
    %8946 = vmatpush1.msra.mxu0 %v7603
    %8947 = vmatprep.subr.mxu0 %v7612
    %8948 = vmatpush1.msra.mxu0 %v7611
    %8949 = vmatprep.subr.mxu0 %v7620
    %8950 = vmatpush1.msra.mxu0 %v7619
    %8951 = vmatprep.subr.mxu0 %v7628
    %8952 = vmatpush1.msra.mxu0 %v7627
    %8953 = vmatprep.subr.mxu0 %v7636
    %8954 = vmatpush1.msra.mxu0 %v7635
    %8955 = vmatprep.subr.mxu0 %v7644
    %8956 = vmatpush1.msra.mxu0 %v7643
    %8957 = vmatprep.subr.mxu0 %v7652
    %8958 = vmatpush1.msra.mxu0 %v7651
    %8959 = vmatprep.subr.mxu0 %v7660
    %8960 = vmatpush1.msra.mxu0 %v7659
    %8961 = vmatprep.subr.mxu0 %v7668
    %8962 = vmatpush1.msra.mxu0 %v7667
    %8963 = vmatprep.subr.mxu0 %v7676
    %8964 = vmatpush1.msra.mxu0 %v7675
    %8965 = vmatprep.subr.mxu0 %v7684
    %8966 = vmatpush1.msra.mxu0 %v7683
    %8967 = vmatprep.subr.mxu0 %v7692
    %8968 = vmatpush1.msra.mxu0 %v7691
    %8969 = vmatprep.subr.mxu0 %v7700
    %8970 = vmatpush1.msra.mxu0 %v7699
    %8971 = vmatprep.subr.mxu0 %v7708
    %8972 = vmatpush1.msra.mxu0 %v7707
    %8973 = vmatprep.subr.mxu0 %v7716
    %8974 = vmatpush1.msra.mxu0 %v7715
    %8975 = vmatprep.subr.mxu0 %v7724
    %8976 = vmatpush1.msra.mxu0 %v7723
    %8977 = vmatprep.subr.mxu0 %v7732
    %8978 = vmatpush1.msra.mxu0 %v7731
    %8979 = vmatprep.subr.mxu0 %v7740
    %8980 = vmatpush1.msra.mxu0 %v7739
    %8981 = vmatprep.subr.mxu0 %v7748
    %8982 = vmatpush1.msra.mxu0 %v7747
    %8983 = vmatprep.subr.mxu0 %v7756
    %8984 = vmatpush1.msra.mxu0 %v7755
    %8985 = vmatprep.subr.mxu0 %v7764
    %8986 = vmatpush1.msra.mxu0 %v7763
    %8987 = vmatprep.subr.mxu0 %v7772
    %8988 = vmatpush1.msra.mxu0 %v7771
    %8989 = vmatprep.subr.mxu0 %v7780
    %8990 = vmatpush1.msra.mxu0 %v7779
    %8991 = vmatprep.subr.mxu0 %v7788
    %8992 = vmatpush1.msra.mxu0 %v7787
    %8993 = vmatprep.subr.mxu0 %v7796
    %8994 = vmatpush1.msra.mxu0 %v7795
    %8995 = vmatprep.subr.mxu0 %v7804
    %8996 = vmatpush1.msra.mxu0 %v7803
    %8997 = vmatprep.subr.mxu0 %v7812
    %8998 = vmatpush1.msra.mxu0 %v7811
    %8999 = vmatprep.mubr.f32.mxu0 %v7546
    %9000 = vmatmul.mubr.f32.gmra.mrb[0].mxu0 %v7545
    %v9001 = vpop.f32.mrb[0].mxu0
    %v9002 = vadd.f32 %v8598, %v9001
    %v9003 = vpop.f32.mrb[0].mxu0
    %v9004 = vadd.f32 %v8602, %v9003
    %9005 = vmatprep.mubr.f32.mxu0 %v7554
    %9006 = vmatmul.mubr.f32.gmra.mrb[0].mxu0 %v7553
    %v9007 = vpop.f32.mrb[0].mxu0
    %v9008 = vadd.f32 %v8598, %v9007
    %v9009 = vpop.f32.mrb[0].mxu0
    %v9010 = vadd.f32 %v8602, %v9009
    %9011 = vdwg.mxu0
    %9012 = vmatprep.subr.mxu0 %v7820
    %9013 = vmatpush1.msra.mxu0 %v7819
    %9014 = vmatprep.subr.mxu0 %v7828
    %9015 = vmatpush1.msra.mxu0 %v7827
    %9016 = vmatprep.subr.mxu0 %v7836
    %9017 = vmatpush1.msra.mxu0 %v7835
    %9018 = vmatprep.subr.mxu0 %v7844
    %9019 = vmatpush1.msra.mxu0 %v7843
    %9020 = vmatprep.subr.mxu0 %v7852
    %9021 = vmatpush1.msra.mxu0 %v7851
    %9022 = vmatprep.subr.mxu0 %v7860
    %9023 = vmatpush1.msra.mxu0 %v7859
    %9024 = vmatprep.subr.mxu0 %v7868
    %9025 = vmatpush1.msra.mxu0 %v7867
    %9026 = vmatprep.subr.mxu0 %v7876
    %9027 = vmatpush1.msra.mxu0 %v7875
    %9028 = vmatprep.subr.mxu0 %v7884
    %9029 = vmatpush1.msra.mxu0 %v7883
    %9030 = vmatprep.subr.mxu0 %v7892
    %9031 = vmatpush1.msra.mxu0 %v7891
    %9032 = vmatprep.subr.mxu0 %v7900
    %9033 = vmatpush1.msra.mxu0 %v7899
    %9034 = vmatprep.subr.mxu0 %v7908
    %9035 = vmatpush1.msra.mxu0 %v7907
    %9036 = vmatprep.subr.mxu0 %v7916
    %9037 = vmatpush1.msra.mxu0 %v7915
    %9038 = vmatprep.subr.mxu0 %v7924
    %9039 = vmatpush1.msra.mxu0 %v7923
    %9040 = vmatprep.subr.mxu0 %v7932
    %9041 = vmatpush1.msra.mxu0 %v7931
    %9042 = vmatprep.subr.mxu0 %v7940
    %9043 = vmatpush1.msra.mxu0 %v7939
    %9044 = vmatprep.subr.mxu0 %v7948
    %9045 = vmatpush1.msra.mxu0 %v7947
    %9046 = vmatprep.subr.mxu0 %v7956
    %9047 = vmatpush1.msra.mxu0 %v7955
    %9048 = vmatprep.subr.mxu0 %v7964
    %9049 = vmatpush1.msra.mxu0 %v7963
    %9050 = vmatprep.subr.mxu0 %v7972
    %9051 = vmatpush1.msra.mxu0 %v7971
    %9052 = vmatprep.subr.mxu0 %v7980
    %9053 = vmatpush1.msra.mxu0 %v7979
    %9054 = vmatprep.subr.mxu0 %v7988
    %9055 = vmatpush1.msra.mxu0 %v7987
    %9056 = vmatprep.subr.mxu0 %v7996
    %9057 = vmatpush1.msra.mxu0 %v7995
    %9058 = vmatprep.subr.mxu0 %v8004
    %9059 = vmatpush1.msra.mxu0 %v8003
    %9060 = vmatprep.subr.mxu0 %v8012
    %9061 = vmatpush1.msra.mxu0 %v8011
    %9062 = vmatprep.subr.mxu0 %v8020
    %9063 = vmatpush1.msra.mxu0 %v8019
    %9064 = vmatprep.subr.mxu0 %v8028
    %9065 = vmatpush1.msra.mxu0 %v8027
    %9066 = vmatprep.subr.mxu0 %v8036
    %9067 = vmatpush1.msra.mxu0 %v8035
    %9068 = vmatprep.subr.mxu0 %v8044
    %9069 = vmatpush1.msra.mxu0 %v8043
    %9070 = vmatprep.subr.mxu0 %v8052
    %9071 = vmatpush1.msra.mxu0 %v8051
    %9072 = vmatprep.subr.mxu0 %v8060
    %9073 = vmatpush1.msra.mxu0 %v8059
    %9074 = vmatprep.subr.mxu0 %v8068
    %9075 = vmatpush1.msra.mxu0 %v8067
    %9076 = vmatprep.mubr.f32.mxu0 %v7548
    %9077 = vmatmul.mubr.f32.gmra.mrb[0].mxu0 %v7547
    %v9078 = vpop.f32.mrb[0].mxu0
    %v9079 = vadd.f32 %v9002, %v9078
    %v9080 = vpop.f32.mrb[0].mxu0
    %v9081 = vadd.f32 %v9004, %v9080
    %9082 = vmatprep.mubr.f32.mxu0 %v7556
    %9083 = vmatmul.mubr.f32.gmra.mrb[0].mxu0 %v7555
    %v9084 = vpop.f32.mrb[0].mxu0
    %v9085 = vadd.f32 %v9008, %v9084
    %v9086 = vpop.f32.mrb[0].mxu0
    %v9087 = vadd.f32 %v9010, %v9086
    %9088 = vdwg.mxu0
    %9089 = vmatprep.subr.mxu0 %v8076
    %9090 = vmatpush1.msra.mxu0 %v8075
    %9091 = vmatprep.subr.mxu0 %v8084
    %9092 = vmatpush1.msra.mxu0 %v8083
    %9093 = vmatprep.subr.mxu0 %v8092
    %9094 = vmatpush1.msra.mxu0 %v8091
    %9095 = vmatprep.subr.mxu0 %v8100
    %9096 = vmatpush1.msra.mxu0 %v8099
    %9097 = vmatprep.subr.mxu0 %v8108
    %9098 = vmatpush1.msra.mxu0 %v8107
    %9099 = vmatprep.subr.mxu0 %v8116
    %9100 = vmatpush1.msra.mxu0 %v8115
    %9101 = vmatprep.subr.mxu0 %v8124
    %9102 = vmatpush1.msra.mxu0 %v8123
    %9103 = vmatprep.subr.mxu0 %v8132
    %9104 = vmatpush1.msra.mxu0 %v8131
    %9105 = vmatprep.subr.mxu0 %v8140
    %9106 = vmatpush1.msra.mxu0 %v8139
    %9107 = vmatprep.subr.mxu0 %v8148
    %9108 = vmatpush1.msra.mxu0 %v8147
    %9109 = vmatprep.subr.mxu0 %v8156
    %9110 = vmatpush1.msra.mxu0 %v8155
    %9111 = vmatprep.subr.mxu0 %v8164
    %9112 = vmatpush1.msra.mxu0 %v8163
    %9113 = vmatprep.subr.mxu0 %v8172
    %9114 = vmatpush1.msra.mxu0 %v8171
    %9115 = vmatprep.subr.mxu0 %v8180
    %9116 = vmatpush1.msra.mxu0 %v8179
    %9117 = vmatprep.subr.mxu0 %v8188
    %9118 = vmatpush1.msra.mxu0 %v8187
    %9119 = vmatprep.subr.mxu0 %v8196
    %9120 = vmatpush1.msra.mxu0 %v8195
    %9121 = vmatprep.subr.mxu0 %v8204
    %9122 = vmatpush1.msra.mxu0 %v8203
    %9123 = vmatprep.subr.mxu0 %v8212
    %9124 = vmatpush1.msra.mxu0 %v8211
    %9125 = vmatprep.subr.mxu0 %v8220
    %9126 = vmatpush1.msra.mxu0 %v8219
    %9127 = vmatprep.subr.mxu0 %v8228
    %9128 = vmatpush1.msra.mxu0 %v8227
    %9129 = vmatprep.subr.mxu0 %v8236
    %9130 = vmatpush1.msra.mxu0 %v8235
    %9131 = vmatprep.subr.mxu0 %v8244
    %9132 = vmatpush1.msra.mxu0 %v8243
    %9133 = vmatprep.subr.mxu0 %v8252
    %9134 = vmatpush1.msra.mxu0 %v8251
    %9135 = vmatprep.subr.mxu0 %v8260
    %9136 = vmatpush1.msra.mxu0 %v8259
    %9137 = vmatprep.subr.mxu0 %v8268
    %9138 = vmatpush1.msra.mxu0 %v8267
    %9139 = vmatprep.subr.mxu0 %v8276
    %9140 = vmatpush1.msra.mxu0 %v8275
    %9141 = vmatprep.subr.mxu0 %v8284
    %9142 = vmatpush1.msra.mxu0 %v8283
    %9143 = vmatprep.subr.mxu0 %v8292
    %9144 = vmatpush1.msra.mxu0 %v8291
    %9145 = vmatprep.subr.mxu0 %v8300
    %9146 = vmatpush1.msra.mxu0 %v8299
    %9147 = vmatprep.subr.mxu0 %v8308
    %9148 = vmatpush1.msra.mxu0 %v8307
    %9149 = vmatprep.subr.mxu0 %v8316
    %9150 = vmatpush1.msra.mxu0 %v8315
    %9151 = vmatprep.subr.mxu0 %v8324
    %9152 = vmatpush1.msra.mxu0 %v8323
    %9153 = vmatprep.mubr.f32.mxu0 %v7550
    %9154 = vmatmul.mubr.f32.gmra.mrb[0].mxu0 %v7549
    %v9155 = vpop.f32.mrb[0].mxu0
    %v9156 = vadd.f32 %v9079, %v9155
    %v9157 = vpop.f32.mrb[0].mxu0
    %v9158 = vadd.f32 %v9081, %v9157
    %9159 = vmatprep.mubr.f32.mxu0 %v7558
    %9160 = vmatmul.mubr.f32.gmra.mrb[0].mxu0 %v7557
    %v9161 = vpop.f32.mrb[0].mxu0
    %v9162 = vadd.f32 %v9085, %v9161
    %v9163 = vpop.f32.mrb[0].mxu0
    %v9164 = vadd.f32 %v9087, %v9163
    %9165 = vdwg.mxu0
    %9166 = vmatprep.subr.mxu0 %v8332
    %9167 = vmatpush1.msra.mxu0 %v8331
    %9168 = vmatprep.subr.mxu0 %v8340
    %9169 = vmatpush1.msra.mxu0 %v8339
    %9170 = vmatprep.subr.mxu0 %v8348
    %9171 = vmatpush1.msra.mxu0 %v8347
    %9172 = vmatprep.subr.mxu0 %v8356
    %9173 = vmatpush1.msra.mxu0 %v8355
    %9174 = vmatprep.subr.mxu0 %v8364
    %9175 = vmatpush1.msra.mxu0 %v8363
    %9176 = vmatprep.subr.mxu0 %v8372
    %9177 = vmatpush1.msra.mxu0 %v8371
    %9178 = vmatprep.subr.mxu0 %v8380
    %9179 = vmatpush1.msra.mxu0 %v8379
    %9180 = vmatprep.subr.mxu0 %v8388
    %9181 = vmatpush1.msra.mxu0 %v8387
    %9182 = vmatprep.subr.mxu0 %v8396
    %9183 = vmatpush1.msra.mxu0 %v8395
    %9184 = vmatprep.subr.mxu0 %v8404
    %9185 = vmatpush1.msra.mxu0 %v8403
    %9186 = vmatprep.subr.mxu0 %v8412
    %9187 = vmatpush1.msra.mxu0 %v8411
    %9188 = vmatprep.subr.mxu0 %v8420
    %9189 = vmatpush1.msra.mxu0 %v8419
    %9190 = vmatprep.subr.mxu0 %v8428
    %9191 = vmatpush1.msra.mxu0 %v8427
    %9192 = vmatprep.subr.mxu0 %v8436
    %9193 = vmatpush1.msra.mxu0 %v8435
    %9194 = vmatprep.subr.mxu0 %v8444
    %9195 = vmatpush1.msra.mxu0 %v8443
    %9196 = vmatprep.subr.mxu0 %v8452
    %9197 = vmatpush1.msra.mxu0 %v8451
    %9198 = vmatprep.subr.mxu0 %v8460
    %9199 = vmatpush1.msra.mxu0 %v8459
    %9200 = vmatprep.subr.mxu0 %v8468
    %9201 = vmatpush1.msra.mxu0 %v8467
    %9202 = vmatprep.subr.mxu0 %v8476
    %9203 = vmatpush1.msra.mxu0 %v8475
    %9204 = vmatprep.subr.mxu0 %v8484
    %9205 = vmatpush1.msra.mxu0 %v8483
    %9206 = vmatprep.subr.mxu0 %v8492
    %9207 = vmatpush1.msra.mxu0 %v8491
    %9208 = vmatprep.subr.mxu0 %v8500
    %9209 = vmatpush1.msra.mxu0 %v8499
    %9210 = vmatprep.subr.mxu0 %v8508
    %9211 = vmatpush1.msra.mxu0 %v8507
    %9212 = vmatprep.subr.mxu0 %v8516
    %9213 = vmatpush1.msra.mxu0 %v8515
    %9214 = vmatprep.subr.mxu0 %v8524
    %9215 = vmatpush1.msra.mxu0 %v8523
    %9216 = vmatprep.subr.mxu0 %v8532
    %9217 = vmatpush1.msra.mxu0 %v8531
    %9218 = vmatprep.subr.mxu0 %v8540
    %9219 = vmatpush1.msra.mxu0 %v8539
    %9220 = vmatprep.subr.mxu0 %v8548
    %9221 = vmatpush1.msra.mxu0 %v8547
    %9222 = vmatprep.subr.mxu0 %v8556
    %9223 = vmatpush1.msra.mxu0 %v8555
    %9224 = vmatprep.subr.mxu0 %v8564
    %9225 = vmatpush1.msra.mxu0 %v8563
    %9226 = vmatprep.subr.mxu0 %v8572
    %9227 = vmatpush1.msra.mxu0 %v8571
    %9228 = vmatprep.subr.mxu0 %v8580
    %9229 = vmatpush1.msra.mxu0 %v8579
    %9230 = vmatprep.mubr.f32.mxu0 %v7552
    %9231 = vmatmul.mubr.f32.gmra.mrb[0].mxu0 %v7551
    %v9232 = vpop.f32.mrb[0].mxu0
    %v9233 = vadd.f32 %v9156, %v9232
    %v9234 = vpop.f32.mrb[0].mxu0
    %v9235 = vadd.f32 %v9158, %v9234
    %9236 = vmatprep.mubr.f32.mxu0 %v7560
    %9237 = vmatmul.mubr.f32.gmra.mrb[0].mxu0 %v7559
    %v9238 = vpop.f32.mrb[0].mxu0
    %v9239 = vadd.f32 %v9162, %v9238
    %v9240 = vpop.f32.mrb[0].mxu0
    %v9241 = vadd.f32 %v9164, %v9240
    %9242 = vdwg.mxu0
    %9243 = vmatprep.subr.mxu0 %v7566
    %9244 = vmatpush1.msra.mxu0 %v7565
    %9245 = vmatprep.subr.mxu0 %v7574
    %9246 = vmatpush1.msra.mxu0 %v7573
    %9247 = vmatprep.subr.mxu0 %v7582
    %9248 = vmatpush1.msra.mxu0 %v7581
    %9249 = vmatprep.subr.mxu0 %v7590
    %9250 = vmatpush1.msra.mxu0 %v7589
    %9251 = vmatprep.subr.mxu0 %v7598
    %9252 = vmatpush1.msra.mxu0 %v7597
    %9253 = vmatprep.subr.mxu0 %v7606
    %9254 = vmatpush1.msra.mxu0 %v7605
    %9255 = vmatprep.subr.mxu0 %v7614
    %9256 = vmatpush1.msra.mxu0 %v7613
    %9257 = vmatprep.subr.mxu0 %v7622
    %9258 = vmatpush1.msra.mxu0 %v7621
    %9259 = vmatprep.subr.mxu0 %v7630
    %9260 = vmatpush1.msra.mxu0 %v7629
    %9261 = vmatprep.subr.mxu0 %v7638
    %9262 = vmatpush1.msra.mxu0 %v7637
    %9263 = vmatprep.subr.mxu0 %v7646
    %9264 = vmatpush1.msra.mxu0 %v7645
    %9265 = vmatprep.subr.mxu0 %v7654
    %9266 = vmatpush1.msra.mxu0 %v7653
    %9267 = vmatprep.subr.mxu0 %v7662
    %9268 = vmatpush1.msra.mxu0 %v7661
    %9269 = vmatprep.subr.mxu0 %v7670
    %9270 = vmatpush1.msra.mxu0 %v7669
    %9271 = vmatprep.subr.mxu0 %v7678
    %9272 = vmatpush1.msra.mxu0 %v7677
    %9273 = vmatprep.subr.mxu0 %v7686
    %9274 = vmatpush1.msra.mxu0 %v7685
    %9275 = vmatprep.subr.mxu0 %v7694
    %9276 = vmatpush1.msra.mxu0 %v7693
    %9277 = vmatprep.subr.mxu0 %v7702
    %9278 = vmatpush1.msra.mxu0 %v7701
    %9279 = vmatprep.subr.mxu0 %v7710
    %9280 = vmatpush1.msra.mxu0 %v7709
    %9281 = vmatprep.subr.mxu0 %v7718
    %9282 = vmatpush1.msra.mxu0 %v7717
    %9283 = vmatprep.subr.mxu0 %v7726
    %9284 = vmatpush1.msra.mxu0 %v7725
    %9285 = vmatprep.subr.mxu0 %v7734
    %9286 = vmatpush1.msra.mxu0 %v7733
    %9287 = vmatprep.subr.mxu0 %v7742
    %9288 = vmatpush1.msra.mxu0 %v7741
    %9289 = vmatprep.subr.mxu0 %v7750
    %9290 = vmatpush1.msra.mxu0 %v7749
    %9291 = vmatprep.subr.mxu0 %v7758
    %9292 = vmatpush1.msra.mxu0 %v7757
    %9293 = vmatprep.subr.mxu0 %v7766
    %9294 = vmatpush1.msra.mxu0 %v7765
    %9295 = vmatprep.subr.mxu0 %v7774
    %9296 = vmatpush1.msra.mxu0 %v7773
    %9297 = vmatprep.subr.mxu0 %v7782
    %9298 = vmatpush1.msra.mxu0 %v7781
    %9299 = vmatprep.subr.mxu0 %v7790
    %9300 = vmatpush1.msra.mxu0 %v7789
    %9301 = vmatprep.subr.mxu0 %v7798
    %9302 = vmatpush1.msra.mxu0 %v7797
    %9303 = vmatprep.subr.mxu0 %v7806
    %9304 = vmatpush1.msra.mxu0 %v7805
    %9305 = vmatprep.subr.mxu0 %v7814
    %9306 = vmatpush1.msra.mxu0 %v7813
    %9307 = vmatprep.mubr.f32.mxu0 %v7546
    %9308 = vmatmul.mubr.f32.gmra.mrb[0].mxu0 %v7545
    %v9309 = vpop.f32.mrb[0].mxu0
    %v9310 = vadd.f32 %v8606, %v9309
    %v9311 = vpop.f32.mrb[0].mxu0
    %v9312 = vadd.f32 %v8610, %v9311
    %9313 = vmatprep.mubr.f32.mxu0 %v7554
    %9314 = vmatmul.mubr.f32.gmra.mrb[0].mxu0 %v7553
    %v9315 = vpop.f32.mrb[0].mxu0
    %v9316 = vadd.f32 %v8606, %v9315
    %v9317 = vpop.f32.mrb[0].mxu0
    %v9318 = vadd.f32 %v8610, %v9317
    %9319 = vdwg.mxu0
    %9320 = vmatprep.subr.mxu0 %v7822
    %9321 = vmatpush1.msra.mxu0 %v7821
    %9322 = vmatprep.subr.mxu0 %v7830
    %9323 = vmatpush1.msra.mxu0 %v7829
    %9324 = vmatprep.subr.mxu0 %v7838
    %9325 = vmatpush1.msra.mxu0 %v7837
    %9326 = vmatprep.subr.mxu0 %v7846
    %9327 = vmatpush1.msra.mxu0 %v7845
    %9328 = vmatprep.subr.mxu0 %v7854
    %9329 = vmatpush1.msra.mxu0 %v7853
    %9330 = vmatprep.subr.mxu0 %v7862
    %9331 = vmatpush1.msra.mxu0 %v7861
    %9332 = vmatprep.subr.mxu0 %v7870
    %9333 = vmatpush1.msra.mxu0 %v7869
    %9334 = vmatprep.subr.mxu0 %v7878
    %9335 = vmatpush1.msra.mxu0 %v7877
    %9336 = vmatprep.subr.mxu0 %v7886
    %9337 = vmatpush1.msra.mxu0 %v7885
    %9338 = vmatprep.subr.mxu0 %v7894
    %9339 = vmatpush1.msra.mxu0 %v7893
    %9340 = vmatprep.subr.mxu0 %v7902
    %9341 = vmatpush1.msra.mxu0 %v7901
    %9342 = vmatprep.subr.mxu0 %v7910
    %9343 = vmatpush1.msra.mxu0 %v7909
    %9344 = vmatprep.subr.mxu0 %v7918
    %9345 = vmatpush1.msra.mxu0 %v7917
    %9346 = vmatprep.subr.mxu0 %v7926
    %9347 = vmatpush1.msra.mxu0 %v7925
    %9348 = vmatprep.subr.mxu0 %v7934
    %9349 = vmatpush1.msra.mxu0 %v7933
    %9350 = vmatprep.subr.mxu0 %v7942
    %9351 = vmatpush1.msra.mxu0 %v7941
    %9352 = vmatprep.subr.mxu0 %v7950
    %9353 = vmatpush1.msra.mxu0 %v7949
    %9354 = vmatprep.subr.mxu0 %v7958
    %9355 = vmatpush1.msra.mxu0 %v7957
    %9356 = vmatprep.subr.mxu0 %v7966
    %9357 = vmatpush1.msra.mxu0 %v7965
    %9358 = vmatprep.subr.mxu0 %v7974
    %9359 = vmatpush1.msra.mxu0 %v7973
    %9360 = vmatprep.subr.mxu0 %v7982
    %9361 = vmatpush1.msra.mxu0 %v7981
    %9362 = vmatprep.subr.mxu0 %v7990
    %9363 = vmatpush1.msra.mxu0 %v7989
    %9364 = vmatprep.subr.mxu0 %v7998
    %9365 = vmatpush1.msra.mxu0 %v7997
    %9366 = vmatprep.subr.mxu0 %v8006
    %9367 = vmatpush1.msra.mxu0 %v8005
    %9368 = vmatprep.subr.mxu0 %v8014
    %9369 = vmatpush1.msra.mxu0 %v8013
    %9370 = vmatprep.subr.mxu0 %v8022
    %9371 = vmatpush1.msra.mxu0 %v8021
    %9372 = vmatprep.subr.mxu0 %v8030
    %9373 = vmatpush1.msra.mxu0 %v8029
    %9374 = vmatprep.subr.mxu0 %v8038
    %9375 = vmatpush1.msra.mxu0 %v8037
    %9376 = vmatprep.subr.mxu0 %v8046
    %9377 = vmatpush1.msra.mxu0 %v8045
    %9378 = vmatprep.subr.mxu0 %v8054
    %9379 = vmatpush1.msra.mxu0 %v8053
    %9380 = vmatprep.subr.mxu0 %v8062
    %9381 = vmatpush1.msra.mxu0 %v8061
    %9382 = vmatprep.subr.mxu0 %v8070
    %9383 = vmatpush1.msra.mxu0 %v8069
    %9384 = vmatprep.mubr.f32.mxu0 %v7548
    %9385 = vmatmul.mubr.f32.gmra.mrb[0].mxu0 %v7547
    %v9386 = vpop.f32.mrb[0].mxu0
    %v9387 = vadd.f32 %v9310, %v9386
    %v9388 = vpop.f32.mrb[0].mxu0
    %v9389 = vadd.f32 %v9312, %v9388
    %9390 = vmatprep.mubr.f32.mxu0 %v7556
    %9391 = vmatmul.mubr.f32.gmra.mrb[0].mxu0 %v7555
    %v9392 = vpop.f32.mrb[0].mxu0
    %v9393 = vadd.f32 %v9316, %v9392
    %v9394 = vpop.f32.mrb[0].mxu0
    %v9395 = vadd.f32 %v9318, %v9394
    %9396 = vdwg.mxu0
    %9397 = vmatprep.subr.mxu0 %v8078
    %9398 = vmatpush1.msra.mxu0 %v8077
    %9399 = vmatprep.subr.mxu0 %v8086
    %9400 = vmatpush1.msra.mxu0 %v8085
    %9401 = vmatprep.subr.mxu0 %v8094
    %9402 = vmatpush1.msra.mxu0 %v8093
    %9403 = vmatprep.subr.mxu0 %v8102
    %9404 = vmatpush1.msra.mxu0 %v8101
    %9405 = vmatprep.subr.mxu0 %v8110
    %9406 = vmatpush1.msra.mxu0 %v8109
    %9407 = vmatprep.subr.mxu0 %v8118
    %9408 = vmatpush1.msra.mxu0 %v8117
    %9409 = vmatprep.subr.mxu0 %v8126
    %9410 = vmatpush1.msra.mxu0 %v8125
    %9411 = vmatprep.subr.mxu0 %v8134
    %9412 = vmatpush1.msra.mxu0 %v8133
    %9413 = vmatprep.subr.mxu0 %v8142
    %9414 = vmatpush1.msra.mxu0 %v8141
    %9415 = vmatprep.subr.mxu0 %v8150
    %9416 = vmatpush1.msra.mxu0 %v8149
    %9417 = vmatprep.subr.mxu0 %v8158
    %9418 = vmatpush1.msra.mxu0 %v8157
    %9419 = vmatprep.subr.mxu0 %v8166
    %9420 = vmatpush1.msra.mxu0 %v8165
    %9421 = vmatprep.subr.mxu0 %v8174
    %9422 = vmatpush1.msra.mxu0 %v8173
    %9423 = vmatprep.subr.mxu0 %v8182
    %9424 = vmatpush1.msra.mxu0 %v8181
    %9425 = vmatprep.subr.mxu0 %v8190
    %9426 = vmatpush1.msra.mxu0 %v8189
    %9427 = vmatprep.subr.mxu0 %v8198
    %9428 = vmatpush1.msra.mxu0 %v8197
    %9429 = vmatprep.subr.mxu0 %v8206
    %9430 = vmatpush1.msra.mxu0 %v8205
    %9431 = vmatprep.subr.mxu0 %v8214
    %9432 = vmatpush1.msra.mxu0 %v8213
    %9433 = vmatprep.subr.mxu0 %v8222
    %9434 = vmatpush1.msra.mxu0 %v8221
    %9435 = vmatprep.subr.mxu0 %v8230
    %9436 = vmatpush1.msra.mxu0 %v8229
    %9437 = vmatprep.subr.mxu0 %v8238
    %9438 = vmatpush1.msra.mxu0 %v8237
    %9439 = vmatprep.subr.mxu0 %v8246
    %9440 = vmatpush1.msra.mxu0 %v8245
    %9441 = vmatprep.subr.mxu0 %v8254
    %9442 = vmatpush1.msra.mxu0 %v8253
    %9443 = vmatprep.subr.mxu0 %v8262
    %9444 = vmatpush1.msra.mxu0 %v8261
    %9445 = vmatprep.subr.mxu0 %v8270
    %9446 = vmatpush1.msra.mxu0 %v8269
    %9447 = vmatprep.subr.mxu0 %v8278
    %9448 = vmatpush1.msra.mxu0 %v8277
    %9449 = vmatprep.subr.mxu0 %v8286
    %9450 = vmatpush1.msra.mxu0 %v8285
    %9451 = vmatprep.subr.mxu0 %v8294
    %9452 = vmatpush1.msra.mxu0 %v8293
    %9453 = vmatprep.subr.mxu0 %v8302
    %9454 = vmatpush1.msra.mxu0 %v8301
    %9455 = vmatprep.subr.mxu0 %v8310
    %9456 = vmatpush1.msra.mxu0 %v8309
    %9457 = vmatprep.subr.mxu0 %v8318
    %9458 = vmatpush1.msra.mxu0 %v8317
    %9459 = vmatprep.subr.mxu0 %v8326
    %9460 = vmatpush1.msra.mxu0 %v8325
    %9461 = vmatprep.mubr.f32.mxu0 %v7550
    %9462 = vmatmul.mubr.f32.gmra.mrb[0].mxu0 %v7549
    %v9463 = vpop.f32.mrb[0].mxu0
    %v9464 = vadd.f32 %v9387, %v9463
    %v9465 = vpop.f32.mrb[0].mxu0
    %v9466 = vadd.f32 %v9389, %v9465
    %9467 = vmatprep.mubr.f32.mxu0 %v7558
    %9468 = vmatmul.mubr.f32.gmra.mrb[0].mxu0 %v7557
    %v9469 = vpop.f32.mrb[0].mxu0
    %v9470 = vadd.f32 %v9393, %v9469
    %v9471 = vpop.f32.mrb[0].mxu0
    %v9472 = vadd.f32 %v9395, %v9471
    %9473 = vdwg.mxu0
    %9474 = vmatprep.subr.mxu0 %v8334
    %9475 = vmatpush1.msra.mxu0 %v8333
    %9476 = vmatprep.subr.mxu0 %v8342
    %9477 = vmatpush1.msra.mxu0 %v8341
    %9478 = vmatprep.subr.mxu0 %v8350
    %9479 = vmatpush1.msra.mxu0 %v8349
    %9480 = vmatprep.subr.mxu0 %v8358
    %9481 = vmatpush1.msra.mxu0 %v8357
    %9482 = vmatprep.subr.mxu0 %v8366
    %9483 = vmatpush1.msra.mxu0 %v8365
    %9484 = vmatprep.subr.mxu0 %v8374
    %9485 = vmatpush1.msra.mxu0 %v8373
    %9486 = vmatprep.subr.mxu0 %v8382
    %9487 = vmatpush1.msra.mxu0 %v8381
    %9488 = vmatprep.subr.mxu0 %v8390
    %9489 = vmatpush1.msra.mxu0 %v8389
    %9490 = vmatprep.subr.mxu0 %v8398
    %9491 = vmatpush1.msra.mxu0 %v8397
    %9492 = vmatprep.subr.mxu0 %v8406
    %9493 = vmatpush1.msra.mxu0 %v8405
    %9494 = vmatprep.subr.mxu0 %v8414
    %9495 = vmatpush1.msra.mxu0 %v8413
    %9496 = vmatprep.subr.mxu0 %v8422
    %9497 = vmatpush1.msra.mxu0 %v8421
    %9498 = vmatprep.subr.mxu0 %v8430
    %9499 = vmatpush1.msra.mxu0 %v8429
    %9500 = vmatprep.subr.mxu0 %v8438
    %9501 = vmatpush1.msra.mxu0 %v8437
    %9502 = vmatprep.subr.mxu0 %v8446
    %9503 = vmatpush1.msra.mxu0 %v8445
    %9504 = vmatprep.subr.mxu0 %v8454
    %9505 = vmatpush1.msra.mxu0 %v8453
    %9506 = vmatprep.subr.mxu0 %v8462
    %9507 = vmatpush1.msra.mxu0 %v8461
    %9508 = vmatprep.subr.mxu0 %v8470
    %9509 = vmatpush1.msra.mxu0 %v8469
    %9510 = vmatprep.subr.mxu0 %v8478
    %9511 = vmatpush1.msra.mxu0 %v8477
    %9512 = vmatprep.subr.mxu0 %v8486
    %9513 = vmatpush1.msra.mxu0 %v8485
    %9514 = vmatprep.subr.mxu0 %v8494
    %9515 = vmatpush1.msra.mxu0 %v8493
    %9516 = vmatprep.subr.mxu0 %v8502
    %9517 = vmatpush1.msra.mxu0 %v8501
    %9518 = vmatprep.subr.mxu0 %v8510
    %9519 = vmatpush1.msra.mxu0 %v8509
    %9520 = vmatprep.subr.mxu0 %v8518
    %9521 = vmatpush1.msra.mxu0 %v8517
    %9522 = vmatprep.subr.mxu0 %v8526
    %9523 = vmatpush1.msra.mxu0 %v8525
    %9524 = vmatprep.subr.mxu0 %v8534
    %9525 = vmatpush1.msra.mxu0 %v8533
    %9526 = vmatprep.subr.mxu0 %v8542
    %9527 = vmatpush1.msra.mxu0 %v8541
    %9528 = vmatprep.subr.mxu0 %v8550
    %9529 = vmatpush1.msra.mxu0 %v8549
    %9530 = vmatprep.subr.mxu0 %v8558
    %9531 = vmatpush1.msra.mxu0 %v8557
    %9532 = vmatprep.subr.mxu0 %v8566
    %9533 = vmatpush1.msra.mxu0 %v8565
    %9534 = vmatprep.subr.mxu0 %v8574
    %9535 = vmatpush1.msra.mxu0 %v8573
    %9536 = vmatprep.subr.mxu0 %v8582
    %9537 = vmatpush1.msra.mxu0 %v8581
    %9538 = vmatprep.mubr.f32.mxu0 %v7552
    %9539 = vmatmul.mubr.f32.gmra.mrb[0].mxu0 %v7551
    %v9540 = vpop.f32.mrb[0].mxu0
    %v9541 = vadd.f32 %v9464, %v9540
    %v9542 = vpop.f32.mrb[0].mxu0
    %v9543 = vadd.f32 %v9466, %v9542
    %9544 = vmatprep.mubr.f32.mxu0 %v7560
    %9545 = vmatmul.mubr.f32.gmra.mrb[0].mxu0 %v7559
    %v9546 = vpop.f32.mrb[0].mxu0
    %v9547 = vadd.f32 %v9470, %v9546
    %v9548 = vpop.f32.mrb[0].mxu0
    %v9549 = vadd.f32 %v9472, %v9548
    %9550 = vdwg.mxu0
    %9551 = vmatprep.subr.mxu0 %v7568
    %9552 = vmatpush1.msra.mxu0 %v7567
    %9553 = vmatprep.subr.mxu0 %v7576
    %9554 = vmatpush1.msra.mxu0 %v7575
    %9555 = vmatprep.subr.mxu0 %v7584
    %9556 = vmatpush1.msra.mxu0 %v7583
    %9557 = vmatprep.subr.mxu0 %v7592
    %9558 = vmatpush1.msra.mxu0 %v7591
    %9559 = vmatprep.subr.mxu0 %v7600
    %9560 = vmatpush1.msra.mxu0 %v7599
    %9561 = vmatprep.subr.mxu0 %v7608
    %9562 = vmatpush1.msra.mxu0 %v7607
    %9563 = vmatprep.subr.mxu0 %v7616
    %9564 = vmatpush1.msra.mxu0 %v7615
    %9565 = vmatprep.subr.mxu0 %v7624
    %9566 = vmatpush1.msra.mxu0 %v7623
    %9567 = vmatprep.subr.mxu0 %v7632
    %9568 = vmatpush1.msra.mxu0 %v7631
    %9569 = vmatprep.subr.mxu0 %v7640
    %9570 = vmatpush1.msra.mxu0 %v7639
    %9571 = vmatprep.subr.mxu0 %v7648
    %9572 = vmatpush1.msra.mxu0 %v7647
    %9573 = vmatprep.subr.mxu0 %v7656
    %9574 = vmatpush1.msra.mxu0 %v7655
    %9575 = vmatprep.subr.mxu0 %v7664
    %9576 = vmatpush1.msra.mxu0 %v7663
    %9577 = vmatprep.subr.mxu0 %v7672
    %9578 = vmatpush1.msra.mxu0 %v7671
    %9579 = vmatprep.subr.mxu0 %v7680
    %9580 = vmatpush1.msra.mxu0 %v7679
    %9581 = vmatprep.subr.mxu0 %v7688
    %9582 = vmatpush1.msra.mxu0 %v7687
    %9583 = vmatprep.subr.mxu0 %v7696
    %9584 = vmatpush1.msra.mxu0 %v7695
    %9585 = vmatprep.subr.mxu0 %v7704
    %9586 = vmatpush1.msra.mxu0 %v7703
    %9587 = vmatprep.subr.mxu0 %v7712
    %9588 = vmatpush1.msra.mxu0 %v7711
    %9589 = vmatprep.subr.mxu0 %v7720
    %9590 = vmatpush1.msra.mxu0 %v7719
    %9591 = vmatprep.subr.mxu0 %v7728
    %9592 = vmatpush1.msra.mxu0 %v7727
    %9593 = vmatprep.subr.mxu0 %v7736
    %9594 = vmatpush1.msra.mxu0 %v7735
    %9595 = vmatprep.subr.mxu0 %v7744
    %9596 = vmatpush1.msra.mxu0 %v7743
    %9597 = vmatprep.subr.mxu0 %v7752
    %9598 = vmatpush1.msra.mxu0 %v7751
    %9599 = vmatprep.subr.mxu0 %v7760
    %9600 = vmatpush1.msra.mxu0 %v7759
    %9601 = vmatprep.subr.mxu0 %v7768
    %9602 = vmatpush1.msra.mxu0 %v7767
    %9603 = vmatprep.subr.mxu0 %v7776
    %9604 = vmatpush1.msra.mxu0 %v7775
    %9605 = vmatprep.subr.mxu0 %v7784
    %9606 = vmatpush1.msra.mxu0 %v7783
    %9607 = vmatprep.subr.mxu0 %v7792
    %9608 = vmatpush1.msra.mxu0 %v7791
    %9609 = vmatprep.subr.mxu0 %v7800
    %9610 = vmatpush1.msra.mxu0 %v7799
    %9611 = vmatprep.subr.mxu0 %v7808
    %9612 = vmatpush1.msra.mxu0 %v7807
    %9613 = vmatprep.subr.mxu0 %v7816
    %9614 = vmatpush1.msra.mxu0 %v7815
    %9615 = vmatprep.mubr.f32.mxu0 %v7546
    %9616 = vmatmul.mubr.f32.gmra.mrb[0].mxu0 %v7545
    %v9617 = vpop.f32.mrb[0].mxu0
    %v9618 = vadd.f32 %v8614, %v9617
    %v9619 = vpop.f32.mrb[0].mxu0
    %v9620 = vadd.f32 %v8618, %v9619
    %9621 = vmatprep.mubr.f32.mxu0 %v7554
    %9622 = vmatmul.mubr.f32.gmra.mrb[0].mxu0 %v7553
    %v9623 = vpop.f32.mrb[0].mxu0
    %v9624 = vadd.f32 %v8614, %v9623
    %v9625 = vpop.f32.mrb[0].mxu0
    %v9626 = vadd.f32 %v8618, %v9625
    %9627 = vdwg.mxu0
    %9628 = vmatprep.subr.mxu0 %v7824
    %9629 = vmatpush1.msra.mxu0 %v7823
    %9630 = vmatprep.subr.mxu0 %v7832
    %9631 = vmatpush1.msra.mxu0 %v7831
    %9632 = vmatprep.subr.mxu0 %v7840
    %9633 = vmatpush1.msra.mxu0 %v7839
    %9634 = vmatprep.subr.mxu0 %v7848
    %9635 = vmatpush1.msra.mxu0 %v7847
    %9636 = vmatprep.subr.mxu0 %v7856
    %9637 = vmatpush1.msra.mxu0 %v7855
    %9638 = vmatprep.subr.mxu0 %v7864
    %9639 = vmatpush1.msra.mxu0 %v7863
    %9640 = vmatprep.subr.mxu0 %v7872
    %9641 = vmatpush1.msra.mxu0 %v7871
    %9642 = vmatprep.subr.mxu0 %v7880
    %9643 = vmatpush1.msra.mxu0 %v7879
    %9644 = vmatprep.subr.mxu0 %v7888
    %9645 = vmatpush1.msra.mxu0 %v7887
    %9646 = vmatprep.subr.mxu0 %v7896
    %9647 = vmatpush1.msra.mxu0 %v7895
    %9648 = vmatprep.subr.mxu0 %v7904
    %9649 = vmatpush1.msra.mxu0 %v7903
    %9650 = vmatprep.subr.mxu0 %v7912
    %9651 = vmatpush1.msra.mxu0 %v7911
    %9652 = vmatprep.subr.mxu0 %v7920
    %9653 = vmatpush1.msra.mxu0 %v7919
    %9654 = vmatprep.subr.mxu0 %v7928
    %9655 = vmatpush1.msra.mxu0 %v7927
    %9656 = vmatprep.subr.mxu0 %v7936
    %9657 = vmatpush1.msra.mxu0 %v7935
    %9658 = vmatprep.subr.mxu0 %v7944
    %9659 = vmatpush1.msra.mxu0 %v7943
    %9660 = vmatprep.subr.mxu0 %v7952
    %9661 = vmatpush1.msra.mxu0 %v7951
    %9662 = vmatprep.subr.mxu0 %v7960
    %9663 = vmatpush1.msra.mxu0 %v7959
    %9664 = vmatprep.subr.mxu0 %v7968
    %9665 = vmatpush1.msra.mxu0 %v7967
    %9666 = vmatprep.subr.mxu0 %v7976
    %9667 = vmatpush1.msra.mxu0 %v7975
    %9668 = vmatprep.subr.mxu0 %v7984
    %9669 = vmatpush1.msra.mxu0 %v7983
    %9670 = vmatprep.subr.mxu0 %v7992
    %9671 = vmatpush1.msra.mxu0 %v7991
    %9672 = vmatprep.subr.mxu0 %v8000
    %9673 = vmatpush1.msra.mxu0 %v7999
    %9674 = vmatprep.subr.mxu0 %v8008
    %9675 = vmatpush1.msra.mxu0 %v8007
    %9676 = vmatprep.subr.mxu0 %v8016
    %9677 = vmatpush1.msra.mxu0 %v8015
    %9678 = vmatprep.subr.mxu0 %v8024
    %9679 = vmatpush1.msra.mxu0 %v8023
    %9680 = vmatprep.subr.mxu0 %v8032
    %9681 = vmatpush1.msra.mxu0 %v8031
    %9682 = vmatprep.subr.mxu0 %v8040
    %9683 = vmatpush1.msra.mxu0 %v8039
    %9684 = vmatprep.subr.mxu0 %v8048
    %9685 = vmatpush1.msra.mxu0 %v8047
    %9686 = vmatprep.subr.mxu0 %v8056
    %9687 = vmatpush1.msra.mxu0 %v8055
    %9688 = vmatprep.subr.mxu0 %v8064
    %9689 = vmatpush1.msra.mxu0 %v8063
    %9690 = vmatprep.subr.mxu0 %v8072
    %9691 = vmatpush1.msra.mxu0 %v8071
    %9692 = vmatprep.mubr.f32.mxu0 %v7548
    %9693 = vmatmul.mubr.f32.gmra.mrb[0].mxu0 %v7547
    %v9694 = vpop.f32.mrb[0].mxu0
    %v9695 = vadd.f32 %v9618, %v9694
    %v9696 = vpop.f32.mrb[0].mxu0
    %v9697 = vadd.f32 %v9620, %v9696
    %9698 = vmatprep.mubr.f32.mxu0 %v7556
    %9699 = vmatmul.mubr.f32.gmra.mrb[0].mxu0 %v7555
    %v9700 = vpop.f32.mrb[0].mxu0
    %v9701 = vadd.f32 %v9624, %v9700
    %v9702 = vpop.f32.mrb[0].mxu0
    %v9703 = vadd.f32 %v9626, %v9702
    %9704 = vdwg.mxu0
    %9705 = vmatprep.subr.mxu0 %v8080
    %9706 = vmatpush1.msra.mxu0 %v8079
    %9707 = vmatprep.subr.mxu0 %v8088
    %9708 = vmatpush1.msra.mxu0 %v8087
    %9709 = vmatprep.subr.mxu0 %v8096
    %9710 = vmatpush1.msra.mxu0 %v8095
    %9711 = vmatprep.subr.mxu0 %v8104
    %9712 = vmatpush1.msra.mxu0 %v8103
    %9713 = vmatprep.subr.mxu0 %v8112
    %9714 = vmatpush1.msra.mxu0 %v8111
    %9715 = vmatprep.subr.mxu0 %v8120
    %9716 = vmatpush1.msra.mxu0 %v8119
    %9717 = vmatprep.subr.mxu0 %v8128
    %9718 = vmatpush1.msra.mxu0 %v8127
    %9719 = vmatprep.subr.mxu0 %v8136
    %9720 = vmatpush1.msra.mxu0 %v8135
    %9721 = vmatprep.subr.mxu0 %v8144
    %9722 = vmatpush1.msra.mxu0 %v8143
    %9723 = vmatprep.subr.mxu0 %v8152
    %9724 = vmatpush1.msra.mxu0 %v8151
    %9725 = vmatprep.subr.mxu0 %v8160
    %9726 = vmatpush1.msra.mxu0 %v8159
    %9727 = vmatprep.subr.mxu0 %v8168
    %9728 = vmatpush1.msra.mxu0 %v8167
    %9729 = vmatprep.subr.mxu0 %v8176
    %9730 = vmatpush1.msra.mxu0 %v8175
    %9731 = vmatprep.subr.mxu0 %v8184
    %9732 = vmatpush1.msra.mxu0 %v8183
    %9733 = vmatprep.subr.mxu0 %v8192
    %9734 = vmatpush1.msra.mxu0 %v8191
    %9735 = vmatprep.subr.mxu0 %v8200
    %9736 = vmatpush1.msra.mxu0 %v8199
    %9737 = vmatprep.subr.mxu0 %v8208
    %9738 = vmatpush1.msra.mxu0 %v8207
    %9739 = vmatprep.subr.mxu0 %v8216
    %9740 = vmatpush1.msra.mxu0 %v8215
    %9741 = vmatprep.subr.mxu0 %v8224
    %9742 = vmatpush1.msra.mxu0 %v8223
    %9743 = vmatprep.subr.mxu0 %v8232
    %9744 = vmatpush1.msra.mxu0 %v8231
    %9745 = vmatprep.subr.mxu0 %v8240
    %9746 = vmatpush1.msra.mxu0 %v8239
    %9747 = vmatprep.subr.mxu0 %v8248
    %9748 = vmatpush1.msra.mxu0 %v8247
    %9749 = vmatprep.subr.mxu0 %v8256
    %9750 = vmatpush1.msra.mxu0 %v8255
    %9751 = vmatprep.subr.mxu0 %v8264
    %9752 = vmatpush1.msra.mxu0 %v8263
    %9753 = vmatprep.subr.mxu0 %v8272
    %9754 = vmatpush1.msra.mxu0 %v8271
    %9755 = vmatprep.subr.mxu0 %v8280
    %9756 = vmatpush1.msra.mxu0 %v8279
    %9757 = vmatprep.subr.mxu0 %v8288
    %9758 = vmatpush1.msra.mxu0 %v8287
    %9759 = vmatprep.subr.mxu0 %v8296
    %9760 = vmatpush1.msra.mxu0 %v8295
    %9761 = vmatprep.subr.mxu0 %v8304
    %9762 = vmatpush1.msra.mxu0 %v8303
    %9763 = vmatprep.subr.mxu0 %v8312
    %9764 = vmatpush1.msra.mxu0 %v8311
    %9765 = vmatprep.subr.mxu0 %v8320
    %9766 = vmatpush1.msra.mxu0 %v8319
    %9767 = vmatprep.subr.mxu0 %v8328
    %9768 = vmatpush1.msra.mxu0 %v8327
    %9769 = vmatprep.mubr.f32.mxu0 %v7550
    %9770 = vmatmul.mubr.f32.gmra.mrb[0].mxu0 %v7549
    %v9771 = vpop.f32.mrb[0].mxu0
    %v9772 = vadd.f32 %v9695, %v9771
    %v9773 = vpop.f32.mrb[0].mxu0
    %v9774 = vadd.f32 %v9697, %v9773
    %9775 = vmatprep.mubr.f32.mxu0 %v7558
    %9776 = vmatmul.mubr.f32.gmra.mrb[0].mxu0 %v7557
    %v9777 = vpop.f32.mrb[0].mxu0
    %v9778 = vadd.f32 %v9701, %v9777
    %v9779 = vpop.f32.mrb[0].mxu0
    %v9780 = vadd.f32 %v9703, %v9779
    %9781 = vdwg.mxu0
    %9782 = vmatprep.subr.mxu0 %v8336
    %9783 = vmatpush1.msra.mxu0 %v8335
    %9784 = vmatprep.subr.mxu0 %v8344
    %9785 = vmatpush1.msra.mxu0 %v8343
    %9786 = vmatprep.subr.mxu0 %v8352
    %9787 = vmatpush1.msra.mxu0 %v8351
    %9788 = vmatprep.subr.mxu0 %v8360
    %9789 = vmatpush1.msra.mxu0 %v8359
    %9790 = vmatprep.subr.mxu0 %v8368
    %9791 = vmatpush1.msra.mxu0 %v8367
    %9792 = vmatprep.subr.mxu0 %v8376
    %9793 = vmatpush1.msra.mxu0 %v8375
    %9794 = vmatprep.subr.mxu0 %v8384
    %9795 = vmatpush1.msra.mxu0 %v8383
    %9796 = vmatprep.subr.mxu0 %v8392
    %9797 = vmatpush1.msra.mxu0 %v8391
    %9798 = vmatprep.subr.mxu0 %v8400
    %9799 = vmatpush1.msra.mxu0 %v8399
    %9800 = vmatprep.subr.mxu0 %v8408
    %9801 = vmatpush1.msra.mxu0 %v8407
    %9802 = vmatprep.subr.mxu0 %v8416
    %9803 = vmatpush1.msra.mxu0 %v8415
    %9804 = vmatprep.subr.mxu0 %v8424
    %9805 = vmatpush1.msra.mxu0 %v8423
    %9806 = vmatprep.subr.mxu0 %v8432
    %9807 = vmatpush1.msra.mxu0 %v8431
    %9808 = vmatprep.subr.mxu0 %v8440
    %9809 = vmatpush1.msra.mxu0 %v8439
    %9810 = vmatprep.subr.mxu0 %v8448
    %9811 = vmatpush1.msra.mxu0 %v8447
    %9812 = vmatprep.subr.mxu0 %v8456
    %9813 = vmatpush1.msra.mxu0 %v8455
    %9814 = vmatprep.subr.mxu0 %v8464
    %9815 = vmatpush1.msra.mxu0 %v8463
    %9816 = vmatprep.subr.mxu0 %v8472
    %9817 = vmatpush1.msra.mxu0 %v8471
    %9818 = vmatprep.subr.mxu0 %v8480
    %9819 = vmatpush1.msra.mxu0 %v8479
    %9820 = vmatprep.subr.mxu0 %v8488
    %9821 = vmatpush1.msra.mxu0 %v8487
    %9822 = vmatprep.subr.mxu0 %v8496
    %9823 = vmatpush1.msra.mxu0 %v8495
    %9824 = vmatprep.subr.mxu0 %v8504
    %9825 = vmatpush1.msra.mxu0 %v8503
    %9826 = vmatprep.subr.mxu0 %v8512
    %9827 = vmatpush1.msra.mxu0 %v8511
    %9828 = vmatprep.subr.mxu0 %v8520
    %9829 = vmatpush1.msra.mxu0 %v8519
    %9830 = vmatprep.subr.mxu0 %v8528
    %9831 = vmatpush1.msra.mxu0 %v8527
    %9832 = vmatprep.subr.mxu0 %v8536
    %9833 = vmatpush1.msra.mxu0 %v8535
    %9834 = vmatprep.subr.mxu0 %v8544
    %9835 = vmatpush1.msra.mxu0 %v8543
    %9836 = vmatprep.subr.mxu0 %v8552
    %9837 = vmatpush1.msra.mxu0 %v8551
    %9838 = vmatprep.subr.mxu0 %v8560
    %9839 = vmatpush1.msra.mxu0 %v8559
    %9840 = vmatprep.subr.mxu0 %v8568
    %9841 = vmatpush1.msra.mxu0 %v8567
    %9842 = vmatprep.subr.mxu0 %v8576
    %9843 = vmatpush1.msra.mxu0 %v8575
    %9844 = vmatprep.subr.mxu0 %v8584
    %9845 = vmatpush1.msra.mxu0 %v8583
    %9846 = vmatprep.mubr.f32.mxu0 %v7552
    %9847 = vmatmul.mubr.f32.gmra.mrb[0].mxu0 %v7551
    %v9848 = vpop.f32.mrb[0].mxu0
    %v9849 = vadd.f32 %v9772, %v9848
    %v9850 = vpop.f32.mrb[0].mxu0
    %v9851 = vadd.f32 %v9774, %v9850
    %9852 = vmatprep.mubr.f32.mxu0 %v7560
    %9853 = vmatmul.mubr.f32.gmra.mrb[0].mxu0 %v7559
    %v9854 = vpop.f32.mrb[0].mxu0
    %v9855 = vadd.f32 %v9778, %v9854
    %v9856 = vpop.f32.mrb[0].mxu0
    %v9857 = vadd.f32 %v9780, %v9856
    %9858 = vdwg.mxu0
    %9859 = vst [vmem:[#allocation20] sm:$0xff] %v8925
    %9860 = vst [vmem:[#allocation20 + $0x8] sm:$0xff] %v8927
    %9861 = vst [vmem:[#allocation20 + $0x10] sm:$0xff] %v9233
    %9862 = vst [vmem:[#allocation20 + $0x18] sm:$0xff] %v9235
    %9863 = vst [vmem:[#allocation20 + $0x20] sm:$0xff] %v9541
    %9864 = vst [vmem:[#allocation20 + $0x28] sm:$0xff] %v9543
    %9865 = vst [vmem:[#allocation20 + $0x30] sm:$0xff] %v9849
    %9866 = vst [vmem:[#allocation20 + $0x38] sm:$0xff] %v9851
    %9867 = vst [vmem:[#allocation20 + $0x40] sm:$0xff] %v8931
    %9868 = vst [vmem:[#allocation20 + $0x48] sm:$0xff] %v8933
    %9869 = vst [vmem:[#allocation20 + $0x50] sm:$0xff] %v9239
    %9870 = vst [vmem:[#allocation20 + $0x58] sm:$0xff] %v9241
    %9871 = vst [vmem:[#allocation20 + $0x60] sm:$0xff] %v9547
    %9872 = vst [vmem:[#allocation20 + $0x68] sm:$0xff] %v9549
    %9873 = vst [vmem:[#allocation20 + $0x70] sm:$0xff] %v9855
    %9874 = vst [vmem:[#allocation20 + $0x78] sm:$0xff] %v9857
    // Predicated region
    $region90: #{decoder_forward.1} parent=1 // pred_check
      _
    $region91: #{decoder_forward.1} parent=1 // pred_check_branch
      %9876 = sbr.rel (0) target = $region93
    $region92: #{decoder_forward.1} parent=1 // pred_region
      %s9878 = ssub.s32 2048, 2048
      %9879 = vsyncadd [#allocation4], %s9878
      %s9880 = sshll.u32 [#allocation20], 4
      %s9881 = int_to_ptr.vmem [resolvable:$true] %s9880
      %9886 = dma.vmem_to_hbm [thread:$0]  %s9881, 2048, %s11, [#allocation4], 1024, 1024, 64
    $region93: #{decoder_forward.1} parent=1 // pred_fallthru
      _
    // Predicated region
    $region94: #{decoder_forward.1} parent=1 // pred_check
      _
    $region95: #{decoder_forward.1} parent=1 // pred_check_branch
      %9888 = sbr.rel (0) target = $region97
    $region96: #{decoder_forward.1} parent=1 // pred_region
      %9889 = dma.done [#allocation4], 2048
    $region97: #{decoder_forward.1} parent=1 // pred_fallthru
      _
    %9890 = vsyncpa [#allocation3], 1
    %9891 = vsyncpa [#allocation6], 1
    %9892 = vsyncpa [#allocation9], 1
    %9893 = vsyncpa [#allocation12], 1
    %9894 = vsyncpa [#allocation15], 1
    %9895 = vsyncpa [#allocation18], 1
    %9896 = vsyncpa [#allocation4], 1

</llo_original>
